<compile_context>
chip_gen: v7x
topology: tpu7x:2x2x1
jax: 0.10.0
libtpu: 0.0.40
codegen_flags: <defaults>
</compile_context>

<pallas_src>
import math
from functools import partial

import jax
import jax.numpy as jnp
from jax.experimental import pallas as pl
from jax.experimental.pallas import tpu as pltpu

HP = 128            # per-gate / per-direction hidden padding (one lane tile)
NG = 4 * HP         # padded width of the 4 stacked gates (i, f, g, o)
BP = 8              # batch padded to one f32 sublane tile
R = 2 * BP          # rows per timestep block: [fwd batch rows ; bwd batch rows]


# ----------------------------------------------------------------------------
# Fused Pallas kernel
# ----------------------------------------------------------------------------
def fused_lstm_kernel(xin_ref,
                      wih1_ref, b1_ref, whh1_ref,
                      wih2_ref, b2_ref, whh2_ref,
                      wd1_ref, bd1_ref, wd2_ref, bd2_ref, wo_ref, bo_ref,
                      out_ref,
                      xp_scr, z_scr, h2_scr, *, T):
    f32 = jnp.float32

    # Direction row masks (fwd rows = [0,BP), bwd rows = [BP,R)); hoisted once.
    row = jax.lax.broadcasted_iota(jnp.int32, (R, HP), 0)
    fmask = (row < BP).astype(f32)
    bmask = 1.0 - fmask

    def cell(g, c):
        # g: (R, NG) pre-activations, gate blocks [i|f|g|o] of HP lanes each.
        i = jax.nn.sigmoid(g[:, 0 * HP:1 * HP])
        f = jax.nn.sigmoid(g[:, 1 * HP:2 * HP])
        u = jnp.tanh(g[:, 2 * HP:3 * HP])
        o = jax.nn.sigmoid(g[:, 3 * HP:4 * HP])
        c_new = f * c + i * u
        return o * jnp.tanh(c_new), c_new

    def recurrence(whh_ref, b_ref, store):
        # Both directions advance together: ONE matmul + ONE cell per step.
        b = b_ref[...]                                # (R, NG) per-dir bias
        h = jnp.zeros((R, 2 * HP), f32)               # lane-split packed state
        c = jnp.zeros((R, HP), f32)
        # TODO(synk): switch to lax.fori_loop(..., unroll=2..4) with pl.ds /
        # pl.multiple_of row offsets if T grows beyond ~16.
        for t in range(T):
            g = (jnp.dot(h, whh_ref[...], preferred_element_type=f32)
                 + xp_scr[t * R:(t + 1) * R, :] + b)
            hn, c = cell(g, c)
            # Repack for the next fused matmul: fwd rows -> lanes [0,HP),
            # bwd rows -> lanes [HP,2HP); zeroed half keeps it exact.
            h = jnp.concatenate([hn * fmask, hn * bmask], axis=1)
            store(t, hn)

    # ---------------- Layer 1 ----------------
    # Hoisted input projection: one matmul covers every timestep and BOTH
    # directions (backward rows pre-time-reversed by the wrapper).
    xp_scr[...] = jnp.dot(xin_ref[...], wih1_ref[...],
                          preferred_element_type=f32)

    # Layer-2 stacked input (direction-split feature blocks); zero the halves
    # the recurrence never writes.
    z_scr[...] = jnp.zeros_like(z_scr)

    def store1(t, hn):
        rt = T - 1 - t
        hf = hn[:BP]          # forward direction output, original time t
        hb = hn[BP:]          # backward direction output, original time rt
        # fwd rows of block t / rt get [h1f|h1b] in cols [0,2HP);
        # bwd rows of block rt / t get them in cols [2HP,4HP).
        z_scr[t * R:t * R + BP, 0 * HP:1 * HP] = hf
        z_scr[rt * R:rt * R + BP, 1 * HP:2 * HP] = hb
        z_scr[rt * R + BP:rt * R + R, 2 * HP:3 * HP] = hf
        z_scr[t * R + BP:t * R + R, 3 * HP:4 * HP] = hb

    recurrence(whh1_ref, b1_ref, store1)

    # ---------------- Layer 2 ----------------
    xp_scr[...] = jnp.dot(z_scr[...], wih2_ref[...],
                          preferred_element_type=f32)

    def store2(t, hn):
        rt = T - 1 - t
        h2_scr[t * BP:(t + 1) * BP, 0:HP] = hn[:BP]           # h2_fwd @ time t
        h2_scr[rt * BP:(rt + 1) * BP, HP:2 * HP] = hn[BP:]    # h2_bwd @ time rt

    recurrence(whh2_ref, b2_ref, store2)

    # ---------------- MLP head (lane-dense, padded to 128 lanes) ------------
    d1 = jnp.maximum(jnp.dot(h2_scr[...], wd1_ref[...],
                             preferred_element_type=f32) + bd1_ref[...], 0.0)
    d2 = jnp.maximum(jnp.dot(d1, wd2_ref[...],
                             preferred_element_type=f32) + bd2_ref[...], 0.0)
    out_ref[...] = jnp.dot(d2, wo_ref[...],
                           preferred_element_type=f32) + bo_ref[...]


# ----------------------------------------------------------------------------
# Wrapper
# ----------------------------------------------------------------------------
_VMEM = pl.BlockSpec(memory_space=pltpu.MemorySpace.VMEM)


@jax.jit
def lstm_forward(x, kp):
    """x: (B, T, F) float32  ->  (B, T, 1) float32 (matches PyTorch forward)."""
    B, T, F = x.shape
    assert B <= BP, "demo wrapper supports one padded batch tile"
    # TODO(synk): for larger batches add a grid axis over batch blocks with
    # dimension_semantics=("parallel",) (to use v7x's 2nd TensorCore) and
    # re-budget the sequence-resident scratch for 64 MiB VMEM.
    Fp = kp['wih1'].shape[0]

    # Direction-fused, time-major stacked input.  Time block t (2*BP rows):
    #   rows [0,BP)  = x_t        with features in cols [0,F)    (fwd weights)
    #   rows [BP,R)  = x_{T-1-t}  with features in cols [F,2F)   (bwd weights)
    x_tm = jnp.transpose(x, (1, 0, 2))                       # (T, B, F)
    x_tm = jnp.pad(x_tm, ((0, 0), (0, BP - B), (0, 0)))      # (T, BP, F)
    z = jnp.zeros_like(x_tm)
    xf = jnp.concatenate([x_tm, z], axis=-1)                 # (T, BP, 2F)
    xb = jnp.concatenate([z, x_tm[::-1]], axis=-1)           # time-reversed
    xin = jnp.stack([xf, xb], axis=1).reshape(T * R, 2 * F)
    xin = jnp.pad(xin, ((0, 0), (0, Fp - 2 * F)))

    out = pl.pallas_call(
        partial(fused_lstm_kernel, T=T),
        out_shape=jax.ShapeDtypeStruct((T * BP, HP), jnp.float32),
        in_specs=[_VMEM] * 13,
        out_specs=_VMEM,
        scratch_shapes=[
            pltpu.VMEM((T * R, NG), jnp.float32),       # hoisted gate projections
            pltpu.VMEM((T * R, 4 * HP), jnp.float32),   # layer-2 stacked input
            pltpu.VMEM((T * BP, 2 * HP), jnp.float32),  # layer-2 BiLSTM output
        ],
    )(xin,
      kp['wih1'], kp['b1'], kp['whh1'],
      kp['wih2'], kp['b2'], kp['whh2'],
      kp['wd1'], kp['bd1'], kp['wd2'], kp['bd2'], kp['wo'], kp['bo'])

    y = out.reshape(T, BP, HP)[:, :B, 0]                     # (T, B), lane 0
    return jnp.transpose(y, (1, 0))[:, :, None]              # (B, T, 1)


# ----------------------------------------------------------------------------
# Parameter init (PyTorch layouts) + packing into padded kernel layouts
# ----------------------------------------------------------------------------
def init_torch_params(key, num_features, h1, h2, d1=30, d2=20):
    keys = iter(jax.random.split(key, 64))

    def u(shape, k):
        return jax.random.uniform(next(keys), shape, jnp.float32, -k, k)

    def lstm_dir(in_dim, H):
        k = 1.0 / math.sqrt(H)
        return {'w_ih': u((4 * H, in_dim), k),   # PyTorch weight_ih (4H, in)
                'w_hh': u((4 * H, H), k),        # PyTorch weight_hh (4H, H)
                'b_ih': u((4 * H,), k),
                'b_hh': u((4 * H,), k)}

    def linear(i, o):
        k = 1.0 / math.sqrt(i)
        return {'w': u((o, i), k), 'b': u((o,), k)}   # PyTorch (out, in)

    return {'lstm1_f': lstm_dir(num_features, h1),
            'lstm1_b': lstm_dir(num_features, h1),
            'lstm2_f': lstm_dir(2 * h1, h2),
            'lstm2_b': lstm_dir(2 * h1, h2),
            'dense1': linear(2 * h2, d1),
            'dense2': linear(d1, d2),
            'output': linear(d2, 1)}


def _pad_gate_cols(w, H):
    """(rows, 4H) gate order i,f,g,o -> (rows, NG), gate g at cols [g*HP, g*HP+H)."""
    rows = w.shape[0]
    out = jnp.zeros((rows, NG), jnp.float32)
    for g in range(4):
        out = out.at[:, g * HP:g * HP + H].set(w[:, g * H:(g + 1) * H])
    return out


def pack_params(tp, num_features, h1, h2, d1=30, d2=20):
    F = num_features
    Fp = max(8, ((2 * F + 7) // 8) * 8)

    def bias(pf, pb, H):
        b = jnp.zeros((R, NG), jnp.float32)
        bf = _pad_gate_cols((pf['b_ih'] + pf['b_hh'])[None, :], H)
        bb = _pad_gate_cols((pb['b_ih'] + pb['b_hh'])[None, :], H)
        b = b.at[:BP].set(jnp.broadcast_to(bf, (BP, NG)))
        b = b.at[BP:].set(jnp.broadcast_to(bb, (BP, NG)))
        return b

    def whh(pf, pb, H):
        # Both directions stacked: rows [0,HP) = fwd w_hh, rows [HP,2HP) = bwd.
        w = jnp.zeros((2 * HP, NG), jnp.float32)
        w = w.at[:H].set(_pad_gate_cols(pf['w_hh'].T, H))
        w = w.at[HP:HP + H].set(_pad_gate_cols(pb['w_hh'].T, H))
        return w

    # Layer-1 input weights: fwd features in rows [0,F), bwd in rows [F,2F).
    wih1 = jnp.zeros((Fp, NG), jnp.float32)
    wih1 = wih1.at[:F].set(_pad_gate_cols(tp['lstm1_f']['w_ih'].T, h1))
    wih1 = wih1.at[F:2 * F].set(_pad_gate_cols(tp['lstm1_b']['w_ih'].T, h1))

    # Layer-2 input weights operate on the direction-split stacked layer-1
    # output: [h1f|h1b] in cols [0,2HP) for fwd rows, cols [2HP,4HP) for bwd.
    wih2 = jnp.zeros((4 * HP, NG), jnp.float32)
    wf = _pad_gate_cols(tp['lstm2_f']['w_ih'].T, h2)        # (2*h1, NG)
    wb = _pad_gate_cols(tp['lstm2_b']['w_ih'].T, h2)
    wih2 = wih2.at[0:h1].set(wf[:h1])
    wih2 = wih2.at[HP:HP + h1].set(wf[h1:])
    wih2 = wih2.at[2 * HP:2 * HP + h1].set(wb[:h1])
    wih2 = wih2.at[3 * HP:3 * HP + h1].set(wb[h1:])

    # Lane-dense MLP head (zero padding is exact under ReLU / linear).
    wt1 = tp['dense1']['w'].T                               # (2*h2, d1)
    wd1 = jnp.zeros((2 * HP, HP), jnp.float32)
    wd1 = wd1.at[:h2, :d1].set(wt1[:h2])
    wd1 = wd1.at[HP:HP + h2, :d1].set(wt1[h2:])
    bd1 = jnp.zeros((1, HP), jnp.float32).at[0, :d1].set(tp['dense1']['b'])

    wd2 = jnp.zeros((HP, HP), jnp.float32).at[:d1, :d2].set(tp['dense2']['w'].T)
    bd2 = jnp.zeros((1, HP), jnp.float32).at[0, :d2].set(tp['dense2']['b'])

    wo = jnp.zeros((HP, HP), jnp.float32).at[:d2, :1].set(tp['output']['w'].T)
    bo = jnp.zeros((1, HP), jnp.float32).at[0, :1].set(tp['output']['b'])

    return dict(wih1=wih1, b1=bias(tp['lstm1_f'], tp['lstm1_b'], h1),
                whh1=whh(tp['lstm1_f'], tp['lstm1_b'], h1),
                wih2=wih2, b2=bias(tp['lstm2_f'], tp['lstm2_b'], h2),
                whh2=whh(tp['lstm2_f'], tp['lstm2_b'], h2),
                wd1=wd1, bd1=bd1, wd2=wd2, bd2=bd2, wo=wo, bo=bo)


# ----------------------------------------------------------------------------
# Pure-JAX reference (PyTorch-layout params) for validation
# ----------------------------------------------------------------------------
def _ref_lstm_dir(x, p, reverse):
    B, T, _ = x.shape
    H = p['w_hh'].shape[1]
    w_ih, w_hh = p['w_ih'].T, p['w_hh'].T
    b = (p['b_ih'] + p['b_hh'])[None, :]
    h = jnp.zeros((B, H), jnp.float32)
    c = jnp.zeros((B, H), jnp.float32)
    outs = [None] * T
    ts = range(T - 1, -1, -1) if reverse else range(T)
    for t in ts:
        g = x[:, t, :] @ w_ih + h @ w_hh + b
        i = jax.nn.sigmoid(g[:, :H])
        f = jax.nn.sigmoid(g[:, H:2 * H])
        u = jnp.tanh(g[:, 2 * H:3 * H])
        o = jax.nn.sigmoid(g[:, 3 * H:])
        c = f * c + i * u
        h = o * jnp.tanh(c)
        outs[t] = h
    return jnp.stack(outs, axis=1)


def ref_forward(x, tp):
    h = jnp.concatenate([_ref_lstm_dir(x, tp['lstm1_f'], False),
                         _ref_lstm_dir(x, tp['lstm1_b'], True)], axis=-1)
    h = jnp.concatenate([_ref_lstm_dir(h, tp['lstm2_f'], False),
                         _ref_lstm_dir(h, tp['lstm2_b'], True)], axis=-1)
    h = jnp.maximum(h @ tp['dense1']['w'].T + tp['dense1']['b'], 0.0)
    h = jnp.maximum(h @ tp['dense2']['w'].T + tp['dense2']['b'], 0.0)
    return h @ tp['output']['w'].T + tp['output']['b']


# ----------------------------------------------------------------------------
if __name__ == "__main__":
    # model_size='5k' -> hidden_dimension_lstm1=8, hidden_dimension_lstm2=9
    H1, H2 = 8, 9
    NUM_FEATURES = 4
    B, T = 2, 8

    key = jax.random.PRNGKey(0)
    pkey, xkey = jax.random.split(key)
    tparams = init_torch_params(pkey, NUM_FEATURES, H1, H2)
    kparams = pack_params(tparams, NUM_FEATURES, H1, H2)
    x = jax.random.normal(xkey, (B, T, NUM_FEATURES), jnp.float32)

    y = lstm_forward(x, kparams)
    y = jax.block_until_ready(y)

    y_ref = ref_forward(x, tparams)
    assert y.shape == (B, T, 1), y.shape
    assert jnp.allclose(y, y_ref, rtol=1e-3, atol=2e-3), \
        float(jnp.max(jnp.abs(y - y_ref)))

    print("KERNEL_OK")
</pallas_src>

<mosaic_0001>
module attributes {stable_mosaic.version = 11 : i64} {
  func.func @fused_lstm_kernel(%arg0: memref<128x8xf32, #tpu.memory_space<vmem>>, %arg1: memref<8x512xf32, #tpu.memory_space<vmem>>, %arg2: memref<16x512xf32, #tpu.memory_space<vmem>>, %arg3: memref<256x512xf32, #tpu.memory_space<vmem>>, %arg4: memref<512x512xf32, #tpu.memory_space<vmem>>, %arg5: memref<16x512xf32, #tpu.memory_space<vmem>>, %arg6: memref<256x512xf32, #tpu.memory_space<vmem>>, %arg7: memref<256x128xf32, #tpu.memory_space<vmem>>, %arg8: memref<1x128xf32, #tpu.memory_space<vmem>>, %arg9: memref<128x128xf32, #tpu.memory_space<vmem>>, %arg10: memref<1x128xf32, #tpu.memory_space<vmem>>, %arg11: memref<128x128xf32, #tpu.memory_space<vmem>>, %arg12: memref<1x128xf32, #tpu.memory_space<vmem>>, %arg13: memref<64x128xf32, #tpu.memory_space<vmem>>, %arg14: memref<128x512xf32, #tpu.memory_space<vmem>>, %arg15: memref<128x512xf32, #tpu.memory_space<vmem>>, %arg16: memref<64x256xf32, #tpu.memory_space<vmem>>) attributes {dimension_semantics = [], scalar_prefetch = 0 : i64, scratch_operands = 3 : i64, tpu.core_type = #tpu.core_type<tc>} {
    %0 = tpu.iota {dimensions = array<i32: 0>} : vector<16x128xi32>
    %c8_i32 = arith.constant 8 : i32
    %1 = vector.broadcast %c8_i32 : i32 to vector<16x128xi32>
    %2 = arith.cmpi slt, %0, %1 : vector<16x128xi32>
    %3 = arith.extui %2 : vector<16x128xi1> to vector<16x128xi32>
    %4 = arith.sitofp %3 : vector<16x128xi32> to vector<16x128xf32>
    %cst = arith.constant 1.000000e+00 : f32
    %5 = vector.broadcast %cst : f32 to vector<16x128xf32>
    %6 = arith.subf %5, %4 : vector<16x128xf32>
    %c0 = arith.constant 0 : index
    %c0_0 = arith.constant 0 : index
    %7 = vector.load %arg0[%c0, %c0_0] : memref<128x8xf32, #tpu.memory_space<vmem>>, vector<128x8xf32>
    %c0_1 = arith.constant 0 : index
    %c0_2 = arith.constant 0 : index
    %8 = vector.load %arg1[%c0_1, %c0_2] : memref<8x512xf32, #tpu.memory_space<vmem>>, vector<8x512xf32>
    %cst_3 = arith.constant dense<0.000000e+00> : vector<128x512xf32>
    %9 = tpu.matmul %7, %8, %cst_3 {dimension_numbers = #tpu.dot_dimension_numbers<[1], [0], [0], [1], [0, 0, 1, 1], [], []>} : vector<128x8xf32>, vector<8x512xf32>, vector<128x512xf32> -> vector<128x512xf32>
    %c0_4 = arith.constant 0 : index
    %c0_5 = arith.constant 0 : index
    %10 = vector.load %arg14[%c0_4, %c0_5] : memref<128x512xf32, #tpu.memory_space<vmem>>, vector<128x512xf32>
    tpu.vector_store %arg14[%c0_4, %c0_5], %9 {strides = array<i32>} : memref<128x512xf32, #tpu.memory_space<vmem>>, vector<128x512xf32>,
    %cst_6 = arith.constant 0.000000e+00 : f32
    %11 = vector.broadcast %cst_6 : f32 to vector<128x512xf32>
    %c0_7 = arith.constant 0 : index
    %c0_8 = arith.constant 0 : index
    %12 = vector.load %arg15[%c0_7, %c0_8] : memref<128x512xf32, #tpu.memory_space<vmem>>, vector<128x512xf32>
    tpu.vector_store %arg15[%c0_7, %c0_8], %11 {strides = array<i32>} : memref<128x512xf32, #tpu.memory_space<vmem>>, vector<128x512xf32>,
    %c0_9 = arith.constant 0 : index
    %c0_10 = arith.constant 0 : index
    %13 = vector.load %arg2[%c0_9, %c0_10] : memref<16x512xf32, #tpu.memory_space<vmem>>, vector<16x512xf32>
    %cst_11 = arith.constant 0.000000e+00 : f32
    %14 = vector.broadcast %cst_11 : f32 to vector<16x256xf32>
    %cst_12 = arith.constant 0.000000e+00 : f32
    %15 = vector.broadcast %cst_12 : f32 to vector<16x128xf32>
    %c0_13 = arith.constant 0 : index
    %c0_14 = arith.constant 0 : index
    %16 = vector.load %arg3[%c0_13, %c0_14] : memref<256x512xf32, #tpu.memory_space<vmem>>, vector<256x512xf32>
    %cst_15 = arith.constant dense<0.000000e+00> : vector<16x512xf32>
    %17 = tpu.matmul %14, %16, %cst_15 {dimension_numbers = #tpu.dot_dimension_numbers<[1], [0], [0], [1], [0, 0, 1, 1], [], []>} : vector<16x256xf32>, vector<256x512xf32>, vector<16x512xf32> -> vector<16x512xf32>
    %c0_16 = arith.constant 0 : index
    %c0_17 = arith.constant 0 : index
    %18 = vector.load %arg14[%c0_16, %c0_17] : memref<128x512xf32, #tpu.memory_space<vmem>>, vector<16x512xf32>
    %19 = arith.addf %17, %18 : vector<16x512xf32>
    %20 = arith.addf %19, %13 : vector<16x512xf32>
    %21 = vector.extract_strided_slice %20 {offsets = [0, 0], sizes = [16, 128], strides = [1, 1]} : vector<16x512xf32> to vector<16x128xf32>
    %22 = arith.negf %21 : vector<16x128xf32>
    %23 = math.exp %22 : vector<16x128xf32>
    %cst_18 = arith.constant 1.000000e+00 : f32
    %24 = vector.broadcast %cst_18 : f32 to vector<16x128xf32>
    %25 = arith.addf %24, %23 : vector<16x128xf32>
    %26 = arith.divf %24, %25 : vector<16x128xf32>
    %27 = vector.extract_strided_slice %20 {offsets = [0, 128], sizes = [16, 128], strides = [1, 1]} : vector<16x512xf32> to vector<16x128xf32>
    %28 = arith.negf %27 : vector<16x128xf32>
    %29 = math.exp %28 : vector<16x128xf32>
    %cst_19 = arith.constant 1.000000e+00 : f32
    %30 = vector.broadcast %cst_19 : f32 to vector<16x128xf32>
    %31 = arith.addf %30, %29 : vector<16x128xf32>
    %32 = arith.divf %30, %31 : vector<16x128xf32>
    %33 = vector.extract_strided_slice %20 {offsets = [0, 256], sizes = [16, 128], strides = [1, 1]} : vector<16x512xf32> to vector<16x128xf32>
    %34 = math.tanh %33 : vector<16x128xf32>
    %35 = vector.extract_strided_slice %20 {offsets = [0, 384], sizes = [16, 128], strides = [1, 1]} : vector<16x512xf32> to vector<16x128xf32>
    %36 = arith.negf %35 : vector<16x128xf32>
    %37 = math.exp %36 : vector<16x128xf32>
    %cst_20 = arith.constant 1.000000e+00 : f32
    %38 = vector.broadcast %cst_20 : f32 to vector<16x128xf32>
    %39 = arith.addf %38, %37 : vector<16x128xf32>
    %40 = arith.divf %38, %39 : vector<16x128xf32>
    %41 = arith.mulf %32, %15 : vector<16x128xf32>
    %42 = arith.mulf %26, %34 : vector<16x128xf32>
    %43 = arith.addf %41, %42 : vector<16x128xf32>
    %44 = math.tanh %43 : vector<16x128xf32>
    %45 = arith.mulf %40, %44 : vector<16x128xf32>
    %46 = arith.mulf %45, %4 : vector<16x128xf32>
    %47 = arith.mulf %45, %6 : vector<16x128xf32>
    %48 = tpu.concatenate %46, %47 in 1 : vector<16x128xf32>, vector<16x128xf32> -> vector<16x256xf32>
    %49 = vector.extract_strided_slice %45 {offsets = [0, 0], sizes = [8, 128], strides = [1, 1]} : vector<16x128xf32> to vector<8x128xf32>
    %50 = vector.extract_strided_slice %45 {offsets = [8, 0], sizes = [8, 128], strides = [1, 1]} : vector<16x128xf32> to vector<8x128xf32>
    %c0_21 = arith.constant 0 : index
    %c0_22 = arith.constant 0 : index
    %51 = vector.load %arg15[%c0_21, %c0_22] : memref<128x512xf32, #tpu.memory_space<vmem>>, vector<8x128xf32>
    tpu.vector_store %arg15[%c0_21, %c0_22], %49 {strides = array<i32>} : memref<128x512xf32, #tpu.memory_space<vmem>>, vector<8x128xf32>,
    %c112 = arith.constant 112 : index
    %c128 = arith.constant 128 : index
    %52 = vector.load %arg15[%c112, %c128] : memref<128x512xf32, #tpu.memory_space<vmem>>, vector<8x128xf32>
    tpu.vector_store %arg15[%c112, %c128], %50 {strides = array<i32>} : memref<128x512xf32, #tpu.memory_space<vmem>>, vector<8x128xf32>,
    %c120 = arith.constant 120 : index
    %c256 = arith.constant 256 : index
    %53 = vector.load %arg15[%c120, %c256] : memref<128x512xf32, #tpu.memory_space<vmem>>, vector<8x128xf32>
    tpu.vector_store %arg15[%c120, %c256], %49 {strides = array<i32>} : memref<128x512xf32, #tpu.memory_space<vmem>>, vector<8x128xf32>,
    %c8 = arith.constant 8 : index
    %c384 = arith.constant 384 : index
    %54 = vector.load %arg15[%c8, %c384] : memref<128x512xf32, #tpu.memory_space<vmem>>, vector<8x128xf32>
    tpu.vector_store %arg15[%c8, %c384], %50 {strides = array<i32>} : memref<128x512xf32, #tpu.memory_space<vmem>>, vector<8x128xf32>,
    %c0_23 = arith.constant 0 : index
    %c0_24 = arith.constant 0 : index
    %55 = vector.load %arg3[%c0_23, %c0_24] : memref<256x512xf32, #tpu.memory_space<vmem>>, vector<256x512xf32>
    %cst_25 = arith.constant dense<0.000000e+00> : vector<16x512xf32>
    %56 = tpu.matmul %48, %55, %cst_25 {dimension_numbers = #tpu.dot_dimension_numbers<[1], [0], [0], [1], [0, 0, 1, 1], [], []>} : vector<16x256xf32>, vector<256x512xf32>, vector<16x512xf32> -> vector<16x512xf32>
    %c16 = arith.constant 16 : index
    %c0_26 = arith.constant 0 : index
    %57 = vector.load %arg14[%c16, %c0_26] : memref<128x512xf32, #tpu.memory_space<vmem>>, vector<16x512xf32>
    %58 = arith.addf %56, %57 : vector<16x512xf32>
    %59 = arith.addf %58, %13 : vector<16x512xf32>
    %60 = vector.extract_strided_slice %59 {offsets = [0, 0], sizes = [16, 128], strides = [1, 1]} : vector<16x512xf32> to vector<16x128xf32>
    %61 = arith.negf %60 : vector<16x128xf32>
    %62 = math.exp %61 : vector<16x128xf32>
    %cst_27 = arith.constant 1.000000e+00 : f32
    %63 = vector.broadcast %cst_27 : f32 to vector<16x128xf32>
    %64 = arith.addf %63, %62 : vector<16x128xf32>
    %65 = arith.divf %63, %64 : vector<16x128xf32>
    %66 = vector.extract_strided_slice %59 {offsets = [0, 128], sizes = [16, 128], strides = [1, 1]} : vector<16x512xf32> to vector<16x128xf32>
    %67 = arith.negf %66 : vector<16x128xf32>
    %68 = math.exp %67 : vector<16x128xf32>
    %cst_28 = arith.constant 1.000000e+00 : f32
    %69 = vector.broadcast %cst_28 : f32 to vector<16x128xf32>
    %70 = arith.addf %69, %68 : vector<16x128xf32>
    %71 = arith.divf %69, %70 : vector<16x128xf32>
    %72 = vector.extract_strided_slice %59 {offsets = [0, 256], sizes = [16, 128], strides = [1, 1]} : vector<16x512xf32> to vector<16x128xf32>
    %73 = math.tanh %72 : vector<16x128xf32>
    %74 = vector.extract_strided_slice %59 {offsets = [0, 384], sizes = [16, 128], strides = [1, 1]} : vector<16x512xf32> to vector<16x128xf32>
    %75 = arith.negf %74 : vector<16x128xf32>
    %76 = math.exp %75 : vector<16x128xf32>
    %cst_29 = arith.constant 1.000000e+00 : f32
    %77 = vector.broadcast %cst_29 : f32 to vector<16x128xf32>
    %78 = arith.addf %77, %76 : vector<16x128xf32>
    %79 = arith.divf %77, %78 : vector<16x128xf32>
    %80 = arith.mulf %71, %43 : vector<16x128xf32>
    %81 = arith.mulf %65, %73 : vector<16x128xf32>
    %82 = arith.addf %80, %81 : vector<16x128xf32>
    %83 = math.tanh %82 : vector<16x128xf32>
    %84 = arith.mulf %79, %83 : vector<16x128xf32>
    %85 = arith.mulf %84, %4 : vector<16x128xf32>
    %86 = arith.mulf %84, %6 : vector<16x128xf32>
    %87 = tpu.concatenate %85, %86 in 1 : vector<16x128xf32>, vector<16x128xf32> -> vector<16x256xf32>
    %88 = vector.extract_strided_slice %84 {offsets = [0, 0], sizes = [8, 128], strides = [1, 1]} : vector<16x128xf32> to vector<8x128xf32>
    %89 = vector.extract_strided_slice %84 {offsets = [8, 0], sizes = [8, 128], strides = [1, 1]} : vector<16x128xf32> to vector<8x128xf32>
    %c16_30 = arith.constant 16 : index
    %c0_31 = arith.constant 0 : index
    %90 = vector.load %arg15[%c16_30, %c0_31] : memref<128x512xf32, #tpu.memory_space<vmem>>, vector<8x128xf32>
    tpu.vector_store %arg15[%c16_30, %c0_31], %88 {strides = array<i32>} : memref<128x512xf32, #tpu.memory_space<vmem>>, vector<8x128xf32>,
    %c96 = arith.constant 96 : index
    %c128_32 = arith.constant 128 : index
    %91 = vector.load %arg15[%c96, %c128_32] : memref<128x512xf32, #tpu.memory_space<vmem>>, vector<8x128xf32>
    tpu.vector_store %arg15[%c96, %c128_32], %89 {strides = array<i32>} : memref<128x512xf32, #tpu.memory_space<vmem>>, vector<8x128xf32>,
    %c104 = arith.constant 104 : index
    %c256_33 = arith.constant 256 : index
    %92 = vector.load %arg15[%c104, %c256_33] : memref<128x512xf32, #tpu.memory_space<vmem>>, vector<8x128xf32>
    tpu.vector_store %arg15[%c104, %c256_33], %88 {strides = array<i32>} : memref<128x512xf32, #tpu.memory_space<vmem>>, vector<8x128xf32>,
    %c24 = arith.constant 24 : index
    %c384_34 = arith.constant 384 : index
    %93 = vector.load %arg15[%c24, %c384_34] : memref<128x512xf32, #tpu.memory_space<vmem>>, vector<8x128xf32>
    tpu.vector_store %arg15[%c24, %c384_34], %89 {strides = array<i32>} : memref<128x512xf32, #tpu.memory_space<vmem>>, vector<8x128xf32>,
    %c0_35 = arith.constant 0 : index
    %c0_36 = arith.constant 0 : index
    %94 = vector.load %arg3[%c0_35, %c0_36] : memref<256x512xf32, #tpu.memory_space<vmem>>, vector<256x512xf32>
    %cst_37 = arith.constant dense<0.000000e+00> : vector<16x512xf32>
    %95 = tpu.matmul %87, %94, %cst_37 {dimension_numbers = #tpu.dot_dimension_numbers<[1], [0], [0], [1], [0, 0, 1, 1], [], []>} : vector<16x256xf32>, vector<256x512xf32>, vector<16x512xf32> -> vector<16x512xf32>
    %c32 = arith.constant 32 : index
    %c0_38 = arith.constant 0 : index
    %96 = vector.load %arg14[%c32, %c0_38] : memref<128x512xf32, #tpu.memory_space<vmem>>, vector<16x512xf32>
    %97 = arith.addf %95, %96 : vector<16x512xf32>
    %98 = arith.addf %97, %13 : vector<16x512xf32>
    %99 = vector.extract_strided_slice %98 {offsets = [0, 0], sizes = [16, 128], strides = [1, 1]} : vector<16x512xf32> to vector<16x128xf32>
    %100 = arith.negf %99 : vector<16x128xf32>
    %101 = math.exp %100 : vector<16x128xf32>
    %cst_39 = arith.constant 1.000000e+00 : f32
    %102 = vector.broadcast %cst_39 : f32 to vector<16x128xf32>
    %103 = arith.addf %102, %101 : vector<16x128xf32>
    %104 = arith.divf %102, %103 : vector<16x128xf32>
    %105 = vector.extract_strided_slice %98 {offsets = [0, 128], sizes = [16, 128], strides = [1, 1]} : vector<16x512xf32> to vector<16x128xf32>
    %106 = arith.negf %105 : vector<16x128xf32>
    %107 = math.exp %106 : vector<16x128xf32>
    %cst_40 = arith.constant 1.000000e+00 : f32
    %108 = vector.broadcast %cst_40 : f32 to vector<16x128xf32>
    %109 = arith.addf %108, %107 : vector<16x128xf32>
    %110 = arith.divf %108, %109 : vector<16x128xf32>
    %111 = vector.extract_strided_slice %98 {offsets = [0, 256], sizes = [16, 128], strides = [1, 1]} : vector<16x512xf32> to vector<16x128xf32>
    %112 = math.tanh %111 : vector<16x128xf32>
    %113 = vector.extract_strided_slice %98 {offsets = [0, 384], sizes = [16, 128], strides = [1, 1]} : vector<16x512xf32> to vector<16x128xf32>
    %114 = arith.negf %113 : vector<16x128xf32>
    %115 = math.exp %114 : vector<16x128xf32>
    %cst_41 = arith.constant 1.000000e+00 : f32
    %116 = vector.broadcast %cst_41 : f32 to vector<16x128xf32>
    %117 = arith.addf %116, %115 : vector<16x128xf32>
    %118 = arith.divf %116, %117 : vector<16x128xf32>
    %119 = arith.mulf %110, %82 : vector<16x128xf32>
    %120 = arith.mulf %104, %112 : vector<16x128xf32>
    %121 = arith.addf %119, %120 : vector<16x128xf32>
    %122 = math.tanh %121 : vector<16x128xf32>
    %123 = arith.mulf %118, %122 : vector<16x128xf32>
    %124 = arith.mulf %123, %4 : vector<16x128xf32>
    %125 = arith.mulf %123, %6 : vector<16x128xf32>
    %126 = tpu.concatenate %124, %125 in 1 : vector<16x128xf32>, vector<16x128xf32> -> vector<16x256xf32>
    %127 = vector.extract_strided_slice %123 {offsets = [0, 0], sizes = [8, 128], strides = [1, 1]} : vector<16x128xf32> to vector<8x128xf32>
    %128 = vector.extract_strided_slice %123 {offsets = [8, 0], sizes = [8, 128], strides = [1, 1]} : vector<16x128xf32> to vector<8x128xf32>
    %c32_42 = arith.constant 32 : index
    %c0_43 = arith.constant 0 : index
    %129 = vector.load %arg15[%c32_42, %c0_43] : memref<128x512xf32, #tpu.memory_space<vmem>>, vector<8x128xf32>
    tpu.vector_store %arg15[%c32_42, %c0_43], %127 {strides = array<i32>} : memref<128x512xf32, #tpu.memory_space<vmem>>, vector<8x128xf32>,
    %c80 = arith.constant 80 : index
    %c128_44 = arith.constant 128 : index
    %130 = vector.load %arg15[%c80, %c128_44] : memref<128x512xf32, #tpu.memory_space<vmem>>, vector<8x128xf32>
    tpu.vector_store %arg15[%c80, %c128_44], %128 {strides = array<i32>} : memref<128x512xf32, #tpu.memory_space<vmem>>, vector<8x128xf32>,
    %c88 = arith.constant 88 : index
    %c256_45 = arith.constant 256 : index
    %131 = vector.load %arg15[%c88, %c256_45] : memref<128x512xf32, #tpu.memory_space<vmem>>, vector<8x128xf32>
    tpu.vector_store %arg15[%c88, %c256_45], %127 {strides = array<i32>} : memref<128x512xf32, #tpu.memory_space<vmem>>, vector<8x128xf32>,
    %c40 = arith.constant 40 : index
    %c384_46 = arith.constant 384 : index
    %132 = vector.load %arg15[%c40, %c384_46] : memref<128x512xf32, #tpu.memory_space<vmem>>, vector<8x128xf32>
    tpu.vector_store %arg15[%c40, %c384_46], %128 {strides = array<i32>} : memref<128x512xf32, #tpu.memory_space<vmem>>, vector<8x128xf32>,
    %c0_47 = arith.constant 0 : index
    %c0_48 = arith.constant 0 : index
    %133 = vector.load %arg3[%c0_47, %c0_48] : memref<256x512xf32, #tpu.memory_space<vmem>>, vector<256x512xf32>
    %cst_49 = arith.constant dense<0.000000e+00> : vector<16x512xf32>
    %134 = tpu.matmul %126, %133, %cst_49 {dimension_numbers = #tpu.dot_dimension_numbers<[1], [0], [0], [1], [0, 0, 1, 1], [], []>} : vector<16x256xf32>, vector<256x512xf32>, vector<16x512xf32> -> vector<16x512xf32>
    %c48 = arith.constant 48 : index
    %c0_50 = arith.constant 0 : index
    %135 = vector.load %arg14[%c48, %c0_50] : memref<128x512xf32, #tpu.memory_space<vmem>>, vector<16x512xf32>
    %136 = arith.addf %134, %135 : vector<16x512xf32>
    %137 = arith.addf %136, %13 : vector<16x512xf32>
    %138 = vector.extract_strided_slice %137 {offsets = [0, 0], sizes = [16, 128], strides = [1, 1]} : vector<16x512xf32> to vector<16x128xf32>
    %139 = arith.negf %138 : vector<16x128xf32>
    %140 = math.exp %139 : vector<16x128xf32>
    %cst_51 = arith.constant 1.000000e+00 : f32
    %141 = vector.broadcast %cst_51 : f32 to vector<16x128xf32>
    %142 = arith.addf %141, %140 : vector<16x128xf32>
    %143 = arith.divf %141, %142 : vector<16x128xf32>
    %144 = vector.extract_strided_slice %137 {offsets = [0, 128], sizes = [16, 128], strides = [1, 1]} : vector<16x512xf32> to vector<16x128xf32>
    %145 = arith.negf %144 : vector<16x128xf32>
    %146 = math.exp %145 : vector<16x128xf32>
    %cst_52 = arith.constant 1.000000e+00 : f32
    %147 = vector.broadcast %cst_52 : f32 to vector<16x128xf32>
    %148 = arith.addf %147, %146 : vector<16x128xf32>
    %149 = arith.divf %147, %148 : vector<16x128xf32>
    %150 = vector.extract_strided_slice %137 {offsets = [0, 256], sizes = [16, 128], strides = [1, 1]} : vector<16x512xf32> to vector<16x128xf32>
    %151 = math.tanh %150 : vector<16x128xf32>
    %152 = vector.extract_strided_slice %137 {offsets = [0, 384], sizes = [16, 128], strides = [1, 1]} : vector<16x512xf32> to vector<16x128xf32>
    %153 = arith.negf %152 : vector<16x128xf32>
    %154 = math.exp %153 : vector<16x128xf32>
    %cst_53 = arith.constant 1.000000e+00 : f32
    %155 = vector.broadcast %cst_53 : f32 to vector<16x128xf32>
    %156 = arith.addf %155, %154 : vector<16x128xf32>
    %157 = arith.divf %155, %156 : vector<16x128xf32>
    %158 = arith.mulf %149, %121 : vector<16x128xf32>
    %159 = arith.mulf %143, %151 : vector<16x128xf32>
    %160 = arith.addf %158, %159 : vector<16x128xf32>
    %161 = math.tanh %160 : vector<16x128xf32>
    %162 = arith.mulf %157, %161 : vector<16x128xf32>
    %163 = arith.mulf %162, %4 : vector<16x128xf32>
    %164 = arith.mulf %162, %6 : vector<16x128xf32>
    %165 = tpu.concatenate %163, %164 in 1 : vector<16x128xf32>, vector<16x128xf32> -> vector<16x256xf32>
    %166 = vector.extract_strided_slice %162 {offsets = [0, 0], sizes = [8, 128], strides = [1, 1]} : vector<16x128xf32> to vector<8x128xf32>
    %167 = vector.extract_strided_slice %162 {offsets = [8, 0], sizes = [8, 128], strides = [1, 1]} : vector<16x128xf32> to vector<8x128xf32>
    %c48_54 = arith.constant 48 : index
    %c0_55 = arith.constant 0 : index
    %168 = vector.load %arg15[%c48_54, %c0_55] : memref<128x512xf32, #tpu.memory_space<vmem>>, vector<8x128xf32>
    tpu.vector_store %arg15[%c48_54, %c0_55], %166 {strides = array<i32>} : memref<128x512xf32, #tpu.memory_space<vmem>>, vector<8x128xf32>,
    %c64 = arith.constant 64 : index
    %c128_56 = arith.constant 128 : index
    %169 = vector.load %arg15[%c64, %c128_56] : memref<128x512xf32, #tpu.memory_space<vmem>>, vector<8x128xf32>
    tpu.vector_store %arg15[%c64, %c128_56], %167 {strides = array<i32>} : memref<128x512xf32, #tpu.memory_space<vmem>>, vector<8x128xf32>,
    %c72 = arith.constant 72 : index
    %c256_57 = arith.constant 256 : index
    %170 = vector.load %arg15[%c72, %c256_57] : memref<128x512xf32, #tpu.memory_space<vmem>>, vector<8x128xf32>
    tpu.vector_store %arg15[%c72, %c256_57], %166 {strides = array<i32>} : memref<128x512xf32, #tpu.memory_space<vmem>>, vector<8x128xf32>,
    %c56 = arith.constant 56 : index
    %c384_58 = arith.constant 384 : index
    %171 = vector.load %arg15[%c56, %c384_58] : memref<128x512xf32, #tpu.memory_space<vmem>>, vector<8x128xf32>
    tpu.vector_store %arg15[%c56, %c384_58], %167 {strides = array<i32>} : memref<128x512xf32, #tpu.memory_space<vmem>>, vector<8x128xf32>,
    %c0_59 = arith.constant 0 : index
    %c0_60 = arith.constant 0 : index
    %172 = vector.load %arg3[%c0_59, %c0_60] : memref<256x512xf32, #tpu.memory_space<vmem>>, vector<256x512xf32>
    %cst_61 = arith.constant dense<0.000000e+00> : vector<16x512xf32>
    %173 = tpu.matmul %165, %172, %cst_61 {dimension_numbers = #tpu.dot_dimension_numbers<[1], [0], [0], [1], [0, 0, 1, 1], [], []>} : vector<16x256xf32>, vector<256x512xf32>, vector<16x512xf32> -> vector<16x512xf32>
    %c64_62 = arith.constant 64 : index
    %c0_63 = arith.constant 0 : index
    %174 = vector.load %arg14[%c64_62, %c0_63] : memref<128x512xf32, #tpu.memory_space<vmem>>, vector<16x512xf32>
    %175 = arith.addf %173, %174 : vector<16x512xf32>
    %176 = arith.addf %175, %13 : vector<16x512xf32>
    %177 = vector.extract_strided_slice %176 {offsets = [0, 0], sizes = [16, 128], strides = [1, 1]} : vector<16x512xf32> to vector<16x128xf32>
    %178 = arith.negf %177 : vector<16x128xf32>
    %179 = math.exp %178 : vector<16x128xf32>
    %cst_64 = arith.constant 1.000000e+00 : f32
    %180 = vector.broadcast %cst_64 : f32 to vector<16x128xf32>
    %181 = arith.addf %180, %179 : vector<16x128xf32>
    %182 = arith.divf %180, %181 : vector<16x128xf32>
    %183 = vector.extract_strided_slice %176 {offsets = [0, 128], sizes = [16, 128], strides = [1, 1]} : vector<16x512xf32> to vector<16x128xf32>
    %184 = arith.negf %183 : vector<16x128xf32>
    %185 = math.exp %184 : vector<16x128xf32>
    %cst_65 = arith.constant 1.000000e+00 : f32
    %186 = vector.broadcast %cst_65 : f32 to vector<16x128xf32>
    %187 = arith.addf %186, %185 : vector<16x128xf32>
    %188 = arith.divf %186, %187 : vector<16x128xf32>
    %189 = vector.extract_strided_slice %176 {offsets = [0, 256], sizes = [16, 128], strides = [1, 1]} : vector<16x512xf32> to vector<16x128xf32>
    %190 = math.tanh %189 : vector<16x128xf32>
    %191 = vector.extract_strided_slice %176 {offsets = [0, 384], sizes = [16, 128], strides = [1, 1]} : vector<16x512xf32> to vector<16x128xf32>
    %192 = arith.negf %191 : vector<16x128xf32>
    %193 = math.exp %192 : vector<16x128xf32>
    %cst_66 = arith.constant 1.000000e+00 : f32
    %194 = vector.broadcast %cst_66 : f32 to vector<16x128xf32>
    %195 = arith.addf %194, %193 : vector<16x128xf32>
    %196 = arith.divf %194, %195 : vector<16x128xf32>
    %197 = arith.mulf %188, %160 : vector<16x128xf32>
    %198 = arith.mulf %182, %190 : vector<16x128xf32>
    %199 = arith.addf %197, %198 : vector<16x128xf32>
    %200 = math.tanh %199 : vector<16x128xf32>
    %201 = arith.mulf %196, %200 : vector<16x128xf32>
    %202 = arith.mulf %201, %4 : vector<16x128xf32>
    %203 = arith.mulf %201, %6 : vector<16x128xf32>
    %204 = tpu.concatenate %202, %203 in 1 : vector<16x128xf32>, vector<16x128xf32> -> vector<16x256xf32>
    %205 = vector.extract_strided_slice %201 {offsets = [0, 0], sizes = [8, 128], strides = [1, 1]} : vector<16x128xf32> to vector<8x128xf32>
    %206 = vector.extract_strided_slice %201 {offsets = [8, 0], sizes = [8, 128], strides = [1, 1]} : vector<16x128xf32> to vector<8x128xf32>
    %c64_67 = arith.constant 64 : index
    %c0_68 = arith.constant 0 : index
    %207 = vector.load %arg15[%c64_67, %c0_68] : memref<128x512xf32, #tpu.memory_space<vmem>>, vector<8x128xf32>
    tpu.vector_store %arg15[%c64_67, %c0_68], %205 {strides = array<i32>} : memref<128x512xf32, #tpu.memory_space<vmem>>, vector<8x128xf32>,
    %c48_69 = arith.constant 48 : index
    %c128_70 = arith.constant 128 : index
    %208 = vector.load %arg15[%c48_69, %c128_70] : memref<128x512xf32, #tpu.memory_space<vmem>>, vector<8x128xf32>
    tpu.vector_store %arg15[%c48_69, %c128_70], %206 {strides = array<i32>} : memref<128x512xf32, #tpu.memory_space<vmem>>, vector<8x128xf32>,
    %c56_71 = arith.constant 56 : index
    %c256_72 = arith.constant 256 : index
    %209 = vector.load %arg15[%c56_71, %c256_72] : memref<128x512xf32, #tpu.memory_space<vmem>>, vector<8x128xf32>
    tpu.vector_store %arg15[%c56_71, %c256_72], %205 {strides = array<i32>} : memref<128x512xf32, #tpu.memory_space<vmem>>, vector<8x128xf32>,
    %c72_73 = arith.constant 72 : index
    %c384_74 = arith.constant 384 : index
    %210 = vector.load %arg15[%c72_73, %c384_74] : memref<128x512xf32, #tpu.memory_space<vmem>>, vector<8x128xf32>
    tpu.vector_store %arg15[%c72_73, %c384_74], %206 {strides = array<i32>} : memref<128x512xf32, #tpu.memory_space<vmem>>, vector<8x128xf32>,
    %c0_75 = arith.constant 0 : index
    %c0_76 = arith.constant 0 : index
    %211 = vector.load %arg3[%c0_75, %c0_76] : memref<256x512xf32, #tpu.memory_space<vmem>>, vector<256x512xf32>
    %cst_77 = arith.constant dense<0.000000e+00> : vector<16x512xf32>
    %212 = tpu.matmul %204, %211, %cst_77 {dimension_numbers = #tpu.dot_dimension_numbers<[1], [0], [0], [1], [0, 0, 1, 1], [], []>} : vector<16x256xf32>, vector<256x512xf32>, vector<16x512xf32> -> vector<16x512xf32>
    %c80_78 = arith.constant 80 : index
    %c0_79 = arith.constant 0 : index
    %213 = vector.load %arg14[%c80_78, %c0_79] : memref<128x512xf32, #tpu.memory_space<vmem>>, vector<16x512xf32>
    %214 = arith.addf %212, %213 : vector<16x512xf32>
    %215 = arith.addf %214, %13 : vector<16x512xf32>
    %216 = vector.extract_strided_slice %215 {offsets = [0, 0], sizes = [16, 128], strides = [1, 1]} : vector<16x512xf32> to vector<16x128xf32>
    %217 = arith.negf %216 : vector<16x128xf32>
    %218 = math.exp %217 : vector<16x128xf32>
    %cst_80 = arith.constant 1.000000e+00 : f32
    %219 = vector.broadcast %cst_80 : f32 to vector<16x128xf32>
    %220 = arith.addf %219, %218 : vector<16x128xf32>
    %221 = arith.divf %219, %220 : vector<16x128xf32>
    %222 = vector.extract_strided_slice %215 {offsets = [0, 128], sizes = [16, 128], strides = [1, 1]} : vector<16x512xf32> to vector<16x128xf32>
    %223 = arith.negf %222 : vector<16x128xf32>
    %224 = math.exp %223 : vector<16x128xf32>
    %cst_81 = arith.constant 1.000000e+00 : f32
    %225 = vector.broadcast %cst_81 : f32 to vector<16x128xf32>
    %226 = arith.addf %225, %224 : vector<16x128xf32>
    %227 = arith.divf %225, %226 : vector<16x128xf32>
    %228 = vector.extract_strided_slice %215 {offsets = [0, 256], sizes = [16, 128], strides = [1, 1]} : vector<16x512xf32> to vector<16x128xf32>
    %229 = math.tanh %228 : vector<16x128xf32>
    %230 = vector.extract_strided_slice %215 {offsets = [0, 384], sizes = [16, 128], strides = [1, 1]} : vector<16x512xf32> to vector<16x128xf32>
    %231 = arith.negf %230 : vector<16x128xf32>
    %232 = math.exp %231 : vector<16x128xf32>
    %cst_82 = arith.constant 1.000000e+00 : f32
    %233 = vector.broadcast %cst_82 : f32 to vector<16x128xf32>
    %234 = arith.addf %233, %232 : vector<16x128xf32>
    %235 = arith.divf %233, %234 : vector<16x128xf32>
    %236 = arith.mulf %227, %199 : vector<16x128xf32>
    %237 = arith.mulf %221, %229 : vector<16x128xf32>
    %238 = arith.addf %236, %237 : vector<16x128xf32>
    %239 = math.tanh %238 : vector<16x128xf32>
    %240 = arith.mulf %235, %239 : vector<16x128xf32>
    %241 = arith.mulf %240, %4 : vector<16x128xf32>
    %242 = arith.mulf %240, %6 : vector<16x128xf32>
    %243 = tpu.concatenate %241, %242 in 1 : vector<16x128xf32>, vector<16x128xf32> -> vector<16x256xf32>
    %244 = vector.extract_strided_slice %240 {offsets = [0, 0], sizes = [8, 128], strides = [1, 1]} : vector<16x128xf32> to vector<8x128xf32>
    %245 = vector.extract_strided_slice %240 {offsets = [8, 0], sizes = [8, 128], strides = [1, 1]} : vector<16x128xf32> to vector<8x128xf32>
    %c80_83 = arith.constant 80 : index
    %c0_84 = arith.constant 0 : index
    %246 = vector.load %arg15[%c80_83, %c0_84] : memref<128x512xf32, #tpu.memory_space<vmem>>, vector<8x128xf32>
    tpu.vector_store %arg15[%c80_83, %c0_84], %244 {strides = array<i32>} : memref<128x512xf32, #tpu.memory_space<vmem>>, vector<8x128xf32>,
    %c32_85 = arith.constant 32 : index
    %c128_86 = arith.constant 128 : index
    %247 = vector.load %arg15[%c32_85, %c128_86] : memref<128x512xf32, #tpu.memory_space<vmem>>, vector<8x128xf32>
    tpu.vector_store %arg15[%c32_85, %c128_86], %245 {strides = array<i32>} : memref<128x512xf32, #tpu.memory_space<vmem>>, vector<8x128xf32>,
    %c40_87 = arith.constant 40 : index
    %c256_88 = arith.constant 256 : index
    %248 = vector.load %arg15[%c40_87, %c256_88] : memref<128x512xf32, #tpu.memory_space<vmem>>, vector<8x128xf32>
    tpu.vector_store %arg15[%c40_87, %c256_88], %244 {strides = array<i32>} : memref<128x512xf32, #tpu.memory_space<vmem>>, vector<8x128xf32>,
    %c88_89 = arith.constant 88 : index
    %c384_90 = arith.constant 384 : index
    %249 = vector.load %arg15[%c88_89, %c384_90] : memref<128x512xf32, #tpu.memory_space<vmem>>, vector<8x128xf32>
    tpu.vector_store %arg15[%c88_89, %c384_90], %245 {strides = array<i32>} : memref<128x512xf32, #tpu.memory_space<vmem>>, vector<8x128xf32>,
    %c0_91 = arith.constant 0 : index
    %c0_92 = arith.constant 0 : index
    %250 = vector.load %arg3[%c0_91, %c0_92] : memref<256x512xf32, #tpu.memory_space<vmem>>, vector<256x512xf32>
    %cst_93 = arith.constant dense<0.000000e+00> : vector<16x512xf32>
    %251 = tpu.matmul %243, %250, %cst_93 {dimension_numbers = #tpu.dot_dimension_numbers<[1], [0], [0], [1], [0, 0, 1, 1], [], []>} : vector<16x256xf32>, vector<256x512xf32>, vector<16x512xf32> -> vector<16x512xf32>
    %c96_94 = arith.constant 96 : index
    %c0_95 = arith.constant 0 : index
    %252 = vector.load %arg14[%c96_94, %c0_95] : memref<128x512xf32, #tpu.memory_space<vmem>>, vector<16x512xf32>
    %253 = arith.addf %251, %252 : vector<16x512xf32>
    %254 = arith.addf %253, %13 : vector<16x512xf32>
    %255 = vector.extract_strided_slice %254 {offsets = [0, 0], sizes = [16, 128], strides = [1, 1]} : vector<16x512xf32> to vector<16x128xf32>
    %256 = arith.negf %255 : vector<16x128xf32>
    %257 = math.exp %256 : vector<16x128xf32>
    %cst_96 = arith.constant 1.000000e+00 : f32
    %258 = vector.broadcast %cst_96 : f32 to vector<16x128xf32>
    %259 = arith.addf %258, %257 : vector<16x128xf32>
    %260 = arith.divf %258, %259 : vector<16x128xf32>
    %261 = vector.extract_strided_slice %254 {offsets = [0, 128], sizes = [16, 128], strides = [1, 1]} : vector<16x512xf32> to vector<16x128xf32>
    %262 = arith.negf %261 : vector<16x128xf32>
    %263 = math.exp %262 : vector<16x128xf32>
    %cst_97 = arith.constant 1.000000e+00 : f32
    %264 = vector.broadcast %cst_97 : f32 to vector<16x128xf32>
    %265 = arith.addf %264, %263 : vector<16x128xf32>
    %266 = arith.divf %264, %265 : vector<16x128xf32>
    %267 = vector.extract_strided_slice %254 {offsets = [0, 256], sizes = [16, 128], strides = [1, 1]} : vector<16x512xf32> to vector<16x128xf32>
    %268 = math.tanh %267 : vector<16x128xf32>
    %269 = vector.extract_strided_slice %254 {offsets = [0, 384], sizes = [16, 128], strides = [1, 1]} : vector<16x512xf32> to vector<16x128xf32>
    %270 = arith.negf %269 : vector<16x128xf32>
    %271 = math.exp %270 : vector<16x128xf32>
    %cst_98 = arith.constant 1.000000e+00 : f32
    %272 = vector.broadcast %cst_98 : f32 to vector<16x128xf32>
    %273 = arith.addf %272, %271 : vector<16x128xf32>
    %274 = arith.divf %272, %273 : vector<16x128xf32>
    %275 = arith.mulf %266, %238 : vector<16x128xf32>
    %276 = arith.mulf %260, %268 : vector<16x128xf32>
    %277 = arith.addf %275, %276 : vector<16x128xf32>
    %278 = math.tanh %277 : vector<16x128xf32>
    %279 = arith.mulf %274, %278 : vector<16x128xf32>
    %280 = arith.mulf %279, %4 : vector<16x128xf32>
    %281 = arith.mulf %279, %6 : vector<16x128xf32>
    %282 = tpu.concatenate %280, %281 in 1 : vector<16x128xf32>, vector<16x128xf32> -> vector<16x256xf32>
    %283 = vector.extract_strided_slice %279 {offsets = [0, 0], sizes = [8, 128], strides = [1, 1]} : vector<16x128xf32> to vector<8x128xf32>
    %284 = vector.extract_strided_slice %279 {offsets = [8, 0], sizes = [8, 128], strides = [1, 1]} : vector<16x128xf32> to vector<8x128xf32>
    %c96_99 = arith.constant 96 : index
    %c0_100 = arith.constant 0 : index
    %285 = vector.load %arg15[%c96_99, %c0_100] : memref<128x512xf32, #tpu.memory_space<vmem>>, vector<8x128xf32>
    tpu.vector_store %arg15[%c96_99, %c0_100], %283 {strides = array<i32>} : memref<128x512xf32, #tpu.memory_space<vmem>>, vector<8x128xf32>,
    %c16_101 = arith.constant 16 : index
    %c128_102 = arith.constant 128 : index
    %286 = vector.load %arg15[%c16_101, %c128_102] : memref<128x512xf32, #tpu.memory_space<vmem>>, vector<8x128xf32>
    tpu.vector_store %arg15[%c16_101, %c128_102], %284 {strides = array<i32>} : memref<128x512xf32, #tpu.memory_space<vmem>>, vector<8x128xf32>,
    %c24_103 = arith.constant 24 : index
    %c256_104 = arith.constant 256 : index
    %287 = vector.load %arg15[%c24_103, %c256_104] : memref<128x512xf32, #tpu.memory_space<vmem>>, vector<8x128xf32>
    tpu.vector_store %arg15[%c24_103, %c256_104], %283 {strides = array<i32>} : memref<128x512xf32, #tpu.memory_space<vmem>>, vector<8x128xf32>,
    %c104_105 = arith.constant 104 : index
    %c384_106 = arith.constant 384 : index
    %288 = vector.load %arg15[%c104_105, %c384_106] : memref<128x512xf32, #tpu.memory_space<vmem>>, vector<8x128xf32>
    tpu.vector_store %arg15[%c104_105, %c384_106], %284 {strides = array<i32>} : memref<128x512xf32, #tpu.memory_space<vmem>>, vector<8x128xf32>,
    %c0_107 = arith.constant 0 : index
    %c0_108 = arith.constant 0 : index
    %289 = vector.load %arg3[%c0_107, %c0_108] : memref<256x512xf32, #tpu.memory_space<vmem>>, vector<256x512xf32>
    %cst_109 = arith.constant dense<0.000000e+00> : vector<16x512xf32>
    %290 = tpu.matmul %282, %289, %cst_109 {dimension_numbers = #tpu.dot_dimension_numbers<[1], [0], [0], [1], [0, 0, 1, 1], [], []>} : vector<16x256xf32>, vector<256x512xf32>, vector<16x512xf32> -> vector<16x512xf32>
    %c112_110 = arith.constant 112 : index
    %c0_111 = arith.constant 0 : index
    %291 = vector.load %arg14[%c112_110, %c0_111] : memref<128x512xf32, #tpu.memory_space<vmem>>, vector<16x512xf32>
    %292 = arith.addf %290, %291 : vector<16x512xf32>
    %293 = arith.addf %292, %13 : vector<16x512xf32>
    %294 = vector.extract_strided_slice %293 {offsets = [0, 0], sizes = [16, 128], strides = [1, 1]} : vector<16x512xf32> to vector<16x128xf32>
    %295 = arith.negf %294 : vector<16x128xf32>
    %296 = math.exp %295 : vector<16x128xf32>
    %cst_112 = arith.constant 1.000000e+00 : f32
    %297 = vector.broadcast %cst_112 : f32 to vector<16x128xf32>
    %298 = arith.addf %297, %296 : vector<16x128xf32>
    %299 = arith.divf %297, %298 : vector<16x128xf32>
    %300 = vector.extract_strided_slice %293 {offsets = [0, 128], sizes = [16, 128], strides = [1, 1]} : vector<16x512xf32> to vector<16x128xf32>
    %301 = arith.negf %300 : vector<16x128xf32>
    %302 = math.exp %301 : vector<16x128xf32>
    %cst_113 = arith.constant 1.000000e+00 : f32
    %303 = vector.broadcast %cst_113 : f32 to vector<16x128xf32>
    %304 = arith.addf %303, %302 : vector<16x128xf32>
    %305 = arith.divf %303, %304 : vector<16x128xf32>
    %306 = vector.extract_strided_slice %293 {offsets = [0, 256], sizes = [16, 128], strides = [1, 1]} : vector<16x512xf32> to vector<16x128xf32>
    %307 = math.tanh %306 : vector<16x128xf32>
    %308 = vector.extract_strided_slice %293 {offsets = [0, 384], sizes = [16, 128], strides = [1, 1]} : vector<16x512xf32> to vector<16x128xf32>
    %309 = arith.negf %308 : vector<16x128xf32>
    %310 = math.exp %309 : vector<16x128xf32>
    %cst_114 = arith.constant 1.000000e+00 : f32
    %311 = vector.broadcast %cst_114 : f32 to vector<16x128xf32>
    %312 = arith.addf %311, %310 : vector<16x128xf32>
    %313 = arith.divf %311, %312 : vector<16x128xf32>
    %314 = arith.mulf %305, %277 : vector<16x128xf32>
    %315 = arith.mulf %299, %307 : vector<16x128xf32>
    %316 = arith.addf %314, %315 : vector<16x128xf32>
    %317 = math.tanh %316 : vector<16x128xf32>
    %318 = arith.mulf %313, %317 : vector<16x128xf32>
    %319 = vector.extract_strided_slice %318 {offsets = [0, 0], sizes = [8, 128], strides = [1, 1]} : vector<16x128xf32> to vector<8x128xf32>
    %320 = vector.extract_strided_slice %318 {offsets = [8, 0], sizes = [8, 128], strides = [1, 1]} : vector<16x128xf32> to vector<8x128xf32>
    %c112_115 = arith.constant 112 : index
    %c0_116 = arith.constant 0 : index
    %321 = vector.load %arg15[%c112_115, %c0_116] : memref<128x512xf32, #tpu.memory_space<vmem>>, vector<8x128xf32>
    tpu.vector_store %arg15[%c112_115, %c0_116], %319 {strides = array<i32>} : memref<128x512xf32, #tpu.memory_space<vmem>>, vector<8x128xf32>,
    %c0_117 = arith.constant 0 : index
    %c128_118 = arith.constant 128 : index
    %322 = vector.load %arg15[%c0_117, %c128_118] : memref<128x512xf32, #tpu.memory_space<vmem>>, vector<8x128xf32>
    tpu.vector_store %arg15[%c0_117, %c128_118], %320 {strides = array<i32>} : memref<128x512xf32, #tpu.memory_space<vmem>>, vector<8x128xf32>,
    %c8_119 = arith.constant 8 : index
    %c256_120 = arith.constant 256 : index
    %323 = vector.load %arg15[%c8_119, %c256_120] : memref<128x512xf32, #tpu.memory_space<vmem>>, vector<8x128xf32>
    tpu.vector_store %arg15[%c8_119, %c256_120], %319 {strides = array<i32>} : memref<128x512xf32, #tpu.memory_space<vmem>>, vector<8x128xf32>,
    %c120_121 = arith.constant 120 : index
    %c384_122 = arith.constant 384 : index
    %324 = vector.load %arg15[%c120_121, %c384_122] : memref<128x512xf32, #tpu.memory_space<vmem>>, vector<8x128xf32>
    tpu.vector_store %arg15[%c120_121, %c384_122], %320 {strides = array<i32>} : memref<128x512xf32, #tpu.memory_space<vmem>>, vector<8x128xf32>,
    %c0_123 = arith.constant 0 : index
    %c0_124 = arith.constant 0 : index
    %325 = vector.load %arg15[%c0_123, %c0_124] : memref<128x512xf32, #tpu.memory_space<vmem>>, vector<128x512xf32>
    %c0_125 = arith.constant 0 : index
    %c0_126 = arith.constant 0 : index
    %326 = vector.load %arg4[%c0_125, %c0_126] : memref<512x512xf32, #tpu.memory_space<vmem>>, vector<512x512xf32>
    %cst_127 = arith.constant dense<0.000000e+00> : vector<128x512xf32>
    %327 = tpu.matmul %325, %326, %cst_127 {dimension_numbers = #tpu.dot_dimension_numbers<[1], [0], [0], [1], [0, 0, 1, 1], [], []>} : vector<128x512xf32>, vector<512x512xf32>, vector<128x512xf32> -> vector<128x512xf32>
    %c0_128 = arith.constant 0 : index
    %c0_129 = arith.constant 0 : index
    %328 = vector.load %arg14[%c0_128, %c0_129] : memref<128x512xf32, #tpu.memory_space<vmem>>, vector<128x512xf32>
    tpu.vector_store %arg14[%c0_128, %c0_129], %327 {strides = array<i32>} : memref<128x512xf32, #tpu.memory_space<vmem>>, vector<128x512xf32>,
    %c0_130 = arith.constant 0 : index
    %c0_131 = arith.constant 0 : index
    %329 = vector.load %arg5[%c0_130, %c0_131] : memref<16x512xf32, #tpu.memory_space<vmem>>, vector<16x512xf32>
    %cst_132 = arith.constant 0.000000e+00 : f32
    %330 = vector.broadcast %cst_132 : f32 to vector<16x256xf32>
    %cst_133 = arith.constant 0.000000e+00 : f32
    %331 = vector.broadcast %cst_133 : f32 to vector<16x128xf32>
    %c0_134 = arith.constant 0 : index
    %c0_135 = arith.constant 0 : index
    %332 = vector.load %arg6[%c0_134, %c0_135] : memref<256x512xf32, #tpu.memory_space<vmem>>, vector<256x512xf32>
    %cst_136 = arith.constant dense<0.000000e+00> : vector<16x512xf32>
    %333 = tpu.matmul %330, %332, %cst_136 {dimension_numbers = #tpu.dot_dimension_numbers<[1], [0], [0], [1], [0, 0, 1, 1], [], []>} : vector<16x256xf32>, vector<256x512xf32>, vector<16x512xf32> -> vector<16x512xf32>
    %c0_137 = arith.constant 0 : index
    %c0_138 = arith.constant 0 : index
    %334 = vector.load %arg14[%c0_137, %c0_138] : memref<128x512xf32, #tpu.memory_space<vmem>>, vector<16x512xf32>
    %335 = arith.addf %333, %334 : vector<16x512xf32>
    %336 = arith.addf %335, %329 : vector<16x512xf32>
    %337 = vector.extract_strided_slice %336 {offsets = [0, 0], sizes = [16, 128], strides = [1, 1]} : vector<16x512xf32> to vector<16x128xf32>
    %338 = arith.negf %337 : vector<16x128xf32>
    %339 = math.exp %338 : vector<16x128xf32>
    %cst_139 = arith.constant 1.000000e+00 : f32
    %340 = vector.broadcast %cst_139 : f32 to vector<16x128xf32>
    %341 = arith.addf %340, %339 : vector<16x128xf32>
    %342 = arith.divf %340, %341 : vector<16x128xf32>
    %343 = vector.extract_strided_slice %336 {offsets = [0, 128], sizes = [16, 128], strides = [1, 1]} : vector<16x512xf32> to vector<16x128xf32>
    %344 = arith.negf %343 : vector<16x128xf32>
    %345 = math.exp %344 : vector<16x128xf32>
    %cst_140 = arith.constant 1.000000e+00 : f32
    %346 = vector.broadcast %cst_140 : f32 to vector<16x128xf32>
    %347 = arith.addf %346, %345 : vector<16x128xf32>
    %348 = arith.divf %346, %347 : vector<16x128xf32>
    %349 = vector.extract_strided_slice %336 {offsets = [0, 256], sizes = [16, 128], strides = [1, 1]} : vector<16x512xf32> to vector<16x128xf32>
    %350 = math.tanh %349 : vector<16x128xf32>
    %351 = vector.extract_strided_slice %336 {offsets = [0, 384], sizes = [16, 128], strides = [1, 1]} : vector<16x512xf32> to vector<16x128xf32>
    %352 = arith.negf %351 : vector<16x128xf32>
    %353 = math.exp %352 : vector<16x128xf32>
    %cst_141 = arith.constant 1.000000e+00 : f32
    %354 = vector.broadcast %cst_141 : f32 to vector<16x128xf32>
    %355 = arith.addf %354, %353 : vector<16x128xf32>
    %356 = arith.divf %354, %355 : vector<16x128xf32>
    %357 = arith.mulf %348, %331 : vector<16x128xf32>
    %358 = arith.mulf %342, %350 : vector<16x128xf32>
    %359 = arith.addf %357, %358 : vector<16x128xf32>
    %360 = math.tanh %359 : vector<16x128xf32>
    %361 = arith.mulf %356, %360 : vector<16x128xf32>
    %362 = arith.mulf %361, %4 : vector<16x128xf32>
    %363 = arith.mulf %361, %6 : vector<16x128xf32>
    %364 = tpu.concatenate %362, %363 in 1 : vector<16x128xf32>, vector<16x128xf32> -> vector<16x256xf32>
    %365 = vector.extract_strided_slice %361 {offsets = [0, 0], sizes = [8, 128], strides = [1, 1]} : vector<16x128xf32> to vector<8x128xf32>
    %c0_142 = arith.constant 0 : index
    %c0_143 = arith.constant 0 : index
    %366 = vector.load %arg16[%c0_142, %c0_143] : memref<64x256xf32, #tpu.memory_space<vmem>>, vector<8x128xf32>
    tpu.vector_store %arg16[%c0_142, %c0_143], %365 {strides = array<i32>} : memref<64x256xf32, #tpu.memory_space<vmem>>, vector<8x128xf32>,
    %367 = vector.extract_strided_slice %361 {offsets = [8, 0], sizes = [8, 128], strides = [1, 1]} : vector<16x128xf32> to vector<8x128xf32>
    %c56_144 = arith.constant 56 : index
    %c128_145 = arith.constant 128 : index
    %368 = vector.load %arg16[%c56_144, %c128_145] : memref<64x256xf32, #tpu.memory_space<vmem>>, vector<8x128xf32>
    tpu.vector_store %arg16[%c56_144, %c128_145], %367 {strides = array<i32>} : memref<64x256xf32, #tpu.memory_space<vmem>>, vector<8x128xf32>,
    %c0_146 = arith.constant 0 : index
    %c0_147 = arith.constant 0 : index
    %369 = vector.load %arg6[%c0_146, %c0_147] : memref<256x512xf32, #tpu.memory_space<vmem>>, vector<256x512xf32>
    %cst_148 = arith.constant dense<0.000000e+00> : vector<16x512xf32>
    %370 = tpu.matmul %364, %369, %cst_148 {dimension_numbers = #tpu.dot_dimension_numbers<[1], [0], [0], [1], [0, 0, 1, 1], [], []>} : vector<16x256xf32>, vector<256x512xf32>, vector<16x512xf32> -> vector<16x512xf32>
    %c16_149 = arith.constant 16 : index
    %c0_150 = arith.constant 0 : index
    %371 = vector.load %arg14[%c16_149, %c0_150] : memref<128x512xf32, #tpu.memory_space<vmem>>, vector<16x512xf32>
    %372 = arith.addf %370, %371 : vector<16x512xf32>
    %373 = arith.addf %372, %329 : vector<16x512xf32>
    %374 = vector.extract_strided_slice %373 {offsets = [0, 0], sizes = [16, 128], strides = [1, 1]} : vector<16x512xf32> to vector<16x128xf32>
    %375 = arith.negf %374 : vector<16x128xf32>
    %376 = math.exp %375 : vector<16x128xf32>
    %cst_151 = arith.constant 1.000000e+00 : f32
    %377 = vector.broadcast %cst_151 : f32 to vector<16x128xf32>
    %378 = arith.addf %377, %376 : vector<16x128xf32>
    %379 = arith.divf %377, %378 : vector<16x128xf32>
    %380 = vector.extract_strided_slice %373 {offsets = [0, 128], sizes = [16, 128], strides = [1, 1]} : vector<16x512xf32> to vector<16x128xf32>
    %381 = arith.negf %380 : vector<16x128xf32>
    %382 = math.exp %381 : vector<16x128xf32>
    %cst_152 = arith.constant 1.000000e+00 : f32
    %383 = vector.broadcast %cst_152 : f32 to vector<16x128xf32>
    %384 = arith.addf %383, %382 : vector<16x128xf32>
    %385 = arith.divf %383, %384 : vector<16x128xf32>
    %386 = vector.extract_strided_slice %373 {offsets = [0, 256], sizes = [16, 128], strides = [1, 1]} : vector<16x512xf32> to vector<16x128xf32>
    %387 = math.tanh %386 : vector<16x128xf32>
    %388 = vector.extract_strided_slice %373 {offsets = [0, 384], sizes = [16, 128], strides = [1, 1]} : vector<16x512xf32> to vector<16x128xf32>
    %389 = arith.negf %388 : vector<16x128xf32>
    %390 = math.exp %389 : vector<16x128xf32>
    %cst_153 = arith.constant 1.000000e+00 : f32
    %391 = vector.broadcast %cst_153 : f32 to vector<16x128xf32>
    %392 = arith.addf %391, %390 : vector<16x128xf32>
    %393 = arith.divf %391, %392 : vector<16x128xf32>
    %394 = arith.mulf %385, %359 : vector<16x128xf32>
    %395 = arith.mulf %379, %387 : vector<16x128xf32>
    %396 = arith.addf %394, %395 : vector<16x128xf32>
    %397 = math.tanh %396 : vector<16x128xf32>
    %398 = arith.mulf %393, %397 : vector<16x128xf32>
    %399 = arith.mulf %398, %4 : vector<16x128xf32>
    %400 = arith.mulf %398, %6 : vector<16x128xf32>
    %401 = tpu.concatenate %399, %400 in 1 : vector<16x128xf32>, vector<16x128xf32> -> vector<16x256xf32>
    %402 = vector.extract_strided_slice %398 {offsets = [0, 0], sizes = [8, 128], strides = [1, 1]} : vector<16x128xf32> to vector<8x128xf32>
    %c8_154 = arith.constant 8 : index
    %c0_155 = arith.constant 0 : index
    %403 = vector.load %arg16[%c8_154, %c0_155] : memref<64x256xf32, #tpu.memory_space<vmem>>, vector<8x128xf32>
    tpu.vector_store %arg16[%c8_154, %c0_155], %402 {strides = array<i32>} : memref<64x256xf32, #tpu.memory_space<vmem>>, vector<8x128xf32>,
    %404 = vector.extract_strided_slice %398 {offsets = [8, 0], sizes = [8, 128], strides = [1, 1]} : vector<16x128xf32> to vector<8x128xf32>
    %c48_156 = arith.constant 48 : index
    %c128_157 = arith.constant 128 : index
    %405 = vector.load %arg16[%c48_156, %c128_157] : memref<64x256xf32, #tpu.memory_space<vmem>>, vector<8x128xf32>
    tpu.vector_store %arg16[%c48_156, %c128_157], %404 {strides = array<i32>} : memref<64x256xf32, #tpu.memory_space<vmem>>, vector<8x128xf32>,
    %c0_158 = arith.constant 0 : index
    %c0_159 = arith.constant 0 : index
    %406 = vector.load %arg6[%c0_158, %c0_159] : memref<256x512xf32, #tpu.memory_space<vmem>>, vector<256x512xf32>
    %cst_160 = arith.constant dense<0.000000e+00> : vector<16x512xf32>
    %407 = tpu.matmul %401, %406, %cst_160 {dimension_numbers = #tpu.dot_dimension_numbers<[1], [0], [0], [1], [0, 0, 1, 1], [], []>} : vector<16x256xf32>, vector<256x512xf32>, vector<16x512xf32> -> vector<16x512xf32>
    %c32_161 = arith.constant 32 : index
    %c0_162 = arith.constant 0 : index
    %408 = vector.load %arg14[%c32_161, %c0_162] : memref<128x512xf32, #tpu.memory_space<vmem>>, vector<16x512xf32>
    %409 = arith.addf %407, %408 : vector<16x512xf32>
    %410 = arith.addf %409, %329 : vector<16x512xf32>
    %411 = vector.extract_strided_slice %410 {offsets = [0, 0], sizes = [16, 128], strides = [1, 1]} : vector<16x512xf32> to vector<16x128xf32>
    %412 = arith.negf %411 : vector<16x128xf32>
    %413 = math.exp %412 : vector<16x128xf32>
    %cst_163 = arith.constant 1.000000e+00 : f32
    %414 = vector.broadcast %cst_163 : f32 to vector<16x128xf32>
    %415 = arith.addf %414, %413 : vector<16x128xf32>
    %416 = arith.divf %414, %415 : vector<16x128xf32>
    %417 = vector.extract_strided_slice %410 {offsets = [0, 128], sizes = [16, 128], strides = [1, 1]} : vector<16x512xf32> to vector<16x128xf32>
    %418 = arith.negf %417 : vector<16x128xf32>
    %419 = math.exp %418 : vector<16x128xf32>
    %cst_164 = arith.constant 1.000000e+00 : f32
    %420 = vector.broadcast %cst_164 : f32 to vector<16x128xf32>
    %421 = arith.addf %420, %419 : vector<16x128xf32>
    %422 = arith.divf %420, %421 : vector<16x128xf32>
    %423 = vector.extract_strided_slice %410 {offsets = [0, 256], sizes = [16, 128], strides = [1, 1]} : vector<16x512xf32> to vector<16x128xf32>
    %424 = math.tanh %423 : vector<16x128xf32>
    %425 = vector.extract_strided_slice %410 {offsets = [0, 384], sizes = [16, 128], strides = [1, 1]} : vector<16x512xf32> to vector<16x128xf32>
    %426 = arith.negf %425 : vector<16x128xf32>
    %427 = math.exp %426 : vector<16x128xf32>
    %cst_165 = arith.constant 1.000000e+00 : f32
    %428 = vector.broadcast %cst_165 : f32 to vector<16x128xf32>
    %429 = arith.addf %428, %427 : vector<16x128xf32>
    %430 = arith.divf %428, %429 : vector<16x128xf32>
    %431 = arith.mulf %422, %396 : vector<16x128xf32>
    %432 = arith.mulf %416, %424 : vector<16x128xf32>
    %433 = arith.addf %431, %432 : vector<16x128xf32>
    %434 = math.tanh %433 : vector<16x128xf32>
    %435 = arith.mulf %430, %434 : vector<16x128xf32>
    %436 = arith.mulf %435, %4 : vector<16x128xf32>
    %437 = arith.mulf %435, %6 : vector<16x128xf32>
    %438 = tpu.concatenate %436, %437 in 1 : vector<16x128xf32>, vector<16x128xf32> -> vector<16x256xf32>
    %439 = vector.extract_strided_slice %435 {offsets = [0, 0], sizes = [8, 128], strides = [1, 1]} : vector<16x128xf32> to vector<8x128xf32>
    %c16_166 = arith.constant 16 : index
    %c0_167 = arith.constant 0 : index
    %440 = vector.load %arg16[%c16_166, %c0_167] : memref<64x256xf32, #tpu.memory_space<vmem>>, vector<8x128xf32>
    tpu.vector_store %arg16[%c16_166, %c0_167], %439 {strides = array<i32>} : memref<64x256xf32, #tpu.memory_space<vmem>>, vector<8x128xf32>,
    %441 = vector.extract_strided_slice %435 {offsets = [8, 0], sizes = [8, 128], strides = [1, 1]} : vector<16x128xf32> to vector<8x128xf32>
    %c40_168 = arith.constant 40 : index
    %c128_169 = arith.constant 128 : index
    %442 = vector.load %arg16[%c40_168, %c128_169] : memref<64x256xf32, #tpu.memory_space<vmem>>, vector<8x128xf32>
    tpu.vector_store %arg16[%c40_168, %c128_169], %441 {strides = array<i32>} : memref<64x256xf32, #tpu.memory_space<vmem>>, vector<8x128xf32>,
    %c0_170 = arith.constant 0 : index
    %c0_171 = arith.constant 0 : index
    %443 = vector.load %arg6[%c0_170, %c0_171] : memref<256x512xf32, #tpu.memory_space<vmem>>, vector<256x512xf32>
    %cst_172 = arith.constant dense<0.000000e+00> : vector<16x512xf32>
    %444 = tpu.matmul %438, %443, %cst_172 {dimension_numbers = #tpu.dot_dimension_numbers<[1], [0], [0], [1], [0, 0, 1, 1], [], []>} : vector<16x256xf32>, vector<256x512xf32>, vector<16x512xf32> -> vector<16x512xf32>
    %c48_173 = arith.constant 48 : index
    %c0_174 = arith.constant 0 : index
    %445 = vector.load %arg14[%c48_173, %c0_174] : memref<128x512xf32, #tpu.memory_space<vmem>>, vector<16x512xf32>
    %446 = arith.addf %444, %445 : vector<16x512xf32>
    %447 = arith.addf %446, %329 : vector<16x512xf32>
    %448 = vector.extract_strided_slice %447 {offsets = [0, 0], sizes = [16, 128], strides = [1, 1]} : vector<16x512xf32> to vector<16x128xf32>
    %449 = arith.negf %448 : vector<16x128xf32>
    %450 = math.exp %449 : vector<16x128xf32>
    %cst_175 = arith.constant 1.000000e+00 : f32
    %451 = vector.broadcast %cst_175 : f32 to vector<16x128xf32>
    %452 = arith.addf %451, %450 : vector<16x128xf32>
    %453 = arith.divf %451, %452 : vector<16x128xf32>
    %454 = vector.extract_strided_slice %447 {offsets = [0, 128], sizes = [16, 128], strides = [1, 1]} : vector<16x512xf32> to vector<16x128xf32>
    %455 = arith.negf %454 : vector<16x128xf32>
    %456 = math.exp %455 : vector<16x128xf32>
    %cst_176 = arith.constant 1.000000e+00 : f32
    %457 = vector.broadcast %cst_176 : f32 to vector<16x128xf32>
    %458 = arith.addf %457, %456 : vector<16x128xf32>
    %459 = arith.divf %457, %458 : vector<16x128xf32>
    %460 = vector.extract_strided_slice %447 {offsets = [0, 256], sizes = [16, 128], strides = [1, 1]} : vector<16x512xf32> to vector<16x128xf32>
    %461 = math.tanh %460 : vector<16x128xf32>
    %462 = vector.extract_strided_slice %447 {offsets = [0, 384], sizes = [16, 128], strides = [1, 1]} : vector<16x512xf32> to vector<16x128xf32>
    %463 = arith.negf %462 : vector<16x128xf32>
    %464 = math.exp %463 : vector<16x128xf32>
    %cst_177 = arith.constant 1.000000e+00 : f32
    %465 = vector.broadcast %cst_177 : f32 to vector<16x128xf32>
    %466 = arith.addf %465, %464 : vector<16x128xf32>
    %467 = arith.divf %465, %466 : vector<16x128xf32>
    %468 = arith.mulf %459, %433 : vector<16x128xf32>
    %469 = arith.mulf %453, %461 : vector<16x128xf32>
    %470 = arith.addf %468, %469 : vector<16x128xf32>
    %471 = math.tanh %470 : vector<16x128xf32>
    %472 = arith.mulf %467, %471 : vector<16x128xf32>
    %473 = arith.mulf %472, %4 : vector<16x128xf32>
    %474 = arith.mulf %472, %6 : vector<16x128xf32>
    %475 = tpu.concatenate %473, %474 in 1 : vector<16x128xf32>, vector<16x128xf32> -> vector<16x256xf32>
    %476 = vector.extract_strided_slice %472 {offsets = [0, 0], sizes = [8, 128], strides = [1, 1]} : vector<16x128xf32> to vector<8x128xf32>
    %c24_178 = arith.constant 24 : index
    %c0_179 = arith.constant 0 : index
    %477 = vector.load %arg16[%c24_178, %c0_179] : memref<64x256xf32, #tpu.memory_space<vmem>>, vector<8x128xf32>
    tpu.vector_store %arg16[%c24_178, %c0_179], %476 {strides = array<i32>} : memref<64x256xf32, #tpu.memory_space<vmem>>, vector<8x128xf32>,
    %478 = vector.extract_strided_slice %472 {offsets = [8, 0], sizes = [8, 128], strides = [1, 1]} : vector<16x128xf32> to vector<8x128xf32>
    %c32_180 = arith.constant 32 : index
    %c128_181 = arith.constant 128 : index
    %479 = vector.load %arg16[%c32_180, %c128_181] : memref<64x256xf32, #tpu.memory_space<vmem>>, vector<8x128xf32>
    tpu.vector_store %arg16[%c32_180, %c128_181], %478 {strides = array<i32>} : memref<64x256xf32, #tpu.memory_space<vmem>>, vector<8x128xf32>,
    %c0_182 = arith.constant 0 : index
    %c0_183 = arith.constant 0 : index
    %480 = vector.load %arg6[%c0_182, %c0_183] : memref<256x512xf32, #tpu.memory_space<vmem>>, vector<256x512xf32>
    %cst_184 = arith.constant dense<0.000000e+00> : vector<16x512xf32>
    %481 = tpu.matmul %475, %480, %cst_184 {dimension_numbers = #tpu.dot_dimension_numbers<[1], [0], [0], [1], [0, 0, 1, 1], [], []>} : vector<16x256xf32>, vector<256x512xf32>, vector<16x512xf32> -> vector<16x512xf32>
    %c64_185 = arith.constant 64 : index
    %c0_186 = arith.constant 0 : index
    %482 = vector.load %arg14[%c64_185, %c0_186] : memref<128x512xf32, #tpu.memory_space<vmem>>, vector<16x512xf32>
    %483 = arith.addf %481, %482 : vector<16x512xf32>
    %484 = arith.addf %483, %329 : vector<16x512xf32>
    %485 = vector.extract_strided_slice %484 {offsets = [0, 0], sizes = [16, 128], strides = [1, 1]} : vector<16x512xf32> to vector<16x128xf32>
    %486 = arith.negf %485 : vector<16x128xf32>
    %487 = math.exp %486 : vector<16x128xf32>
    %cst_187 = arith.constant 1.000000e+00 : f32
    %488 = vector.broadcast %cst_187 : f32 to vector<16x128xf32>
    %489 = arith.addf %488, %487 : vector<16x128xf32>
    %490 = arith.divf %488, %489 : vector<16x128xf32>
    %491 = vector.extract_strided_slice %484 {offsets = [0, 128], sizes = [16, 128], strides = [1, 1]} : vector<16x512xf32> to vector<16x128xf32>
    %492 = arith.negf %491 : vector<16x128xf32>
    %493 = math.exp %492 : vector<16x128xf32>
    %cst_188 = arith.constant 1.000000e+00 : f32
    %494 = vector.broadcast %cst_188 : f32 to vector<16x128xf32>
    %495 = arith.addf %494, %493 : vector<16x128xf32>
    %496 = arith.divf %494, %495 : vector<16x128xf32>
    %497 = vector.extract_strided_slice %484 {offsets = [0, 256], sizes = [16, 128], strides = [1, 1]} : vector<16x512xf32> to vector<16x128xf32>
    %498 = math.tanh %497 : vector<16x128xf32>
    %499 = vector.extract_strided_slice %484 {offsets = [0, 384], sizes = [16, 128], strides = [1, 1]} : vector<16x512xf32> to vector<16x128xf32>
    %500 = arith.negf %499 : vector<16x128xf32>
    %501 = math.exp %500 : vector<16x128xf32>
    %cst_189 = arith.constant 1.000000e+00 : f32
    %502 = vector.broadcast %cst_189 : f32 to vector<16x128xf32>
    %503 = arith.addf %502, %501 : vector<16x128xf32>
    %504 = arith.divf %502, %503 : vector<16x128xf32>
    %505 = arith.mulf %496, %470 : vector<16x128xf32>
    %506 = arith.mulf %490, %498 : vector<16x128xf32>
    %507 = arith.addf %505, %506 : vector<16x128xf32>
    %508 = math.tanh %507 : vector<16x128xf32>
    %509 = arith.mulf %504, %508 : vector<16x128xf32>
    %510 = arith.mulf %509, %4 : vector<16x128xf32>
    %511 = arith.mulf %509, %6 : vector<16x128xf32>
    %512 = tpu.concatenate %510, %511 in 1 : vector<16x128xf32>, vector<16x128xf32> -> vector<16x256xf32>
    %513 = vector.extract_strided_slice %509 {offsets = [0, 0], sizes = [8, 128], strides = [1, 1]} : vector<16x128xf32> to vector<8x128xf32>
    %c32_190 = arith.constant 32 : index
    %c0_191 = arith.constant 0 : index
    %514 = vector.load %arg16[%c32_190, %c0_191] : memref<64x256xf32, #tpu.memory_space<vmem>>, vector<8x128xf32>
    tpu.vector_store %arg16[%c32_190, %c0_191], %513 {strides = array<i32>} : memref<64x256xf32, #tpu.memory_space<vmem>>, vector<8x128xf32>,
    %515 = vector.extract_strided_slice %509 {offsets = [8, 0], sizes = [8, 128], strides = [1, 1]} : vector<16x128xf32> to vector<8x128xf32>
    %c24_192 = arith.constant 24 : index
    %c128_193 = arith.constant 128 : index
    %516 = vector.load %arg16[%c24_192, %c128_193] : memref<64x256xf32, #tpu.memory_space<vmem>>, vector<8x128xf32>
    tpu.vector_store %arg16[%c24_192, %c128_193], %515 {strides = array<i32>} : memref<64x256xf32, #tpu.memory_space<vmem>>, vector<8x128xf32>,
    %c0_194 = arith.constant 0 : index
    %c0_195 = arith.constant 0 : index
    %517 = vector.load %arg6[%c0_194, %c0_195] : memref<256x512xf32, #tpu.memory_space<vmem>>, vector<256x512xf32>
    %cst_196 = arith.constant dense<0.000000e+00> : vector<16x512xf32>
    %518 = tpu.matmul %512, %517, %cst_196 {dimension_numbers = #tpu.dot_dimension_numbers<[1], [0], [0], [1], [0, 0, 1, 1], [], []>} : vector<16x256xf32>, vector<256x512xf32>, vector<16x512xf32> -> vector<16x512xf32>
    %c80_197 = arith.constant 80 : index
    %c0_198 = arith.constant 0 : index
    %519 = vector.load %arg14[%c80_197, %c0_198] : memref<128x512xf32, #tpu.memory_space<vmem>>, vector<16x512xf32>
    %520 = arith.addf %518, %519 : vector<16x512xf32>
    %521 = arith.addf %520, %329 : vector<16x512xf32>
    %522 = vector.extract_strided_slice %521 {offsets = [0, 0], sizes = [16, 128], strides = [1, 1]} : vector<16x512xf32> to vector<16x128xf32>
    %523 = arith.negf %522 : vector<16x128xf32>
    %524 = math.exp %523 : vector<16x128xf32>
    %cst_199 = arith.constant 1.000000e+00 : f32
    %525 = vector.broadcast %cst_199 : f32 to vector<16x128xf32>
    %526 = arith.addf %525, %524 : vector<16x128xf32>
    %527 = arith.divf %525, %526 : vector<16x128xf32>
    %528 = vector.extract_strided_slice %521 {offsets = [0, 128], sizes = [16, 128], strides = [1, 1]} : vector<16x512xf32> to vector<16x128xf32>
    %529 = arith.negf %528 : vector<16x128xf32>
    %530 = math.exp %529 : vector<16x128xf32>
    %cst_200 = arith.constant 1.000000e+00 : f32
    %531 = vector.broadcast %cst_200 : f32 to vector<16x128xf32>
    %532 = arith.addf %531, %530 : vector<16x128xf32>
    %533 = arith.divf %531, %532 : vector<16x128xf32>
    %534 = vector.extract_strided_slice %521 {offsets = [0, 256], sizes = [16, 128], strides = [1, 1]} : vector<16x512xf32> to vector<16x128xf32>
    %535 = math.tanh %534 : vector<16x128xf32>
    %536 = vector.extract_strided_slice %521 {offsets = [0, 384], sizes = [16, 128], strides = [1, 1]} : vector<16x512xf32> to vector<16x128xf32>
    %537 = arith.negf %536 : vector<16x128xf32>
    %538 = math.exp %537 : vector<16x128xf32>
    %cst_201 = arith.constant 1.000000e+00 : f32
    %539 = vector.broadcast %cst_201 : f32 to vector<16x128xf32>
    %540 = arith.addf %539, %538 : vector<16x128xf32>
    %541 = arith.divf %539, %540 : vector<16x128xf32>
    %542 = arith.mulf %533, %507 : vector<16x128xf32>
    %543 = arith.mulf %527, %535 : vector<16x128xf32>
    %544 = arith.addf %542, %543 : vector<16x128xf32>
    %545 = math.tanh %544 : vector<16x128xf32>
    %546 = arith.mulf %541, %545 : vector<16x128xf32>
    %547 = arith.mulf %546, %4 : vector<16x128xf32>
    %548 = arith.mulf %546, %6 : vector<16x128xf32>
    %549 = tpu.concatenate %547, %548 in 1 : vector<16x128xf32>, vector<16x128xf32> -> vector<16x256xf32>
    %550 = vector.extract_strided_slice %546 {offsets = [0, 0], sizes = [8, 128], strides = [1, 1]} : vector<16x128xf32> to vector<8x128xf32>
    %c40_202 = arith.constant 40 : index
    %c0_203 = arith.constant 0 : index
    %551 = vector.load %arg16[%c40_202, %c0_203] : memref<64x256xf32, #tpu.memory_space<vmem>>, vector<8x128xf32>
    tpu.vector_store %arg16[%c40_202, %c0_203], %550 {strides = array<i32>} : memref<64x256xf32, #tpu.memory_space<vmem>>, vector<8x128xf32>,
    %552 = vector.extract_strided_slice %546 {offsets = [8, 0], sizes = [8, 128], strides = [1, 1]} : vector<16x128xf32> to vector<8x128xf32>
    %c16_204 = arith.constant 16 : index
    %c128_205 = arith.constant 128 : index
    %553 = vector.load %arg16[%c16_204, %c128_205] : memref<64x256xf32, #tpu.memory_space<vmem>>, vector<8x128xf32>
    tpu.vector_store %arg16[%c16_204, %c128_205], %552 {strides = array<i32>} : memref<64x256xf32, #tpu.memory_space<vmem>>, vector<8x128xf32>,
    %c0_206 = arith.constant 0 : index
    %c0_207 = arith.constant 0 : index
    %554 = vector.load %arg6[%c0_206, %c0_207] : memref<256x512xf32, #tpu.memory_space<vmem>>, vector<256x512xf32>
    %cst_208 = arith.constant dense<0.000000e+00> : vector<16x512xf32>
    %555 = tpu.matmul %549, %554, %cst_208 {dimension_numbers = #tpu.dot_dimension_numbers<[1], [0], [0], [1], [0, 0, 1, 1], [], []>} : vector<16x256xf32>, vector<256x512xf32>, vector<16x512xf32> -> vector<16x512xf32>
    %c96_209 = arith.constant 96 : index
    %c0_210 = arith.constant 0 : index
    %556 = vector.load %arg14[%c96_209, %c0_210] : memref<128x512xf32, #tpu.memory_space<vmem>>, vector<16x512xf32>
    %557 = arith.addf %555, %556 : vector<16x512xf32>
    %558 = arith.addf %557, %329 : vector<16x512xf32>
    %559 = vector.extract_strided_slice %558 {offsets = [0, 0], sizes = [16, 128], strides = [1, 1]} : vector<16x512xf32> to vector<16x128xf32>
    %560 = arith.negf %559 : vector<16x128xf32>
    %561 = math.exp %560 : vector<16x128xf32>
    %cst_211 = arith.constant 1.000000e+00 : f32
    %562 = vector.broadcast %cst_211 : f32 to vector<16x128xf32>
    %563 = arith.addf %562, %561 : vector<16x128xf32>
    %564 = arith.divf %562, %563 : vector<16x128xf32>
    %565 = vector.extract_strided_slice %558 {offsets = [0, 128], sizes = [16, 128], strides = [1, 1]} : vector<16x512xf32> to vector<16x128xf32>
    %566 = arith.negf %565 : vector<16x128xf32>
    %567 = math.exp %566 : vector<16x128xf32>
    %cst_212 = arith.constant 1.000000e+00 : f32
    %568 = vector.broadcast %cst_212 : f32 to vector<16x128xf32>
    %569 = arith.addf %568, %567 : vector<16x128xf32>
    %570 = arith.divf %568, %569 : vector<16x128xf32>
    %571 = vector.extract_strided_slice %558 {offsets = [0, 256], sizes = [16, 128], strides = [1, 1]} : vector<16x512xf32> to vector<16x128xf32>
    %572 = math.tanh %571 : vector<16x128xf32>
    %573 = vector.extract_strided_slice %558 {offsets = [0, 384], sizes = [16, 128], strides = [1, 1]} : vector<16x512xf32> to vector<16x128xf32>
    %574 = arith.negf %573 : vector<16x128xf32>
    %575 = math.exp %574 : vector<16x128xf32>
    %cst_213 = arith.constant 1.000000e+00 : f32
    %576 = vector.broadcast %cst_213 : f32 to vector<16x128xf32>
    %577 = arith.addf %576, %575 : vector<16x128xf32>
    %578 = arith.divf %576, %577 : vector<16x128xf32>
    %579 = arith.mulf %570, %544 : vector<16x128xf32>
    %580 = arith.mulf %564, %572 : vector<16x128xf32>
    %581 = arith.addf %579, %580 : vector<16x128xf32>
    %582 = math.tanh %581 : vector<16x128xf32>
    %583 = arith.mulf %578, %582 : vector<16x128xf32>
    %584 = arith.mulf %583, %4 : vector<16x128xf32>
    %585 = arith.mulf %583, %6 : vector<16x128xf32>
    %586 = tpu.concatenate %584, %585 in 1 : vector<16x128xf32>, vector<16x128xf32> -> vector<16x256xf32>
    %587 = vector.extract_strided_slice %583 {offsets = [0, 0], sizes = [8, 128], strides = [1, 1]} : vector<16x128xf32> to vector<8x128xf32>
    %c48_214 = arith.constant 48 : index
    %c0_215 = arith.constant 0 : index
    %588 = vector.load %arg16[%c48_214, %c0_215] : memref<64x256xf32, #tpu.memory_space<vmem>>, vector<8x128xf32>
    tpu.vector_store %arg16[%c48_214, %c0_215], %587 {strides = array<i32>} : memref<64x256xf32, #tpu.memory_space<vmem>>, vector<8x128xf32>,
    %589 = vector.extract_strided_slice %583 {offsets = [8, 0], sizes = [8, 128], strides = [1, 1]} : vector<16x128xf32> to vector<8x128xf32>
    %c8_216 = arith.constant 8 : index
    %c128_217 = arith.constant 128 : index
    %590 = vector.load %arg16[%c8_216, %c128_217] : memref<64x256xf32, #tpu.memory_space<vmem>>, vector<8x128xf32>
    tpu.vector_store %arg16[%c8_216, %c128_217], %589 {strides = array<i32>} : memref<64x256xf32, #tpu.memory_space<vmem>>, vector<8x128xf32>,
    %c0_218 = arith.constant 0 : index
    %c0_219 = arith.constant 0 : index
    %591 = vector.load %arg6[%c0_218, %c0_219] : memref<256x512xf32, #tpu.memory_space<vmem>>, vector<256x512xf32>
    %cst_220 = arith.constant dense<0.000000e+00> : vector<16x512xf32>
    %592 = tpu.matmul %586, %591, %cst_220 {dimension_numbers = #tpu.dot_dimension_numbers<[1], [0], [0], [1], [0, 0, 1, 1], [], []>} : vector<16x256xf32>, vector<256x512xf32>, vector<16x512xf32> -> vector<16x512xf32>
    %c112_221 = arith.constant 112 : index
    %c0_222 = arith.constant 0 : index
    %593 = vector.load %arg14[%c112_221, %c0_222] : memref<128x512xf32, #tpu.memory_space<vmem>>, vector<16x512xf32>
    %594 = arith.addf %592, %593 : vector<16x512xf32>
    %595 = arith.addf %594, %329 : vector<16x512xf32>
    %596 = vector.extract_strided_slice %595 {offsets = [0, 0], sizes = [16, 128], strides = [1, 1]} : vector<16x512xf32> to vector<16x128xf32>
    %597 = arith.negf %596 : vector<16x128xf32>
    %598 = math.exp %597 : vector<16x128xf32>
    %cst_223 = arith.constant 1.000000e+00 : f32
    %599 = vector.broadcast %cst_223 : f32 to vector<16x128xf32>
    %600 = arith.addf %599, %598 : vector<16x128xf32>
    %601 = arith.divf %599, %600 : vector<16x128xf32>
    %602 = vector.extract_strided_slice %595 {offsets = [0, 128], sizes = [16, 128], strides = [1, 1]} : vector<16x512xf32> to vector<16x128xf32>
    %603 = arith.negf %602 : vector<16x128xf32>
    %604 = math.exp %603 : vector<16x128xf32>
    %cst_224 = arith.constant 1.000000e+00 : f32
    %605 = vector.broadcast %cst_224 : f32 to vector<16x128xf32>
    %606 = arith.addf %605, %604 : vector<16x128xf32>
    %607 = arith.divf %605, %606 : vector<16x128xf32>
    %608 = vector.extract_strided_slice %595 {offsets = [0, 256], sizes = [16, 128], strides = [1, 1]} : vector<16x512xf32> to vector<16x128xf32>
    %609 = math.tanh %608 : vector<16x128xf32>
    %610 = vector.extract_strided_slice %595 {offsets = [0, 384], sizes = [16, 128], strides = [1, 1]} : vector<16x512xf32> to vector<16x128xf32>
    %611 = arith.negf %610 : vector<16x128xf32>
    %612 = math.exp %611 : vector<16x128xf32>
    %cst_225 = arith.constant 1.000000e+00 : f32
    %613 = vector.broadcast %cst_225 : f32 to vector<16x128xf32>
    %614 = arith.addf %613, %612 : vector<16x128xf32>
    %615 = arith.divf %613, %614 : vector<16x128xf32>
    %616 = arith.mulf %607, %581 : vector<16x128xf32>
    %617 = arith.mulf %601, %609 : vector<16x128xf32>
    %618 = arith.addf %616, %617 : vector<16x128xf32>
    %619 = math.tanh %618 : vector<16x128xf32>
    %620 = arith.mulf %615, %619 : vector<16x128xf32>
    %621 = vector.extract_strided_slice %620 {offsets = [0, 0], sizes = [8, 128], strides = [1, 1]} : vector<16x128xf32> to vector<8x128xf32>
    %c56_226 = arith.constant 56 : index
    %c0_227 = arith.constant 0 : index
    %622 = vector.load %arg16[%c56_226, %c0_227] : memref<64x256xf32, #tpu.memory_space<vmem>>, vector<8x128xf32>
    tpu.vector_store %arg16[%c56_226, %c0_227], %621 {strides = array<i32>} : memref<64x256xf32, #tpu.memory_space<vmem>>, vector<8x128xf32>,
    %623 = vector.extract_strided_slice %620 {offsets = [8, 0], sizes = [8, 128], strides = [1, 1]} : vector<16x128xf32> to vector<8x128xf32>
    %c0_228 = arith.constant 0 : index
    %c128_229 = arith.constant 128 : index
    %624 = vector.load %arg16[%c0_228, %c128_229] : memref<64x256xf32, #tpu.memory_space<vmem>>, vector<8x128xf32>
    tpu.vector_store %arg16[%c0_228, %c128_229], %623 {strides = array<i32>} : memref<64x256xf32, #tpu.memory_space<vmem>>, vector<8x128xf32>,
    %c0_230 = arith.constant 0 : index
    %c0_231 = arith.constant 0 : index
    %625 = vector.load %arg16[%c0_230, %c0_231] : memref<64x256xf32, #tpu.memory_space<vmem>>, vector<64x256xf32>
    %c0_232 = arith.constant 0 : index
    %c0_233 = arith.constant 0 : index
    %626 = vector.load %arg7[%c0_232, %c0_233] : memref<256x128xf32, #tpu.memory_space<vmem>>, vector<256x128xf32>
    %cst_234 = arith.constant dense<0.000000e+00> : vector<64x128xf32>
    %627 = tpu.matmul %625, %626, %cst_234 {dimension_numbers = #tpu.dot_dimension_numbers<[1], [0], [0], [1], [0, 0, 1, 1], [], []>} : vector<64x256xf32>, vector<256x128xf32>, vector<64x128xf32> -> vector<64x128xf32>
    %c0_235 = arith.constant 0 : index
    %c0_236 = arith.constant 0 : index
    %628 = vector.load %arg8[%c0_235, %c0_236] : memref<1x128xf32, #tpu.memory_space<vmem>>, vector<1x128xf32>
    %629 = vector.broadcast %628 : vector<1x128xf32> to vector<64x128xf32>
    %630 = arith.addf %627, %629 : vector<64x128xf32>
    %cst_237 = arith.constant 0.000000e+00 : f32
    %631 = vector.broadcast %cst_237 : f32 to vector<64x128xf32>
    %632 = arith.maximumf %630, %631 : vector<64x128xf32>
    %c0_238 = arith.constant 0 : index
    %c0_239 = arith.constant 0 : index
    %633 = vector.load %arg9[%c0_238, %c0_239] : memref<128x128xf32, #tpu.memory_space<vmem>>, vector<128x128xf32>
    %cst_240 = arith.constant dense<0.000000e+00> : vector<64x128xf32>
    %634 = tpu.matmul %632, %633, %cst_240 {dimension_numbers = #tpu.dot_dimension_numbers<[1], [0], [0], [1], [0, 0, 1, 1], [], []>} : vector<64x128xf32>, vector<128x128xf32>, vector<64x128xf32> -> vector<64x128xf32>
    %c0_241 = arith.constant 0 : index
    %c0_242 = arith.constant 0 : index
    %635 = vector.load %arg10[%c0_241, %c0_242] : memref<1x128xf32, #tpu.memory_space<vmem>>, vector<1x128xf32>
    %636 = vector.broadcast %635 : vector<1x128xf32> to vector<64x128xf32>
    %637 = arith.addf %634, %636 : vector<64x128xf32>
    %cst_243 = arith.constant 0.000000e+00 : f32
    %638 = vector.broadcast %cst_243 : f32 to vector<64x128xf32>
    %639 = arith.maximumf %637, %638 : vector<64x128xf32>
    %c0_244 = arith.constant 0 : index
    %c0_245 = arith.constant 0 : index
    %640 = vector.load %arg11[%c0_244, %c0_245] : memref<128x128xf32, #tpu.memory_space<vmem>>, vector<128x128xf32>
    %cst_246 = arith.constant dense<0.000000e+00> : vector<64x128xf32>
    %641 = tpu.matmul %639, %640, %cst_246 {dimension_numbers = #tpu.dot_dimension_numbers<[1], [0], [0], [1], [0, 0, 1, 1], [], []>} : vector<64x128xf32>, vector<128x128xf32>, vector<64x128xf32> -> vector<64x128xf32>
    %c0_247 = arith.constant 0 : index
    %c0_248 = arith.constant 0 : index
    %642 = vector.load %arg12[%c0_247, %c0_248] : memref<1x128xf32, #tpu.memory_space<vmem>>, vector<1x128xf32>
    %643 = vector.broadcast %642 : vector<1x128xf32> to vector<64x128xf32>
    %644 = arith.addf %641, %643 : vector<64x128xf32>
    %c0_249 = arith.constant 0 : index
    %c0_250 = arith.constant 0 : index
    %645 = vector.load %arg13[%c0_249, %c0_250] : memref<64x128xf32, #tpu.memory_space<vmem>>, vector<64x128xf32>
    tpu.vector_store %arg13[%c0_249, %c0_250], %644 {strides = array<i32>} : memref<64x128xf32, #tpu.memory_space<vmem>>, vector<64x128xf32>,
    return
  }
}

</mosaic_0001>

<llo_original>
// kernel: lstm_forward.1
$region0: #{lstm_forward.1}
  #allocation0 [shape = 'u32[]', space=smem, size = 0x4, offset = 0x4, fixed_abs, tag = 'smem constant byte address 0x4 - core index']
  #allocation1 [shape = 'u32[144,128]{1,0:T(1,128)}', space=vmem, size = 0x12000, scoped, tag = 'internal scratch']
  #allocation2 [shape = 'f32[128,512]{1,0:T(8,128)}', space=vmem, size = 0x40000, scoped, tag = 'scratch operand']
  #allocation3 [shape = 'f32[128,512]{1,0:T(8,128)}', space=vmem, size = 0x40000, scoped, tag = 'scratch operand']
  #allocation4 [shape = 'f32[64,256]{1,0:T(8,128)}', space=vmem, size = 0x10000, scoped, tag = 'scratch operand']
  %s0 = inlined_call_operand.vmem [shape: f32[128,8], index: 0, kind: input, shape index: {}]
  %s1 = inlined_call_operand.vmem [shape: f32[8,512], index: 1, kind: input, shape index: {}]
  %s2 = inlined_call_operand.vmem [shape: f32[16,512], index: 2, kind: input, shape index: {}]
  %s3 = inlined_call_operand.hbm [shape: f32[256,512], index: 3, kind: input, shape index: {}]
  %s4 = inlined_call_operand.hbm [shape: f32[512,512], index: 4, kind: input, shape index: {}]
  %s5 = inlined_call_operand.vmem [shape: f32[16,512], index: 5, kind: input, shape index: {}]
  %s6 = inlined_call_operand.hbm [shape: f32[256,512], index: 6, kind: input, shape index: {}]
  %s7 = inlined_call_operand.vmem [shape: f32[256,128], index: 7, kind: input, shape index: {}]
  %s8 = inlined_call_operand.vmem [shape: f32[1,128], index: 8, kind: input, shape index: {}]
  %s9 = inlined_call_operand.vmem [shape: f32[128,128], index: 9, kind: input, shape index: {}]
  %s10 = inlined_call_operand.vmem [shape: f32[1,128], index: 10, kind: input, shape index: {}]
  %s11 = inlined_call_operand.vmem [shape: f32[128,128], index: 11, kind: input, shape index: {}]
  %s12 = inlined_call_operand.vmem [shape: f32[1,128], index: 12, kind: input, shape index: {}]
  %s13 = inlined_call_operand.vmem [shape: f32[64,128], index: 13, kind: output, shape index: {}]
  %s14 = sld [smem:[#allocation0]]
  $region74: #{lstm_forward.1} parent=0
    _
  %s16 = ssub.s32 1, %s14
  %s17 = scalar_select 0, %s16, %s14
  $region1: #{lstm_forward.1} parent=0
    #allocation5 [shape = 'u8[524288]{0}', space=vmem, size = 0x80000, scoped, tag = 'input window, operand 3, single buffered']
    #allocation6 [shape = 's32[1]{0}', space=sflag, size = 0x4, scoped, tag = 'scoped memory for lstm_forward.1']
    #allocation7 [shape = 'u8[1048576]{0}', space=vmem, size = 0x100000, scoped, tag = 'input window, operand 4, single buffered']
    #allocation8 [shape = 's32[1]{0}', space=sflag, size = 0x4, scoped, tag = 'scoped memory for lstm_forward.1']
    #allocation9 [shape = 'u8[524288]{0}', space=vmem, size = 0x80000, scoped, tag = 'input window, operand 6, single buffered']
    %18 = vsyncpa [#allocation6], 0
    %19 = vsyncpa [#allocation8], 0
    // Predicated region
    $region2: #{lstm_forward.1} parent=1 // pred_check
      _
    $region3: #{lstm_forward.1} parent=1 // pred_check_branch
      %21 = sbr.rel (0) target = $region5
    $region4: #{lstm_forward.1} parent=1 // pred_region
      _
    $region5: #{lstm_forward.1} parent=1 // pred_fallthru
      _
    // Predicated region
    $region6: #{lstm_forward.1} parent=1 // pred_check
      _
    $region7: #{lstm_forward.1} parent=1 // pred_check_branch
      %23 = sbr.rel (0) target = $region9
    $region8: #{lstm_forward.1} parent=1 // pred_region
      _
    $region9: #{lstm_forward.1} parent=1 // pred_fallthru
      _
    // Predicated region
    $region10: #{lstm_forward.1} parent=1 // pred_check
      _
    $region11: #{lstm_forward.1} parent=1 // pred_check_branch
      %25 = sbr.rel (0) target = $region13
    $region12: #{lstm_forward.1} parent=1 // pred_region
      _
    $region13: #{lstm_forward.1} parent=1 // pred_fallthru
      _
    // Predicated region
    $region14: #{lstm_forward.1} parent=1 // pred_check
      _
    $region15: #{lstm_forward.1} parent=1 // pred_check_branch
      %27 = sbr.rel (0) target = $region17
    $region16: #{lstm_forward.1} parent=1 // pred_region
      %s29 = ssub.s32 16384, 16384
      %30 = vsyncadd [#allocation6], %s29
      %s31 = sshll.u32 [#allocation5], 4
      %s32 = int_to_ptr.vmem [resolvable:$true] %s31
      %37 = dma.hbm_to_vmem [thread:$0]  %s3, 16384, %s32, [#allocation6], 512, 512, 32
    $region17: #{lstm_forward.1} parent=1 // pred_fallthru
      _
    // Predicated region
    $region18: #{lstm_forward.1} parent=1 // pred_check
      _
    $region19: #{lstm_forward.1} parent=1 // pred_check_branch
      %39 = sbr.rel (0) target = $region21
    $region20: #{lstm_forward.1} parent=1 // pred_region
      %s41 = ssub.s32 32768, 32768
      %42 = vsyncadd [#allocation8], %s41
      %s43 = sshll.u32 [#allocation7], 4
      %s44 = int_to_ptr.vmem [resolvable:$true] %s43
      %49 = dma.hbm_to_vmem [thread:$0]  %s4, 32768, %s44, [#allocation8], 512, 512, 32
    $region21: #{lstm_forward.1} parent=1 // pred_fallthru
      _
    // Predicated region
    $region22: #{lstm_forward.1} parent=1 // pred_check
      _
    $region23: #{lstm_forward.1} parent=1 // pred_check_branch
      %51 = sbr.rel (0) target = $region25
    $region24: #{lstm_forward.1} parent=1 // pred_region
      _
    $region25: #{lstm_forward.1} parent=1 // pred_fallthru
      _
    // Predicated region
    $region26: #{lstm_forward.1} parent=1 // pred_check
      _
    $region27: #{lstm_forward.1} parent=1 // pred_check_branch
      %53 = sbr.rel (0) target = $region29
    $region28: #{lstm_forward.1} parent=1 // pred_region
      %s55 = ssub.s32 16384, 16384
      %56 = vsyncadd [#allocation8], %s55
      %s57 = sshll.u32 [#allocation9], 4
      %s58 = int_to_ptr.vmem [resolvable:$true] %s57
      %63 = dma.hbm_to_vmem [thread:$0]  %s6, 16384, %s58, [#allocation8], 512, 512, 32
    $region29: #{lstm_forward.1} parent=1 // pred_fallthru
      _
    // Predicated region
    $region30: #{lstm_forward.1} parent=1 // pred_check
      _
    $region31: #{lstm_forward.1} parent=1 // pred_check_branch
      %65 = sbr.rel (0) target = $region33
    $region32: #{lstm_forward.1} parent=1 // pred_region
      _
    $region33: #{lstm_forward.1} parent=1 // pred_fallthru
      _
    // Predicated region
    $region34: #{lstm_forward.1} parent=1 // pred_check
      _
    $region35: #{lstm_forward.1} parent=1 // pred_check_branch
      %67 = sbr.rel (0) target = $region37
    $region36: #{lstm_forward.1} parent=1 // pred_region
      _
    $region37: #{lstm_forward.1} parent=1 // pred_fallthru
      _
    // Predicated region
    $region38: #{lstm_forward.1} parent=1 // pred_check
      _
    $region39: #{lstm_forward.1} parent=1 // pred_check_branch
      %69 = sbr.rel (0) target = $region41
    $region40: #{lstm_forward.1} parent=1 // pred_region
      _
    $region41: #{lstm_forward.1} parent=1 // pred_fallthru
      _
    // Predicated region
    $region42: #{lstm_forward.1} parent=1 // pred_check
      _
    $region43: #{lstm_forward.1} parent=1 // pred_check_branch
      %71 = sbr.rel (0) target = $region45
    $region44: #{lstm_forward.1} parent=1 // pred_region
      _
    $region45: #{lstm_forward.1} parent=1 // pred_fallthru
      _
    // Predicated region
    $region46: #{lstm_forward.1} parent=1 // pred_check
      _
    $region47: #{lstm_forward.1} parent=1 // pred_check_branch
      %73 = sbr.rel (0) target = $region49
    $region48: #{lstm_forward.1} parent=1 // pred_region
      _
    $region49: #{lstm_forward.1} parent=1 // pred_fallthru
      _
    // Predicated region
    $region50: #{lstm_forward.1} parent=1 // pred_check
      _
    $region51: #{lstm_forward.1} parent=1 // pred_check_branch
      %75 = sbr.rel (0) target = $region53
    $region52: #{lstm_forward.1} parent=1 // pred_region
      _
    $region53: #{lstm_forward.1} parent=1 // pred_fallthru
      _
    // Predicated region
    $region54: #{lstm_forward.1} parent=1 // pred_check
      _
    $region55: #{lstm_forward.1} parent=1 // pred_check_branch
      %77 = sbr.rel (0) target = $region57
    $region56: #{lstm_forward.1} parent=1 // pred_region
      %78 = dma.done [#allocation6], 16384
    $region57: #{lstm_forward.1} parent=1 // pred_fallthru
      _
    // Predicated region
    $region58: #{lstm_forward.1} parent=1 // pred_check
      _
    $region59: #{lstm_forward.1} parent=1 // pred_check_branch
      %80 = sbr.rel (0) target = $region61
    $region60: #{lstm_forward.1} parent=1 // pred_region
      %81 = dma.done [#allocation8], 32768
    $region61: #{lstm_forward.1} parent=1 // pred_fallthru
      _
    // Predicated region
    $region62: #{lstm_forward.1} parent=1 // pred_check
      _
    $region63: #{lstm_forward.1} parent=1 // pred_check_branch
      %83 = sbr.rel (0) target = $region65
    $region64: #{lstm_forward.1} parent=1 // pred_region
      %84 = dma.done [#allocation8], 16384
    $region65: #{lstm_forward.1} parent=1 // pred_fallthru
      _
    %v85 = vlaneseq
    %v86 = vshrl.u32 %v85, 7
    %v87 = vadd.s32 %v86, 8
    %vm88 = vcmp.lt.s32.totalorder %v86, 8
    %vm89 = vcmp.lt.s32.totalorder %v87, 8
    %v90 = vsel %vm88, 1, 0
    %v91 = vsel %vm89, 1, 0
    %v92 = vcvt.s32.f32 %v90
    %v93 = vcvt.s32.f32 %v91
    %v94 = vsub.f32 1.0, %v92
    %v95 = vsub.f32 1.0, %v93
    %v96 = vld [vmem:[%s0] sm:$0xff]
    %v97 = vld [vmem:[%s0 + $0x8] sm:$0xff]
    %v98 = vld [vmem:[%s0 + $0x10] sm:$0xff]
    %v99 = vld [vmem:[%s0 + $0x18] sm:$0xff]
    %v100 = vld [vmem:[%s0 + $0x20] sm:$0xff]
    %v101 = vld [vmem:[%s0 + $0x28] sm:$0xff]
    %v102 = vld [vmem:[%s0 + $0x30] sm:$0xff]
    %v103 = vld [vmem:[%s0 + $0x38] sm:$0xff]
    %v104 = vld [vmem:[%s0 + $0x40] sm:$0xff]
    %v105 = vld [vmem:[%s0 + $0x48] sm:$0xff]
    %v106 = vld [vmem:[%s0 + $0x50] sm:$0xff]
    %v107 = vld [vmem:[%s0 + $0x58] sm:$0xff]
    %v108 = vld [vmem:[%s0 + $0x60] sm:$0xff]
    %v109 = vld [vmem:[%s0 + $0x68] sm:$0xff]
    %v110 = vld [vmem:[%s0 + $0x70] sm:$0xff]
    %v111 = vld [vmem:[%s0 + $0x78] sm:$0xff]
    %v112 = vld [vmem:[%s1] sm:$0xff]
    %v113 = vld [vmem:[%s1 + $0x8] sm:$0xff]
    %v114 = vld [vmem:[%s1 + $0x10] sm:$0xff]
    %v115 = vld [vmem:[%s1 + $0x18] sm:$0xff]
    %vm116 = vcmask 64512
    %v118 = vsel %vm116, %v96, 0
    %v121 = vsel %vm116, %v97, 0
    %v124 = vsel %vm116, %v98, 0
    %v127 = vsel %vm116, %v99, 0
    %v130 = vsel %vm116, %v100, 0
    %v133 = vsel %vm116, %v101, 0
    %v136 = vsel %vm116, %v102, 0
    %v139 = vsel %vm116, %v103, 0
    %v142 = vsel %vm116, %v104, 0
    %v145 = vsel %vm116, %v105, 0
    %v148 = vsel %vm116, %v106, 0
    %v151 = vsel %vm116, %v107, 0
    %v154 = vsel %vm116, %v108, 0
    %v157 = vsel %vm116, %v109, 0
    %v160 = vsel %vm116, %v110, 0
    %v163 = vsel %vm116, %v111, 0
    %165 = vmatprep.subr.mxu0 %v113
    %166 = vmatpush1.msra.mxu0 %v112
    %167 = vmatprep.subr.mxu0 0.0
    %168 = vmatpush1.msra.mxu0 0.0
    %169 = vmatprep.subr.mxu0 0.0
    %170 = vmatpush1.msra.mxu0 0.0
    %171 = vmatprep.subr.mxu0 0.0
    %172 = vmatpush1.msra.mxu0 0.0
    %173 = vmatprep.subr.mxu0 0.0
    %174 = vmatpush1.msra.mxu0 0.0
    %175 = vmatprep.subr.mxu0 0.0
    %176 = vmatpush1.msra.mxu0 0.0
    %177 = vmatprep.subr.mxu0 0.0
    %178 = vmatpush1.msra.mxu0 0.0
    %179 = vmatprep.subr.mxu0 0.0
    %180 = vmatpush1.msra.mxu0 0.0
    %181 = vmatprep.subr.mxu0 0.0
    %182 = vmatpush1.msra.mxu0 0.0
    %183 = vmatprep.subr.mxu0 0.0
    %184 = vmatpush1.msra.mxu0 0.0
    %185 = vmatprep.subr.mxu0 0.0
    %186 = vmatpush1.msra.mxu0 0.0
    %187 = vmatprep.subr.mxu0 0.0
    %188 = vmatpush1.msra.mxu0 0.0
    %189 = vmatprep.subr.mxu0 0.0
    %190 = vmatpush1.msra.mxu0 0.0
    %191 = vmatprep.subr.mxu0 0.0
    %192 = vmatpush1.msra.mxu0 0.0
    %193 = vmatprep.subr.mxu0 0.0
    %194 = vmatpush1.msra.mxu0 0.0
    %195 = vmatprep.subr.mxu0 0.0
    %196 = vmatpush1.msra.mxu0 0.0
    %197 = vmatprep.subr.mxu0 0.0
    %198 = vmatpush1.msra.mxu0 0.0
    %199 = vmatprep.subr.mxu0 0.0
    %200 = vmatpush1.msra.mxu0 0.0
    %201 = vmatprep.subr.mxu0 0.0
    %202 = vmatpush1.msra.mxu0 0.0
    %203 = vmatprep.subr.mxu0 0.0
    %204 = vmatpush1.msra.mxu0 0.0
    %205 = vmatprep.subr.mxu0 0.0
    %206 = vmatpush1.msra.mxu0 0.0
    %207 = vmatprep.subr.mxu0 0.0
    %208 = vmatpush1.msra.mxu0 0.0
    %209 = vmatprep.subr.mxu0 0.0
    %210 = vmatpush1.msra.mxu0 0.0
    %211 = vmatprep.subr.mxu0 0.0
    %212 = vmatpush1.msra.mxu0 0.0
    %213 = vmatprep.subr.mxu0 0.0
    %214 = vmatpush1.msra.mxu0 0.0
    %215 = vmatprep.subr.mxu0 0.0
    %216 = vmatpush1.msra.mxu0 0.0
    %217 = vmatprep.subr.mxu0 0.0
    %218 = vmatpush1.msra.mxu0 0.0
    %219 = vmatprep.subr.mxu0 0.0
    %220 = vmatpush1.msra.mxu0 0.0
    %221 = vmatprep.subr.mxu0 0.0
    %222 = vmatpush1.msra.mxu0 0.0
    %223 = vmatprep.subr.mxu0 0.0
    %224 = vmatpush1.msra.mxu0 0.0
    %225 = vmatprep.subr.mxu0 0.0
    %226 = vmatpush1.msra.mxu0 0.0
    %227 = vmatprep.subr.mxu0 0.0
    %228 = vmatpush1.msra.mxu0 0.0
    %229 = vmatprep.mubr.f32.mxu0 0.0
    %230 = vmatmul.mubr.f32.gmra.mrb[0].mxu0 %v118
    %v231 = vpop.f32.mrb[0].mxu0
    %v232 = vadd.f32 0.0, %v231
    %v233 = vpop.f32.mrb[0].mxu0
    %v234 = vadd.f32 0.0, %v233
    %235 = vmatprep.mubr.f32.mxu0 0.0
    %236 = vmatmul.mubr.f32.gmra.mrb[0].mxu0 %v121
    %v237 = vpop.f32.mrb[0].mxu0
    %v238 = vadd.f32 0.0, %v237
    %v239 = vpop.f32.mrb[0].mxu0
    %v240 = vadd.f32 0.0, %v239
    %241 = vmatprep.mubr.f32.mxu0 0.0
    %242 = vmatmul.mubr.f32.gmra.mrb[0].mxu0 %v124
    %v243 = vpop.f32.mrb[0].mxu0
    %v244 = vadd.f32 0.0, %v243
    %v245 = vpop.f32.mrb[0].mxu0
    %v246 = vadd.f32 0.0, %v245
    %247 = vmatprep.mubr.f32.mxu0 0.0
    %248 = vmatmul.mubr.f32.gmra.mrb[0].mxu0 %v127
    %v249 = vpop.f32.mrb[0].mxu0
    %v250 = vadd.f32 0.0, %v249
    %v251 = vpop.f32.mrb[0].mxu0
    %v252 = vadd.f32 0.0, %v251
    %253 = vmatprep.mubr.f32.mxu0 0.0
    %254 = vmatmul.mubr.f32.gmra.mrb[0].mxu0 %v130
    %v255 = vpop.f32.mrb[0].mxu0
    %v256 = vadd.f32 0.0, %v255
    %v257 = vpop.f32.mrb[0].mxu0
    %v258 = vadd.f32 0.0, %v257
    %259 = vmatprep.mubr.f32.mxu0 0.0
    %260 = vmatmul.mubr.f32.gmra.mrb[0].mxu0 %v133
    %v261 = vpop.f32.mrb[0].mxu0
    %v262 = vadd.f32 0.0, %v261
    %v263 = vpop.f32.mrb[0].mxu0
    %v264 = vadd.f32 0.0, %v263
    %265 = vmatprep.mubr.f32.mxu0 0.0
    %266 = vmatmul.mubr.f32.gmra.mrb[0].mxu0 %v136
    %v267 = vpop.f32.mrb[0].mxu0
    %v268 = vadd.f32 0.0, %v267
    %v269 = vpop.f32.mrb[0].mxu0
    %v270 = vadd.f32 0.0, %v269
    %271 = vmatprep.mubr.f32.mxu0 0.0
    %272 = vmatmul.mubr.f32.gmra.mrb[0].mxu0 %v139
    %v273 = vpop.f32.mrb[0].mxu0
    %v274 = vadd.f32 0.0, %v273
    %v275 = vpop.f32.mrb[0].mxu0
    %v276 = vadd.f32 0.0, %v275
    %277 = vmatprep.mubr.f32.mxu0 0.0
    %278 = vmatmul.mubr.f32.gmra.mrb[0].mxu0 %v142
    %v279 = vpop.f32.mrb[0].mxu0
    %v280 = vadd.f32 0.0, %v279
    %v281 = vpop.f32.mrb[0].mxu0
    %v282 = vadd.f32 0.0, %v281
    %283 = vmatprep.mubr.f32.mxu0 0.0
    %284 = vmatmul.mubr.f32.gmra.mrb[0].mxu0 %v145
    %v285 = vpop.f32.mrb[0].mxu0
    %v286 = vadd.f32 0.0, %v285
    %v287 = vpop.f32.mrb[0].mxu0
    %v288 = vadd.f32 0.0, %v287
    %289 = vmatprep.mubr.f32.mxu0 0.0
    %290 = vmatmul.mubr.f32.gmra.mrb[0].mxu0 %v148
    %v291 = vpop.f32.mrb[0].mxu0
    %v292 = vadd.f32 0.0, %v291
    %v293 = vpop.f32.mrb[0].mxu0
    %v294 = vadd.f32 0.0, %v293
    %295 = vmatprep.mubr.f32.mxu0 0.0
    %296 = vmatmul.mubr.f32.gmra.mrb[0].mxu0 %v151
    %v297 = vpop.f32.mrb[0].mxu0
    %v298 = vadd.f32 0.0, %v297
    %v299 = vpop.f32.mrb[0].mxu0
    %v300 = vadd.f32 0.0, %v299
    %301 = vmatprep.mubr.f32.mxu0 0.0
    %302 = vmatmul.mubr.f32.gmra.mrb[0].mxu0 %v154
    %v303 = vpop.f32.mrb[0].mxu0
    %v304 = vadd.f32 0.0, %v303
    %v305 = vpop.f32.mrb[0].mxu0
    %v306 = vadd.f32 0.0, %v305
    %307 = vmatprep.mubr.f32.mxu0 0.0
    %308 = vmatmul.mubr.f32.gmra.mrb[0].mxu0 %v157
    %v309 = vpop.f32.mrb[0].mxu0
    %v310 = vadd.f32 0.0, %v309
    %v311 = vpop.f32.mrb[0].mxu0
    %v312 = vadd.f32 0.0, %v311
    %313 = vmatprep.mubr.f32.mxu0 0.0
    %314 = vmatmul.mubr.f32.gmra.mrb[0].mxu0 %v160
    %v315 = vpop.f32.mrb[0].mxu0
    %v316 = vadd.f32 0.0, %v315
    %v317 = vpop.f32.mrb[0].mxu0
    %v318 = vadd.f32 0.0, %v317
    %319 = vmatprep.mubr.f32.mxu0 0.0
    %320 = vmatmul.mubr.f32.gmra.mrb[0].mxu0 %v163
    %v321 = vpop.f32.mrb[0].mxu0
    %v322 = vadd.f32 0.0, %v321
    %v323 = vpop.f32.mrb[0].mxu0
    %v324 = vadd.f32 0.0, %v323
    %325 = vdwg.mxu0
    %326 = vmatprep.subr.mxu0 %v115
    %327 = vmatpush1.msra.mxu0 %v114
    %328 = vmatprep.subr.mxu0 0.0
    %329 = vmatpush1.msra.mxu0 0.0
    %330 = vmatprep.subr.mxu0 0.0
    %331 = vmatpush1.msra.mxu0 0.0
    %332 = vmatprep.subr.mxu0 0.0
    %333 = vmatpush1.msra.mxu0 0.0
    %334 = vmatprep.subr.mxu0 0.0
    %335 = vmatpush1.msra.mxu0 0.0
    %336 = vmatprep.subr.mxu0 0.0
    %337 = vmatpush1.msra.mxu0 0.0
    %338 = vmatprep.subr.mxu0 0.0
    %339 = vmatpush1.msra.mxu0 0.0
    %340 = vmatprep.subr.mxu0 0.0
    %341 = vmatpush1.msra.mxu0 0.0
    %342 = vmatprep.subr.mxu0 0.0
    %343 = vmatpush1.msra.mxu0 0.0
    %344 = vmatprep.subr.mxu0 0.0
    %345 = vmatpush1.msra.mxu0 0.0
    %346 = vmatprep.subr.mxu0 0.0
    %347 = vmatpush1.msra.mxu0 0.0
    %348 = vmatprep.subr.mxu0 0.0
    %349 = vmatpush1.msra.mxu0 0.0
    %350 = vmatprep.subr.mxu0 0.0
    %351 = vmatpush1.msra.mxu0 0.0
    %352 = vmatprep.subr.mxu0 0.0
    %353 = vmatpush1.msra.mxu0 0.0
    %354 = vmatprep.subr.mxu0 0.0
    %355 = vmatpush1.msra.mxu0 0.0
    %356 = vmatprep.subr.mxu0 0.0
    %357 = vmatpush1.msra.mxu0 0.0
    %358 = vmatprep.subr.mxu0 0.0
    %359 = vmatpush1.msra.mxu0 0.0
    %360 = vmatprep.subr.mxu0 0.0
    %361 = vmatpush1.msra.mxu0 0.0
    %362 = vmatprep.subr.mxu0 0.0
    %363 = vmatpush1.msra.mxu0 0.0
    %364 = vmatprep.subr.mxu0 0.0
    %365 = vmatpush1.msra.mxu0 0.0
    %366 = vmatprep.subr.mxu0 0.0
    %367 = vmatpush1.msra.mxu0 0.0
    %368 = vmatprep.subr.mxu0 0.0
    %369 = vmatpush1.msra.mxu0 0.0
    %370 = vmatprep.subr.mxu0 0.0
    %371 = vmatpush1.msra.mxu0 0.0
    %372 = vmatprep.subr.mxu0 0.0
    %373 = vmatpush1.msra.mxu0 0.0
    %374 = vmatprep.subr.mxu0 0.0
    %375 = vmatpush1.msra.mxu0 0.0
    %376 = vmatprep.subr.mxu0 0.0
    %377 = vmatpush1.msra.mxu0 0.0
    %378 = vmatprep.subr.mxu0 0.0
    %379 = vmatpush1.msra.mxu0 0.0
    %380 = vmatprep.subr.mxu0 0.0
    %381 = vmatpush1.msra.mxu0 0.0
    %382 = vmatprep.subr.mxu0 0.0
    %383 = vmatpush1.msra.mxu0 0.0
    %384 = vmatprep.subr.mxu0 0.0
    %385 = vmatpush1.msra.mxu0 0.0
    %386 = vmatprep.subr.mxu0 0.0
    %387 = vmatpush1.msra.mxu0 0.0
    %388 = vmatprep.subr.mxu0 0.0
    %389 = vmatpush1.msra.mxu0 0.0
    %390 = vmatprep.mubr.f32.mxu0 0.0
    %391 = vmatmul.mubr.f32.gmra.mrb[0].mxu0 %v118
    %v392 = vpop.f32.mrb[0].mxu0
    %v393 = vadd.f32 0.0, %v392
    %v394 = vpop.f32.mrb[0].mxu0
    %v395 = vadd.f32 0.0, %v394
    %396 = vmatprep.mubr.f32.mxu0 0.0
    %397 = vmatmul.mubr.f32.gmra.mrb[0].mxu0 %v121
    %v398 = vpop.f32.mrb[0].mxu0
    %v399 = vadd.f32 0.0, %v398
    %v400 = vpop.f32.mrb[0].mxu0
    %v401 = vadd.f32 0.0, %v400
    %402 = vmatprep.mubr.f32.mxu0 0.0
    %403 = vmatmul.mubr.f32.gmra.mrb[0].mxu0 %v124
    %v404 = vpop.f32.mrb[0].mxu0
    %v405 = vadd.f32 0.0, %v404
    %v406 = vpop.f32.mrb[0].mxu0
    %v407 = vadd.f32 0.0, %v406
    %408 = vmatprep.mubr.f32.mxu0 0.0
    %409 = vmatmul.mubr.f32.gmra.mrb[0].mxu0 %v127
    %v410 = vpop.f32.mrb[0].mxu0
    %v411 = vadd.f32 0.0, %v410
    %v412 = vpop.f32.mrb[0].mxu0
    %v413 = vadd.f32 0.0, %v412
    %414 = vmatprep.mubr.f32.mxu0 0.0
    %415 = vmatmul.mubr.f32.gmra.mrb[0].mxu0 %v130
    %v416 = vpop.f32.mrb[0].mxu0
    %v417 = vadd.f32 0.0, %v416
    %v418 = vpop.f32.mrb[0].mxu0
    %v419 = vadd.f32 0.0, %v418
    %420 = vmatprep.mubr.f32.mxu0 0.0
    %421 = vmatmul.mubr.f32.gmra.mrb[0].mxu0 %v133
    %v422 = vpop.f32.mrb[0].mxu0
    %v423 = vadd.f32 0.0, %v422
    %v424 = vpop.f32.mrb[0].mxu0
    %v425 = vadd.f32 0.0, %v424
    %426 = vmatprep.mubr.f32.mxu0 0.0
    %427 = vmatmul.mubr.f32.gmra.mrb[0].mxu0 %v136
    %v428 = vpop.f32.mrb[0].mxu0
    %v429 = vadd.f32 0.0, %v428
    %v430 = vpop.f32.mrb[0].mxu0
    %v431 = vadd.f32 0.0, %v430
    %432 = vmatprep.mubr.f32.mxu0 0.0
    %433 = vmatmul.mubr.f32.gmra.mrb[0].mxu0 %v139
    %v434 = vpop.f32.mrb[0].mxu0
    %v435 = vadd.f32 0.0, %v434
    %v436 = vpop.f32.mrb[0].mxu0
    %v437 = vadd.f32 0.0, %v436
    %438 = vmatprep.mubr.f32.mxu0 0.0
    %439 = vmatmul.mubr.f32.gmra.mrb[0].mxu0 %v142
    %v440 = vpop.f32.mrb[0].mxu0
    %v441 = vadd.f32 0.0, %v440
    %v442 = vpop.f32.mrb[0].mxu0
    %v443 = vadd.f32 0.0, %v442
    %444 = vmatprep.mubr.f32.mxu0 0.0
    %445 = vmatmul.mubr.f32.gmra.mrb[0].mxu0 %v145
    %v446 = vpop.f32.mrb[0].mxu0
    %v447 = vadd.f32 0.0, %v446
    %v448 = vpop.f32.mrb[0].mxu0
    %v449 = vadd.f32 0.0, %v448
    %450 = vmatprep.mubr.f32.mxu0 0.0
    %451 = vmatmul.mubr.f32.gmra.mrb[0].mxu0 %v148
    %v452 = vpop.f32.mrb[0].mxu0
    %v453 = vadd.f32 0.0, %v452
    %v454 = vpop.f32.mrb[0].mxu0
    %v455 = vadd.f32 0.0, %v454
    %456 = vmatprep.mubr.f32.mxu0 0.0
    %457 = vmatmul.mubr.f32.gmra.mrb[0].mxu0 %v151
    %v458 = vpop.f32.mrb[0].mxu0
    %v459 = vadd.f32 0.0, %v458
    %v460 = vpop.f32.mrb[0].mxu0
    %v461 = vadd.f32 0.0, %v460
    %462 = vmatprep.mubr.f32.mxu0 0.0
    %463 = vmatmul.mubr.f32.gmra.mrb[0].mxu0 %v154
    %v464 = vpop.f32.mrb[0].mxu0
    %v465 = vadd.f32 0.0, %v464
    %v466 = vpop.f32.mrb[0].mxu0
    %v467 = vadd.f32 0.0, %v466
    %468 = vmatprep.mubr.f32.mxu0 0.0
    %469 = vmatmul.mubr.f32.gmra.mrb[0].mxu0 %v157
    %v470 = vpop.f32.mrb[0].mxu0
    %v471 = vadd.f32 0.0, %v470
    %v472 = vpop.f32.mrb[0].mxu0
    %v473 = vadd.f32 0.0, %v472
    %474 = vmatprep.mubr.f32.mxu0 0.0
    %475 = vmatmul.mubr.f32.gmra.mrb[0].mxu0 %v160
    %v476 = vpop.f32.mrb[0].mxu0
    %v477 = vadd.f32 0.0, %v476
    %v478 = vpop.f32.mrb[0].mxu0
    %v479 = vadd.f32 0.0, %v478
    %480 = vmatprep.mubr.f32.mxu0 0.0
    %481 = vmatmul.mubr.f32.gmra.mrb[0].mxu0 %v163
    %v482 = vpop.f32.mrb[0].mxu0
    %v483 = vadd.f32 0.0, %v482
    %v484 = vpop.f32.mrb[0].mxu0
    %v485 = vadd.f32 0.0, %v484
    %486 = vdwg.mxu0
    %487 = vst [vmem:[#allocation2] sm:$0xff] %v232
    %488 = vst [vmem:[#allocation2 + $0x8] sm:$0xff] %v234
    %489 = vst [vmem:[#allocation2 + $0x10] sm:$0xff] %v393
    %490 = vst [vmem:[#allocation2 + $0x18] sm:$0xff] %v395
    %491 = vst [vmem:[#allocation2 + $0x20] sm:$0xff] %v238
    %492 = vst [vmem:[#allocation2 + $0x28] sm:$0xff] %v240
    %493 = vst [vmem:[#allocation2 + $0x30] sm:$0xff] %v399
    %494 = vst [vmem:[#allocation2 + $0x38] sm:$0xff] %v401
    %495 = vst [vmem:[#allocation2 + $0x40] sm:$0xff] %v244
    %496 = vst [vmem:[#allocation2 + $0x48] sm:$0xff] %v246
    %497 = vst [vmem:[#allocation2 + $0x50] sm:$0xff] %v405
    %498 = vst [vmem:[#allocation2 + $0x58] sm:$0xff] %v407
    %499 = vst [vmem:[#allocation2 + $0x60] sm:$0xff] %v250
    %500 = vst [vmem:[#allocation2 + $0x68] sm:$0xff] %v252
    %501 = vst [vmem:[#allocation2 + $0x70] sm:$0xff] %v411
    %502 = vst [vmem:[#allocation2 + $0x78] sm:$0xff] %v413
    %503 = vst [vmem:[#allocation2 + $0x80] sm:$0xff] %v256
    %504 = vst [vmem:[#allocation2 + $0x88] sm:$0xff] %v258
    %505 = vst [vmem:[#allocation2 + $0x90] sm:$0xff] %v417
    %506 = vst [vmem:[#allocation2 + $0x98] sm:$0xff] %v419
    %507 = vst [vmem:[#allocation2 + $0xa0] sm:$0xff] %v262
    %508 = vst [vmem:[#allocation2 + $0xa8] sm:$0xff] %v264
    %509 = vst [vmem:[#allocation2 + $0xb0] sm:$0xff] %v423
    %510 = vst [vmem:[#allocation2 + $0xb8] sm:$0xff] %v425
    %511 = vst [vmem:[#allocation2 + $0xc0] sm:$0xff] %v268
    %512 = vst [vmem:[#allocation2 + $0xc8] sm:$0xff] %v270
    %513 = vst [vmem:[#allocation2 + $0xd0] sm:$0xff] %v429
    %514 = vst [vmem:[#allocation2 + $0xd8] sm:$0xff] %v431
    %515 = vst [vmem:[#allocation2 + $0xe0] sm:$0xff] %v274
    %516 = vst [vmem:[#allocation2 + $0xe8] sm:$0xff] %v276
    %517 = vst [vmem:[#allocation2 + $0xf0] sm:$0xff] %v435
    %518 = vst [vmem:[#allocation2 + $0xf8] sm:$0xff] %v437
    %519 = vst [vmem:[#allocation2 + $0x100] sm:$0xff] %v280
    %520 = vst [vmem:[#allocation2 + $0x108] sm:$0xff] %v282
    %521 = vst [vmem:[#allocation2 + $0x110] sm:$0xff] %v441
    %522 = vst [vmem:[#allocation2 + $0x118] sm:$0xff] %v443
    %523 = vst [vmem:[#allocation2 + $0x120] sm:$0xff] %v286
    %524 = vst [vmem:[#allocation2 + $0x128] sm:$0xff] %v288
    %525 = vst [vmem:[#allocation2 + $0x130] sm:$0xff] %v447
    %526 = vst [vmem:[#allocation2 + $0x138] sm:$0xff] %v449
    %527 = vst [vmem:[#allocation2 + $0x140] sm:$0xff] %v292
    %528 = vst [vmem:[#allocation2 + $0x148] sm:$0xff] %v294
    %529 = vst [vmem:[#allocation2 + $0x150] sm:$0xff] %v453
    %530 = vst [vmem:[#allocation2 + $0x158] sm:$0xff] %v455
    %531 = vst [vmem:[#allocation2 + $0x160] sm:$0xff] %v298
    %532 = vst [vmem:[#allocation2 + $0x168] sm:$0xff] %v300
    %533 = vst [vmem:[#allocation2 + $0x170] sm:$0xff] %v459
    %534 = vst [vmem:[#allocation2 + $0x178] sm:$0xff] %v461
    %535 = vst [vmem:[#allocation2 + $0x180] sm:$0xff] %v304
    %536 = vst [vmem:[#allocation2 + $0x188] sm:$0xff] %v306
    %537 = vst [vmem:[#allocation2 + $0x190] sm:$0xff] %v465
    %538 = vst [vmem:[#allocation2 + $0x198] sm:$0xff] %v467
    %539 = vst [vmem:[#allocation2 + $0x1a0] sm:$0xff] %v310
    %540 = vst [vmem:[#allocation2 + $0x1a8] sm:$0xff] %v312
    %541 = vst [vmem:[#allocation2 + $0x1b0] sm:$0xff] %v471
    %542 = vst [vmem:[#allocation2 + $0x1b8] sm:$0xff] %v473
    %543 = vst [vmem:[#allocation2 + $0x1c0] sm:$0xff] %v316
    %544 = vst [vmem:[#allocation2 + $0x1c8] sm:$0xff] %v318
    %545 = vst [vmem:[#allocation2 + $0x1d0] sm:$0xff] %v477
    %546 = vst [vmem:[#allocation2 + $0x1d8] sm:$0xff] %v479
    %547 = vst [vmem:[#allocation2 + $0x1e0] sm:$0xff] %v322
    %548 = vst [vmem:[#allocation2 + $0x1e8] sm:$0xff] %v324
    %549 = vst [vmem:[#allocation2 + $0x1f0] sm:$0xff] %v483
    %550 = vst [vmem:[#allocation2 + $0x1f8] sm:$0xff] %v485
    %551 = vst [vmem:[#allocation3] sm:$0xff] 0.0
    %552 = vst [vmem:[#allocation3 + $0x8] sm:$0xff] 0.0
    %553 = vst [vmem:[#allocation3 + $0x10] sm:$0xff] 0.0
    %554 = vst [vmem:[#allocation3 + $0x18] sm:$0xff] 0.0
    %555 = vst [vmem:[#allocation3 + $0x20] sm:$0xff] 0.0
    %556 = vst [vmem:[#allocation3 + $0x28] sm:$0xff] 0.0
    %557 = vst [vmem:[#allocation3 + $0x30] sm:$0xff] 0.0
    %558 = vst [vmem:[#allocation3 + $0x38] sm:$0xff] 0.0
    %559 = vst [vmem:[#allocation3 + $0x40] sm:$0xff] 0.0
    %560 = vst [vmem:[#allocation3 + $0x48] sm:$0xff] 0.0
    %561 = vst [vmem:[#allocation3 + $0x50] sm:$0xff] 0.0
    %562 = vst [vmem:[#allocation3 + $0x58] sm:$0xff] 0.0
    %563 = vst [vmem:[#allocation3 + $0x60] sm:$0xff] 0.0
    %564 = vst [vmem:[#allocation3 + $0x68] sm:$0xff] 0.0
    %565 = vst [vmem:[#allocation3 + $0x70] sm:$0xff] 0.0
    %566 = vst [vmem:[#allocation3 + $0x78] sm:$0xff] 0.0
    %567 = vst [vmem:[#allocation3 + $0x80] sm:$0xff] 0.0
    %568 = vst [vmem:[#allocation3 + $0x88] sm:$0xff] 0.0
    %569 = vst [vmem:[#allocation3 + $0x90] sm:$0xff] 0.0
    %570 = vst [vmem:[#allocation3 + $0x98] sm:$0xff] 0.0
    %571 = vst [vmem:[#allocation3 + $0xa0] sm:$0xff] 0.0
    %572 = vst [vmem:[#allocation3 + $0xa8] sm:$0xff] 0.0
    %573 = vst [vmem:[#allocation3 + $0xb0] sm:$0xff] 0.0
    %574 = vst [vmem:[#allocation3 + $0xb8] sm:$0xff] 0.0
    %575 = vst [vmem:[#allocation3 + $0xc0] sm:$0xff] 0.0
    %576 = vst [vmem:[#allocation3 + $0xc8] sm:$0xff] 0.0
    %577 = vst [vmem:[#allocation3 + $0xd0] sm:$0xff] 0.0
    %578 = vst [vmem:[#allocation3 + $0xd8] sm:$0xff] 0.0
    %579 = vst [vmem:[#allocation3 + $0xe0] sm:$0xff] 0.0
    %580 = vst [vmem:[#allocation3 + $0xe8] sm:$0xff] 0.0
    %581 = vst [vmem:[#allocation3 + $0xf0] sm:$0xff] 0.0
    %582 = vst [vmem:[#allocation3 + $0xf8] sm:$0xff] 0.0
    %583 = vst [vmem:[#allocation3 + $0x100] sm:$0xff] 0.0
    %584 = vst [vmem:[#allocation3 + $0x108] sm:$0xff] 0.0
    %585 = vst [vmem:[#allocation3 + $0x110] sm:$0xff] 0.0
    %586 = vst [vmem:[#allocation3 + $0x118] sm:$0xff] 0.0
    %587 = vst [vmem:[#allocation3 + $0x120] sm:$0xff] 0.0
    %588 = vst [vmem:[#allocation3 + $0x128] sm:$0xff] 0.0
    %589 = vst [vmem:[#allocation3 + $0x130] sm:$0xff] 0.0
    %590 = vst [vmem:[#allocation3 + $0x138] sm:$0xff] 0.0
    %591 = vst [vmem:[#allocation3 + $0x140] sm:$0xff] 0.0
    %592 = vst [vmem:[#allocation3 + $0x148] sm:$0xff] 0.0
    %593 = vst [vmem:[#allocation3 + $0x150] sm:$0xff] 0.0
    %594 = vst [vmem:[#allocation3 + $0x158] sm:$0xff] 0.0
    %595 = vst [vmem:[#allocation3 + $0x160] sm:$0xff] 0.0
    %596 = vst [vmem:[#allocation3 + $0x168] sm:$0xff] 0.0
    %597 = vst [vmem:[#allocation3 + $0x170] sm:$0xff] 0.0
    %598 = vst [vmem:[#allocation3 + $0x178] sm:$0xff] 0.0
    %599 = vst [vmem:[#allocation3 + $0x180] sm:$0xff] 0.0
    %600 = vst [vmem:[#allocation3 + $0x188] sm:$0xff] 0.0
    %601 = vst [vmem:[#allocation3 + $0x190] sm:$0xff] 0.0
    %602 = vst [vmem:[#allocation3 + $0x198] sm:$0xff] 0.0
    %603 = vst [vmem:[#allocation3 + $0x1a0] sm:$0xff] 0.0
    %604 = vst [vmem:[#allocation3 + $0x1a8] sm:$0xff] 0.0
    %605 = vst [vmem:[#allocation3 + $0x1b0] sm:$0xff] 0.0
    %606 = vst [vmem:[#allocation3 + $0x1b8] sm:$0xff] 0.0
    %607 = vst [vmem:[#allocation3 + $0x1c0] sm:$0xff] 0.0
    %608 = vst [vmem:[#allocation3 + $0x1c8] sm:$0xff] 0.0
    %609 = vst [vmem:[#allocation3 + $0x1d0] sm:$0xff] 0.0
    %610 = vst [vmem:[#allocation3 + $0x1d8] sm:$0xff] 0.0
    %611 = vst [vmem:[#allocation3 + $0x1e0] sm:$0xff] 0.0
    %612 = vst [vmem:[#allocation3 + $0x1e8] sm:$0xff] 0.0
    %613 = vst [vmem:[#allocation3 + $0x1f0] sm:$0xff] 0.0
    %614 = vst [vmem:[#allocation3 + $0x1f8] sm:$0xff] 0.0
    %v615 = vld [vmem:[%s2] sm:$0xff]
    %v616 = vld [vmem:[%s2 + $0x8] sm:$0xff]
    %v617 = vld [vmem:[%s2 + $0x10] sm:$0xff]
    %v618 = vld [vmem:[%s2 + $0x18] sm:$0xff]
    %v619 = vld [vmem:[%s2 + $0x20] sm:$0xff]
    %v620 = vld [vmem:[%s2 + $0x28] sm:$0xff]
    %v621 = vld [vmem:[%s2 + $0x30] sm:$0xff]
    %v622 = vld [vmem:[%s2 + $0x38] sm:$0xff]
    %v623 = vld [vmem:[#allocation5] sm:$0xff]
    %v624 = vld [vmem:[#allocation5 + $0x8] sm:$0xff]
    %v625 = vld [vmem:[#allocation5 + $0x10] sm:$0xff]
    %v626 = vld [vmem:[#allocation5 + $0x18] sm:$0xff]
    %v627 = vld [vmem:[#allocation5 + $0x20] sm:$0xff]
    %v628 = vld [vmem:[#allocation5 + $0x28] sm:$0xff]
    %v629 = vld [vmem:[#allocation5 + $0x30] sm:$0xff]
    %v630 = vld [vmem:[#allocation5 + $0x38] sm:$0xff]
    %v631 = vld [vmem:[#allocation5 + $0x40] sm:$0xff]
    %v632 = vld [vmem:[#allocation5 + $0x48] sm:$0xff]
    %v633 = vld [vmem:[#allocation5 + $0x50] sm:$0xff]
    %v634 = vld [vmem:[#allocation5 + $0x58] sm:$0xff]
    %v635 = vld [vmem:[#allocation5 + $0x60] sm:$0xff]
    %v636 = vld [vmem:[#allocation5 + $0x68] sm:$0xff]
    %v637 = vld [vmem:[#allocation5 + $0x70] sm:$0xff]
    %v638 = vld [vmem:[#allocation5 + $0x78] sm:$0xff]
    %v639 = vld [vmem:[#allocation5 + $0x80] sm:$0xff]
    %v640 = vld [vmem:[#allocation5 + $0x88] sm:$0xff]
    %v641 = vld [vmem:[#allocation5 + $0x90] sm:$0xff]
    %v642 = vld [vmem:[#allocation5 + $0x98] sm:$0xff]
    %v643 = vld [vmem:[#allocation5 + $0xa0] sm:$0xff]
    %v644 = vld [vmem:[#allocation5 + $0xa8] sm:$0xff]
    %v645 = vld [vmem:[#allocation5 + $0xb0] sm:$0xff]
    %v646 = vld [vmem:[#allocation5 + $0xb8] sm:$0xff]
    %v647 = vld [vmem:[#allocation5 + $0xc0] sm:$0xff]
    %v648 = vld [vmem:[#allocation5 + $0xc8] sm:$0xff]
    %v649 = vld [vmem:[#allocation5 + $0xd0] sm:$0xff]
    %v650 = vld [vmem:[#allocation5 + $0xd8] sm:$0xff]
    %v651 = vld [vmem:[#allocation5 + $0xe0] sm:$0xff]
    %v652 = vld [vmem:[#allocation5 + $0xe8] sm:$0xff]
    %v653 = vld [vmem:[#allocation5 + $0xf0] sm:$0xff]
    %v654 = vld [vmem:[#allocation5 + $0xf8] sm:$0xff]
    %v655 = vld [vmem:[#allocation5 + $0x100] sm:$0xff]
    %v656 = vld [vmem:[#allocation5 + $0x108] sm:$0xff]
    %v657 = vld [vmem:[#allocation5 + $0x110] sm:$0xff]
    %v658 = vld [vmem:[#allocation5 + $0x118] sm:$0xff]
    %v659 = vld [vmem:[#allocation5 + $0x120] sm:$0xff]
    %v660 = vld [vmem:[#allocation5 + $0x128] sm:$0xff]
    %v661 = vld [vmem:[#allocation5 + $0x130] sm:$0xff]
    %v662 = vld [vmem:[#allocation5 + $0x138] sm:$0xff]
    %v663 = vld [vmem:[#allocation5 + $0x140] sm:$0xff]
    %v664 = vld [vmem:[#allocation5 + $0x148] sm:$0xff]
    %v665 = vld [vmem:[#allocation5 + $0x150] sm:$0xff]
    %v666 = vld [vmem:[#allocation5 + $0x158] sm:$0xff]
    %v667 = vld [vmem:[#allocation5 + $0x160] sm:$0xff]
    %v668 = vld [vmem:[#allocation5 + $0x168] sm:$0xff]
    %v669 = vld [vmem:[#allocation5 + $0x170] sm:$0xff]
    %v670 = vld [vmem:[#allocation5 + $0x178] sm:$0xff]
    %v671 = vld [vmem:[#allocation5 + $0x180] sm:$0xff]
    %v672 = vld [vmem:[#allocation5 + $0x188] sm:$0xff]
    %v673 = vld [vmem:[#allocation5 + $0x190] sm:$0xff]
    %v674 = vld [vmem:[#allocation5 + $0x198] sm:$0xff]
    %v675 = vld [vmem:[#allocation5 + $0x1a0] sm:$0xff]
    %v676 = vld [vmem:[#allocation5 + $0x1a8] sm:$0xff]
    %v677 = vld [vmem:[#allocation5 + $0x1b0] sm:$0xff]
    %v678 = vld [vmem:[#allocation5 + $0x1b8] sm:$0xff]
    %v679 = vld [vmem:[#allocation5 + $0x1c0] sm:$0xff]
    %v680 = vld [vmem:[#allocation5 + $0x1c8] sm:$0xff]
    %v681 = vld [vmem:[#allocation5 + $0x1d0] sm:$0xff]
    %v682 = vld [vmem:[#allocation5 + $0x1d8] sm:$0xff]
    %v683 = vld [vmem:[#allocation5 + $0x1e0] sm:$0xff]
    %v684 = vld [vmem:[#allocation5 + $0x1e8] sm:$0xff]
    %v685 = vld [vmem:[#allocation5 + $0x1f0] sm:$0xff]
    %v686 = vld [vmem:[#allocation5 + $0x1f8] sm:$0xff]
    %v687 = vld [vmem:[#allocation5 + $0x200] sm:$0xff]
    %v688 = vld [vmem:[#allocation5 + $0x208] sm:$0xff]
    %v689 = vld [vmem:[#allocation5 + $0x210] sm:$0xff]
    %v690 = vld [vmem:[#allocation5 + $0x218] sm:$0xff]
    %v691 = vld [vmem:[#allocation5 + $0x220] sm:$0xff]
    %v692 = vld [vmem:[#allocation5 + $0x228] sm:$0xff]
    %v693 = vld [vmem:[#allocation5 + $0x230] sm:$0xff]
    %v694 = vld [vmem:[#allocation5 + $0x238] sm:$0xff]
    %v695 = vld [vmem:[#allocation5 + $0x240] sm:$0xff]
    %v696 = vld [vmem:[#allocation5 + $0x248] sm:$0xff]
    %v697 = vld [vmem:[#allocation5 + $0x250] sm:$0xff]
    %v698 = vld [vmem:[#allocation5 + $0x258] sm:$0xff]
    %v699 = vld [vmem:[#allocation5 + $0x260] sm:$0xff]
    %v700 = vld [vmem:[#allocation5 + $0x268] sm:$0xff]
    %v701 = vld [vmem:[#allocation5 + $0x270] sm:$0xff]
    %v702 = vld [vmem:[#allocation5 + $0x278] sm:$0xff]
    %v703 = vld [vmem:[#allocation5 + $0x280] sm:$0xff]
    %v704 = vld [vmem:[#allocation5 + $0x288] sm:$0xff]
    %v705 = vld [vmem:[#allocation5 + $0x290] sm:$0xff]
    %v706 = vld [vmem:[#allocation5 + $0x298] sm:$0xff]
    %v707 = vld [vmem:[#allocation5 + $0x2a0] sm:$0xff]
    %v708 = vld [vmem:[#allocation5 + $0x2a8] sm:$0xff]
    %v709 = vld [vmem:[#allocation5 + $0x2b0] sm:$0xff]
    %v710 = vld [vmem:[#allocation5 + $0x2b8] sm:$0xff]
    %v711 = vld [vmem:[#allocation5 + $0x2c0] sm:$0xff]
    %v712 = vld [vmem:[#allocation5 + $0x2c8] sm:$0xff]
    %v713 = vld [vmem:[#allocation5 + $0x2d0] sm:$0xff]
    %v714 = vld [vmem:[#allocation5 + $0x2d8] sm:$0xff]
    %v715 = vld [vmem:[#allocation5 + $0x2e0] sm:$0xff]
    %v716 = vld [vmem:[#allocation5 + $0x2e8] sm:$0xff]
    %v717 = vld [vmem:[#allocation5 + $0x2f0] sm:$0xff]
    %v718 = vld [vmem:[#allocation5 + $0x2f8] sm:$0xff]
    %v719 = vld [vmem:[#allocation5 + $0x300] sm:$0xff]
    %v720 = vld [vmem:[#allocation5 + $0x308] sm:$0xff]
    %v721 = vld [vmem:[#allocation5 + $0x310] sm:$0xff]
    %v722 = vld [vmem:[#allocation5 + $0x318] sm:$0xff]
    %v723 = vld [vmem:[#allocation5 + $0x320] sm:$0xff]
    %v724 = vld [vmem:[#allocation5 + $0x328] sm:$0xff]
    %v725 = vld [vmem:[#allocation5 + $0x330] sm:$0xff]
    %v726 = vld [vmem:[#allocation5 + $0x338] sm:$0xff]
    %v727 = vld [vmem:[#allocation5 + $0x340] sm:$0xff]
    %v728 = vld [vmem:[#allocation5 + $0x348] sm:$0xff]
    %v729 = vld [vmem:[#allocation5 + $0x350] sm:$0xff]
    %v730 = vld [vmem:[#allocation5 + $0x358] sm:$0xff]
    %v731 = vld [vmem:[#allocation5 + $0x360] sm:$0xff]
    %v732 = vld [vmem:[#allocation5 + $0x368] sm:$0xff]
    %v733 = vld [vmem:[#allocation5 + $0x370] sm:$0xff]
    %v734 = vld [vmem:[#allocation5 + $0x378] sm:$0xff]
    %v735 = vld [vmem:[#allocation5 + $0x380] sm:$0xff]
    %v736 = vld [vmem:[#allocation5 + $0x388] sm:$0xff]
    %v737 = vld [vmem:[#allocation5 + $0x390] sm:$0xff]
    %v738 = vld [vmem:[#allocation5 + $0x398] sm:$0xff]
    %v739 = vld [vmem:[#allocation5 + $0x3a0] sm:$0xff]
    %v740 = vld [vmem:[#allocation5 + $0x3a8] sm:$0xff]
    %v741 = vld [vmem:[#allocation5 + $0x3b0] sm:$0xff]
    %v742 = vld [vmem:[#allocation5 + $0x3b8] sm:$0xff]
    %v743 = vld [vmem:[#allocation5 + $0x3c0] sm:$0xff]
    %v744 = vld [vmem:[#allocation5 + $0x3c8] sm:$0xff]
    %v745 = vld [vmem:[#allocation5 + $0x3d0] sm:$0xff]
    %v746 = vld [vmem:[#allocation5 + $0x3d8] sm:$0xff]
    %v747 = vld [vmem:[#allocation5 + $0x3e0] sm:$0xff]
    %v748 = vld [vmem:[#allocation5 + $0x3e8] sm:$0xff]
    %v749 = vld [vmem:[#allocation5 + $0x3f0] sm:$0xff]
    %v750 = vld [vmem:[#allocation5 + $0x3f8] sm:$0xff]
    %v751 = vld [vmem:[#allocation2] sm:$0xff]
    %v752 = vld [vmem:[#allocation2 + $0x8] sm:$0xff]
    %v753 = vld [vmem:[#allocation2 + $0x10] sm:$0xff]
    %v754 = vld [vmem:[#allocation2 + $0x18] sm:$0xff]
    %v755 = vld [vmem:[#allocation2 + $0x20] sm:$0xff]
    %v756 = vld [vmem:[#allocation2 + $0x28] sm:$0xff]
    %v757 = vld [vmem:[#allocation2 + $0x30] sm:$0xff]
    %v758 = vld [vmem:[#allocation2 + $0x38] sm:$0xff]
    %759 = vmatprep.subr.mxu0 %v624
    %760 = vmatpush1.msra.mxu0 %v623
    %761 = vmatprep.subr.mxu0 %v628
    %762 = vmatpush1.msra.mxu0 %v627
    %763 = vmatprep.subr.mxu0 %v632
    %764 = vmatpush1.msra.mxu0 %v631
    %765 = vmatprep.subr.mxu0 %v636
    %766 = vmatpush1.msra.mxu0 %v635
    %767 = vmatprep.subr.mxu0 %v640
    %768 = vmatpush1.msra.mxu0 %v639
    %769 = vmatprep.subr.mxu0 %v644
    %770 = vmatpush1.msra.mxu0 %v643
    %771 = vmatprep.subr.mxu0 %v648
    %772 = vmatpush1.msra.mxu0 %v647
    %773 = vmatprep.subr.mxu0 %v652
    %774 = vmatpush1.msra.mxu0 %v651
    %775 = vmatprep.subr.mxu0 %v656
    %776 = vmatpush1.msra.mxu0 %v655
    %777 = vmatprep.subr.mxu0 %v660
    %778 = vmatpush1.msra.mxu0 %v659
    %779 = vmatprep.subr.mxu0 %v664
    %780 = vmatpush1.msra.mxu0 %v663
    %781 = vmatprep.subr.mxu0 %v668
    %782 = vmatpush1.msra.mxu0 %v667
    %783 = vmatprep.subr.mxu0 %v672
    %784 = vmatpush1.msra.mxu0 %v671
    %785 = vmatprep.subr.mxu0 %v676
    %786 = vmatpush1.msra.mxu0 %v675
    %787 = vmatprep.subr.mxu0 %v680
    %788 = vmatpush1.msra.mxu0 %v679
    %789 = vmatprep.subr.mxu0 %v684
    %790 = vmatpush1.msra.mxu0 %v683
    %791 = vmatprep.subr.mxu0 %v688
    %792 = vmatpush1.msra.mxu0 %v687
    %793 = vmatprep.subr.mxu0 %v692
    %794 = vmatpush1.msra.mxu0 %v691
    %795 = vmatprep.subr.mxu0 %v696
    %796 = vmatpush1.msra.mxu0 %v695
    %797 = vmatprep.subr.mxu0 %v700
    %798 = vmatpush1.msra.mxu0 %v699
    %799 = vmatprep.subr.mxu0 %v704
    %800 = vmatpush1.msra.mxu0 %v703
    %801 = vmatprep.subr.mxu0 %v708
    %802 = vmatpush1.msra.mxu0 %v707
    %803 = vmatprep.subr.mxu0 %v712
    %804 = vmatpush1.msra.mxu0 %v711
    %805 = vmatprep.subr.mxu0 %v716
    %806 = vmatpush1.msra.mxu0 %v715
    %807 = vmatprep.subr.mxu0 %v720
    %808 = vmatpush1.msra.mxu0 %v719
    %809 = vmatprep.subr.mxu0 %v724
    %810 = vmatpush1.msra.mxu0 %v723
    %811 = vmatprep.subr.mxu0 %v728
    %812 = vmatpush1.msra.mxu0 %v727
    %813 = vmatprep.subr.mxu0 %v732
    %814 = vmatpush1.msra.mxu0 %v731
    %815 = vmatprep.subr.mxu0 %v736
    %816 = vmatpush1.msra.mxu0 %v735
    %817 = vmatprep.subr.mxu0 %v740
    %818 = vmatpush1.msra.mxu0 %v739
    %819 = vmatprep.subr.mxu0 %v744
    %820 = vmatpush1.msra.mxu0 %v743
    %821 = vmatprep.subr.mxu0 %v748
    %822 = vmatpush1.msra.mxu0 %v747
    %823 = vmatprep.mubr.f32.mxu0 0.0
    %824 = vmatmul.mubr.f32.gmra.mrb[0].mxu0 0.0
    %v825 = vpop.f32.mrb[0].mxu0
    %v826 = vadd.f32 %v751, %v825
    %v827 = vpop.f32.mrb[0].mxu0
    %v828 = vadd.f32 %v752, %v827
    %829 = vmatprep.mubr.f32.mxu0 0.0
    %830 = vmatmul.mubr.f32.gmra.mrb[0].mxu0 0.0
    %v831 = vpop.f32.mrb[0].mxu0
    %v832 = vadd.f32 %v755, %v831
    %v833 = vpop.f32.mrb[0].mxu0
    %v834 = vadd.f32 %v756, %v833
    %835 = vdwg.mxu0
    %836 = vmatprep.subr.mxu0 %v626
    %837 = vmatpush1.msra.mxu0 %v625
    %838 = vmatprep.subr.mxu0 %v630
    %839 = vmatpush1.msra.mxu0 %v629
    %840 = vmatprep.subr.mxu0 %v634
    %841 = vmatpush1.msra.mxu0 %v633
    %842 = vmatprep.subr.mxu0 %v638
    %843 = vmatpush1.msra.mxu0 %v637
    %844 = vmatprep.subr.mxu0 %v642
    %845 = vmatpush1.msra.mxu0 %v641
    %846 = vmatprep.subr.mxu0 %v646
    %847 = vmatpush1.msra.mxu0 %v645
    %848 = vmatprep.subr.mxu0 %v650
    %849 = vmatpush1.msra.mxu0 %v649
    %850 = vmatprep.subr.mxu0 %v654
    %851 = vmatpush1.msra.mxu0 %v653
    %852 = vmatprep.subr.mxu0 %v658
    %853 = vmatpush1.msra.mxu0 %v657
    %854 = vmatprep.subr.mxu0 %v662
    %855 = vmatpush1.msra.mxu0 %v661
    %856 = vmatprep.subr.mxu0 %v666
    %857 = vmatpush1.msra.mxu0 %v665
    %858 = vmatprep.subr.mxu0 %v670
    %859 = vmatpush1.msra.mxu0 %v669
    %860 = vmatprep.subr.mxu0 %v674
    %861 = vmatpush1.msra.mxu0 %v673
    %862 = vmatprep.subr.mxu0 %v678
    %863 = vmatpush1.msra.mxu0 %v677
    %864 = vmatprep.subr.mxu0 %v682
    %865 = vmatpush1.msra.mxu0 %v681
    %866 = vmatprep.subr.mxu0 %v686
    %867 = vmatpush1.msra.mxu0 %v685
    %868 = vmatprep.subr.mxu0 %v690
    %869 = vmatpush1.msra.mxu0 %v689
    %870 = vmatprep.subr.mxu0 %v694
    %871 = vmatpush1.msra.mxu0 %v693
    %872 = vmatprep.subr.mxu0 %v698
    %873 = vmatpush1.msra.mxu0 %v697
    %874 = vmatprep.subr.mxu0 %v702
    %875 = vmatpush1.msra.mxu0 %v701
    %876 = vmatprep.subr.mxu0 %v706
    %877 = vmatpush1.msra.mxu0 %v705
    %878 = vmatprep.subr.mxu0 %v710
    %879 = vmatpush1.msra.mxu0 %v709
    %880 = vmatprep.subr.mxu0 %v714
    %881 = vmatpush1.msra.mxu0 %v713
    %882 = vmatprep.subr.mxu0 %v718
    %883 = vmatpush1.msra.mxu0 %v717
    %884 = vmatprep.subr.mxu0 %v722
    %885 = vmatpush1.msra.mxu0 %v721
    %886 = vmatprep.subr.mxu0 %v726
    %887 = vmatpush1.msra.mxu0 %v725
    %888 = vmatprep.subr.mxu0 %v730
    %889 = vmatpush1.msra.mxu0 %v729
    %890 = vmatprep.subr.mxu0 %v734
    %891 = vmatpush1.msra.mxu0 %v733
    %892 = vmatprep.subr.mxu0 %v738
    %893 = vmatpush1.msra.mxu0 %v737
    %894 = vmatprep.subr.mxu0 %v742
    %895 = vmatpush1.msra.mxu0 %v741
    %896 = vmatprep.subr.mxu0 %v746
    %897 = vmatpush1.msra.mxu0 %v745
    %898 = vmatprep.subr.mxu0 %v750
    %899 = vmatpush1.msra.mxu0 %v749
    %900 = vmatprep.mubr.f32.mxu0 0.0
    %901 = vmatmul.mubr.f32.gmra.mrb[0].mxu0 0.0
    %v902 = vpop.f32.mrb[0].mxu0
    %v903 = vadd.f32 %v753, %v902
    %v904 = vpop.f32.mrb[0].mxu0
    %v905 = vadd.f32 %v754, %v904
    %906 = vmatprep.mubr.f32.mxu0 0.0
    %907 = vmatmul.mubr.f32.gmra.mrb[0].mxu0 0.0
    %v908 = vpop.f32.mrb[0].mxu0
    %v909 = vadd.f32 %v757, %v908
    %v910 = vpop.f32.mrb[0].mxu0
    %v911 = vadd.f32 %v758, %v910
    %912 = vdwg.mxu0
    %v913 = vadd.f32 %v826, %v615
    %v914 = vadd.f32 %v828, %v616
    %v915 = vadd.f32 %v903, %v617
    %v916 = vadd.f32 %v905, %v618
    %v917 = vadd.f32 %v832, %v619
    %v918 = vadd.f32 %v834, %v620
    %v919 = vadd.f32 %v909, %v621
    %v920 = vadd.f32 %v911, %v622
    %v921 = vxor.u32 %v913, 2147483648
    %v922 = vxor.u32 %v917, 2147483648
    %v923 = vmul.f32 %v921, 1.442695
    %v924 = vpow.pop %v923
    %v925 = vmul.f32 %v922, 1.442695
    %v926 = vpow.pop %v925
    %v927 = vadd.f32 %v924, 1.0
    %v928 = vadd.f32 %v926, 1.0
    %v929 = vrcp.pop %v927
    %v930 = vmul.f32 1.0, %v929
    %v931 = vrcp.pop %v928
    %v932 = vmul.f32 1.0, %v931
    %v933 = vxor.u32 %v914, 2147483648
    %v934 = vxor.u32 %v918, 2147483648
    %v935 = vmul.f32 %v933, 1.442695
    %v936 = vpow.pop %v935
    %v937 = vmul.f32 %v934, 1.442695
    %v938 = vpow.pop %v937
    %v939 = vadd.f32 %v936, 1.0
    %v940 = vadd.f32 %v938, 1.0
    %v941 = vrcp.pop %v939
    %v942 = vmul.f32 1.0, %v941
    %v943 = vrcp.pop %v940
    %v944 = vmul.f32 1.0, %v943
    %v945 = vtanh.pop %v915
    %v946 = vtanh.pop %v919
    %v947 = vxor.u32 %v916, 2147483648
    %v948 = vxor.u32 %v920, 2147483648
    %v949 = vmul.f32 %v947, 1.442695
    %v950 = vpow.pop %v949
    %v951 = vmul.f32 %v948, 1.442695
    %v952 = vpow.pop %v951
    %v953 = vadd.f32 %v950, 1.0
    %v954 = vadd.f32 %v952, 1.0
    %v955 = vrcp.pop %v953
    %v956 = vmul.f32 1.0, %v955
    %v957 = vrcp.pop %v954
    %v958 = vmul.f32 1.0, %v957
    %v959 = vmul.f32 %v942, 0.0
    %v960 = vmul.f32 %v944, 0.0
    %v961 = vmul.f32 %v930, %v945
    %v962 = vmul.f32 %v932, %v946
    %v963 = vadd.f32 %v959, %v961
    %v964 = vadd.f32 %v960, %v962
    %v965 = vtanh.pop %v963
    %v966 = vtanh.pop %v964
    %v967 = vmul.f32 %v956, %v965
    %v968 = vmul.f32 %v958, %v966
    %v969 = vmul.f32 %v967, %v92
    %v970 = vmul.f32 %v968, %v93
    %v971 = vmul.f32 %v967, %v94
    %v972 = vmul.f32 %v968, %v95
    %973 = vst [vmem:[#allocation3] sm:$0xff] %v967
    %974 = vst [vmem:[#allocation3 + $0x1c8] sm:$0xff] %v968
    %975 = vst [vmem:[#allocation3 + $0x1f0] sm:$0xff] %v967
    %976 = vst [vmem:[#allocation3 + $0x38] sm:$0xff] %v968
    %v977 = vld [vmem:[#allocation5] sm:$0xff]
    %v978 = vld [vmem:[#allocation5 + $0x8] sm:$0xff]
    %v979 = vld [vmem:[#allocation5 + $0x10] sm:$0xff]
    %v980 = vld [vmem:[#allocation5 + $0x18] sm:$0xff]
    %v981 = vld [vmem:[#allocation5 + $0x20] sm:$0xff]
    %v982 = vld [vmem:[#allocation5 + $0x28] sm:$0xff]
    %v983 = vld [vmem:[#allocation5 + $0x30] sm:$0xff]
    %v984 = vld [vmem:[#allocation5 + $0x38] sm:$0xff]
    %v985 = vld [vmem:[#allocation5 + $0x40] sm:$0xff]
    %v986 = vld [vmem:[#allocation5 + $0x48] sm:$0xff]
    %v987 = vld [vmem:[#allocation5 + $0x50] sm:$0xff]
    %v988 = vld [vmem:[#allocation5 + $0x58] sm:$0xff]
    %v989 = vld [vmem:[#allocation5 + $0x60] sm:$0xff]
    %v990 = vld [vmem:[#allocation5 + $0x68] sm:$0xff]
    %v991 = vld [vmem:[#allocation5 + $0x70] sm:$0xff]
    %v992 = vld [vmem:[#allocation5 + $0x78] sm:$0xff]
    %v993 = vld [vmem:[#allocation5 + $0x80] sm:$0xff]
    %v994 = vld [vmem:[#allocation5 + $0x88] sm:$0xff]
    %v995 = vld [vmem:[#allocation5 + $0x90] sm:$0xff]
    %v996 = vld [vmem:[#allocation5 + $0x98] sm:$0xff]
    %v997 = vld [vmem:[#allocation5 + $0xa0] sm:$0xff]
    %v998 = vld [vmem:[#allocation5 + $0xa8] sm:$0xff]
    %v999 = vld [vmem:[#allocation5 + $0xb0] sm:$0xff]
    %v1000 = vld [vmem:[#allocation5 + $0xb8] sm:$0xff]
    %v1001 = vld [vmem:[#allocation5 + $0xc0] sm:$0xff]
    %v1002 = vld [vmem:[#allocation5 + $0xc8] sm:$0xff]
    %v1003 = vld [vmem:[#allocation5 + $0xd0] sm:$0xff]
    %v1004 = vld [vmem:[#allocation5 + $0xd8] sm:$0xff]
    %v1005 = vld [vmem:[#allocation5 + $0xe0] sm:$0xff]
    %v1006 = vld [vmem:[#allocation5 + $0xe8] sm:$0xff]
    %v1007 = vld [vmem:[#allocation5 + $0xf0] sm:$0xff]
    %v1008 = vld [vmem:[#allocation5 + $0xf8] sm:$0xff]
    %v1009 = vld [vmem:[#allocation5 + $0x100] sm:$0xff]
    %v1010 = vld [vmem:[#allocation5 + $0x108] sm:$0xff]
    %v1011 = vld [vmem:[#allocation5 + $0x110] sm:$0xff]
    %v1012 = vld [vmem:[#allocation5 + $0x118] sm:$0xff]
    %v1013 = vld [vmem:[#allocation5 + $0x120] sm:$0xff]
    %v1014 = vld [vmem:[#allocation5 + $0x128] sm:$0xff]
    %v1015 = vld [vmem:[#allocation5 + $0x130] sm:$0xff]
    %v1016 = vld [vmem:[#allocation5 + $0x138] sm:$0xff]
    %v1017 = vld [vmem:[#allocation5 + $0x140] sm:$0xff]
    %v1018 = vld [vmem:[#allocation5 + $0x148] sm:$0xff]
    %v1019 = vld [vmem:[#allocation5 + $0x150] sm:$0xff]
    %v1020 = vld [vmem:[#allocation5 + $0x158] sm:$0xff]
    %v1021 = vld [vmem:[#allocation5 + $0x160] sm:$0xff]
    %v1022 = vld [vmem:[#allocation5 + $0x168] sm:$0xff]
    %v1023 = vld [vmem:[#allocation5 + $0x170] sm:$0xff]
    %v1024 = vld [vmem:[#allocation5 + $0x178] sm:$0xff]
    %v1025 = vld [vmem:[#allocation5 + $0x180] sm:$0xff]
    %v1026 = vld [vmem:[#allocation5 + $0x188] sm:$0xff]
    %v1027 = vld [vmem:[#allocation5 + $0x190] sm:$0xff]
    %v1028 = vld [vmem:[#allocation5 + $0x198] sm:$0xff]
    %v1029 = vld [vmem:[#allocation5 + $0x1a0] sm:$0xff]
    %v1030 = vld [vmem:[#allocation5 + $0x1a8] sm:$0xff]
    %v1031 = vld [vmem:[#allocation5 + $0x1b0] sm:$0xff]
    %v1032 = vld [vmem:[#allocation5 + $0x1b8] sm:$0xff]
    %v1033 = vld [vmem:[#allocation5 + $0x1c0] sm:$0xff]
    %v1034 = vld [vmem:[#allocation5 + $0x1c8] sm:$0xff]
    %v1035 = vld [vmem:[#allocation5 + $0x1d0] sm:$0xff]
    %v1036 = vld [vmem:[#allocation5 + $0x1d8] sm:$0xff]
    %v1037 = vld [vmem:[#allocation5 + $0x1e0] sm:$0xff]
    %v1038 = vld [vmem:[#allocation5 + $0x1e8] sm:$0xff]
    %v1039 = vld [vmem:[#allocation5 + $0x1f0] sm:$0xff]
    %v1040 = vld [vmem:[#allocation5 + $0x1f8] sm:$0xff]
    %v1041 = vld [vmem:[#allocation5 + $0x200] sm:$0xff]
    %v1042 = vld [vmem:[#allocation5 + $0x208] sm:$0xff]
    %v1043 = vld [vmem:[#allocation5 + $0x210] sm:$0xff]
    %v1044 = vld [vmem:[#allocation5 + $0x218] sm:$0xff]
    %v1045 = vld [vmem:[#allocation5 + $0x220] sm:$0xff]
    %v1046 = vld [vmem:[#allocation5 + $0x228] sm:$0xff]
    %v1047 = vld [vmem:[#allocation5 + $0x230] sm:$0xff]
    %v1048 = vld [vmem:[#allocation5 + $0x238] sm:$0xff]
    %v1049 = vld [vmem:[#allocation5 + $0x240] sm:$0xff]
    %v1050 = vld [vmem:[#allocation5 + $0x248] sm:$0xff]
    %v1051 = vld [vmem:[#allocation5 + $0x250] sm:$0xff]
    %v1052 = vld [vmem:[#allocation5 + $0x258] sm:$0xff]
    %v1053 = vld [vmem:[#allocation5 + $0x260] sm:$0xff]
    %v1054 = vld [vmem:[#allocation5 + $0x268] sm:$0xff]
    %v1055 = vld [vmem:[#allocation5 + $0x270] sm:$0xff]
    %v1056 = vld [vmem:[#allocation5 + $0x278] sm:$0xff]
    %v1057 = vld [vmem:[#allocation5 + $0x280] sm:$0xff]
    %v1058 = vld [vmem:[#allocation5 + $0x288] sm:$0xff]
    %v1059 = vld [vmem:[#allocation5 + $0x290] sm:$0xff]
    %v1060 = vld [vmem:[#allocation5 + $0x298] sm:$0xff]
    %v1061 = vld [vmem:[#allocation5 + $0x2a0] sm:$0xff]
    %v1062 = vld [vmem:[#allocation5 + $0x2a8] sm:$0xff]
    %v1063 = vld [vmem:[#allocation5 + $0x2b0] sm:$0xff]
    %v1064 = vld [vmem:[#allocation5 + $0x2b8] sm:$0xff]
    %v1065 = vld [vmem:[#allocation5 + $0x2c0] sm:$0xff]
    %v1066 = vld [vmem:[#allocation5 + $0x2c8] sm:$0xff]
    %v1067 = vld [vmem:[#allocation5 + $0x2d0] sm:$0xff]
    %v1068 = vld [vmem:[#allocation5 + $0x2d8] sm:$0xff]
    %v1069 = vld [vmem:[#allocation5 + $0x2e0] sm:$0xff]
    %v1070 = vld [vmem:[#allocation5 + $0x2e8] sm:$0xff]
    %v1071 = vld [vmem:[#allocation5 + $0x2f0] sm:$0xff]
    %v1072 = vld [vmem:[#allocation5 + $0x2f8] sm:$0xff]
    %v1073 = vld [vmem:[#allocation5 + $0x300] sm:$0xff]
    %v1074 = vld [vmem:[#allocation5 + $0x308] sm:$0xff]
    %v1075 = vld [vmem:[#allocation5 + $0x310] sm:$0xff]
    %v1076 = vld [vmem:[#allocation5 + $0x318] sm:$0xff]
    %v1077 = vld [vmem:[#allocation5 + $0x320] sm:$0xff]
    %v1078 = vld [vmem:[#allocation5 + $0x328] sm:$0xff]
    %v1079 = vld [vmem:[#allocation5 + $0x330] sm:$0xff]
    %v1080 = vld [vmem:[#allocation5 + $0x338] sm:$0xff]
    %v1081 = vld [vmem:[#allocation5 + $0x340] sm:$0xff]
    %v1082 = vld [vmem:[#allocation5 + $0x348] sm:$0xff]
    %v1083 = vld [vmem:[#allocation5 + $0x350] sm:$0xff]
    %v1084 = vld [vmem:[#allocation5 + $0x358] sm:$0xff]
    %v1085 = vld [vmem:[#allocation5 + $0x360] sm:$0xff]
    %v1086 = vld [vmem:[#allocation5 + $0x368] sm:$0xff]
    %v1087 = vld [vmem:[#allocation5 + $0x370] sm:$0xff]
    %v1088 = vld [vmem:[#allocation5 + $0x378] sm:$0xff]
    %v1089 = vld [vmem:[#allocation5 + $0x380] sm:$0xff]
    %v1090 = vld [vmem:[#allocation5 + $0x388] sm:$0xff]
    %v1091 = vld [vmem:[#allocation5 + $0x390] sm:$0xff]
    %v1092 = vld [vmem:[#allocation5 + $0x398] sm:$0xff]
    %v1093 = vld [vmem:[#allocation5 + $0x3a0] sm:$0xff]
    %v1094 = vld [vmem:[#allocation5 + $0x3a8] sm:$0xff]
    %v1095 = vld [vmem:[#allocation5 + $0x3b0] sm:$0xff]
    %v1096 = vld [vmem:[#allocation5 + $0x3b8] sm:$0xff]
    %v1097 = vld [vmem:[#allocation5 + $0x3c0] sm:$0xff]
    %v1098 = vld [vmem:[#allocation5 + $0x3c8] sm:$0xff]
    %v1099 = vld [vmem:[#allocation5 + $0x3d0] sm:$0xff]
    %v1100 = vld [vmem:[#allocation5 + $0x3d8] sm:$0xff]
    %v1101 = vld [vmem:[#allocation5 + $0x3e0] sm:$0xff]
    %v1102 = vld [vmem:[#allocation5 + $0x3e8] sm:$0xff]
    %v1103 = vld [vmem:[#allocation5 + $0x3f0] sm:$0xff]
    %v1104 = vld [vmem:[#allocation5 + $0x3f8] sm:$0xff]
    %v1105 = vld [vmem:[#allocation2 + $0x40] sm:$0xff]
    %v1106 = vld [vmem:[#allocation2 + $0x48] sm:$0xff]
    %v1107 = vld [vmem:[#allocation2 + $0x50] sm:$0xff]
    %v1108 = vld [vmem:[#allocation2 + $0x58] sm:$0xff]
    %v1109 = vld [vmem:[#allocation2 + $0x60] sm:$0xff]
    %v1110 = vld [vmem:[#allocation2 + $0x68] sm:$0xff]
    %v1111 = vld [vmem:[#allocation2 + $0x70] sm:$0xff]
    %v1112 = vld [vmem:[#allocation2 + $0x78] sm:$0xff]
    %1113 = vmatprep.subr.mxu0 %v978
    %1114 = vmatpush1.msra.mxu0 %v977
    %1115 = vmatprep.subr.mxu0 %v982
    %1116 = vmatpush1.msra.mxu0 %v981
    %1117 = vmatprep.subr.mxu0 %v986
    %1118 = vmatpush1.msra.mxu0 %v985
    %1119 = vmatprep.subr.mxu0 %v990
    %1120 = vmatpush1.msra.mxu0 %v989
    %1121 = vmatprep.subr.mxu0 %v994
    %1122 = vmatpush1.msra.mxu0 %v993
    %1123 = vmatprep.subr.mxu0 %v998
    %1124 = vmatpush1.msra.mxu0 %v997
    %1125 = vmatprep.subr.mxu0 %v1002
    %1126 = vmatpush1.msra.mxu0 %v1001
    %1127 = vmatprep.subr.mxu0 %v1006
    %1128 = vmatpush1.msra.mxu0 %v1005
    %1129 = vmatprep.subr.mxu0 %v1010
    %1130 = vmatpush1.msra.mxu0 %v1009
    %1131 = vmatprep.subr.mxu0 %v1014
    %1132 = vmatpush1.msra.mxu0 %v1013
    %1133 = vmatprep.subr.mxu0 %v1018
    %1134 = vmatpush1.msra.mxu0 %v1017
    %1135 = vmatprep.subr.mxu0 %v1022
    %1136 = vmatpush1.msra.mxu0 %v1021
    %1137 = vmatprep.subr.mxu0 %v1026
    %1138 = vmatpush1.msra.mxu0 %v1025
    %1139 = vmatprep.subr.mxu0 %v1030
    %1140 = vmatpush1.msra.mxu0 %v1029
    %1141 = vmatprep.subr.mxu0 %v1034
    %1142 = vmatpush1.msra.mxu0 %v1033
    %1143 = vmatprep.subr.mxu0 %v1038
    %1144 = vmatpush1.msra.mxu0 %v1037
    %1145 = vmatprep.subr.mxu0 %v1042
    %1146 = vmatpush1.msra.mxu0 %v1041
    %1147 = vmatprep.subr.mxu0 %v1046
    %1148 = vmatpush1.msra.mxu0 %v1045
    %1149 = vmatprep.subr.mxu0 %v1050
    %1150 = vmatpush1.msra.mxu0 %v1049
    %1151 = vmatprep.subr.mxu0 %v1054
    %1152 = vmatpush1.msra.mxu0 %v1053
    %1153 = vmatprep.subr.mxu0 %v1058
    %1154 = vmatpush1.msra.mxu0 %v1057
    %1155 = vmatprep.subr.mxu0 %v1062
    %1156 = vmatpush1.msra.mxu0 %v1061
    %1157 = vmatprep.subr.mxu0 %v1066
    %1158 = vmatpush1.msra.mxu0 %v1065
    %1159 = vmatprep.subr.mxu0 %v1070
    %1160 = vmatpush1.msra.mxu0 %v1069
    %1161 = vmatprep.subr.mxu0 %v1074
    %1162 = vmatpush1.msra.mxu0 %v1073
    %1163 = vmatprep.subr.mxu0 %v1078
    %1164 = vmatpush1.msra.mxu0 %v1077
    %1165 = vmatprep.subr.mxu0 %v1082
    %1166 = vmatpush1.msra.mxu0 %v1081
    %1167 = vmatprep.subr.mxu0 %v1086
    %1168 = vmatpush1.msra.mxu0 %v1085
    %1169 = vmatprep.subr.mxu0 %v1090
    %1170 = vmatpush1.msra.mxu0 %v1089
    %1171 = vmatprep.subr.mxu0 %v1094
    %1172 = vmatpush1.msra.mxu0 %v1093
    %1173 = vmatprep.subr.mxu0 %v1098
    %1174 = vmatpush1.msra.mxu0 %v1097
    %1175 = vmatprep.subr.mxu0 %v1102
    %1176 = vmatpush1.msra.mxu0 %v1101
    %1177 = vmatprep.mubr.f32.mxu0 %v971
    %1178 = vmatmul.mubr.f32.gmra.mrb[0].mxu0 %v969
    %v1179 = vpop.f32.mrb[0].mxu0
    %v1180 = vadd.f32 %v1105, %v1179
    %v1181 = vpop.f32.mrb[0].mxu0
    %v1182 = vadd.f32 %v1106, %v1181
    %1183 = vmatprep.mubr.f32.mxu0 %v972
    %1184 = vmatmul.mubr.f32.gmra.mrb[0].mxu0 %v970
    %v1185 = vpop.f32.mrb[0].mxu0
    %v1186 = vadd.f32 %v1109, %v1185
    %v1187 = vpop.f32.mrb[0].mxu0
    %v1188 = vadd.f32 %v1110, %v1187
    %1189 = vdwg.mxu0
    %1190 = vmatprep.subr.mxu0 %v980
    %1191 = vmatpush1.msra.mxu0 %v979
    %1192 = vmatprep.subr.mxu0 %v984
    %1193 = vmatpush1.msra.mxu0 %v983
    %1194 = vmatprep.subr.mxu0 %v988
    %1195 = vmatpush1.msra.mxu0 %v987
    %1196 = vmatprep.subr.mxu0 %v992
    %1197 = vmatpush1.msra.mxu0 %v991
    %1198 = vmatprep.subr.mxu0 %v996
    %1199 = vmatpush1.msra.mxu0 %v995
    %1200 = vmatprep.subr.mxu0 %v1000
    %1201 = vmatpush1.msra.mxu0 %v999
    %1202 = vmatprep.subr.mxu0 %v1004
    %1203 = vmatpush1.msra.mxu0 %v1003
    %1204 = vmatprep.subr.mxu0 %v1008
    %1205 = vmatpush1.msra.mxu0 %v1007
    %1206 = vmatprep.subr.mxu0 %v1012
    %1207 = vmatpush1.msra.mxu0 %v1011
    %1208 = vmatprep.subr.mxu0 %v1016
    %1209 = vmatpush1.msra.mxu0 %v1015
    %1210 = vmatprep.subr.mxu0 %v1020
    %1211 = vmatpush1.msra.mxu0 %v1019
    %1212 = vmatprep.subr.mxu0 %v1024
    %1213 = vmatpush1.msra.mxu0 %v1023
    %1214 = vmatprep.subr.mxu0 %v1028
    %1215 = vmatpush1.msra.mxu0 %v1027
    %1216 = vmatprep.subr.mxu0 %v1032
    %1217 = vmatpush1.msra.mxu0 %v1031
    %1218 = vmatprep.subr.mxu0 %v1036
    %1219 = vmatpush1.msra.mxu0 %v1035
    %1220 = vmatprep.subr.mxu0 %v1040
    %1221 = vmatpush1.msra.mxu0 %v1039
    %1222 = vmatprep.subr.mxu0 %v1044
    %1223 = vmatpush1.msra.mxu0 %v1043
    %1224 = vmatprep.subr.mxu0 %v1048
    %1225 = vmatpush1.msra.mxu0 %v1047
    %1226 = vmatprep.subr.mxu0 %v1052
    %1227 = vmatpush1.msra.mxu0 %v1051
    %1228 = vmatprep.subr.mxu0 %v1056
    %1229 = vmatpush1.msra.mxu0 %v1055
    %1230 = vmatprep.subr.mxu0 %v1060
    %1231 = vmatpush1.msra.mxu0 %v1059
    %1232 = vmatprep.subr.mxu0 %v1064
    %1233 = vmatpush1.msra.mxu0 %v1063
    %1234 = vmatprep.subr.mxu0 %v1068
    %1235 = vmatpush1.msra.mxu0 %v1067
    %1236 = vmatprep.subr.mxu0 %v1072
    %1237 = vmatpush1.msra.mxu0 %v1071
    %1238 = vmatprep.subr.mxu0 %v1076
    %1239 = vmatpush1.msra.mxu0 %v1075
    %1240 = vmatprep.subr.mxu0 %v1080
    %1241 = vmatpush1.msra.mxu0 %v1079
    %1242 = vmatprep.subr.mxu0 %v1084
    %1243 = vmatpush1.msra.mxu0 %v1083
    %1244 = vmatprep.subr.mxu0 %v1088
    %1245 = vmatpush1.msra.mxu0 %v1087
    %1246 = vmatprep.subr.mxu0 %v1092
    %1247 = vmatpush1.msra.mxu0 %v1091
    %1248 = vmatprep.subr.mxu0 %v1096
    %1249 = vmatpush1.msra.mxu0 %v1095
    %1250 = vmatprep.subr.mxu0 %v1100
    %1251 = vmatpush1.msra.mxu0 %v1099
    %1252 = vmatprep.subr.mxu0 %v1104
    %1253 = vmatpush1.msra.mxu0 %v1103
    %1254 = vmatprep.mubr.f32.mxu0 %v971
    %1255 = vmatmul.mubr.f32.gmra.mrb[0].mxu0 %v969
    %v1256 = vpop.f32.mrb[0].mxu0
    %v1257 = vadd.f32 %v1107, %v1256
    %v1258 = vpop.f32.mrb[0].mxu0
    %v1259 = vadd.f32 %v1108, %v1258
    %1260 = vmatprep.mubr.f32.mxu0 %v972
    %1261 = vmatmul.mubr.f32.gmra.mrb[0].mxu0 %v970
    %v1262 = vpop.f32.mrb[0].mxu0
    %v1263 = vadd.f32 %v1111, %v1262
    %v1264 = vpop.f32.mrb[0].mxu0
    %v1265 = vadd.f32 %v1112, %v1264
    %1266 = vdwg.mxu0
    %v1267 = vadd.f32 %v1180, %v615
    %v1268 = vadd.f32 %v1182, %v616
    %v1269 = vadd.f32 %v1257, %v617
    %v1270 = vadd.f32 %v1259, %v618
    %v1271 = vadd.f32 %v1186, %v619
    %v1272 = vadd.f32 %v1188, %v620
    %v1273 = vadd.f32 %v1263, %v621
    %v1274 = vadd.f32 %v1265, %v622
    %v1275 = vxor.u32 %v1267, 2147483648
    %v1276 = vxor.u32 %v1271, 2147483648
    %v1277 = vmul.f32 %v1275, 1.442695
    %v1278 = vpow.pop %v1277
    %v1279 = vmul.f32 %v1276, 1.442695
    %v1280 = vpow.pop %v1279
    %v1281 = vadd.f32 %v1278, 1.0
    %v1282 = vadd.f32 %v1280, 1.0
    %v1283 = vrcp.pop %v1281
    %v1284 = vmul.f32 1.0, %v1283
    %v1285 = vrcp.pop %v1282
    %v1286 = vmul.f32 1.0, %v1285
    %v1287 = vxor.u32 %v1268, 2147483648
    %v1288 = vxor.u32 %v1272, 2147483648
    %v1289 = vmul.f32 %v1287, 1.442695
    %v1290 = vpow.pop %v1289
    %v1291 = vmul.f32 %v1288, 1.442695
    %v1292 = vpow.pop %v1291
    %v1293 = vadd.f32 %v1290, 1.0
    %v1294 = vadd.f32 %v1292, 1.0
    %v1295 = vrcp.pop %v1293
    %v1296 = vmul.f32 1.0, %v1295
    %v1297 = vrcp.pop %v1294
    %v1298 = vmul.f32 1.0, %v1297
    %v1299 = vtanh.pop %v1269
    %v1300 = vtanh.pop %v1273
    %v1301 = vxor.u32 %v1270, 2147483648
    %v1302 = vxor.u32 %v1274, 2147483648
    %v1303 = vmul.f32 %v1301, 1.442695
    %v1304 = vpow.pop %v1303
    %v1305 = vmul.f32 %v1302, 1.442695
    %v1306 = vpow.pop %v1305
    %v1307 = vadd.f32 %v1304, 1.0
    %v1308 = vadd.f32 %v1306, 1.0
    %v1309 = vrcp.pop %v1307
    %v1310 = vmul.f32 1.0, %v1309
    %v1311 = vrcp.pop %v1308
    %v1312 = vmul.f32 1.0, %v1311
    %v1313 = vmul.f32 %v1296, %v963
    %v1314 = vmul.f32 %v1298, %v964
    %v1315 = vmul.f32 %v1284, %v1299
    %v1316 = vmul.f32 %v1286, %v1300
    %v1317 = vadd.f32 %v1313, %v1315
    %v1318 = vadd.f32 %v1314, %v1316
    %v1319 = vtanh.pop %v1317
    %v1320 = vtanh.pop %v1318
    %v1321 = vmul.f32 %v1310, %v1319
    %v1322 = vmul.f32 %v1312, %v1320
    %v1323 = vmul.f32 %v1321, %v92
    %v1324 = vmul.f32 %v1322, %v93
    %v1325 = vmul.f32 %v1321, %v94
    %v1326 = vmul.f32 %v1322, %v95
    %1327 = vst [vmem:[#allocation3 + $0x40] sm:$0xff] %v1321
    %1328 = vst [vmem:[#allocation3 + $0x188] sm:$0xff] %v1322
    %1329 = vst [vmem:[#allocation3 + $0x1b0] sm:$0xff] %v1321
    %1330 = vst [vmem:[#allocation3 + $0x78] sm:$0xff] %v1322
    %v1331 = vld [vmem:[#allocation5] sm:$0xff]
    %v1332 = vld [vmem:[#allocation5 + $0x8] sm:$0xff]
    %v1333 = vld [vmem:[#allocation5 + $0x10] sm:$0xff]
    %v1334 = vld [vmem:[#allocation5 + $0x18] sm:$0xff]
    %v1335 = vld [vmem:[#allocation5 + $0x20] sm:$0xff]
    %v1336 = vld [vmem:[#allocation5 + $0x28] sm:$0xff]
    %v1337 = vld [vmem:[#allocation5 + $0x30] sm:$0xff]
    %v1338 = vld [vmem:[#allocation5 + $0x38] sm:$0xff]
    %v1339 = vld [vmem:[#allocation5 + $0x40] sm:$0xff]
    %v1340 = vld [vmem:[#allocation5 + $0x48] sm:$0xff]
    %v1341 = vld [vmem:[#allocation5 + $0x50] sm:$0xff]
    %v1342 = vld [vmem:[#allocation5 + $0x58] sm:$0xff]
    %v1343 = vld [vmem:[#allocation5 + $0x60] sm:$0xff]
    %v1344 = vld [vmem:[#allocation5 + $0x68] sm:$0xff]
    %v1345 = vld [vmem:[#allocation5 + $0x70] sm:$0xff]
    %v1346 = vld [vmem:[#allocation5 + $0x78] sm:$0xff]
    %v1347 = vld [vmem:[#allocation5 + $0x80] sm:$0xff]
    %v1348 = vld [vmem:[#allocation5 + $0x88] sm:$0xff]
    %v1349 = vld [vmem:[#allocation5 + $0x90] sm:$0xff]
    %v1350 = vld [vmem:[#allocation5 + $0x98] sm:$0xff]
    %v1351 = vld [vmem:[#allocation5 + $0xa0] sm:$0xff]
    %v1352 = vld [vmem:[#allocation5 + $0xa8] sm:$0xff]
    %v1353 = vld [vmem:[#allocation5 + $0xb0] sm:$0xff]
    %v1354 = vld [vmem:[#allocation5 + $0xb8] sm:$0xff]
    %v1355 = vld [vmem:[#allocation5 + $0xc0] sm:$0xff]
    %v1356 = vld [vmem:[#allocation5 + $0xc8] sm:$0xff]
    %v1357 = vld [vmem:[#allocation5 + $0xd0] sm:$0xff]
    %v1358 = vld [vmem:[#allocation5 + $0xd8] sm:$0xff]
    %v1359 = vld [vmem:[#allocation5 + $0xe0] sm:$0xff]
    %v1360 = vld [vmem:[#allocation5 + $0xe8] sm:$0xff]
    %v1361 = vld [vmem:[#allocation5 + $0xf0] sm:$0xff]
    %v1362 = vld [vmem:[#allocation5 + $0xf8] sm:$0xff]
    %v1363 = vld [vmem:[#allocation5 + $0x100] sm:$0xff]
    %v1364 = vld [vmem:[#allocation5 + $0x108] sm:$0xff]
    %v1365 = vld [vmem:[#allocation5 + $0x110] sm:$0xff]
    %v1366 = vld [vmem:[#allocation5 + $0x118] sm:$0xff]
    %v1367 = vld [vmem:[#allocation5 + $0x120] sm:$0xff]
    %v1368 = vld [vmem:[#allocation5 + $0x128] sm:$0xff]
    %v1369 = vld [vmem:[#allocation5 + $0x130] sm:$0xff]
    %v1370 = vld [vmem:[#allocation5 + $0x138] sm:$0xff]
    %v1371 = vld [vmem:[#allocation5 + $0x140] sm:$0xff]
    %v1372 = vld [vmem:[#allocation5 + $0x148] sm:$0xff]
    %v1373 = vld [vmem:[#allocation5 + $0x150] sm:$0xff]
    %v1374 = vld [vmem:[#allocation5 + $0x158] sm:$0xff]
    %v1375 = vld [vmem:[#allocation5 + $0x160] sm:$0xff]
    %v1376 = vld [vmem:[#allocation5 + $0x168] sm:$0xff]
    %v1377 = vld [vmem:[#allocation5 + $0x170] sm:$0xff]
    %v1378 = vld [vmem:[#allocation5 + $0x178] sm:$0xff]
    %v1379 = vld [vmem:[#allocation5 + $0x180] sm:$0xff]
    %v1380 = vld [vmem:[#allocation5 + $0x188] sm:$0xff]
    %v1381 = vld [vmem:[#allocation5 + $0x190] sm:$0xff]
    %v1382 = vld [vmem:[#allocation5 + $0x198] sm:$0xff]
    %v1383 = vld [vmem:[#allocation5 + $0x1a0] sm:$0xff]
    %v1384 = vld [vmem:[#allocation5 + $0x1a8] sm:$0xff]
    %v1385 = vld [vmem:[#allocation5 + $0x1b0] sm:$0xff]
    %v1386 = vld [vmem:[#allocation5 + $0x1b8] sm:$0xff]
    %v1387 = vld [vmem:[#allocation5 + $0x1c0] sm:$0xff]
    %v1388 = vld [vmem:[#allocation5 + $0x1c8] sm:$0xff]
    %v1389 = vld [vmem:[#allocation5 + $0x1d0] sm:$0xff]
    %v1390 = vld [vmem:[#allocation5 + $0x1d8] sm:$0xff]
    %v1391 = vld [vmem:[#allocation5 + $0x1e0] sm:$0xff]
    %v1392 = vld [vmem:[#allocation5 + $0x1e8] sm:$0xff]
    %v1393 = vld [vmem:[#allocation5 + $0x1f0] sm:$0xff]
    %v1394 = vld [vmem:[#allocation5 + $0x1f8] sm:$0xff]
    %v1395 = vld [vmem:[#allocation5 + $0x200] sm:$0xff]
    %v1396 = vld [vmem:[#allocation5 + $0x208] sm:$0xff]
    %v1397 = vld [vmem:[#allocation5 + $0x210] sm:$0xff]
    %v1398 = vld [vmem:[#allocation5 + $0x218] sm:$0xff]
    %v1399 = vld [vmem:[#allocation5 + $0x220] sm:$0xff]
    %v1400 = vld [vmem:[#allocation5 + $0x228] sm:$0xff]
    %v1401 = vld [vmem:[#allocation5 + $0x230] sm:$0xff]
    %v1402 = vld [vmem:[#allocation5 + $0x238] sm:$0xff]
    %v1403 = vld [vmem:[#allocation5 + $0x240] sm:$0xff]
    %v1404 = vld [vmem:[#allocation5 + $0x248] sm:$0xff]
    %v1405 = vld [vmem:[#allocation5 + $0x250] sm:$0xff]
    %v1406 = vld [vmem:[#allocation5 + $0x258] sm:$0xff]
    %v1407 = vld [vmem:[#allocation5 + $0x260] sm:$0xff]
    %v1408 = vld [vmem:[#allocation5 + $0x268] sm:$0xff]
    %v1409 = vld [vmem:[#allocation5 + $0x270] sm:$0xff]
    %v1410 = vld [vmem:[#allocation5 + $0x278] sm:$0xff]
    %v1411 = vld [vmem:[#allocation5 + $0x280] sm:$0xff]
    %v1412 = vld [vmem:[#allocation5 + $0x288] sm:$0xff]
    %v1413 = vld [vmem:[#allocation5 + $0x290] sm:$0xff]
    %v1414 = vld [vmem:[#allocation5 + $0x298] sm:$0xff]
    %v1415 = vld [vmem:[#allocation5 + $0x2a0] sm:$0xff]
    %v1416 = vld [vmem:[#allocation5 + $0x2a8] sm:$0xff]
    %v1417 = vld [vmem:[#allocation5 + $0x2b0] sm:$0xff]
    %v1418 = vld [vmem:[#allocation5 + $0x2b8] sm:$0xff]
    %v1419 = vld [vmem:[#allocation5 + $0x2c0] sm:$0xff]
    %v1420 = vld [vmem:[#allocation5 + $0x2c8] sm:$0xff]
    %v1421 = vld [vmem:[#allocation5 + $0x2d0] sm:$0xff]
    %v1422 = vld [vmem:[#allocation5 + $0x2d8] sm:$0xff]
    %v1423 = vld [vmem:[#allocation5 + $0x2e0] sm:$0xff]
    %v1424 = vld [vmem:[#allocation5 + $0x2e8] sm:$0xff]
    %v1425 = vld [vmem:[#allocation5 + $0x2f0] sm:$0xff]
    %v1426 = vld [vmem:[#allocation5 + $0x2f8] sm:$0xff]
    %v1427 = vld [vmem:[#allocation5 + $0x300] sm:$0xff]
    %v1428 = vld [vmem:[#allocation5 + $0x308] sm:$0xff]
    %v1429 = vld [vmem:[#allocation5 + $0x310] sm:$0xff]
    %v1430 = vld [vmem:[#allocation5 + $0x318] sm:$0xff]
    %v1431 = vld [vmem:[#allocation5 + $0x320] sm:$0xff]
    %v1432 = vld [vmem:[#allocation5 + $0x328] sm:$0xff]
    %v1433 = vld [vmem:[#allocation5 + $0x330] sm:$0xff]
    %v1434 = vld [vmem:[#allocation5 + $0x338] sm:$0xff]
    %v1435 = vld [vmem:[#allocation5 + $0x340] sm:$0xff]
    %v1436 = vld [vmem:[#allocation5 + $0x348] sm:$0xff]
    %v1437 = vld [vmem:[#allocation5 + $0x350] sm:$0xff]
    %v1438 = vld [vmem:[#allocation5 + $0x358] sm:$0xff]
    %v1439 = vld [vmem:[#allocation5 + $0x360] sm:$0xff]
    %v1440 = vld [vmem:[#allocation5 + $0x368] sm:$0xff]
    %v1441 = vld [vmem:[#allocation5 + $0x370] sm:$0xff]
    %v1442 = vld [vmem:[#allocation5 + $0x378] sm:$0xff]
    %v1443 = vld [vmem:[#allocation5 + $0x380] sm:$0xff]
    %v1444 = vld [vmem:[#allocation5 + $0x388] sm:$0xff]
    %v1445 = vld [vmem:[#allocation5 + $0x390] sm:$0xff]
    %v1446 = vld [vmem:[#allocation5 + $0x398] sm:$0xff]
    %v1447 = vld [vmem:[#allocation5 + $0x3a0] sm:$0xff]
    %v1448 = vld [vmem:[#allocation5 + $0x3a8] sm:$0xff]
    %v1449 = vld [vmem:[#allocation5 + $0x3b0] sm:$0xff]
    %v1450 = vld [vmem:[#allocation5 + $0x3b8] sm:$0xff]
    %v1451 = vld [vmem:[#allocation5 + $0x3c0] sm:$0xff]
    %v1452 = vld [vmem:[#allocation5 + $0x3c8] sm:$0xff]
    %v1453 = vld [vmem:[#allocation5 + $0x3d0] sm:$0xff]
    %v1454 = vld [vmem:[#allocation5 + $0x3d8] sm:$0xff]
    %v1455 = vld [vmem:[#allocation5 + $0x3e0] sm:$0xff]
    %v1456 = vld [vmem:[#allocation5 + $0x3e8] sm:$0xff]
    %v1457 = vld [vmem:[#allocation5 + $0x3f0] sm:$0xff]
    %v1458 = vld [vmem:[#allocation5 + $0x3f8] sm:$0xff]
    %v1459 = vld [vmem:[#allocation2 + $0x80] sm:$0xff]
    %v1460 = vld [vmem:[#allocation2 + $0x88] sm:$0xff]
    %v1461 = vld [vmem:[#allocation2 + $0x90] sm:$0xff]
    %v1462 = vld [vmem:[#allocation2 + $0x98] sm:$0xff]
    %v1463 = vld [vmem:[#allocation2 + $0xa0] sm:$0xff]
    %v1464 = vld [vmem:[#allocation2 + $0xa8] sm:$0xff]
    %v1465 = vld [vmem:[#allocation2 + $0xb0] sm:$0xff]
    %v1466 = vld [vmem:[#allocation2 + $0xb8] sm:$0xff]
    %1467 = vmatprep.subr.mxu0 %v1332
    %1468 = vmatpush1.msra.mxu0 %v1331
    %1469 = vmatprep.subr.mxu0 %v1336
    %1470 = vmatpush1.msra.mxu0 %v1335
    %1471 = vmatprep.subr.mxu0 %v1340
    %1472 = vmatpush1.msra.mxu0 %v1339
    %1473 = vmatprep.subr.mxu0 %v1344
    %1474 = vmatpush1.msra.mxu0 %v1343
    %1475 = vmatprep.subr.mxu0 %v1348
    %1476 = vmatpush1.msra.mxu0 %v1347
    %1477 = vmatprep.subr.mxu0 %v1352
    %1478 = vmatpush1.msra.mxu0 %v1351
    %1479 = vmatprep.subr.mxu0 %v1356
    %1480 = vmatpush1.msra.mxu0 %v1355
    %1481 = vmatprep.subr.mxu0 %v1360
    %1482 = vmatpush1.msra.mxu0 %v1359
    %1483 = vmatprep.subr.mxu0 %v1364
    %1484 = vmatpush1.msra.mxu0 %v1363
    %1485 = vmatprep.subr.mxu0 %v1368
    %1486 = vmatpush1.msra.mxu0 %v1367
    %1487 = vmatprep.subr.mxu0 %v1372
    %1488 = vmatpush1.msra.mxu0 %v1371
    %1489 = vmatprep.subr.mxu0 %v1376
    %1490 = vmatpush1.msra.mxu0 %v1375
    %1491 = vmatprep.subr.mxu0 %v1380
    %1492 = vmatpush1.msra.mxu0 %v1379
    %1493 = vmatprep.subr.mxu0 %v1384
    %1494 = vmatpush1.msra.mxu0 %v1383
    %1495 = vmatprep.subr.mxu0 %v1388
    %1496 = vmatpush1.msra.mxu0 %v1387
    %1497 = vmatprep.subr.mxu0 %v1392
    %1498 = vmatpush1.msra.mxu0 %v1391
    %1499 = vmatprep.subr.mxu0 %v1396
    %1500 = vmatpush1.msra.mxu0 %v1395
    %1501 = vmatprep.subr.mxu0 %v1400
    %1502 = vmatpush1.msra.mxu0 %v1399
    %1503 = vmatprep.subr.mxu0 %v1404
    %1504 = vmatpush1.msra.mxu0 %v1403
    %1505 = vmatprep.subr.mxu0 %v1408
    %1506 = vmatpush1.msra.mxu0 %v1407
    %1507 = vmatprep.subr.mxu0 %v1412
    %1508 = vmatpush1.msra.mxu0 %v1411
    %1509 = vmatprep.subr.mxu0 %v1416
    %1510 = vmatpush1.msra.mxu0 %v1415
    %1511 = vmatprep.subr.mxu0 %v1420
    %1512 = vmatpush1.msra.mxu0 %v1419
    %1513 = vmatprep.subr.mxu0 %v1424
    %1514 = vmatpush1.msra.mxu0 %v1423
    %1515 = vmatprep.subr.mxu0 %v1428
    %1516 = vmatpush1.msra.mxu0 %v1427
    %1517 = vmatprep.subr.mxu0 %v1432
    %1518 = vmatpush1.msra.mxu0 %v1431
    %1519 = vmatprep.subr.mxu0 %v1436
    %1520 = vmatpush1.msra.mxu0 %v1435
    %1521 = vmatprep.subr.mxu0 %v1440
    %1522 = vmatpush1.msra.mxu0 %v1439
    %1523 = vmatprep.subr.mxu0 %v1444
    %1524 = vmatpush1.msra.mxu0 %v1443
    %1525 = vmatprep.subr.mxu0 %v1448
    %1526 = vmatpush1.msra.mxu0 %v1447
    %1527 = vmatprep.subr.mxu0 %v1452
    %1528 = vmatpush1.msra.mxu0 %v1451
    %1529 = vmatprep.subr.mxu0 %v1456
    %1530 = vmatpush1.msra.mxu0 %v1455
    %1531 = vmatprep.mubr.f32.mxu0 %v1325
    %1532 = vmatmul.mubr.f32.gmra.mrb[0].mxu0 %v1323
    %v1533 = vpop.f32.mrb[0].mxu0
    %v1534 = vadd.f32 %v1459, %v1533
    %v1535 = vpop.f32.mrb[0].mxu0
    %v1536 = vadd.f32 %v1460, %v1535
    %1537 = vmatprep.mubr.f32.mxu0 %v1326
    %1538 = vmatmul.mubr.f32.gmra.mrb[0].mxu0 %v1324
    %v1539 = vpop.f32.mrb[0].mxu0
    %v1540 = vadd.f32 %v1463, %v1539
    %v1541 = vpop.f32.mrb[0].mxu0
    %v1542 = vadd.f32 %v1464, %v1541
    %1543 = vdwg.mxu0
    %1544 = vmatprep.subr.mxu0 %v1334
    %1545 = vmatpush1.msra.mxu0 %v1333
    %1546 = vmatprep.subr.mxu0 %v1338
    %1547 = vmatpush1.msra.mxu0 %v1337
    %1548 = vmatprep.subr.mxu0 %v1342
    %1549 = vmatpush1.msra.mxu0 %v1341
    %1550 = vmatprep.subr.mxu0 %v1346
    %1551 = vmatpush1.msra.mxu0 %v1345
    %1552 = vmatprep.subr.mxu0 %v1350
    %1553 = vmatpush1.msra.mxu0 %v1349
    %1554 = vmatprep.subr.mxu0 %v1354
    %1555 = vmatpush1.msra.mxu0 %v1353
    %1556 = vmatprep.subr.mxu0 %v1358
    %1557 = vmatpush1.msra.mxu0 %v1357
    %1558 = vmatprep.subr.mxu0 %v1362
    %1559 = vmatpush1.msra.mxu0 %v1361
    %1560 = vmatprep.subr.mxu0 %v1366
    %1561 = vmatpush1.msra.mxu0 %v1365
    %1562 = vmatprep.subr.mxu0 %v1370
    %1563 = vmatpush1.msra.mxu0 %v1369
    %1564 = vmatprep.subr.mxu0 %v1374
    %1565 = vmatpush1.msra.mxu0 %v1373
    %1566 = vmatprep.subr.mxu0 %v1378
    %1567 = vmatpush1.msra.mxu0 %v1377
    %1568 = vmatprep.subr.mxu0 %v1382
    %1569 = vmatpush1.msra.mxu0 %v1381
    %1570 = vmatprep.subr.mxu0 %v1386
    %1571 = vmatpush1.msra.mxu0 %v1385
    %1572 = vmatprep.subr.mxu0 %v1390
    %1573 = vmatpush1.msra.mxu0 %v1389
    %1574 = vmatprep.subr.mxu0 %v1394
    %1575 = vmatpush1.msra.mxu0 %v1393
    %1576 = vmatprep.subr.mxu0 %v1398
    %1577 = vmatpush1.msra.mxu0 %v1397
    %1578 = vmatprep.subr.mxu0 %v1402
    %1579 = vmatpush1.msra.mxu0 %v1401
    %1580 = vmatprep.subr.mxu0 %v1406
    %1581 = vmatpush1.msra.mxu0 %v1405
    %1582 = vmatprep.subr.mxu0 %v1410
    %1583 = vmatpush1.msra.mxu0 %v1409
    %1584 = vmatprep.subr.mxu0 %v1414
    %1585 = vmatpush1.msra.mxu0 %v1413
    %1586 = vmatprep.subr.mxu0 %v1418
    %1587 = vmatpush1.msra.mxu0 %v1417
    %1588 = vmatprep.subr.mxu0 %v1422
    %1589 = vmatpush1.msra.mxu0 %v1421
    %1590 = vmatprep.subr.mxu0 %v1426
    %1591 = vmatpush1.msra.mxu0 %v1425
    %1592 = vmatprep.subr.mxu0 %v1430
    %1593 = vmatpush1.msra.mxu0 %v1429
    %1594 = vmatprep.subr.mxu0 %v1434
    %1595 = vmatpush1.msra.mxu0 %v1433
    %1596 = vmatprep.subr.mxu0 %v1438
    %1597 = vmatpush1.msra.mxu0 %v1437
    %1598 = vmatprep.subr.mxu0 %v1442
    %1599 = vmatpush1.msra.mxu0 %v1441
    %1600 = vmatprep.subr.mxu0 %v1446
    %1601 = vmatpush1.msra.mxu0 %v1445
    %1602 = vmatprep.subr.mxu0 %v1450
    %1603 = vmatpush1.msra.mxu0 %v1449
    %1604 = vmatprep.subr.mxu0 %v1454
    %1605 = vmatpush1.msra.mxu0 %v1453
    %1606 = vmatprep.subr.mxu0 %v1458
    %1607 = vmatpush1.msra.mxu0 %v1457
    %1608 = vmatprep.mubr.f32.mxu0 %v1325
    %1609 = vmatmul.mubr.f32.gmra.mrb[0].mxu0 %v1323
    %v1610 = vpop.f32.mrb[0].mxu0
    %v1611 = vadd.f32 %v1461, %v1610
    %v1612 = vpop.f32.mrb[0].mxu0
    %v1613 = vadd.f32 %v1462, %v1612
    %1614 = vmatprep.mubr.f32.mxu0 %v1326
    %1615 = vmatmul.mubr.f32.gmra.mrb[0].mxu0 %v1324
    %v1616 = vpop.f32.mrb[0].mxu0
    %v1617 = vadd.f32 %v1465, %v1616
    %v1618 = vpop.f32.mrb[0].mxu0
    %v1619 = vadd.f32 %v1466, %v1618
    %1620 = vdwg.mxu0
    %v1621 = vadd.f32 %v1534, %v615
    %v1622 = vadd.f32 %v1536, %v616
    %v1623 = vadd.f32 %v1611, %v617
    %v1624 = vadd.f32 %v1613, %v618
    %v1625 = vadd.f32 %v1540, %v619
    %v1626 = vadd.f32 %v1542, %v620
    %v1627 = vadd.f32 %v1617, %v621
    %v1628 = vadd.f32 %v1619, %v622
    %v1629 = vxor.u32 %v1621, 2147483648
    %v1630 = vxor.u32 %v1625, 2147483648
    %v1631 = vmul.f32 %v1629, 1.442695
    %v1632 = vpow.pop %v1631
    %v1633 = vmul.f32 %v1630, 1.442695
    %v1634 = vpow.pop %v1633
    %v1635 = vadd.f32 %v1632, 1.0
    %v1636 = vadd.f32 %v1634, 1.0
    %v1637 = vrcp.pop %v1635
    %v1638 = vmul.f32 1.0, %v1637
    %v1639 = vrcp.pop %v1636
    %v1640 = vmul.f32 1.0, %v1639
    %v1641 = vxor.u32 %v1622, 2147483648
    %v1642 = vxor.u32 %v1626, 2147483648
    %v1643 = vmul.f32 %v1641, 1.442695
    %v1644 = vpow.pop %v1643
    %v1645 = vmul.f32 %v1642, 1.442695
    %v1646 = vpow.pop %v1645
    %v1647 = vadd.f32 %v1644, 1.0
    %v1648 = vadd.f32 %v1646, 1.0
    %v1649 = vrcp.pop %v1647
    %v1650 = vmul.f32 1.0, %v1649
    %v1651 = vrcp.pop %v1648
    %v1652 = vmul.f32 1.0, %v1651
    %v1653 = vtanh.pop %v1623
    %v1654 = vtanh.pop %v1627
    %v1655 = vxor.u32 %v1624, 2147483648
    %v1656 = vxor.u32 %v1628, 2147483648
    %v1657 = vmul.f32 %v1655, 1.442695
    %v1658 = vpow.pop %v1657
    %v1659 = vmul.f32 %v1656, 1.442695
    %v1660 = vpow.pop %v1659
    %v1661 = vadd.f32 %v1658, 1.0
    %v1662 = vadd.f32 %v1660, 1.0
    %v1663 = vrcp.pop %v1661
    %v1664 = vmul.f32 1.0, %v1663
    %v1665 = vrcp.pop %v1662
    %v1666 = vmul.f32 1.0, %v1665
    %v1667 = vmul.f32 %v1650, %v1317
    %v1668 = vmul.f32 %v1652, %v1318
    %v1669 = vmul.f32 %v1638, %v1653
    %v1670 = vmul.f32 %v1640, %v1654
    %v1671 = vadd.f32 %v1667, %v1669
    %v1672 = vadd.f32 %v1668, %v1670
    %v1673 = vtanh.pop %v1671
    %v1674 = vtanh.pop %v1672
    %v1675 = vmul.f32 %v1664, %v1673
    %v1676 = vmul.f32 %v1666, %v1674
    %v1677 = vmul.f32 %v1675, %v92
    %v1678 = vmul.f32 %v1676, %v93
    %v1679 = vmul.f32 %v1675, %v94
    %v1680 = vmul.f32 %v1676, %v95
    %1681 = vst [vmem:[#allocation3 + $0x80] sm:$0xff] %v1675
    %1682 = vst [vmem:[#allocation3 + $0x148] sm:$0xff] %v1676
    %1683 = vst [vmem:[#allocation3 + $0x170] sm:$0xff] %v1675
    %1684 = vst [vmem:[#allocation3 + $0xb8] sm:$0xff] %v1676
    %v1685 = vld [vmem:[#allocation5] sm:$0xff]
    %v1686 = vld [vmem:[#allocation5 + $0x8] sm:$0xff]
    %v1687 = vld [vmem:[#allocation5 + $0x10] sm:$0xff]
    %v1688 = vld [vmem:[#allocation5 + $0x18] sm:$0xff]
    %v1689 = vld [vmem:[#allocation5 + $0x20] sm:$0xff]
    %v1690 = vld [vmem:[#allocation5 + $0x28] sm:$0xff]
    %v1691 = vld [vmem:[#allocation5 + $0x30] sm:$0xff]
    %v1692 = vld [vmem:[#allocation5 + $0x38] sm:$0xff]
    %v1693 = vld [vmem:[#allocation5 + $0x40] sm:$0xff]
    %v1694 = vld [vmem:[#allocation5 + $0x48] sm:$0xff]
    %v1695 = vld [vmem:[#allocation5 + $0x50] sm:$0xff]
    %v1696 = vld [vmem:[#allocation5 + $0x58] sm:$0xff]
    %v1697 = vld [vmem:[#allocation5 + $0x60] sm:$0xff]
    %v1698 = vld [vmem:[#allocation5 + $0x68] sm:$0xff]
    %v1699 = vld [vmem:[#allocation5 + $0x70] sm:$0xff]
    %v1700 = vld [vmem:[#allocation5 + $0x78] sm:$0xff]
    %v1701 = vld [vmem:[#allocation5 + $0x80] sm:$0xff]
    %v1702 = vld [vmem:[#allocation5 + $0x88] sm:$0xff]
    %v1703 = vld [vmem:[#allocation5 + $0x90] sm:$0xff]
    %v1704 = vld [vmem:[#allocation5 + $0x98] sm:$0xff]
    %v1705 = vld [vmem:[#allocation5 + $0xa0] sm:$0xff]
    %v1706 = vld [vmem:[#allocation5 + $0xa8] sm:$0xff]
    %v1707 = vld [vmem:[#allocation5 + $0xb0] sm:$0xff]
    %v1708 = vld [vmem:[#allocation5 + $0xb8] sm:$0xff]
    %v1709 = vld [vmem:[#allocation5 + $0xc0] sm:$0xff]
    %v1710 = vld [vmem:[#allocation5 + $0xc8] sm:$0xff]
    %v1711 = vld [vmem:[#allocation5 + $0xd0] sm:$0xff]
    %v1712 = vld [vmem:[#allocation5 + $0xd8] sm:$0xff]
    %v1713 = vld [vmem:[#allocation5 + $0xe0] sm:$0xff]
    %v1714 = vld [vmem:[#allocation5 + $0xe8] sm:$0xff]
    %v1715 = vld [vmem:[#allocation5 + $0xf0] sm:$0xff]
    %v1716 = vld [vmem:[#allocation5 + $0xf8] sm:$0xff]
    %v1717 = vld [vmem:[#allocation5 + $0x100] sm:$0xff]
    %v1718 = vld [vmem:[#allocation5 + $0x108] sm:$0xff]
    %v1719 = vld [vmem:[#allocation5 + $0x110] sm:$0xff]
    %v1720 = vld [vmem:[#allocation5 + $0x118] sm:$0xff]
    %v1721 = vld [vmem:[#allocation5 + $0x120] sm:$0xff]
    %v1722 = vld [vmem:[#allocation5 + $0x128] sm:$0xff]
    %v1723 = vld [vmem:[#allocation5 + $0x130] sm:$0xff]
    %v1724 = vld [vmem:[#allocation5 + $0x138] sm:$0xff]
    %v1725 = vld [vmem:[#allocation5 + $0x140] sm:$0xff]
    %v1726 = vld [vmem:[#allocation5 + $0x148] sm:$0xff]
    %v1727 = vld [vmem:[#allocation5 + $0x150] sm:$0xff]
    %v1728 = vld [vmem:[#allocation5 + $0x158] sm:$0xff]
    %v1729 = vld [vmem:[#allocation5 + $0x160] sm:$0xff]
    %v1730 = vld [vmem:[#allocation5 + $0x168] sm:$0xff]
    %v1731 = vld [vmem:[#allocation5 + $0x170] sm:$0xff]
    %v1732 = vld [vmem:[#allocation5 + $0x178] sm:$0xff]
    %v1733 = vld [vmem:[#allocation5 + $0x180] sm:$0xff]
    %v1734 = vld [vmem:[#allocation5 + $0x188] sm:$0xff]
    %v1735 = vld [vmem:[#allocation5 + $0x190] sm:$0xff]
    %v1736 = vld [vmem:[#allocation5 + $0x198] sm:$0xff]
    %v1737 = vld [vmem:[#allocation5 + $0x1a0] sm:$0xff]
    %v1738 = vld [vmem:[#allocation5 + $0x1a8] sm:$0xff]
    %v1739 = vld [vmem:[#allocation5 + $0x1b0] sm:$0xff]
    %v1740 = vld [vmem:[#allocation5 + $0x1b8] sm:$0xff]
    %v1741 = vld [vmem:[#allocation5 + $0x1c0] sm:$0xff]
    %v1742 = vld [vmem:[#allocation5 + $0x1c8] sm:$0xff]
    %v1743 = vld [vmem:[#allocation5 + $0x1d0] sm:$0xff]
    %v1744 = vld [vmem:[#allocation5 + $0x1d8] sm:$0xff]
    %v1745 = vld [vmem:[#allocation5 + $0x1e0] sm:$0xff]
    %v1746 = vld [vmem:[#allocation5 + $0x1e8] sm:$0xff]
    %v1747 = vld [vmem:[#allocation5 + $0x1f0] sm:$0xff]
    %v1748 = vld [vmem:[#allocation5 + $0x1f8] sm:$0xff]
    %v1749 = vld [vmem:[#allocation5 + $0x200] sm:$0xff]
    %v1750 = vld [vmem:[#allocation5 + $0x208] sm:$0xff]
    %v1751 = vld [vmem:[#allocation5 + $0x210] sm:$0xff]
    %v1752 = vld [vmem:[#allocation5 + $0x218] sm:$0xff]
    %v1753 = vld [vmem:[#allocation5 + $0x220] sm:$0xff]
    %v1754 = vld [vmem:[#allocation5 + $0x228] sm:$0xff]
    %v1755 = vld [vmem:[#allocation5 + $0x230] sm:$0xff]
    %v1756 = vld [vmem:[#allocation5 + $0x238] sm:$0xff]
    %v1757 = vld [vmem:[#allocation5 + $0x240] sm:$0xff]
    %v1758 = vld [vmem:[#allocation5 + $0x248] sm:$0xff]
    %v1759 = vld [vmem:[#allocation5 + $0x250] sm:$0xff]
    %v1760 = vld [vmem:[#allocation5 + $0x258] sm:$0xff]
    %v1761 = vld [vmem:[#allocation5 + $0x260] sm:$0xff]
    %v1762 = vld [vmem:[#allocation5 + $0x268] sm:$0xff]
    %v1763 = vld [vmem:[#allocation5 + $0x270] sm:$0xff]
    %v1764 = vld [vmem:[#allocation5 + $0x278] sm:$0xff]
    %v1765 = vld [vmem:[#allocation5 + $0x280] sm:$0xff]
    %v1766 = vld [vmem:[#allocation5 + $0x288] sm:$0xff]
    %v1767 = vld [vmem:[#allocation5 + $0x290] sm:$0xff]
    %v1768 = vld [vmem:[#allocation5 + $0x298] sm:$0xff]
    %v1769 = vld [vmem:[#allocation5 + $0x2a0] sm:$0xff]
    %v1770 = vld [vmem:[#allocation5 + $0x2a8] sm:$0xff]
    %v1771 = vld [vmem:[#allocation5 + $0x2b0] sm:$0xff]
    %v1772 = vld [vmem:[#allocation5 + $0x2b8] sm:$0xff]
    %v1773 = vld [vmem:[#allocation5 + $0x2c0] sm:$0xff]
    %v1774 = vld [vmem:[#allocation5 + $0x2c8] sm:$0xff]
    %v1775 = vld [vmem:[#allocation5 + $0x2d0] sm:$0xff]
    %v1776 = vld [vmem:[#allocation5 + $0x2d8] sm:$0xff]
    %v1777 = vld [vmem:[#allocation5 + $0x2e0] sm:$0xff]
    %v1778 = vld [vmem:[#allocation5 + $0x2e8] sm:$0xff]
    %v1779 = vld [vmem:[#allocation5 + $0x2f0] sm:$0xff]
    %v1780 = vld [vmem:[#allocation5 + $0x2f8] sm:$0xff]
    %v1781 = vld [vmem:[#allocation5 + $0x300] sm:$0xff]
    %v1782 = vld [vmem:[#allocation5 + $0x308] sm:$0xff]
    %v1783 = vld [vmem:[#allocation5 + $0x310] sm:$0xff]
    %v1784 = vld [vmem:[#allocation5 + $0x318] sm:$0xff]
    %v1785 = vld [vmem:[#allocation5 + $0x320] sm:$0xff]
    %v1786 = vld [vmem:[#allocation5 + $0x328] sm:$0xff]
    %v1787 = vld [vmem:[#allocation5 + $0x330] sm:$0xff]
    %v1788 = vld [vmem:[#allocation5 + $0x338] sm:$0xff]
    %v1789 = vld [vmem:[#allocation5 + $0x340] sm:$0xff]
    %v1790 = vld [vmem:[#allocation5 + $0x348] sm:$0xff]
    %v1791 = vld [vmem:[#allocation5 + $0x350] sm:$0xff]
    %v1792 = vld [vmem:[#allocation5 + $0x358] sm:$0xff]
    %v1793 = vld [vmem:[#allocation5 + $0x360] sm:$0xff]
    %v1794 = vld [vmem:[#allocation5 + $0x368] sm:$0xff]
    %v1795 = vld [vmem:[#allocation5 + $0x370] sm:$0xff]
    %v1796 = vld [vmem:[#allocation5 + $0x378] sm:$0xff]
    %v1797 = vld [vmem:[#allocation5 + $0x380] sm:$0xff]
    %v1798 = vld [vmem:[#allocation5 + $0x388] sm:$0xff]
    %v1799 = vld [vmem:[#allocation5 + $0x390] sm:$0xff]
    %v1800 = vld [vmem:[#allocation5 + $0x398] sm:$0xff]
    %v1801 = vld [vmem:[#allocation5 + $0x3a0] sm:$0xff]
    %v1802 = vld [vmem:[#allocation5 + $0x3a8] sm:$0xff]
    %v1803 = vld [vmem:[#allocation5 + $0x3b0] sm:$0xff]
    %v1804 = vld [vmem:[#allocation5 + $0x3b8] sm:$0xff]
    %v1805 = vld [vmem:[#allocation5 + $0x3c0] sm:$0xff]
    %v1806 = vld [vmem:[#allocation5 + $0x3c8] sm:$0xff]
    %v1807 = vld [vmem:[#allocation5 + $0x3d0] sm:$0xff]
    %v1808 = vld [vmem:[#allocation5 + $0x3d8] sm:$0xff]
    %v1809 = vld [vmem:[#allocation5 + $0x3e0] sm:$0xff]
    %v1810 = vld [vmem:[#allocation5 + $0x3e8] sm:$0xff]
    %v1811 = vld [vmem:[#allocation5 + $0x3f0] sm:$0xff]
    %v1812 = vld [vmem:[#allocation5 + $0x3f8] sm:$0xff]
    %v1813 = vld [vmem:[#allocation2 + $0xc0] sm:$0xff]
    %v1814 = vld [vmem:[#allocation2 + $0xc8] sm:$0xff]
    %v1815 = vld [vmem:[#allocation2 + $0xd0] sm:$0xff]
    %v1816 = vld [vmem:[#allocation2 + $0xd8] sm:$0xff]
    %v1817 = vld [vmem:[#allocation2 + $0xe0] sm:$0xff]
    %v1818 = vld [vmem:[#allocation2 + $0xe8] sm:$0xff]
    %v1819 = vld [vmem:[#allocation2 + $0xf0] sm:$0xff]
    %v1820 = vld [vmem:[#allocation2 + $0xf8] sm:$0xff]
    %1821 = vmatprep.subr.mxu0 %v1686
    %1822 = vmatpush1.msra.mxu0 %v1685
    %1823 = vmatprep.subr.mxu0 %v1690
    %1824 = vmatpush1.msra.mxu0 %v1689
    %1825 = vmatprep.subr.mxu0 %v1694
    %1826 = vmatpush1.msra.mxu0 %v1693
    %1827 = vmatprep.subr.mxu0 %v1698
    %1828 = vmatpush1.msra.mxu0 %v1697
    %1829 = vmatprep.subr.mxu0 %v1702
    %1830 = vmatpush1.msra.mxu0 %v1701
    %1831 = vmatprep.subr.mxu0 %v1706
    %1832 = vmatpush1.msra.mxu0 %v1705
    %1833 = vmatprep.subr.mxu0 %v1710
    %1834 = vmatpush1.msra.mxu0 %v1709
    %1835 = vmatprep.subr.mxu0 %v1714
    %1836 = vmatpush1.msra.mxu0 %v1713
    %1837 = vmatprep.subr.mxu0 %v1718
    %1838 = vmatpush1.msra.mxu0 %v1717
    %1839 = vmatprep.subr.mxu0 %v1722
    %1840 = vmatpush1.msra.mxu0 %v1721
    %1841 = vmatprep.subr.mxu0 %v1726
    %1842 = vmatpush1.msra.mxu0 %v1725
    %1843 = vmatprep.subr.mxu0 %v1730
    %1844 = vmatpush1.msra.mxu0 %v1729
    %1845 = vmatprep.subr.mxu0 %v1734
    %1846 = vmatpush1.msra.mxu0 %v1733
    %1847 = vmatprep.subr.mxu0 %v1738
    %1848 = vmatpush1.msra.mxu0 %v1737
    %1849 = vmatprep.subr.mxu0 %v1742
    %1850 = vmatpush1.msra.mxu0 %v1741
    %1851 = vmatprep.subr.mxu0 %v1746
    %1852 = vmatpush1.msra.mxu0 %v1745
    %1853 = vmatprep.subr.mxu0 %v1750
    %1854 = vmatpush1.msra.mxu0 %v1749
    %1855 = vmatprep.subr.mxu0 %v1754
    %1856 = vmatpush1.msra.mxu0 %v1753
    %1857 = vmatprep.subr.mxu0 %v1758
    %1858 = vmatpush1.msra.mxu0 %v1757
    %1859 = vmatprep.subr.mxu0 %v1762
    %1860 = vmatpush1.msra.mxu0 %v1761
    %1861 = vmatprep.subr.mxu0 %v1766
    %1862 = vmatpush1.msra.mxu0 %v1765
    %1863 = vmatprep.subr.mxu0 %v1770
    %1864 = vmatpush1.msra.mxu0 %v1769
    %1865 = vmatprep.subr.mxu0 %v1774
    %1866 = vmatpush1.msra.mxu0 %v1773
    %1867 = vmatprep.subr.mxu0 %v1778
    %1868 = vmatpush1.msra.mxu0 %v1777
    %1869 = vmatprep.subr.mxu0 %v1782
    %1870 = vmatpush1.msra.mxu0 %v1781
    %1871 = vmatprep.subr.mxu0 %v1786
    %1872 = vmatpush1.msra.mxu0 %v1785
    %1873 = vmatprep.subr.mxu0 %v1790
    %1874 = vmatpush1.msra.mxu0 %v1789
    %1875 = vmatprep.subr.mxu0 %v1794
    %1876 = vmatpush1.msra.mxu0 %v1793
    %1877 = vmatprep.subr.mxu0 %v1798
    %1878 = vmatpush1.msra.mxu0 %v1797
    %1879 = vmatprep.subr.mxu0 %v1802
    %1880 = vmatpush1.msra.mxu0 %v1801
    %1881 = vmatprep.subr.mxu0 %v1806
    %1882 = vmatpush1.msra.mxu0 %v1805
    %1883 = vmatprep.subr.mxu0 %v1810
    %1884 = vmatpush1.msra.mxu0 %v1809
    %1885 = vmatprep.mubr.f32.mxu0 %v1679
    %1886 = vmatmul.mubr.f32.gmra.mrb[0].mxu0 %v1677
    %v1887 = vpop.f32.mrb[0].mxu0
    %v1888 = vadd.f32 %v1813, %v1887
    %v1889 = vpop.f32.mrb[0].mxu0
    %v1890 = vadd.f32 %v1814, %v1889
    %1891 = vmatprep.mubr.f32.mxu0 %v1680
    %1892 = vmatmul.mubr.f32.gmra.mrb[0].mxu0 %v1678
    %v1893 = vpop.f32.mrb[0].mxu0
    %v1894 = vadd.f32 %v1817, %v1893
    %v1895 = vpop.f32.mrb[0].mxu0
    %v1896 = vadd.f32 %v1818, %v1895
    %1897 = vdwg.mxu0
    %1898 = vmatprep.subr.mxu0 %v1688
    %1899 = vmatpush1.msra.mxu0 %v1687
    %1900 = vmatprep.subr.mxu0 %v1692
    %1901 = vmatpush1.msra.mxu0 %v1691
    %1902 = vmatprep.subr.mxu0 %v1696
    %1903 = vmatpush1.msra.mxu0 %v1695
    %1904 = vmatprep.subr.mxu0 %v1700
    %1905 = vmatpush1.msra.mxu0 %v1699
    %1906 = vmatprep.subr.mxu0 %v1704
    %1907 = vmatpush1.msra.mxu0 %v1703
    %1908 = vmatprep.subr.mxu0 %v1708
    %1909 = vmatpush1.msra.mxu0 %v1707
    %1910 = vmatprep.subr.mxu0 %v1712
    %1911 = vmatpush1.msra.mxu0 %v1711
    %1912 = vmatprep.subr.mxu0 %v1716
    %1913 = vmatpush1.msra.mxu0 %v1715
    %1914 = vmatprep.subr.mxu0 %v1720
    %1915 = vmatpush1.msra.mxu0 %v1719
    %1916 = vmatprep.subr.mxu0 %v1724
    %1917 = vmatpush1.msra.mxu0 %v1723
    %1918 = vmatprep.subr.mxu0 %v1728
    %1919 = vmatpush1.msra.mxu0 %v1727
    %1920 = vmatprep.subr.mxu0 %v1732
    %1921 = vmatpush1.msra.mxu0 %v1731
    %1922 = vmatprep.subr.mxu0 %v1736
    %1923 = vmatpush1.msra.mxu0 %v1735
    %1924 = vmatprep.subr.mxu0 %v1740
    %1925 = vmatpush1.msra.mxu0 %v1739
    %1926 = vmatprep.subr.mxu0 %v1744
    %1927 = vmatpush1.msra.mxu0 %v1743
    %1928 = vmatprep.subr.mxu0 %v1748
    %1929 = vmatpush1.msra.mxu0 %v1747
    %1930 = vmatprep.subr.mxu0 %v1752
    %1931 = vmatpush1.msra.mxu0 %v1751
    %1932 = vmatprep.subr.mxu0 %v1756
    %1933 = vmatpush1.msra.mxu0 %v1755
    %1934 = vmatprep.subr.mxu0 %v1760
    %1935 = vmatpush1.msra.mxu0 %v1759
    %1936 = vmatprep.subr.mxu0 %v1764
    %1937 = vmatpush1.msra.mxu0 %v1763
    %1938 = vmatprep.subr.mxu0 %v1768
    %1939 = vmatpush1.msra.mxu0 %v1767
    %1940 = vmatprep.subr.mxu0 %v1772
    %1941 = vmatpush1.msra.mxu0 %v1771
    %1942 = vmatprep.subr.mxu0 %v1776
    %1943 = vmatpush1.msra.mxu0 %v1775
    %1944 = vmatprep.subr.mxu0 %v1780
    %1945 = vmatpush1.msra.mxu0 %v1779
    %1946 = vmatprep.subr.mxu0 %v1784
    %1947 = vmatpush1.msra.mxu0 %v1783
    %1948 = vmatprep.subr.mxu0 %v1788
    %1949 = vmatpush1.msra.mxu0 %v1787
    %1950 = vmatprep.subr.mxu0 %v1792
    %1951 = vmatpush1.msra.mxu0 %v1791
    %1952 = vmatprep.subr.mxu0 %v1796
    %1953 = vmatpush1.msra.mxu0 %v1795
    %1954 = vmatprep.subr.mxu0 %v1800
    %1955 = vmatpush1.msra.mxu0 %v1799
    %1956 = vmatprep.subr.mxu0 %v1804
    %1957 = vmatpush1.msra.mxu0 %v1803
    %1958 = vmatprep.subr.mxu0 %v1808
    %1959 = vmatpush1.msra.mxu0 %v1807
    %1960 = vmatprep.subr.mxu0 %v1812
    %1961 = vmatpush1.msra.mxu0 %v1811
    %1962 = vmatprep.mubr.f32.mxu0 %v1679
    %1963 = vmatmul.mubr.f32.gmra.mrb[0].mxu0 %v1677
    %v1964 = vpop.f32.mrb[0].mxu0
    %v1965 = vadd.f32 %v1815, %v1964
    %v1966 = vpop.f32.mrb[0].mxu0
    %v1967 = vadd.f32 %v1816, %v1966
    %1968 = vmatprep.mubr.f32.mxu0 %v1680
    %1969 = vmatmul.mubr.f32.gmra.mrb[0].mxu0 %v1678
    %v1970 = vpop.f32.mrb[0].mxu0
    %v1971 = vadd.f32 %v1819, %v1970
    %v1972 = vpop.f32.mrb[0].mxu0
    %v1973 = vadd.f32 %v1820, %v1972
    %1974 = vdwg.mxu0
    %v1975 = vadd.f32 %v1888, %v615
    %v1976 = vadd.f32 %v1890, %v616
    %v1977 = vadd.f32 %v1965, %v617
    %v1978 = vadd.f32 %v1967, %v618
    %v1979 = vadd.f32 %v1894, %v619
    %v1980 = vadd.f32 %v1896, %v620
    %v1981 = vadd.f32 %v1971, %v621
    %v1982 = vadd.f32 %v1973, %v622
    %v1983 = vxor.u32 %v1975, 2147483648
    %v1984 = vxor.u32 %v1979, 2147483648
    %v1985 = vmul.f32 %v1983, 1.442695
    %v1986 = vpow.pop %v1985
    %v1987 = vmul.f32 %v1984, 1.442695
    %v1988 = vpow.pop %v1987
    %v1989 = vadd.f32 %v1986, 1.0
    %v1990 = vadd.f32 %v1988, 1.0
    %v1991 = vrcp.pop %v1989
    %v1992 = vmul.f32 1.0, %v1991
    %v1993 = vrcp.pop %v1990
    %v1994 = vmul.f32 1.0, %v1993
    %v1995 = vxor.u32 %v1976, 2147483648
    %v1996 = vxor.u32 %v1980, 2147483648
    %v1997 = vmul.f32 %v1995, 1.442695
    %v1998 = vpow.pop %v1997
    %v1999 = vmul.f32 %v1996, 1.442695
    %v2000 = vpow.pop %v1999
    %v2001 = vadd.f32 %v1998, 1.0
    %v2002 = vadd.f32 %v2000, 1.0
    %v2003 = vrcp.pop %v2001
    %v2004 = vmul.f32 1.0, %v2003
    %v2005 = vrcp.pop %v2002
    %v2006 = vmul.f32 1.0, %v2005
    %v2007 = vtanh.pop %v1977
    %v2008 = vtanh.pop %v1981
    %v2009 = vxor.u32 %v1978, 2147483648
    %v2010 = vxor.u32 %v1982, 2147483648
    %v2011 = vmul.f32 %v2009, 1.442695
    %v2012 = vpow.pop %v2011
    %v2013 = vmul.f32 %v2010, 1.442695
    %v2014 = vpow.pop %v2013
    %v2015 = vadd.f32 %v2012, 1.0
    %v2016 = vadd.f32 %v2014, 1.0
    %v2017 = vrcp.pop %v2015
    %v2018 = vmul.f32 1.0, %v2017
    %v2019 = vrcp.pop %v2016
    %v2020 = vmul.f32 1.0, %v2019
    %v2021 = vmul.f32 %v2004, %v1671
    %v2022 = vmul.f32 %v2006, %v1672
    %v2023 = vmul.f32 %v1992, %v2007
    %v2024 = vmul.f32 %v1994, %v2008
    %v2025 = vadd.f32 %v2021, %v2023
    %v2026 = vadd.f32 %v2022, %v2024
    %v2027 = vtanh.pop %v2025
    %v2028 = vtanh.pop %v2026
    %v2029 = vmul.f32 %v2018, %v2027
    %v2030 = vmul.f32 %v2020, %v2028
    %v2031 = vmul.f32 %v2029, %v92
    %v2032 = vmul.f32 %v2030, %v93
    %v2033 = vmul.f32 %v2029, %v94
    %v2034 = vmul.f32 %v2030, %v95
    %2035 = vst [vmem:[#allocation3 + $0xc0] sm:$0xff] %v2029
    %2036 = vst [vmem:[#allocation3 + $0x108] sm:$0xff] %v2030
    %2037 = vst [vmem:[#allocation3 + $0x130] sm:$0xff] %v2029
    %2038 = vst [vmem:[#allocation3 + $0xf8] sm:$0xff] %v2030
    %v2039 = vld [vmem:[#allocation5] sm:$0xff]
    %v2040 = vld [vmem:[#allocation5 + $0x8] sm:$0xff]
    %v2041 = vld [vmem:[#allocation5 + $0x10] sm:$0xff]
    %v2042 = vld [vmem:[#allocation5 + $0x18] sm:$0xff]
    %v2043 = vld [vmem:[#allocation5 + $0x20] sm:$0xff]
    %v2044 = vld [vmem:[#allocation5 + $0x28] sm:$0xff]
    %v2045 = vld [vmem:[#allocation5 + $0x30] sm:$0xff]
    %v2046 = vld [vmem:[#allocation5 + $0x38] sm:$0xff]
    %v2047 = vld [vmem:[#allocation5 + $0x40] sm:$0xff]
    %v2048 = vld [vmem:[#allocation5 + $0x48] sm:$0xff]
    %v2049 = vld [vmem:[#allocation5 + $0x50] sm:$0xff]
    %v2050 = vld [vmem:[#allocation5 + $0x58] sm:$0xff]
    %v2051 = vld [vmem:[#allocation5 + $0x60] sm:$0xff]
    %v2052 = vld [vmem:[#allocation5 + $0x68] sm:$0xff]
    %v2053 = vld [vmem:[#allocation5 + $0x70] sm:$0xff]
    %v2054 = vld [vmem:[#allocation5 + $0x78] sm:$0xff]
    %v2055 = vld [vmem:[#allocation5 + $0x80] sm:$0xff]
    %v2056 = vld [vmem:[#allocation5 + $0x88] sm:$0xff]
    %v2057 = vld [vmem:[#allocation5 + $0x90] sm:$0xff]
    %v2058 = vld [vmem:[#allocation5 + $0x98] sm:$0xff]
    %v2059 = vld [vmem:[#allocation5 + $0xa0] sm:$0xff]
    %v2060 = vld [vmem:[#allocation5 + $0xa8] sm:$0xff]
    %v2061 = vld [vmem:[#allocation5 + $0xb0] sm:$0xff]
    %v2062 = vld [vmem:[#allocation5 + $0xb8] sm:$0xff]
    %v2063 = vld [vmem:[#allocation5 + $0xc0] sm:$0xff]
    %v2064 = vld [vmem:[#allocation5 + $0xc8] sm:$0xff]
    %v2065 = vld [vmem:[#allocation5 + $0xd0] sm:$0xff]
    %v2066 = vld [vmem:[#allocation5 + $0xd8] sm:$0xff]
    %v2067 = vld [vmem:[#allocation5 + $0xe0] sm:$0xff]
    %v2068 = vld [vmem:[#allocation5 + $0xe8] sm:$0xff]
    %v2069 = vld [vmem:[#allocation5 + $0xf0] sm:$0xff]
    %v2070 = vld [vmem:[#allocation5 + $0xf8] sm:$0xff]
    %v2071 = vld [vmem:[#allocation5 + $0x100] sm:$0xff]
    %v2072 = vld [vmem:[#allocation5 + $0x108] sm:$0xff]
    %v2073 = vld [vmem:[#allocation5 + $0x110] sm:$0xff]
    %v2074 = vld [vmem:[#allocation5 + $0x118] sm:$0xff]
    %v2075 = vld [vmem:[#allocation5 + $0x120] sm:$0xff]
    %v2076 = vld [vmem:[#allocation5 + $0x128] sm:$0xff]
    %v2077 = vld [vmem:[#allocation5 + $0x130] sm:$0xff]
    %v2078 = vld [vmem:[#allocation5 + $0x138] sm:$0xff]
    %v2079 = vld [vmem:[#allocation5 + $0x140] sm:$0xff]
    %v2080 = vld [vmem:[#allocation5 + $0x148] sm:$0xff]
    %v2081 = vld [vmem:[#allocation5 + $0x150] sm:$0xff]
    %v2082 = vld [vmem:[#allocation5 + $0x158] sm:$0xff]
    %v2083 = vld [vmem:[#allocation5 + $0x160] sm:$0xff]
    %v2084 = vld [vmem:[#allocation5 + $0x168] sm:$0xff]
    %v2085 = vld [vmem:[#allocation5 + $0x170] sm:$0xff]
    %v2086 = vld [vmem:[#allocation5 + $0x178] sm:$0xff]
    %v2087 = vld [vmem:[#allocation5 + $0x180] sm:$0xff]
    %v2088 = vld [vmem:[#allocation5 + $0x188] sm:$0xff]
    %v2089 = vld [vmem:[#allocation5 + $0x190] sm:$0xff]
    %v2090 = vld [vmem:[#allocation5 + $0x198] sm:$0xff]
    %v2091 = vld [vmem:[#allocation5 + $0x1a0] sm:$0xff]
    %v2092 = vld [vmem:[#allocation5 + $0x1a8] sm:$0xff]
    %v2093 = vld [vmem:[#allocation5 + $0x1b0] sm:$0xff]
    %v2094 = vld [vmem:[#allocation5 + $0x1b8] sm:$0xff]
    %v2095 = vld [vmem:[#allocation5 + $0x1c0] sm:$0xff]
    %v2096 = vld [vmem:[#allocation5 + $0x1c8] sm:$0xff]
    %v2097 = vld [vmem:[#allocation5 + $0x1d0] sm:$0xff]
    %v2098 = vld [vmem:[#allocation5 + $0x1d8] sm:$0xff]
    %v2099 = vld [vmem:[#allocation5 + $0x1e0] sm:$0xff]
    %v2100 = vld [vmem:[#allocation5 + $0x1e8] sm:$0xff]
    %v2101 = vld [vmem:[#allocation5 + $0x1f0] sm:$0xff]
    %v2102 = vld [vmem:[#allocation5 + $0x1f8] sm:$0xff]
    %v2103 = vld [vmem:[#allocation5 + $0x200] sm:$0xff]
    %v2104 = vld [vmem:[#allocation5 + $0x208] sm:$0xff]
    %v2105 = vld [vmem:[#allocation5 + $0x210] sm:$0xff]
    %v2106 = vld [vmem:[#allocation5 + $0x218] sm:$0xff]
    %v2107 = vld [vmem:[#allocation5 + $0x220] sm:$0xff]
    %v2108 = vld [vmem:[#allocation5 + $0x228] sm:$0xff]
    %v2109 = vld [vmem:[#allocation5 + $0x230] sm:$0xff]
    %v2110 = vld [vmem:[#allocation5 + $0x238] sm:$0xff]
    %v2111 = vld [vmem:[#allocation5 + $0x240] sm:$0xff]
    %v2112 = vld [vmem:[#allocation5 + $0x248] sm:$0xff]
    %v2113 = vld [vmem:[#allocation5 + $0x250] sm:$0xff]
    %v2114 = vld [vmem:[#allocation5 + $0x258] sm:$0xff]
    %v2115 = vld [vmem:[#allocation5 + $0x260] sm:$0xff]
    %v2116 = vld [vmem:[#allocation5 + $0x268] sm:$0xff]
    %v2117 = vld [vmem:[#allocation5 + $0x270] sm:$0xff]
    %v2118 = vld [vmem:[#allocation5 + $0x278] sm:$0xff]
    %v2119 = vld [vmem:[#allocation5 + $0x280] sm:$0xff]
    %v2120 = vld [vmem:[#allocation5 + $0x288] sm:$0xff]
    %v2121 = vld [vmem:[#allocation5 + $0x290] sm:$0xff]
    %v2122 = vld [vmem:[#allocation5 + $0x298] sm:$0xff]
    %v2123 = vld [vmem:[#allocation5 + $0x2a0] sm:$0xff]
    %v2124 = vld [vmem:[#allocation5 + $0x2a8] sm:$0xff]
    %v2125 = vld [vmem:[#allocation5 + $0x2b0] sm:$0xff]
    %v2126 = vld [vmem:[#allocation5 + $0x2b8] sm:$0xff]
    %v2127 = vld [vmem:[#allocation5 + $0x2c0] sm:$0xff]
    %v2128 = vld [vmem:[#allocation5 + $0x2c8] sm:$0xff]
    %v2129 = vld [vmem:[#allocation5 + $0x2d0] sm:$0xff]
    %v2130 = vld [vmem:[#allocation5 + $0x2d8] sm:$0xff]
    %v2131 = vld [vmem:[#allocation5 + $0x2e0] sm:$0xff]
    %v2132 = vld [vmem:[#allocation5 + $0x2e8] sm:$0xff]
    %v2133 = vld [vmem:[#allocation5 + $0x2f0] sm:$0xff]
    %v2134 = vld [vmem:[#allocation5 + $0x2f8] sm:$0xff]
    %v2135 = vld [vmem:[#allocation5 + $0x300] sm:$0xff]
    %v2136 = vld [vmem:[#allocation5 + $0x308] sm:$0xff]
    %v2137 = vld [vmem:[#allocation5 + $0x310] sm:$0xff]
    %v2138 = vld [vmem:[#allocation5 + $0x318] sm:$0xff]
    %v2139 = vld [vmem:[#allocation5 + $0x320] sm:$0xff]
    %v2140 = vld [vmem:[#allocation5 + $0x328] sm:$0xff]
    %v2141 = vld [vmem:[#allocation5 + $0x330] sm:$0xff]
    %v2142 = vld [vmem:[#allocation5 + $0x338] sm:$0xff]
    %v2143 = vld [vmem:[#allocation5 + $0x340] sm:$0xff]
    %v2144 = vld [vmem:[#allocation5 + $0x348] sm:$0xff]
    %v2145 = vld [vmem:[#allocation5 + $0x350] sm:$0xff]
    %v2146 = vld [vmem:[#allocation5 + $0x358] sm:$0xff]
    %v2147 = vld [vmem:[#allocation5 + $0x360] sm:$0xff]
    %v2148 = vld [vmem:[#allocation5 + $0x368] sm:$0xff]
    %v2149 = vld [vmem:[#allocation5 + $0x370] sm:$0xff]
    %v2150 = vld [vmem:[#allocation5 + $0x378] sm:$0xff]
    %v2151 = vld [vmem:[#allocation5 + $0x380] sm:$0xff]
    %v2152 = vld [vmem:[#allocation5 + $0x388] sm:$0xff]
    %v2153 = vld [vmem:[#allocation5 + $0x390] sm:$0xff]
    %v2154 = vld [vmem:[#allocation5 + $0x398] sm:$0xff]
    %v2155 = vld [vmem:[#allocation5 + $0x3a0] sm:$0xff]
    %v2156 = vld [vmem:[#allocation5 + $0x3a8] sm:$0xff]
    %v2157 = vld [vmem:[#allocation5 + $0x3b0] sm:$0xff]
    %v2158 = vld [vmem:[#allocation5 + $0x3b8] sm:$0xff]
    %v2159 = vld [vmem:[#allocation5 + $0x3c0] sm:$0xff]
    %v2160 = vld [vmem:[#allocation5 + $0x3c8] sm:$0xff]
    %v2161 = vld [vmem:[#allocation5 + $0x3d0] sm:$0xff]
    %v2162 = vld [vmem:[#allocation5 + $0x3d8] sm:$0xff]
    %v2163 = vld [vmem:[#allocation5 + $0x3e0] sm:$0xff]
    %v2164 = vld [vmem:[#allocation5 + $0x3e8] sm:$0xff]
    %v2165 = vld [vmem:[#allocation5 + $0x3f0] sm:$0xff]
    %v2166 = vld [vmem:[#allocation5 + $0x3f8] sm:$0xff]
    %v2167 = vld [vmem:[#allocation2 + $0x100] sm:$0xff]
    %v2168 = vld [vmem:[#allocation2 + $0x108] sm:$0xff]
    %v2169 = vld [vmem:[#allocation2 + $0x110] sm:$0xff]
    %v2170 = vld [vmem:[#allocation2 + $0x118] sm:$0xff]
    %v2171 = vld [vmem:[#allocation2 + $0x120] sm:$0xff]
    %v2172 = vld [vmem:[#allocation2 + $0x128] sm:$0xff]
    %v2173 = vld [vmem:[#allocation2 + $0x130] sm:$0xff]
    %v2174 = vld [vmem:[#allocation2 + $0x138] sm:$0xff]
    %2175 = vmatprep.subr.mxu0 %v2040
    %2176 = vmatpush1.msra.mxu0 %v2039
    %2177 = vmatprep.subr.mxu0 %v2044
    %2178 = vmatpush1.msra.mxu0 %v2043
    %2179 = vmatprep.subr.mxu0 %v2048
    %2180 = vmatpush1.msra.mxu0 %v2047
    %2181 = vmatprep.subr.mxu0 %v2052
    %2182 = vmatpush1.msra.mxu0 %v2051
    %2183 = vmatprep.subr.mxu0 %v2056
    %2184 = vmatpush1.msra.mxu0 %v2055
    %2185 = vmatprep.subr.mxu0 %v2060
    %2186 = vmatpush1.msra.mxu0 %v2059
    %2187 = vmatprep.subr.mxu0 %v2064
    %2188 = vmatpush1.msra.mxu0 %v2063
    %2189 = vmatprep.subr.mxu0 %v2068
    %2190 = vmatpush1.msra.mxu0 %v2067
    %2191 = vmatprep.subr.mxu0 %v2072
    %2192 = vmatpush1.msra.mxu0 %v2071
    %2193 = vmatprep.subr.mxu0 %v2076
    %2194 = vmatpush1.msra.mxu0 %v2075
    %2195 = vmatprep.subr.mxu0 %v2080
    %2196 = vmatpush1.msra.mxu0 %v2079
    %2197 = vmatprep.subr.mxu0 %v2084
    %2198 = vmatpush1.msra.mxu0 %v2083
    %2199 = vmatprep.subr.mxu0 %v2088
    %2200 = vmatpush1.msra.mxu0 %v2087
    %2201 = vmatprep.subr.mxu0 %v2092
    %2202 = vmatpush1.msra.mxu0 %v2091
    %2203 = vmatprep.subr.mxu0 %v2096
    %2204 = vmatpush1.msra.mxu0 %v2095
    %2205 = vmatprep.subr.mxu0 %v2100
    %2206 = vmatpush1.msra.mxu0 %v2099
    %2207 = vmatprep.subr.mxu0 %v2104
    %2208 = vmatpush1.msra.mxu0 %v2103
    %2209 = vmatprep.subr.mxu0 %v2108
    %2210 = vmatpush1.msra.mxu0 %v2107
    %2211 = vmatprep.subr.mxu0 %v2112
    %2212 = vmatpush1.msra.mxu0 %v2111
    %2213 = vmatprep.subr.mxu0 %v2116
    %2214 = vmatpush1.msra.mxu0 %v2115
    %2215 = vmatprep.subr.mxu0 %v2120
    %2216 = vmatpush1.msra.mxu0 %v2119
    %2217 = vmatprep.subr.mxu0 %v2124
    %2218 = vmatpush1.msra.mxu0 %v2123
    %2219 = vmatprep.subr.mxu0 %v2128
    %2220 = vmatpush1.msra.mxu0 %v2127
    %2221 = vmatprep.subr.mxu0 %v2132
    %2222 = vmatpush1.msra.mxu0 %v2131
    %2223 = vmatprep.subr.mxu0 %v2136
    %2224 = vmatpush1.msra.mxu0 %v2135
    %2225 = vmatprep.subr.mxu0 %v2140
    %2226 = vmatpush1.msra.mxu0 %v2139
    %2227 = vmatprep.subr.mxu0 %v2144
    %2228 = vmatpush1.msra.mxu0 %v2143
    %2229 = vmatprep.subr.mxu0 %v2148
    %2230 = vmatpush1.msra.mxu0 %v2147
    %2231 = vmatprep.subr.mxu0 %v2152
    %2232 = vmatpush1.msra.mxu0 %v2151
    %2233 = vmatprep.subr.mxu0 %v2156
    %2234 = vmatpush1.msra.mxu0 %v2155
    %2235 = vmatprep.subr.mxu0 %v2160
    %2236 = vmatpush1.msra.mxu0 %v2159
    %2237 = vmatprep.subr.mxu0 %v2164
    %2238 = vmatpush1.msra.mxu0 %v2163
    %2239 = vmatprep.mubr.f32.mxu0 %v2033
    %2240 = vmatmul.mubr.f32.gmra.mrb[0].mxu0 %v2031
    %v2241 = vpop.f32.mrb[0].mxu0
    %v2242 = vadd.f32 %v2167, %v2241
    %v2243 = vpop.f32.mrb[0].mxu0
    %v2244 = vadd.f32 %v2168, %v2243
    %2245 = vmatprep.mubr.f32.mxu0 %v2034
    %2246 = vmatmul.mubr.f32.gmra.mrb[0].mxu0 %v2032
    %v2247 = vpop.f32.mrb[0].mxu0
    %v2248 = vadd.f32 %v2171, %v2247
    %v2249 = vpop.f32.mrb[0].mxu0
    %v2250 = vadd.f32 %v2172, %v2249
    %2251 = vdwg.mxu0
    %2252 = vmatprep.subr.mxu0 %v2042
    %2253 = vmatpush1.msra.mxu0 %v2041
    %2254 = vmatprep.subr.mxu0 %v2046
    %2255 = vmatpush1.msra.mxu0 %v2045
    %2256 = vmatprep.subr.mxu0 %v2050
    %2257 = vmatpush1.msra.mxu0 %v2049
    %2258 = vmatprep.subr.mxu0 %v2054
    %2259 = vmatpush1.msra.mxu0 %v2053
    %2260 = vmatprep.subr.mxu0 %v2058
    %2261 = vmatpush1.msra.mxu0 %v2057
    %2262 = vmatprep.subr.mxu0 %v2062
    %2263 = vmatpush1.msra.mxu0 %v2061
    %2264 = vmatprep.subr.mxu0 %v2066
    %2265 = vmatpush1.msra.mxu0 %v2065
    %2266 = vmatprep.subr.mxu0 %v2070
    %2267 = vmatpush1.msra.mxu0 %v2069
    %2268 = vmatprep.subr.mxu0 %v2074
    %2269 = vmatpush1.msra.mxu0 %v2073
    %2270 = vmatprep.subr.mxu0 %v2078
    %2271 = vmatpush1.msra.mxu0 %v2077
    %2272 = vmatprep.subr.mxu0 %v2082
    %2273 = vmatpush1.msra.mxu0 %v2081
    %2274 = vmatprep.subr.mxu0 %v2086
    %2275 = vmatpush1.msra.mxu0 %v2085
    %2276 = vmatprep.subr.mxu0 %v2090
    %2277 = vmatpush1.msra.mxu0 %v2089
    %2278 = vmatprep.subr.mxu0 %v2094
    %2279 = vmatpush1.msra.mxu0 %v2093
    %2280 = vmatprep.subr.mxu0 %v2098
    %2281 = vmatpush1.msra.mxu0 %v2097
    %2282 = vmatprep.subr.mxu0 %v2102
    %2283 = vmatpush1.msra.mxu0 %v2101
    %2284 = vmatprep.subr.mxu0 %v2106
    %2285 = vmatpush1.msra.mxu0 %v2105
    %2286 = vmatprep.subr.mxu0 %v2110
    %2287 = vmatpush1.msra.mxu0 %v2109
    %2288 = vmatprep.subr.mxu0 %v2114
    %2289 = vmatpush1.msra.mxu0 %v2113
    %2290 = vmatprep.subr.mxu0 %v2118
    %2291 = vmatpush1.msra.mxu0 %v2117
    %2292 = vmatprep.subr.mxu0 %v2122
    %2293 = vmatpush1.msra.mxu0 %v2121
    %2294 = vmatprep.subr.mxu0 %v2126
    %2295 = vmatpush1.msra.mxu0 %v2125
    %2296 = vmatprep.subr.mxu0 %v2130
    %2297 = vmatpush1.msra.mxu0 %v2129
    %2298 = vmatprep.subr.mxu0 %v2134
    %2299 = vmatpush1.msra.mxu0 %v2133
    %2300 = vmatprep.subr.mxu0 %v2138
    %2301 = vmatpush1.msra.mxu0 %v2137
    %2302 = vmatprep.subr.mxu0 %v2142
    %2303 = vmatpush1.msra.mxu0 %v2141
    %2304 = vmatprep.subr.mxu0 %v2146
    %2305 = vmatpush1.msra.mxu0 %v2145
    %2306 = vmatprep.subr.mxu0 %v2150
    %2307 = vmatpush1.msra.mxu0 %v2149
    %2308 = vmatprep.subr.mxu0 %v2154
    %2309 = vmatpush1.msra.mxu0 %v2153
    %2310 = vmatprep.subr.mxu0 %v2158
    %2311 = vmatpush1.msra.mxu0 %v2157
    %2312 = vmatprep.subr.mxu0 %v2162
    %2313 = vmatpush1.msra.mxu0 %v2161
    %2314 = vmatprep.subr.mxu0 %v2166
    %2315 = vmatpush1.msra.mxu0 %v2165
    %2316 = vmatprep.mubr.f32.mxu0 %v2033
    %2317 = vmatmul.mubr.f32.gmra.mrb[0].mxu0 %v2031
    %v2318 = vpop.f32.mrb[0].mxu0
    %v2319 = vadd.f32 %v2169, %v2318
    %v2320 = vpop.f32.mrb[0].mxu0
    %v2321 = vadd.f32 %v2170, %v2320
    %2322 = vmatprep.mubr.f32.mxu0 %v2034
    %2323 = vmatmul.mubr.f32.gmra.mrb[0].mxu0 %v2032
    %v2324 = vpop.f32.mrb[0].mxu0
    %v2325 = vadd.f32 %v2173, %v2324
    %v2326 = vpop.f32.mrb[0].mxu0
    %v2327 = vadd.f32 %v2174, %v2326
    %2328 = vdwg.mxu0
    %v2329 = vadd.f32 %v2242, %v615
    %v2330 = vadd.f32 %v2244, %v616
    %v2331 = vadd.f32 %v2319, %v617
    %v2332 = vadd.f32 %v2321, %v618
    %v2333 = vadd.f32 %v2248, %v619
    %v2334 = vadd.f32 %v2250, %v620
    %v2335 = vadd.f32 %v2325, %v621
    %v2336 = vadd.f32 %v2327, %v622
    %v2337 = vxor.u32 %v2329, 2147483648
    %v2338 = vxor.u32 %v2333, 2147483648
    %v2339 = vmul.f32 %v2337, 1.442695
    %v2340 = vpow.pop %v2339
    %v2341 = vmul.f32 %v2338, 1.442695
    %v2342 = vpow.pop %v2341
    %v2343 = vadd.f32 %v2340, 1.0
    %v2344 = vadd.f32 %v2342, 1.0
    %v2345 = vrcp.pop %v2343
    %v2346 = vmul.f32 1.0, %v2345
    %v2347 = vrcp.pop %v2344
    %v2348 = vmul.f32 1.0, %v2347
    %v2349 = vxor.u32 %v2330, 2147483648
    %v2350 = vxor.u32 %v2334, 2147483648
    %v2351 = vmul.f32 %v2349, 1.442695
    %v2352 = vpow.pop %v2351
    %v2353 = vmul.f32 %v2350, 1.442695
    %v2354 = vpow.pop %v2353
    %v2355 = vadd.f32 %v2352, 1.0
    %v2356 = vadd.f32 %v2354, 1.0
    %v2357 = vrcp.pop %v2355
    %v2358 = vmul.f32 1.0, %v2357
    %v2359 = vrcp.pop %v2356
    %v2360 = vmul.f32 1.0, %v2359
    %v2361 = vtanh.pop %v2331
    %v2362 = vtanh.pop %v2335
    %v2363 = vxor.u32 %v2332, 2147483648
    %v2364 = vxor.u32 %v2336, 2147483648
    %v2365 = vmul.f32 %v2363, 1.442695
    %v2366 = vpow.pop %v2365
    %v2367 = vmul.f32 %v2364, 1.442695
    %v2368 = vpow.pop %v2367
    %v2369 = vadd.f32 %v2366, 1.0
    %v2370 = vadd.f32 %v2368, 1.0
    %v2371 = vrcp.pop %v2369
    %v2372 = vmul.f32 1.0, %v2371
    %v2373 = vrcp.pop %v2370
    %v2374 = vmul.f32 1.0, %v2373
    %v2375 = vmul.f32 %v2358, %v2025
    %v2376 = vmul.f32 %v2360, %v2026
    %v2377 = vmul.f32 %v2346, %v2361
    %v2378 = vmul.f32 %v2348, %v2362
    %v2379 = vadd.f32 %v2375, %v2377
    %v2380 = vadd.f32 %v2376, %v2378
    %v2381 = vtanh.pop %v2379
    %v2382 = vtanh.pop %v2380
    %v2383 = vmul.f32 %v2372, %v2381
    %v2384 = vmul.f32 %v2374, %v2382
    %v2385 = vmul.f32 %v2383, %v92
    %v2386 = vmul.f32 %v2384, %v93
    %v2387 = vmul.f32 %v2383, %v94
    %v2388 = vmul.f32 %v2384, %v95
    %2389 = vst [vmem:[#allocation3 + $0x100] sm:$0xff] %v2383
    %2390 = vst [vmem:[#allocation3 + $0xc8] sm:$0xff] %v2384
    %2391 = vst [vmem:[#allocation3 + $0xf0] sm:$0xff] %v2383
    %2392 = vst [vmem:[#allocation3 + $0x138] sm:$0xff] %v2384
    %v2393 = vld [vmem:[#allocation5] sm:$0xff]
    %v2394 = vld [vmem:[#allocation5 + $0x8] sm:$0xff]
    %v2395 = vld [vmem:[#allocation5 + $0x10] sm:$0xff]
    %v2396 = vld [vmem:[#allocation5 + $0x18] sm:$0xff]
    %v2397 = vld [vmem:[#allocation5 + $0x20] sm:$0xff]
    %v2398 = vld [vmem:[#allocation5 + $0x28] sm:$0xff]
    %v2399 = vld [vmem:[#allocation5 + $0x30] sm:$0xff]
    %v2400 = vld [vmem:[#allocation5 + $0x38] sm:$0xff]
    %v2401 = vld [vmem:[#allocation5 + $0x40] sm:$0xff]
    %v2402 = vld [vmem:[#allocation5 + $0x48] sm:$0xff]
    %v2403 = vld [vmem:[#allocation5 + $0x50] sm:$0xff]
    %v2404 = vld [vmem:[#allocation5 + $0x58] sm:$0xff]
    %v2405 = vld [vmem:[#allocation5 + $0x60] sm:$0xff]
    %v2406 = vld [vmem:[#allocation5 + $0x68] sm:$0xff]
    %v2407 = vld [vmem:[#allocation5 + $0x70] sm:$0xff]
    %v2408 = vld [vmem:[#allocation5 + $0x78] sm:$0xff]
    %v2409 = vld [vmem:[#allocation5 + $0x80] sm:$0xff]
    %v2410 = vld [vmem:[#allocation5 + $0x88] sm:$0xff]
    %v2411 = vld [vmem:[#allocation5 + $0x90] sm:$0xff]
    %v2412 = vld [vmem:[#allocation5 + $0x98] sm:$0xff]
    %v2413 = vld [vmem:[#allocation5 + $0xa0] sm:$0xff]
    %v2414 = vld [vmem:[#allocation5 + $0xa8] sm:$0xff]
    %v2415 = vld [vmem:[#allocation5 + $0xb0] sm:$0xff]
    %v2416 = vld [vmem:[#allocation5 + $0xb8] sm:$0xff]
    %v2417 = vld [vmem:[#allocation5 + $0xc0] sm:$0xff]
    %v2418 = vld [vmem:[#allocation5 + $0xc8] sm:$0xff]
    %v2419 = vld [vmem:[#allocation5 + $0xd0] sm:$0xff]
    %v2420 = vld [vmem:[#allocation5 + $0xd8] sm:$0xff]
    %v2421 = vld [vmem:[#allocation5 + $0xe0] sm:$0xff]
    %v2422 = vld [vmem:[#allocation5 + $0xe8] sm:$0xff]
    %v2423 = vld [vmem:[#allocation5 + $0xf0] sm:$0xff]
    %v2424 = vld [vmem:[#allocation5 + $0xf8] sm:$0xff]
    %v2425 = vld [vmem:[#allocation5 + $0x100] sm:$0xff]
    %v2426 = vld [vmem:[#allocation5 + $0x108] sm:$0xff]
    %v2427 = vld [vmem:[#allocation5 + $0x110] sm:$0xff]
    %v2428 = vld [vmem:[#allocation5 + $0x118] sm:$0xff]
    %v2429 = vld [vmem:[#allocation5 + $0x120] sm:$0xff]
    %v2430 = vld [vmem:[#allocation5 + $0x128] sm:$0xff]
    %v2431 = vld [vmem:[#allocation5 + $0x130] sm:$0xff]
    %v2432 = vld [vmem:[#allocation5 + $0x138] sm:$0xff]
    %v2433 = vld [vmem:[#allocation5 + $0x140] sm:$0xff]
    %v2434 = vld [vmem:[#allocation5 + $0x148] sm:$0xff]
    %v2435 = vld [vmem:[#allocation5 + $0x150] sm:$0xff]
    %v2436 = vld [vmem:[#allocation5 + $0x158] sm:$0xff]
    %v2437 = vld [vmem:[#allocation5 + $0x160] sm:$0xff]
    %v2438 = vld [vmem:[#allocation5 + $0x168] sm:$0xff]
    %v2439 = vld [vmem:[#allocation5 + $0x170] sm:$0xff]
    %v2440 = vld [vmem:[#allocation5 + $0x178] sm:$0xff]
    %v2441 = vld [vmem:[#allocation5 + $0x180] sm:$0xff]
    %v2442 = vld [vmem:[#allocation5 + $0x188] sm:$0xff]
    %v2443 = vld [vmem:[#allocation5 + $0x190] sm:$0xff]
    %v2444 = vld [vmem:[#allocation5 + $0x198] sm:$0xff]
    %v2445 = vld [vmem:[#allocation5 + $0x1a0] sm:$0xff]
    %v2446 = vld [vmem:[#allocation5 + $0x1a8] sm:$0xff]
    %v2447 = vld [vmem:[#allocation5 + $0x1b0] sm:$0xff]
    %v2448 = vld [vmem:[#allocation5 + $0x1b8] sm:$0xff]
    %v2449 = vld [vmem:[#allocation5 + $0x1c0] sm:$0xff]
    %v2450 = vld [vmem:[#allocation5 + $0x1c8] sm:$0xff]
    %v2451 = vld [vmem:[#allocation5 + $0x1d0] sm:$0xff]
    %v2452 = vld [vmem:[#allocation5 + $0x1d8] sm:$0xff]
    %v2453 = vld [vmem:[#allocation5 + $0x1e0] sm:$0xff]
    %v2454 = vld [vmem:[#allocation5 + $0x1e8] sm:$0xff]
    %v2455 = vld [vmem:[#allocation5 + $0x1f0] sm:$0xff]
    %v2456 = vld [vmem:[#allocation5 + $0x1f8] sm:$0xff]
    %v2457 = vld [vmem:[#allocation5 + $0x200] sm:$0xff]
    %v2458 = vld [vmem:[#allocation5 + $0x208] sm:$0xff]
    %v2459 = vld [vmem:[#allocation5 + $0x210] sm:$0xff]
    %v2460 = vld [vmem:[#allocation5 + $0x218] sm:$0xff]
    %v2461 = vld [vmem:[#allocation5 + $0x220] sm:$0xff]
    %v2462 = vld [vmem:[#allocation5 + $0x228] sm:$0xff]
    %v2463 = vld [vmem:[#allocation5 + $0x230] sm:$0xff]
    %v2464 = vld [vmem:[#allocation5 + $0x238] sm:$0xff]
    %v2465 = vld [vmem:[#allocation5 + $0x240] sm:$0xff]
    %v2466 = vld [vmem:[#allocation5 + $0x248] sm:$0xff]
    %v2467 = vld [vmem:[#allocation5 + $0x250] sm:$0xff]
    %v2468 = vld [vmem:[#allocation5 + $0x258] sm:$0xff]
    %v2469 = vld [vmem:[#allocation5 + $0x260] sm:$0xff]
    %v2470 = vld [vmem:[#allocation5 + $0x268] sm:$0xff]
    %v2471 = vld [vmem:[#allocation5 + $0x270] sm:$0xff]
    %v2472 = vld [vmem:[#allocation5 + $0x278] sm:$0xff]
    %v2473 = vld [vmem:[#allocation5 + $0x280] sm:$0xff]
    %v2474 = vld [vmem:[#allocation5 + $0x288] sm:$0xff]
    %v2475 = vld [vmem:[#allocation5 + $0x290] sm:$0xff]
    %v2476 = vld [vmem:[#allocation5 + $0x298] sm:$0xff]
    %v2477 = vld [vmem:[#allocation5 + $0x2a0] sm:$0xff]
    %v2478 = vld [vmem:[#allocation5 + $0x2a8] sm:$0xff]
    %v2479 = vld [vmem:[#allocation5 + $0x2b0] sm:$0xff]
    %v2480 = vld [vmem:[#allocation5 + $0x2b8] sm:$0xff]
    %v2481 = vld [vmem:[#allocation5 + $0x2c0] sm:$0xff]
    %v2482 = vld [vmem:[#allocation5 + $0x2c8] sm:$0xff]
    %v2483 = vld [vmem:[#allocation5 + $0x2d0] sm:$0xff]
    %v2484 = vld [vmem:[#allocation5 + $0x2d8] sm:$0xff]
    %v2485 = vld [vmem:[#allocation5 + $0x2e0] sm:$0xff]
    %v2486 = vld [vmem:[#allocation5 + $0x2e8] sm:$0xff]
    %v2487 = vld [vmem:[#allocation5 + $0x2f0] sm:$0xff]
    %v2488 = vld [vmem:[#allocation5 + $0x2f8] sm:$0xff]
    %v2489 = vld [vmem:[#allocation5 + $0x300] sm:$0xff]
    %v2490 = vld [vmem:[#allocation5 + $0x308] sm:$0xff]
    %v2491 = vld [vmem:[#allocation5 + $0x310] sm:$0xff]
    %v2492 = vld [vmem:[#allocation5 + $0x318] sm:$0xff]
    %v2493 = vld [vmem:[#allocation5 + $0x320] sm:$0xff]
    %v2494 = vld [vmem:[#allocation5 + $0x328] sm:$0xff]
    %v2495 = vld [vmem:[#allocation5 + $0x330] sm:$0xff]
    %v2496 = vld [vmem:[#allocation5 + $0x338] sm:$0xff]
    %v2497 = vld [vmem:[#allocation5 + $0x340] sm:$0xff]
    %v2498 = vld [vmem:[#allocation5 + $0x348] sm:$0xff]
    %v2499 = vld [vmem:[#allocation5 + $0x350] sm:$0xff]
    %v2500 = vld [vmem:[#allocation5 + $0x358] sm:$0xff]
    %v2501 = vld [vmem:[#allocation5 + $0x360] sm:$0xff]
    %v2502 = vld [vmem:[#allocation5 + $0x368] sm:$0xff]
    %v2503 = vld [vmem:[#allocation5 + $0x370] sm:$0xff]
    %v2504 = vld [vmem:[#allocation5 + $0x378] sm:$0xff]
    %v2505 = vld [vmem:[#allocation5 + $0x380] sm:$0xff]
    %v2506 = vld [vmem:[#allocation5 + $0x388] sm:$0xff]
    %v2507 = vld [vmem:[#allocation5 + $0x390] sm:$0xff]
    %v2508 = vld [vmem:[#allocation5 + $0x398] sm:$0xff]
    %v2509 = vld [vmem:[#allocation5 + $0x3a0] sm:$0xff]
    %v2510 = vld [vmem:[#allocation5 + $0x3a8] sm:$0xff]
    %v2511 = vld [vmem:[#allocation5 + $0x3b0] sm:$0xff]
    %v2512 = vld [vmem:[#allocation5 + $0x3b8] sm:$0xff]
    %v2513 = vld [vmem:[#allocation5 + $0x3c0] sm:$0xff]
    %v2514 = vld [vmem:[#allocation5 + $0x3c8] sm:$0xff]
    %v2515 = vld [vmem:[#allocation5 + $0x3d0] sm:$0xff]
    %v2516 = vld [vmem:[#allocation5 + $0x3d8] sm:$0xff]
    %v2517 = vld [vmem:[#allocation5 + $0x3e0] sm:$0xff]
    %v2518 = vld [vmem:[#allocation5 + $0x3e8] sm:$0xff]
    %v2519 = vld [vmem:[#allocation5 + $0x3f0] sm:$0xff]
    %v2520 = vld [vmem:[#allocation5 + $0x3f8] sm:$0xff]
    %v2521 = vld [vmem:[#allocation2 + $0x140] sm:$0xff]
    %v2522 = vld [vmem:[#allocation2 + $0x148] sm:$0xff]
    %v2523 = vld [vmem:[#allocation2 + $0x150] sm:$0xff]
    %v2524 = vld [vmem:[#allocation2 + $0x158] sm:$0xff]
    %v2525 = vld [vmem:[#allocation2 + $0x160] sm:$0xff]
    %v2526 = vld [vmem:[#allocation2 + $0x168] sm:$0xff]
    %v2527 = vld [vmem:[#allocation2 + $0x170] sm:$0xff]
    %v2528 = vld [vmem:[#allocation2 + $0x178] sm:$0xff]
    %2529 = vmatprep.subr.mxu0 %v2394
    %2530 = vmatpush1.msra.mxu0 %v2393
    %2531 = vmatprep.subr.mxu0 %v2398
    %2532 = vmatpush1.msra.mxu0 %v2397
    %2533 = vmatprep.subr.mxu0 %v2402
    %2534 = vmatpush1.msra.mxu0 %v2401
    %2535 = vmatprep.subr.mxu0 %v2406
    %2536 = vmatpush1.msra.mxu0 %v2405
    %2537 = vmatprep.subr.mxu0 %v2410
    %2538 = vmatpush1.msra.mxu0 %v2409
    %2539 = vmatprep.subr.mxu0 %v2414
    %2540 = vmatpush1.msra.mxu0 %v2413
    %2541 = vmatprep.subr.mxu0 %v2418
    %2542 = vmatpush1.msra.mxu0 %v2417
    %2543 = vmatprep.subr.mxu0 %v2422
    %2544 = vmatpush1.msra.mxu0 %v2421
    %2545 = vmatprep.subr.mxu0 %v2426
    %2546 = vmatpush1.msra.mxu0 %v2425
    %2547 = vmatprep.subr.mxu0 %v2430
    %2548 = vmatpush1.msra.mxu0 %v2429
    %2549 = vmatprep.subr.mxu0 %v2434
    %2550 = vmatpush1.msra.mxu0 %v2433
    %2551 = vmatprep.subr.mxu0 %v2438
    %2552 = vmatpush1.msra.mxu0 %v2437
    %2553 = vmatprep.subr.mxu0 %v2442
    %2554 = vmatpush1.msra.mxu0 %v2441
    %2555 = vmatprep.subr.mxu0 %v2446
    %2556 = vmatpush1.msra.mxu0 %v2445
    %2557 = vmatprep.subr.mxu0 %v2450
    %2558 = vmatpush1.msra.mxu0 %v2449
    %2559 = vmatprep.subr.mxu0 %v2454
    %2560 = vmatpush1.msra.mxu0 %v2453
    %2561 = vmatprep.subr.mxu0 %v2458
    %2562 = vmatpush1.msra.mxu0 %v2457
    %2563 = vmatprep.subr.mxu0 %v2462
    %2564 = vmatpush1.msra.mxu0 %v2461
    %2565 = vmatprep.subr.mxu0 %v2466
    %2566 = vmatpush1.msra.mxu0 %v2465
    %2567 = vmatprep.subr.mxu0 %v2470
    %2568 = vmatpush1.msra.mxu0 %v2469
    %2569 = vmatprep.subr.mxu0 %v2474
    %2570 = vmatpush1.msra.mxu0 %v2473
    %2571 = vmatprep.subr.mxu0 %v2478
    %2572 = vmatpush1.msra.mxu0 %v2477
    %2573 = vmatprep.subr.mxu0 %v2482
    %2574 = vmatpush1.msra.mxu0 %v2481
    %2575 = vmatprep.subr.mxu0 %v2486
    %2576 = vmatpush1.msra.mxu0 %v2485
    %2577 = vmatprep.subr.mxu0 %v2490
    %2578 = vmatpush1.msra.mxu0 %v2489
    %2579 = vmatprep.subr.mxu0 %v2494
    %2580 = vmatpush1.msra.mxu0 %v2493
    %2581 = vmatprep.subr.mxu0 %v2498
    %2582 = vmatpush1.msra.mxu0 %v2497
    %2583 = vmatprep.subr.mxu0 %v2502
    %2584 = vmatpush1.msra.mxu0 %v2501
    %2585 = vmatprep.subr.mxu0 %v2506
    %2586 = vmatpush1.msra.mxu0 %v2505
    %2587 = vmatprep.subr.mxu0 %v2510
    %2588 = vmatpush1.msra.mxu0 %v2509
    %2589 = vmatprep.subr.mxu0 %v2514
    %2590 = vmatpush1.msra.mxu0 %v2513
    %2591 = vmatprep.subr.mxu0 %v2518
    %2592 = vmatpush1.msra.mxu0 %v2517
    %2593 = vmatprep.mubr.f32.mxu0 %v2387
    %2594 = vmatmul.mubr.f32.gmra.mrb[0].mxu0 %v2385
    %v2595 = vpop.f32.mrb[0].mxu0
    %v2596 = vadd.f32 %v2521, %v2595
    %v2597 = vpop.f32.mrb[0].mxu0
    %v2598 = vadd.f32 %v2522, %v2597
    %2599 = vmatprep.mubr.f32.mxu0 %v2388
    %2600 = vmatmul.mubr.f32.gmra.mrb[0].mxu0 %v2386
    %v2601 = vpop.f32.mrb[0].mxu0
    %v2602 = vadd.f32 %v2525, %v2601
    %v2603 = vpop.f32.mrb[0].mxu0
    %v2604 = vadd.f32 %v2526, %v2603
    %2605 = vdwg.mxu0
    %2606 = vmatprep.subr.mxu0 %v2396
    %2607 = vmatpush1.msra.mxu0 %v2395
    %2608 = vmatprep.subr.mxu0 %v2400
    %2609 = vmatpush1.msra.mxu0 %v2399
    %2610 = vmatprep.subr.mxu0 %v2404
    %2611 = vmatpush1.msra.mxu0 %v2403
    %2612 = vmatprep.subr.mxu0 %v2408
    %2613 = vmatpush1.msra.mxu0 %v2407
    %2614 = vmatprep.subr.mxu0 %v2412
    %2615 = vmatpush1.msra.mxu0 %v2411
    %2616 = vmatprep.subr.mxu0 %v2416
    %2617 = vmatpush1.msra.mxu0 %v2415
    %2618 = vmatprep.subr.mxu0 %v2420
    %2619 = vmatpush1.msra.mxu0 %v2419
    %2620 = vmatprep.subr.mxu0 %v2424
    %2621 = vmatpush1.msra.mxu0 %v2423
    %2622 = vmatprep.subr.mxu0 %v2428
    %2623 = vmatpush1.msra.mxu0 %v2427
    %2624 = vmatprep.subr.mxu0 %v2432
    %2625 = vmatpush1.msra.mxu0 %v2431
    %2626 = vmatprep.subr.mxu0 %v2436
    %2627 = vmatpush1.msra.mxu0 %v2435
    %2628 = vmatprep.subr.mxu0 %v2440
    %2629 = vmatpush1.msra.mxu0 %v2439
    %2630 = vmatprep.subr.mxu0 %v2444
    %2631 = vmatpush1.msra.mxu0 %v2443
    %2632 = vmatprep.subr.mxu0 %v2448
    %2633 = vmatpush1.msra.mxu0 %v2447
    %2634 = vmatprep.subr.mxu0 %v2452
    %2635 = vmatpush1.msra.mxu0 %v2451
    %2636 = vmatprep.subr.mxu0 %v2456
    %2637 = vmatpush1.msra.mxu0 %v2455
    %2638 = vmatprep.subr.mxu0 %v2460
    %2639 = vmatpush1.msra.mxu0 %v2459
    %2640 = vmatprep.subr.mxu0 %v2464
    %2641 = vmatpush1.msra.mxu0 %v2463
    %2642 = vmatprep.subr.mxu0 %v2468
    %2643 = vmatpush1.msra.mxu0 %v2467
    %2644 = vmatprep.subr.mxu0 %v2472
    %2645 = vmatpush1.msra.mxu0 %v2471
    %2646 = vmatprep.subr.mxu0 %v2476
    %2647 = vmatpush1.msra.mxu0 %v2475
    %2648 = vmatprep.subr.mxu0 %v2480
    %2649 = vmatpush1.msra.mxu0 %v2479
    %2650 = vmatprep.subr.mxu0 %v2484
    %2651 = vmatpush1.msra.mxu0 %v2483
    %2652 = vmatprep.subr.mxu0 %v2488
    %2653 = vmatpush1.msra.mxu0 %v2487
    %2654 = vmatprep.subr.mxu0 %v2492
    %2655 = vmatpush1.msra.mxu0 %v2491
    %2656 = vmatprep.subr.mxu0 %v2496
    %2657 = vmatpush1.msra.mxu0 %v2495
    %2658 = vmatprep.subr.mxu0 %v2500
    %2659 = vmatpush1.msra.mxu0 %v2499
    %2660 = vmatprep.subr.mxu0 %v2504
    %2661 = vmatpush1.msra.mxu0 %v2503
    %2662 = vmatprep.subr.mxu0 %v2508
    %2663 = vmatpush1.msra.mxu0 %v2507
    %2664 = vmatprep.subr.mxu0 %v2512
    %2665 = vmatpush1.msra.mxu0 %v2511
    %2666 = vmatprep.subr.mxu0 %v2516
    %2667 = vmatpush1.msra.mxu0 %v2515
    %2668 = vmatprep.subr.mxu0 %v2520
    %2669 = vmatpush1.msra.mxu0 %v2519
    %2670 = vmatprep.mubr.f32.mxu0 %v2387
    %2671 = vmatmul.mubr.f32.gmra.mrb[0].mxu0 %v2385
    %v2672 = vpop.f32.mrb[0].mxu0
    %v2673 = vadd.f32 %v2523, %v2672
    %v2674 = vpop.f32.mrb[0].mxu0
    %v2675 = vadd.f32 %v2524, %v2674
    %2676 = vmatprep.mubr.f32.mxu0 %v2388
    %2677 = vmatmul.mubr.f32.gmra.mrb[0].mxu0 %v2386
    %v2678 = vpop.f32.mrb[0].mxu0
    %v2679 = vadd.f32 %v2527, %v2678
    %v2680 = vpop.f32.mrb[0].mxu0
    %v2681 = vadd.f32 %v2528, %v2680
    %2682 = vdwg.mxu0
    %v2683 = vadd.f32 %v2596, %v615
    %v2684 = vadd.f32 %v2598, %v616
    %v2685 = vadd.f32 %v2673, %v617
    %v2686 = vadd.f32 %v2675, %v618
    %v2687 = vadd.f32 %v2602, %v619
    %v2688 = vadd.f32 %v2604, %v620
    %v2689 = vadd.f32 %v2679, %v621
    %v2690 = vadd.f32 %v2681, %v622
    %v2691 = vxor.u32 %v2683, 2147483648
    %v2692 = vxor.u32 %v2687, 2147483648
    %v2693 = vmul.f32 %v2691, 1.442695
    %v2694 = vpow.pop %v2693
    %v2695 = vmul.f32 %v2692, 1.442695
    %v2696 = vpow.pop %v2695
    %v2697 = vadd.f32 %v2694, 1.0
    %v2698 = vadd.f32 %v2696, 1.0
    %v2699 = vrcp.pop %v2697
    %v2700 = vmul.f32 1.0, %v2699
    %v2701 = vrcp.pop %v2698
    %v2702 = vmul.f32 1.0, %v2701
    %v2703 = vxor.u32 %v2684, 2147483648
    %v2704 = vxor.u32 %v2688, 2147483648
    %v2705 = vmul.f32 %v2703, 1.442695
    %v2706 = vpow.pop %v2705
    %v2707 = vmul.f32 %v2704, 1.442695
    %v2708 = vpow.pop %v2707
    %v2709 = vadd.f32 %v2706, 1.0
    %v2710 = vadd.f32 %v2708, 1.0
    %v2711 = vrcp.pop %v2709
    %v2712 = vmul.f32 1.0, %v2711
    %v2713 = vrcp.pop %v2710
    %v2714 = vmul.f32 1.0, %v2713
    %v2715 = vtanh.pop %v2685
    %v2716 = vtanh.pop %v2689
    %v2717 = vxor.u32 %v2686, 2147483648
    %v2718 = vxor.u32 %v2690, 2147483648
    %v2719 = vmul.f32 %v2717, 1.442695
    %v2720 = vpow.pop %v2719
    %v2721 = vmul.f32 %v2718, 1.442695
    %v2722 = vpow.pop %v2721
    %v2723 = vadd.f32 %v2720, 1.0
    %v2724 = vadd.f32 %v2722, 1.0
    %v2725 = vrcp.pop %v2723
    %v2726 = vmul.f32 1.0, %v2725
    %v2727 = vrcp.pop %v2724
    %v2728 = vmul.f32 1.0, %v2727
    %v2729 = vmul.f32 %v2712, %v2379
    %v2730 = vmul.f32 %v2714, %v2380
    %v2731 = vmul.f32 %v2700, %v2715
    %v2732 = vmul.f32 %v2702, %v2716
    %v2733 = vadd.f32 %v2729, %v2731
    %v2734 = vadd.f32 %v2730, %v2732
    %v2735 = vtanh.pop %v2733
    %v2736 = vtanh.pop %v2734
    %v2737 = vmul.f32 %v2726, %v2735
    %v2738 = vmul.f32 %v2728, %v2736
    %v2739 = vmul.f32 %v2737, %v92
    %v2740 = vmul.f32 %v2738, %v93
    %v2741 = vmul.f32 %v2737, %v94
    %v2742 = vmul.f32 %v2738, %v95
    %2743 = vst [vmem:[#allocation3 + $0x140] sm:$0xff] %v2737
    %2744 = vst [vmem:[#allocation3 + $0x88] sm:$0xff] %v2738
    %2745 = vst [vmem:[#allocation3 + $0xb0] sm:$0xff] %v2737
    %2746 = vst [vmem:[#allocation3 + $0x178] sm:$0xff] %v2738
    %v2747 = vld [vmem:[#allocation5] sm:$0xff]
    %v2748 = vld [vmem:[#allocation5 + $0x8] sm:$0xff]
    %v2749 = vld [vmem:[#allocation5 + $0x10] sm:$0xff]
    %v2750 = vld [vmem:[#allocation5 + $0x18] sm:$0xff]
    %v2751 = vld [vmem:[#allocation5 + $0x20] sm:$0xff]
    %v2752 = vld [vmem:[#allocation5 + $0x28] sm:$0xff]
    %v2753 = vld [vmem:[#allocation5 + $0x30] sm:$0xff]
    %v2754 = vld [vmem:[#allocation5 + $0x38] sm:$0xff]
    %v2755 = vld [vmem:[#allocation5 + $0x40] sm:$0xff]
    %v2756 = vld [vmem:[#allocation5 + $0x48] sm:$0xff]
    %v2757 = vld [vmem:[#allocation5 + $0x50] sm:$0xff]
    %v2758 = vld [vmem:[#allocation5 + $0x58] sm:$0xff]
    %v2759 = vld [vmem:[#allocation5 + $0x60] sm:$0xff]
    %v2760 = vld [vmem:[#allocation5 + $0x68] sm:$0xff]
    %v2761 = vld [vmem:[#allocation5 + $0x70] sm:$0xff]
    %v2762 = vld [vmem:[#allocation5 + $0x78] sm:$0xff]
    %v2763 = vld [vmem:[#allocation5 + $0x80] sm:$0xff]
    %v2764 = vld [vmem:[#allocation5 + $0x88] sm:$0xff]
    %v2765 = vld [vmem:[#allocation5 + $0x90] sm:$0xff]
    %v2766 = vld [vmem:[#allocation5 + $0x98] sm:$0xff]
    %v2767 = vld [vmem:[#allocation5 + $0xa0] sm:$0xff]
    %v2768 = vld [vmem:[#allocation5 + $0xa8] sm:$0xff]
    %v2769 = vld [vmem:[#allocation5 + $0xb0] sm:$0xff]
    %v2770 = vld [vmem:[#allocation5 + $0xb8] sm:$0xff]
    %v2771 = vld [vmem:[#allocation5 + $0xc0] sm:$0xff]
    %v2772 = vld [vmem:[#allocation5 + $0xc8] sm:$0xff]
    %v2773 = vld [vmem:[#allocation5 + $0xd0] sm:$0xff]
    %v2774 = vld [vmem:[#allocation5 + $0xd8] sm:$0xff]
    %v2775 = vld [vmem:[#allocation5 + $0xe0] sm:$0xff]
    %v2776 = vld [vmem:[#allocation5 + $0xe8] sm:$0xff]
    %v2777 = vld [vmem:[#allocation5 + $0xf0] sm:$0xff]
    %v2778 = vld [vmem:[#allocation5 + $0xf8] sm:$0xff]
    %v2779 = vld [vmem:[#allocation5 + $0x100] sm:$0xff]
    %v2780 = vld [vmem:[#allocation5 + $0x108] sm:$0xff]
    %v2781 = vld [vmem:[#allocation5 + $0x110] sm:$0xff]
    %v2782 = vld [vmem:[#allocation5 + $0x118] sm:$0xff]
    %v2783 = vld [vmem:[#allocation5 + $0x120] sm:$0xff]
    %v2784 = vld [vmem:[#allocation5 + $0x128] sm:$0xff]
    %v2785 = vld [vmem:[#allocation5 + $0x130] sm:$0xff]
    %v2786 = vld [vmem:[#allocation5 + $0x138] sm:$0xff]
    %v2787 = vld [vmem:[#allocation5 + $0x140] sm:$0xff]
    %v2788 = vld [vmem:[#allocation5 + $0x148] sm:$0xff]
    %v2789 = vld [vmem:[#allocation5 + $0x150] sm:$0xff]
    %v2790 = vld [vmem:[#allocation5 + $0x158] sm:$0xff]
    %v2791 = vld [vmem:[#allocation5 + $0x160] sm:$0xff]
    %v2792 = vld [vmem:[#allocation5 + $0x168] sm:$0xff]
    %v2793 = vld [vmem:[#allocation5 + $0x170] sm:$0xff]
    %v2794 = vld [vmem:[#allocation5 + $0x178] sm:$0xff]
    %v2795 = vld [vmem:[#allocation5 + $0x180] sm:$0xff]
    %v2796 = vld [vmem:[#allocation5 + $0x188] sm:$0xff]
    %v2797 = vld [vmem:[#allocation5 + $0x190] sm:$0xff]
    %v2798 = vld [vmem:[#allocation5 + $0x198] sm:$0xff]
    %v2799 = vld [vmem:[#allocation5 + $0x1a0] sm:$0xff]
    %v2800 = vld [vmem:[#allocation5 + $0x1a8] sm:$0xff]
    %v2801 = vld [vmem:[#allocation5 + $0x1b0] sm:$0xff]
    %v2802 = vld [vmem:[#allocation5 + $0x1b8] sm:$0xff]
    %v2803 = vld [vmem:[#allocation5 + $0x1c0] sm:$0xff]
    %v2804 = vld [vmem:[#allocation5 + $0x1c8] sm:$0xff]
    %v2805 = vld [vmem:[#allocation5 + $0x1d0] sm:$0xff]
    %v2806 = vld [vmem:[#allocation5 + $0x1d8] sm:$0xff]
    %v2807 = vld [vmem:[#allocation5 + $0x1e0] sm:$0xff]
    %v2808 = vld [vmem:[#allocation5 + $0x1e8] sm:$0xff]
    %v2809 = vld [vmem:[#allocation5 + $0x1f0] sm:$0xff]
    %v2810 = vld [vmem:[#allocation5 + $0x1f8] sm:$0xff]
    %v2811 = vld [vmem:[#allocation5 + $0x200] sm:$0xff]
    %v2812 = vld [vmem:[#allocation5 + $0x208] sm:$0xff]
    %v2813 = vld [vmem:[#allocation5 + $0x210] sm:$0xff]
    %v2814 = vld [vmem:[#allocation5 + $0x218] sm:$0xff]
    %v2815 = vld [vmem:[#allocation5 + $0x220] sm:$0xff]
    %v2816 = vld [vmem:[#allocation5 + $0x228] sm:$0xff]
    %v2817 = vld [vmem:[#allocation5 + $0x230] sm:$0xff]
    %v2818 = vld [vmem:[#allocation5 + $0x238] sm:$0xff]
    %v2819 = vld [vmem:[#allocation5 + $0x240] sm:$0xff]
    %v2820 = vld [vmem:[#allocation5 + $0x248] sm:$0xff]
    %v2821 = vld [vmem:[#allocation5 + $0x250] sm:$0xff]
    %v2822 = vld [vmem:[#allocation5 + $0x258] sm:$0xff]
    %v2823 = vld [vmem:[#allocation5 + $0x260] sm:$0xff]
    %v2824 = vld [vmem:[#allocation5 + $0x268] sm:$0xff]
    %v2825 = vld [vmem:[#allocation5 + $0x270] sm:$0xff]
    %v2826 = vld [vmem:[#allocation5 + $0x278] sm:$0xff]
    %v2827 = vld [vmem:[#allocation5 + $0x280] sm:$0xff]
    %v2828 = vld [vmem:[#allocation5 + $0x288] sm:$0xff]
    %v2829 = vld [vmem:[#allocation5 + $0x290] sm:$0xff]
    %v2830 = vld [vmem:[#allocation5 + $0x298] sm:$0xff]
    %v2831 = vld [vmem:[#allocation5 + $0x2a0] sm:$0xff]
    %v2832 = vld [vmem:[#allocation5 + $0x2a8] sm:$0xff]
    %v2833 = vld [vmem:[#allocation5 + $0x2b0] sm:$0xff]
    %v2834 = vld [vmem:[#allocation5 + $0x2b8] sm:$0xff]
    %v2835 = vld [vmem:[#allocation5 + $0x2c0] sm:$0xff]
    %v2836 = vld [vmem:[#allocation5 + $0x2c8] sm:$0xff]
    %v2837 = vld [vmem:[#allocation5 + $0x2d0] sm:$0xff]
    %v2838 = vld [vmem:[#allocation5 + $0x2d8] sm:$0xff]
    %v2839 = vld [vmem:[#allocation5 + $0x2e0] sm:$0xff]
    %v2840 = vld [vmem:[#allocation5 + $0x2e8] sm:$0xff]
    %v2841 = vld [vmem:[#allocation5 + $0x2f0] sm:$0xff]
    %v2842 = vld [vmem:[#allocation5 + $0x2f8] sm:$0xff]
    %v2843 = vld [vmem:[#allocation5 + $0x300] sm:$0xff]
    %v2844 = vld [vmem:[#allocation5 + $0x308] sm:$0xff]
    %v2845 = vld [vmem:[#allocation5 + $0x310] sm:$0xff]
    %v2846 = vld [vmem:[#allocation5 + $0x318] sm:$0xff]
    %v2847 = vld [vmem:[#allocation5 + $0x320] sm:$0xff]
    %v2848 = vld [vmem:[#allocation5 + $0x328] sm:$0xff]
    %v2849 = vld [vmem:[#allocation5 + $0x330] sm:$0xff]
    %v2850 = vld [vmem:[#allocation5 + $0x338] sm:$0xff]
    %v2851 = vld [vmem:[#allocation5 + $0x340] sm:$0xff]
    %v2852 = vld [vmem:[#allocation5 + $0x348] sm:$0xff]
    %v2853 = vld [vmem:[#allocation5 + $0x350] sm:$0xff]
    %v2854 = vld [vmem:[#allocation5 + $0x358] sm:$0xff]
    %v2855 = vld [vmem:[#allocation5 + $0x360] sm:$0xff]
    %v2856 = vld [vmem:[#allocation5 + $0x368] sm:$0xff]
    %v2857 = vld [vmem:[#allocation5 + $0x370] sm:$0xff]
    %v2858 = vld [vmem:[#allocation5 + $0x378] sm:$0xff]
    %v2859 = vld [vmem:[#allocation5 + $0x380] sm:$0xff]
    %v2860 = vld [vmem:[#allocation5 + $0x388] sm:$0xff]
    %v2861 = vld [vmem:[#allocation5 + $0x390] sm:$0xff]
    %v2862 = vld [vmem:[#allocation5 + $0x398] sm:$0xff]
    %v2863 = vld [vmem:[#allocation5 + $0x3a0] sm:$0xff]
    %v2864 = vld [vmem:[#allocation5 + $0x3a8] sm:$0xff]
    %v2865 = vld [vmem:[#allocation5 + $0x3b0] sm:$0xff]
    %v2866 = vld [vmem:[#allocation5 + $0x3b8] sm:$0xff]
    %v2867 = vld [vmem:[#allocation5 + $0x3c0] sm:$0xff]
    %v2868 = vld [vmem:[#allocation5 + $0x3c8] sm:$0xff]
    %v2869 = vld [vmem:[#allocation5 + $0x3d0] sm:$0xff]
    %v2870 = vld [vmem:[#allocation5 + $0x3d8] sm:$0xff]
    %v2871 = vld [vmem:[#allocation5 + $0x3e0] sm:$0xff]
    %v2872 = vld [vmem:[#allocation5 + $0x3e8] sm:$0xff]
    %v2873 = vld [vmem:[#allocation5 + $0x3f0] sm:$0xff]
    %v2874 = vld [vmem:[#allocation5 + $0x3f8] sm:$0xff]
    %v2875 = vld [vmem:[#allocation2 + $0x180] sm:$0xff]
    %v2876 = vld [vmem:[#allocation2 + $0x188] sm:$0xff]
    %v2877 = vld [vmem:[#allocation2 + $0x190] sm:$0xff]
    %v2878 = vld [vmem:[#allocation2 + $0x198] sm:$0xff]
    %v2879 = vld [vmem:[#allocation2 + $0x1a0] sm:$0xff]
    %v2880 = vld [vmem:[#allocation2 + $0x1a8] sm:$0xff]
    %v2881 = vld [vmem:[#allocation2 + $0x1b0] sm:$0xff]
    %v2882 = vld [vmem:[#allocation2 + $0x1b8] sm:$0xff]
    %2883 = vmatprep.subr.mxu0 %v2748
    %2884 = vmatpush1.msra.mxu0 %v2747
    %2885 = vmatprep.subr.mxu0 %v2752
    %2886 = vmatpush1.msra.mxu0 %v2751
    %2887 = vmatprep.subr.mxu0 %v2756
    %2888 = vmatpush1.msra.mxu0 %v2755
    %2889 = vmatprep.subr.mxu0 %v2760
    %2890 = vmatpush1.msra.mxu0 %v2759
    %2891 = vmatprep.subr.mxu0 %v2764
    %2892 = vmatpush1.msra.mxu0 %v2763
    %2893 = vmatprep.subr.mxu0 %v2768
    %2894 = vmatpush1.msra.mxu0 %v2767
    %2895 = vmatprep.subr.mxu0 %v2772
    %2896 = vmatpush1.msra.mxu0 %v2771
    %2897 = vmatprep.subr.mxu0 %v2776
    %2898 = vmatpush1.msra.mxu0 %v2775
    %2899 = vmatprep.subr.mxu0 %v2780
    %2900 = vmatpush1.msra.mxu0 %v2779
    %2901 = vmatprep.subr.mxu0 %v2784
    %2902 = vmatpush1.msra.mxu0 %v2783
    %2903 = vmatprep.subr.mxu0 %v2788
    %2904 = vmatpush1.msra.mxu0 %v2787
    %2905 = vmatprep.subr.mxu0 %v2792
    %2906 = vmatpush1.msra.mxu0 %v2791
    %2907 = vmatprep.subr.mxu0 %v2796
    %2908 = vmatpush1.msra.mxu0 %v2795
    %2909 = vmatprep.subr.mxu0 %v2800
    %2910 = vmatpush1.msra.mxu0 %v2799
    %2911 = vmatprep.subr.mxu0 %v2804
    %2912 = vmatpush1.msra.mxu0 %v2803
    %2913 = vmatprep.subr.mxu0 %v2808
    %2914 = vmatpush1.msra.mxu0 %v2807
    %2915 = vmatprep.subr.mxu0 %v2812
    %2916 = vmatpush1.msra.mxu0 %v2811
    %2917 = vmatprep.subr.mxu0 %v2816
    %2918 = vmatpush1.msra.mxu0 %v2815
    %2919 = vmatprep.subr.mxu0 %v2820
    %2920 = vmatpush1.msra.mxu0 %v2819
    %2921 = vmatprep.subr.mxu0 %v2824
    %2922 = vmatpush1.msra.mxu0 %v2823
    %2923 = vmatprep.subr.mxu0 %v2828
    %2924 = vmatpush1.msra.mxu0 %v2827
    %2925 = vmatprep.subr.mxu0 %v2832
    %2926 = vmatpush1.msra.mxu0 %v2831
    %2927 = vmatprep.subr.mxu0 %v2836
    %2928 = vmatpush1.msra.mxu0 %v2835
    %2929 = vmatprep.subr.mxu0 %v2840
    %2930 = vmatpush1.msra.mxu0 %v2839
    %2931 = vmatprep.subr.mxu0 %v2844
    %2932 = vmatpush1.msra.mxu0 %v2843
    %2933 = vmatprep.subr.mxu0 %v2848
    %2934 = vmatpush1.msra.mxu0 %v2847
    %2935 = vmatprep.subr.mxu0 %v2852
    %2936 = vmatpush1.msra.mxu0 %v2851
    %2937 = vmatprep.subr.mxu0 %v2856
    %2938 = vmatpush1.msra.mxu0 %v2855
    %2939 = vmatprep.subr.mxu0 %v2860
    %2940 = vmatpush1.msra.mxu0 %v2859
    %2941 = vmatprep.subr.mxu0 %v2864
    %2942 = vmatpush1.msra.mxu0 %v2863
    %2943 = vmatprep.subr.mxu0 %v2868
    %2944 = vmatpush1.msra.mxu0 %v2867
    %2945 = vmatprep.subr.mxu0 %v2872
    %2946 = vmatpush1.msra.mxu0 %v2871
    %2947 = vmatprep.mubr.f32.mxu0 %v2741
    %2948 = vmatmul.mubr.f32.gmra.mrb[0].mxu0 %v2739
    %v2949 = vpop.f32.mrb[0].mxu0
    %v2950 = vadd.f32 %v2875, %v2949
    %v2951 = vpop.f32.mrb[0].mxu0
    %v2952 = vadd.f32 %v2876, %v2951
    %2953 = vmatprep.mubr.f32.mxu0 %v2742
    %2954 = vmatmul.mubr.f32.gmra.mrb[0].mxu0 %v2740
    %v2955 = vpop.f32.mrb[0].mxu0
    %v2956 = vadd.f32 %v2879, %v2955
    %v2957 = vpop.f32.mrb[0].mxu0
    %v2958 = vadd.f32 %v2880, %v2957
    %2959 = vdwg.mxu0
    %2960 = vmatprep.subr.mxu0 %v2750
    %2961 = vmatpush1.msra.mxu0 %v2749
    %2962 = vmatprep.subr.mxu0 %v2754
    %2963 = vmatpush1.msra.mxu0 %v2753
    %2964 = vmatprep.subr.mxu0 %v2758
    %2965 = vmatpush1.msra.mxu0 %v2757
    %2966 = vmatprep.subr.mxu0 %v2762
    %2967 = vmatpush1.msra.mxu0 %v2761
    %2968 = vmatprep.subr.mxu0 %v2766
    %2969 = vmatpush1.msra.mxu0 %v2765
    %2970 = vmatprep.subr.mxu0 %v2770
    %2971 = vmatpush1.msra.mxu0 %v2769
    %2972 = vmatprep.subr.mxu0 %v2774
    %2973 = vmatpush1.msra.mxu0 %v2773
    %2974 = vmatprep.subr.mxu0 %v2778
    %2975 = vmatpush1.msra.mxu0 %v2777
    %2976 = vmatprep.subr.mxu0 %v2782
    %2977 = vmatpush1.msra.mxu0 %v2781
    %2978 = vmatprep.subr.mxu0 %v2786
    %2979 = vmatpush1.msra.mxu0 %v2785
    %2980 = vmatprep.subr.mxu0 %v2790
    %2981 = vmatpush1.msra.mxu0 %v2789
    %2982 = vmatprep.subr.mxu0 %v2794
    %2983 = vmatpush1.msra.mxu0 %v2793
    %2984 = vmatprep.subr.mxu0 %v2798
    %2985 = vmatpush1.msra.mxu0 %v2797
    %2986 = vmatprep.subr.mxu0 %v2802
    %2987 = vmatpush1.msra.mxu0 %v2801
    %2988 = vmatprep.subr.mxu0 %v2806
    %2989 = vmatpush1.msra.mxu0 %v2805
    %2990 = vmatprep.subr.mxu0 %v2810
    %2991 = vmatpush1.msra.mxu0 %v2809
    %2992 = vmatprep.subr.mxu0 %v2814
    %2993 = vmatpush1.msra.mxu0 %v2813
    %2994 = vmatprep.subr.mxu0 %v2818
    %2995 = vmatpush1.msra.mxu0 %v2817
    %2996 = vmatprep.subr.mxu0 %v2822
    %2997 = vmatpush1.msra.mxu0 %v2821
    %2998 = vmatprep.subr.mxu0 %v2826
    %2999 = vmatpush1.msra.mxu0 %v2825
    %3000 = vmatprep.subr.mxu0 %v2830
    %3001 = vmatpush1.msra.mxu0 %v2829
    %3002 = vmatprep.subr.mxu0 %v2834
    %3003 = vmatpush1.msra.mxu0 %v2833
    %3004 = vmatprep.subr.mxu0 %v2838
    %3005 = vmatpush1.msra.mxu0 %v2837
    %3006 = vmatprep.subr.mxu0 %v2842
    %3007 = vmatpush1.msra.mxu0 %v2841
    %3008 = vmatprep.subr.mxu0 %v2846
    %3009 = vmatpush1.msra.mxu0 %v2845
    %3010 = vmatprep.subr.mxu0 %v2850
    %3011 = vmatpush1.msra.mxu0 %v2849
    %3012 = vmatprep.subr.mxu0 %v2854
    %3013 = vmatpush1.msra.mxu0 %v2853
    %3014 = vmatprep.subr.mxu0 %v2858
    %3015 = vmatpush1.msra.mxu0 %v2857
    %3016 = vmatprep.subr.mxu0 %v2862
    %3017 = vmatpush1.msra.mxu0 %v2861
    %3018 = vmatprep.subr.mxu0 %v2866
    %3019 = vmatpush1.msra.mxu0 %v2865
    %3020 = vmatprep.subr.mxu0 %v2870
    %3021 = vmatpush1.msra.mxu0 %v2869
    %3022 = vmatprep.subr.mxu0 %v2874
    %3023 = vmatpush1.msra.mxu0 %v2873
    %3024 = vmatprep.mubr.f32.mxu0 %v2741
    %3025 = vmatmul.mubr.f32.gmra.mrb[0].mxu0 %v2739
    %v3026 = vpop.f32.mrb[0].mxu0
    %v3027 = vadd.f32 %v2877, %v3026
    %v3028 = vpop.f32.mrb[0].mxu0
    %v3029 = vadd.f32 %v2878, %v3028
    %3030 = vmatprep.mubr.f32.mxu0 %v2742
    %3031 = vmatmul.mubr.f32.gmra.mrb[0].mxu0 %v2740
    %v3032 = vpop.f32.mrb[0].mxu0
    %v3033 = vadd.f32 %v2881, %v3032
    %v3034 = vpop.f32.mrb[0].mxu0
    %v3035 = vadd.f32 %v2882, %v3034
    %3036 = vdwg.mxu0
    %v3037 = vadd.f32 %v2950, %v615
    %v3038 = vadd.f32 %v2952, %v616
    %v3039 = vadd.f32 %v3027, %v617
    %v3040 = vadd.f32 %v3029, %v618
    %v3041 = vadd.f32 %v2956, %v619
    %v3042 = vadd.f32 %v2958, %v620
    %v3043 = vadd.f32 %v3033, %v621
    %v3044 = vadd.f32 %v3035, %v622
    %v3045 = vxor.u32 %v3037, 2147483648
    %v3046 = vxor.u32 %v3041, 2147483648
    %v3047 = vmul.f32 %v3045, 1.442695
    %v3048 = vpow.pop %v3047
    %v3049 = vmul.f32 %v3046, 1.442695
    %v3050 = vpow.pop %v3049
    %v3051 = vadd.f32 %v3048, 1.0
    %v3052 = vadd.f32 %v3050, 1.0
    %v3053 = vrcp.pop %v3051
    %v3054 = vmul.f32 1.0, %v3053
    %v3055 = vrcp.pop %v3052
    %v3056 = vmul.f32 1.0, %v3055
    %v3057 = vxor.u32 %v3038, 2147483648
    %v3058 = vxor.u32 %v3042, 2147483648
    %v3059 = vmul.f32 %v3057, 1.442695
    %v3060 = vpow.pop %v3059
    %v3061 = vmul.f32 %v3058, 1.442695
    %v3062 = vpow.pop %v3061
    %v3063 = vadd.f32 %v3060, 1.0
    %v3064 = vadd.f32 %v3062, 1.0
    %v3065 = vrcp.pop %v3063
    %v3066 = vmul.f32 1.0, %v3065
    %v3067 = vrcp.pop %v3064
    %v3068 = vmul.f32 1.0, %v3067
    %v3069 = vtanh.pop %v3039
    %v3070 = vtanh.pop %v3043
    %v3071 = vxor.u32 %v3040, 2147483648
    %v3072 = vxor.u32 %v3044, 2147483648
    %v3073 = vmul.f32 %v3071, 1.442695
    %v3074 = vpow.pop %v3073
    %v3075 = vmul.f32 %v3072, 1.442695
    %v3076 = vpow.pop %v3075
    %v3077 = vadd.f32 %v3074, 1.0
    %v3078 = vadd.f32 %v3076, 1.0
    %v3079 = vrcp.pop %v3077
    %v3080 = vmul.f32 1.0, %v3079
    %v3081 = vrcp.pop %v3078
    %v3082 = vmul.f32 1.0, %v3081
    %v3083 = vmul.f32 %v3066, %v2733
    %v3084 = vmul.f32 %v3068, %v2734
    %v3085 = vmul.f32 %v3054, %v3069
    %v3086 = vmul.f32 %v3056, %v3070
    %v3087 = vadd.f32 %v3083, %v3085
    %v3088 = vadd.f32 %v3084, %v3086
    %v3089 = vtanh.pop %v3087
    %v3090 = vtanh.pop %v3088
    %v3091 = vmul.f32 %v3080, %v3089
    %v3092 = vmul.f32 %v3082, %v3090
    %v3093 = vmul.f32 %v3091, %v92
    %v3094 = vmul.f32 %v3092, %v93
    %v3095 = vmul.f32 %v3091, %v94
    %v3096 = vmul.f32 %v3092, %v95
    %3097 = vst [vmem:[#allocation3 + $0x180] sm:$0xff] %v3091
    %3098 = vst [vmem:[#allocation3 + $0x48] sm:$0xff] %v3092
    %3099 = vst [vmem:[#allocation3 + $0x70] sm:$0xff] %v3091
    %3100 = vst [vmem:[#allocation3 + $0x1b8] sm:$0xff] %v3092
    %v3101 = vld [vmem:[#allocation5] sm:$0xff]
    %v3102 = vld [vmem:[#allocation5 + $0x8] sm:$0xff]
    %v3103 = vld [vmem:[#allocation5 + $0x10] sm:$0xff]
    %v3104 = vld [vmem:[#allocation5 + $0x18] sm:$0xff]
    %v3105 = vld [vmem:[#allocation5 + $0x20] sm:$0xff]
    %v3106 = vld [vmem:[#allocation5 + $0x28] sm:$0xff]
    %v3107 = vld [vmem:[#allocation5 + $0x30] sm:$0xff]
    %v3108 = vld [vmem:[#allocation5 + $0x38] sm:$0xff]
    %v3109 = vld [vmem:[#allocation5 + $0x40] sm:$0xff]
    %v3110 = vld [vmem:[#allocation5 + $0x48] sm:$0xff]
    %v3111 = vld [vmem:[#allocation5 + $0x50] sm:$0xff]
    %v3112 = vld [vmem:[#allocation5 + $0x58] sm:$0xff]
    %v3113 = vld [vmem:[#allocation5 + $0x60] sm:$0xff]
    %v3114 = vld [vmem:[#allocation5 + $0x68] sm:$0xff]
    %v3115 = vld [vmem:[#allocation5 + $0x70] sm:$0xff]
    %v3116 = vld [vmem:[#allocation5 + $0x78] sm:$0xff]
    %v3117 = vld [vmem:[#allocation5 + $0x80] sm:$0xff]
    %v3118 = vld [vmem:[#allocation5 + $0x88] sm:$0xff]
    %v3119 = vld [vmem:[#allocation5 + $0x90] sm:$0xff]
    %v3120 = vld [vmem:[#allocation5 + $0x98] sm:$0xff]
    %v3121 = vld [vmem:[#allocation5 + $0xa0] sm:$0xff]
    %v3122 = vld [vmem:[#allocation5 + $0xa8] sm:$0xff]
    %v3123 = vld [vmem:[#allocation5 + $0xb0] sm:$0xff]
    %v3124 = vld [vmem:[#allocation5 + $0xb8] sm:$0xff]
    %v3125 = vld [vmem:[#allocation5 + $0xc0] sm:$0xff]
    %v3126 = vld [vmem:[#allocation5 + $0xc8] sm:$0xff]
    %v3127 = vld [vmem:[#allocation5 + $0xd0] sm:$0xff]
    %v3128 = vld [vmem:[#allocation5 + $0xd8] sm:$0xff]
    %v3129 = vld [vmem:[#allocation5 + $0xe0] sm:$0xff]
    %v3130 = vld [vmem:[#allocation5 + $0xe8] sm:$0xff]
    %v3131 = vld [vmem:[#allocation5 + $0xf0] sm:$0xff]
    %v3132 = vld [vmem:[#allocation5 + $0xf8] sm:$0xff]
    %v3133 = vld [vmem:[#allocation5 + $0x100] sm:$0xff]
    %v3134 = vld [vmem:[#allocation5 + $0x108] sm:$0xff]
    %v3135 = vld [vmem:[#allocation5 + $0x110] sm:$0xff]
    %v3136 = vld [vmem:[#allocation5 + $0x118] sm:$0xff]
    %v3137 = vld [vmem:[#allocation5 + $0x120] sm:$0xff]
    %v3138 = vld [vmem:[#allocation5 + $0x128] sm:$0xff]
    %v3139 = vld [vmem:[#allocation5 + $0x130] sm:$0xff]
    %v3140 = vld [vmem:[#allocation5 + $0x138] sm:$0xff]
    %v3141 = vld [vmem:[#allocation5 + $0x140] sm:$0xff]
    %v3142 = vld [vmem:[#allocation5 + $0x148] sm:$0xff]
    %v3143 = vld [vmem:[#allocation5 + $0x150] sm:$0xff]
    %v3144 = vld [vmem:[#allocation5 + $0x158] sm:$0xff]
    %v3145 = vld [vmem:[#allocation5 + $0x160] sm:$0xff]
    %v3146 = vld [vmem:[#allocation5 + $0x168] sm:$0xff]
    %v3147 = vld [vmem:[#allocation5 + $0x170] sm:$0xff]
    %v3148 = vld [vmem:[#allocation5 + $0x178] sm:$0xff]
    %v3149 = vld [vmem:[#allocation5 + $0x180] sm:$0xff]
    %v3150 = vld [vmem:[#allocation5 + $0x188] sm:$0xff]
    %v3151 = vld [vmem:[#allocation5 + $0x190] sm:$0xff]
    %v3152 = vld [vmem:[#allocation5 + $0x198] sm:$0xff]
    %v3153 = vld [vmem:[#allocation5 + $0x1a0] sm:$0xff]
    %v3154 = vld [vmem:[#allocation5 + $0x1a8] sm:$0xff]
    %v3155 = vld [vmem:[#allocation5 + $0x1b0] sm:$0xff]
    %v3156 = vld [vmem:[#allocation5 + $0x1b8] sm:$0xff]
    %v3157 = vld [vmem:[#allocation5 + $0x1c0] sm:$0xff]
    %v3158 = vld [vmem:[#allocation5 + $0x1c8] sm:$0xff]
    %v3159 = vld [vmem:[#allocation5 + $0x1d0] sm:$0xff]
    %v3160 = vld [vmem:[#allocation5 + $0x1d8] sm:$0xff]
    %v3161 = vld [vmem:[#allocation5 + $0x1e0] sm:$0xff]
    %v3162 = vld [vmem:[#allocation5 + $0x1e8] sm:$0xff]
    %v3163 = vld [vmem:[#allocation5 + $0x1f0] sm:$0xff]
    %v3164 = vld [vmem:[#allocation5 + $0x1f8] sm:$0xff]
    %v3165 = vld [vmem:[#allocation5 + $0x200] sm:$0xff]
    %v3166 = vld [vmem:[#allocation5 + $0x208] sm:$0xff]
    %v3167 = vld [vmem:[#allocation5 + $0x210] sm:$0xff]
    %v3168 = vld [vmem:[#allocation5 + $0x218] sm:$0xff]
    %v3169 = vld [vmem:[#allocation5 + $0x220] sm:$0xff]
    %v3170 = vld [vmem:[#allocation5 + $0x228] sm:$0xff]
    %v3171 = vld [vmem:[#allocation5 + $0x230] sm:$0xff]
    %v3172 = vld [vmem:[#allocation5 + $0x238] sm:$0xff]
    %v3173 = vld [vmem:[#allocation5 + $0x240] sm:$0xff]
    %v3174 = vld [vmem:[#allocation5 + $0x248] sm:$0xff]
    %v3175 = vld [vmem:[#allocation5 + $0x250] sm:$0xff]
    %v3176 = vld [vmem:[#allocation5 + $0x258] sm:$0xff]
    %v3177 = vld [vmem:[#allocation5 + $0x260] sm:$0xff]
    %v3178 = vld [vmem:[#allocation5 + $0x268] sm:$0xff]
    %v3179 = vld [vmem:[#allocation5 + $0x270] sm:$0xff]
    %v3180 = vld [vmem:[#allocation5 + $0x278] sm:$0xff]
    %v3181 = vld [vmem:[#allocation5 + $0x280] sm:$0xff]
    %v3182 = vld [vmem:[#allocation5 + $0x288] sm:$0xff]
    %v3183 = vld [vmem:[#allocation5 + $0x290] sm:$0xff]
    %v3184 = vld [vmem:[#allocation5 + $0x298] sm:$0xff]
    %v3185 = vld [vmem:[#allocation5 + $0x2a0] sm:$0xff]
    %v3186 = vld [vmem:[#allocation5 + $0x2a8] sm:$0xff]
    %v3187 = vld [vmem:[#allocation5 + $0x2b0] sm:$0xff]
    %v3188 = vld [vmem:[#allocation5 + $0x2b8] sm:$0xff]
    %v3189 = vld [vmem:[#allocation5 + $0x2c0] sm:$0xff]
    %v3190 = vld [vmem:[#allocation5 + $0x2c8] sm:$0xff]
    %v3191 = vld [vmem:[#allocation5 + $0x2d0] sm:$0xff]
    %v3192 = vld [vmem:[#allocation5 + $0x2d8] sm:$0xff]
    %v3193 = vld [vmem:[#allocation5 + $0x2e0] sm:$0xff]
    %v3194 = vld [vmem:[#allocation5 + $0x2e8] sm:$0xff]
    %v3195 = vld [vmem:[#allocation5 + $0x2f0] sm:$0xff]
    %v3196 = vld [vmem:[#allocation5 + $0x2f8] sm:$0xff]
    %v3197 = vld [vmem:[#allocation5 + $0x300] sm:$0xff]
    %v3198 = vld [vmem:[#allocation5 + $0x308] sm:$0xff]
    %v3199 = vld [vmem:[#allocation5 + $0x310] sm:$0xff]
    %v3200 = vld [vmem:[#allocation5 + $0x318] sm:$0xff]
    %v3201 = vld [vmem:[#allocation5 + $0x320] sm:$0xff]
    %v3202 = vld [vmem:[#allocation5 + $0x328] sm:$0xff]
    %v3203 = vld [vmem:[#allocation5 + $0x330] sm:$0xff]
    %v3204 = vld [vmem:[#allocation5 + $0x338] sm:$0xff]
    %v3205 = vld [vmem:[#allocation5 + $0x340] sm:$0xff]
    %v3206 = vld [vmem:[#allocation5 + $0x348] sm:$0xff]
    %v3207 = vld [vmem:[#allocation5 + $0x350] sm:$0xff]
    %v3208 = vld [vmem:[#allocation5 + $0x358] sm:$0xff]
    %v3209 = vld [vmem:[#allocation5 + $0x360] sm:$0xff]
    %v3210 = vld [vmem:[#allocation5 + $0x368] sm:$0xff]
    %v3211 = vld [vmem:[#allocation5 + $0x370] sm:$0xff]
    %v3212 = vld [vmem:[#allocation5 + $0x378] sm:$0xff]
    %v3213 = vld [vmem:[#allocation5 + $0x380] sm:$0xff]
    %v3214 = vld [vmem:[#allocation5 + $0x388] sm:$0xff]
    %v3215 = vld [vmem:[#allocation5 + $0x390] sm:$0xff]
    %v3216 = vld [vmem:[#allocation5 + $0x398] sm:$0xff]
    %v3217 = vld [vmem:[#allocation5 + $0x3a0] sm:$0xff]
    %v3218 = vld [vmem:[#allocation5 + $0x3a8] sm:$0xff]
    %v3219 = vld [vmem:[#allocation5 + $0x3b0] sm:$0xff]
    %v3220 = vld [vmem:[#allocation5 + $0x3b8] sm:$0xff]
    %v3221 = vld [vmem:[#allocation5 + $0x3c0] sm:$0xff]
    %v3222 = vld [vmem:[#allocation5 + $0x3c8] sm:$0xff]
    %v3223 = vld [vmem:[#allocation5 + $0x3d0] sm:$0xff]
    %v3224 = vld [vmem:[#allocation5 + $0x3d8] sm:$0xff]
    %v3225 = vld [vmem:[#allocation5 + $0x3e0] sm:$0xff]
    %v3226 = vld [vmem:[#allocation5 + $0x3e8] sm:$0xff]
    %v3227 = vld [vmem:[#allocation5 + $0x3f0] sm:$0xff]
    %v3228 = vld [vmem:[#allocation5 + $0x3f8] sm:$0xff]
    %v3229 = vld [vmem:[#allocation2 + $0x1c0] sm:$0xff]
    %v3230 = vld [vmem:[#allocation2 + $0x1c8] sm:$0xff]
    %v3231 = vld [vmem:[#allocation2 + $0x1d0] sm:$0xff]
    %v3232 = vld [vmem:[#allocation2 + $0x1d8] sm:$0xff]
    %v3233 = vld [vmem:[#allocation2 + $0x1e0] sm:$0xff]
    %v3234 = vld [vmem:[#allocation2 + $0x1e8] sm:$0xff]
    %v3235 = vld [vmem:[#allocation2 + $0x1f0] sm:$0xff]
    %v3236 = vld [vmem:[#allocation2 + $0x1f8] sm:$0xff]
    %3237 = vmatprep.subr.mxu0 %v3102
    %3238 = vmatpush1.msra.mxu0 %v3101
    %3239 = vmatprep.subr.mxu0 %v3106
    %3240 = vmatpush1.msra.mxu0 %v3105
    %3241 = vmatprep.subr.mxu0 %v3110
    %3242 = vmatpush1.msra.mxu0 %v3109
    %3243 = vmatprep.subr.mxu0 %v3114
    %3244 = vmatpush1.msra.mxu0 %v3113
    %3245 = vmatprep.subr.mxu0 %v3118
    %3246 = vmatpush1.msra.mxu0 %v3117
    %3247 = vmatprep.subr.mxu0 %v3122
    %3248 = vmatpush1.msra.mxu0 %v3121
    %3249 = vmatprep.subr.mxu0 %v3126
    %3250 = vmatpush1.msra.mxu0 %v3125
    %3251 = vmatprep.subr.mxu0 %v3130
    %3252 = vmatpush1.msra.mxu0 %v3129
    %3253 = vmatprep.subr.mxu0 %v3134
    %3254 = vmatpush1.msra.mxu0 %v3133
    %3255 = vmatprep.subr.mxu0 %v3138
    %3256 = vmatpush1.msra.mxu0 %v3137
    %3257 = vmatprep.subr.mxu0 %v3142
    %3258 = vmatpush1.msra.mxu0 %v3141
    %3259 = vmatprep.subr.mxu0 %v3146
    %3260 = vmatpush1.msra.mxu0 %v3145
    %3261 = vmatprep.subr.mxu0 %v3150
    %3262 = vmatpush1.msra.mxu0 %v3149
    %3263 = vmatprep.subr.mxu0 %v3154
    %3264 = vmatpush1.msra.mxu0 %v3153
    %3265 = vmatprep.subr.mxu0 %v3158
    %3266 = vmatpush1.msra.mxu0 %v3157
    %3267 = vmatprep.subr.mxu0 %v3162
    %3268 = vmatpush1.msra.mxu0 %v3161
    %3269 = vmatprep.subr.mxu0 %v3166
    %3270 = vmatpush1.msra.mxu0 %v3165
    %3271 = vmatprep.subr.mxu0 %v3170
    %3272 = vmatpush1.msra.mxu0 %v3169
    %3273 = vmatprep.subr.mxu0 %v3174
    %3274 = vmatpush1.msra.mxu0 %v3173
    %3275 = vmatprep.subr.mxu0 %v3178
    %3276 = vmatpush1.msra.mxu0 %v3177
    %3277 = vmatprep.subr.mxu0 %v3182
    %3278 = vmatpush1.msra.mxu0 %v3181
    %3279 = vmatprep.subr.mxu0 %v3186
    %3280 = vmatpush1.msra.mxu0 %v3185
    %3281 = vmatprep.subr.mxu0 %v3190
    %3282 = vmatpush1.msra.mxu0 %v3189
    %3283 = vmatprep.subr.mxu0 %v3194
    %3284 = vmatpush1.msra.mxu0 %v3193
    %3285 = vmatprep.subr.mxu0 %v3198
    %3286 = vmatpush1.msra.mxu0 %v3197
    %3287 = vmatprep.subr.mxu0 %v3202
    %3288 = vmatpush1.msra.mxu0 %v3201
    %3289 = vmatprep.subr.mxu0 %v3206
    %3290 = vmatpush1.msra.mxu0 %v3205
    %3291 = vmatprep.subr.mxu0 %v3210
    %3292 = vmatpush1.msra.mxu0 %v3209
    %3293 = vmatprep.subr.mxu0 %v3214
    %3294 = vmatpush1.msra.mxu0 %v3213
    %3295 = vmatprep.subr.mxu0 %v3218
    %3296 = vmatpush1.msra.mxu0 %v3217
    %3297 = vmatprep.subr.mxu0 %v3222
    %3298 = vmatpush1.msra.mxu0 %v3221
    %3299 = vmatprep.subr.mxu0 %v3226
    %3300 = vmatpush1.msra.mxu0 %v3225
    %3301 = vmatprep.mubr.f32.mxu0 %v3095
    %3302 = vmatmul.mubr.f32.gmra.mrb[0].mxu0 %v3093
    %v3303 = vpop.f32.mrb[0].mxu0
    %v3304 = vadd.f32 %v3229, %v3303
    %v3305 = vpop.f32.mrb[0].mxu0
    %v3306 = vadd.f32 %v3230, %v3305
    %3307 = vmatprep.mubr.f32.mxu0 %v3096
    %3308 = vmatmul.mubr.f32.gmra.mrb[0].mxu0 %v3094
    %v3309 = vpop.f32.mrb[0].mxu0
    %v3310 = vadd.f32 %v3233, %v3309
    %v3311 = vpop.f32.mrb[0].mxu0
    %v3312 = vadd.f32 %v3234, %v3311
    %3313 = vdwg.mxu0
    %3314 = vmatprep.subr.mxu0 %v3104
    %3315 = vmatpush1.msra.mxu0 %v3103
    %3316 = vmatprep.subr.mxu0 %v3108
    %3317 = vmatpush1.msra.mxu0 %v3107
    %3318 = vmatprep.subr.mxu0 %v3112
    %3319 = vmatpush1.msra.mxu0 %v3111
    %3320 = vmatprep.subr.mxu0 %v3116
    %3321 = vmatpush1.msra.mxu0 %v3115
    %3322 = vmatprep.subr.mxu0 %v3120
    %3323 = vmatpush1.msra.mxu0 %v3119
    %3324 = vmatprep.subr.mxu0 %v3124
    %3325 = vmatpush1.msra.mxu0 %v3123
    %3326 = vmatprep.subr.mxu0 %v3128
    %3327 = vmatpush1.msra.mxu0 %v3127
    %3328 = vmatprep.subr.mxu0 %v3132
    %3329 = vmatpush1.msra.mxu0 %v3131
    %3330 = vmatprep.subr.mxu0 %v3136
    %3331 = vmatpush1.msra.mxu0 %v3135
    %3332 = vmatprep.subr.mxu0 %v3140
    %3333 = vmatpush1.msra.mxu0 %v3139
    %3334 = vmatprep.subr.mxu0 %v3144
    %3335 = vmatpush1.msra.mxu0 %v3143
    %3336 = vmatprep.subr.mxu0 %v3148
    %3337 = vmatpush1.msra.mxu0 %v3147
    %3338 = vmatprep.subr.mxu0 %v3152
    %3339 = vmatpush1.msra.mxu0 %v3151
    %3340 = vmatprep.subr.mxu0 %v3156
    %3341 = vmatpush1.msra.mxu0 %v3155
    %3342 = vmatprep.subr.mxu0 %v3160
    %3343 = vmatpush1.msra.mxu0 %v3159
    %3344 = vmatprep.subr.mxu0 %v3164
    %3345 = vmatpush1.msra.mxu0 %v3163
    %3346 = vmatprep.subr.mxu0 %v3168
    %3347 = vmatpush1.msra.mxu0 %v3167
    %3348 = vmatprep.subr.mxu0 %v3172
    %3349 = vmatpush1.msra.mxu0 %v3171
    %3350 = vmatprep.subr.mxu0 %v3176
    %3351 = vmatpush1.msra.mxu0 %v3175
    %3352 = vmatprep.subr.mxu0 %v3180
    %3353 = vmatpush1.msra.mxu0 %v3179
    %3354 = vmatprep.subr.mxu0 %v3184
    %3355 = vmatpush1.msra.mxu0 %v3183
    %3356 = vmatprep.subr.mxu0 %v3188
    %3357 = vmatpush1.msra.mxu0 %v3187
    %3358 = vmatprep.subr.mxu0 %v3192
    %3359 = vmatpush1.msra.mxu0 %v3191
    %3360 = vmatprep.subr.mxu0 %v3196
    %3361 = vmatpush1.msra.mxu0 %v3195
    %3362 = vmatprep.subr.mxu0 %v3200
    %3363 = vmatpush1.msra.mxu0 %v3199
    %3364 = vmatprep.subr.mxu0 %v3204
    %3365 = vmatpush1.msra.mxu0 %v3203
    %3366 = vmatprep.subr.mxu0 %v3208
    %3367 = vmatpush1.msra.mxu0 %v3207
    %3368 = vmatprep.subr.mxu0 %v3212
    %3369 = vmatpush1.msra.mxu0 %v3211
    %3370 = vmatprep.subr.mxu0 %v3216
    %3371 = vmatpush1.msra.mxu0 %v3215
    %3372 = vmatprep.subr.mxu0 %v3220
    %3373 = vmatpush1.msra.mxu0 %v3219
    %3374 = vmatprep.subr.mxu0 %v3224
    %3375 = vmatpush1.msra.mxu0 %v3223
    %3376 = vmatprep.subr.mxu0 %v3228
    %3377 = vmatpush1.msra.mxu0 %v3227
    %3378 = vmatprep.mubr.f32.mxu0 %v3095
    %3379 = vmatmul.mubr.f32.gmra.mrb[0].mxu0 %v3093
    %v3380 = vpop.f32.mrb[0].mxu0
    %v3381 = vadd.f32 %v3231, %v3380
    %v3382 = vpop.f32.mrb[0].mxu0
    %v3383 = vadd.f32 %v3232, %v3382
    %3384 = vmatprep.mubr.f32.mxu0 %v3096
    %3385 = vmatmul.mubr.f32.gmra.mrb[0].mxu0 %v3094
    %v3386 = vpop.f32.mrb[0].mxu0
    %v3387 = vadd.f32 %v3235, %v3386
    %v3388 = vpop.f32.mrb[0].mxu0
    %v3389 = vadd.f32 %v3236, %v3388
    %3390 = vdwg.mxu0
    %v3391 = vadd.f32 %v3304, %v615
    %v3392 = vadd.f32 %v3306, %v616
    %v3393 = vadd.f32 %v3381, %v617
    %v3394 = vadd.f32 %v3383, %v618
    %v3395 = vadd.f32 %v3310, %v619
    %v3396 = vadd.f32 %v3312, %v620
    %v3397 = vadd.f32 %v3387, %v621
    %v3398 = vadd.f32 %v3389, %v622
    %v3399 = vxor.u32 %v3391, 2147483648
    %v3400 = vxor.u32 %v3395, 2147483648
    %v3401 = vmul.f32 %v3399, 1.442695
    %v3402 = vpow.pop %v3401
    %v3403 = vmul.f32 %v3400, 1.442695
    %v3404 = vpow.pop %v3403
    %v3405 = vadd.f32 %v3402, 1.0
    %v3406 = vadd.f32 %v3404, 1.0
    %v3407 = vrcp.pop %v3405
    %v3408 = vmul.f32 1.0, %v3407
    %v3409 = vrcp.pop %v3406
    %v3410 = vmul.f32 1.0, %v3409
    %v3411 = vxor.u32 %v3392, 2147483648
    %v3412 = vxor.u32 %v3396, 2147483648
    %v3413 = vmul.f32 %v3411, 1.442695
    %v3414 = vpow.pop %v3413
    %v3415 = vmul.f32 %v3412, 1.442695
    %v3416 = vpow.pop %v3415
    %v3417 = vadd.f32 %v3414, 1.0
    %v3418 = vadd.f32 %v3416, 1.0
    %v3419 = vrcp.pop %v3417
    %v3420 = vmul.f32 1.0, %v3419
    %v3421 = vrcp.pop %v3418
    %v3422 = vmul.f32 1.0, %v3421
    %v3423 = vtanh.pop %v3393
    %v3424 = vtanh.pop %v3397
    %v3425 = vxor.u32 %v3394, 2147483648
    %v3426 = vxor.u32 %v3398, 2147483648
    %v3427 = vmul.f32 %v3425, 1.442695
    %v3428 = vpow.pop %v3427
    %v3429 = vmul.f32 %v3426, 1.442695
    %v3430 = vpow.pop %v3429
    %v3431 = vadd.f32 %v3428, 1.0
    %v3432 = vadd.f32 %v3430, 1.0
    %v3433 = vrcp.pop %v3431
    %v3434 = vmul.f32 1.0, %v3433
    %v3435 = vrcp.pop %v3432
    %v3436 = vmul.f32 1.0, %v3435
    %v3437 = vmul.f32 %v3420, %v3087
    %v3438 = vmul.f32 %v3422, %v3088
    %v3439 = vmul.f32 %v3408, %v3423
    %v3440 = vmul.f32 %v3410, %v3424
    %v3441 = vadd.f32 %v3437, %v3439
    %v3442 = vadd.f32 %v3438, %v3440
    %v3443 = vtanh.pop %v3441
    %v3444 = vtanh.pop %v3442
    %v3445 = vmul.f32 %v3434, %v3443
    %v3446 = vmul.f32 %v3436, %v3444
    %3447 = vst [vmem:[#allocation3 + $0x1c0] sm:$0xff] %v3445
    %3448 = vst [vmem:[#allocation3 + $0x8] sm:$0xff] %v3446
    %3449 = vst [vmem:[#allocation3 + $0x30] sm:$0xff] %v3445
    %3450 = vst [vmem:[#allocation3 + $0x1f8] sm:$0xff] %v3446
    %v3451 = vld [vmem:[#allocation3] sm:$0xff]
    %v3452 = vld [vmem:[#allocation3 + $0x8] sm:$0xff]
    %v3453 = vld [vmem:[#allocation3 + $0x10] sm:$0xff]
    %v3454 = vld [vmem:[#allocation3 + $0x18] sm:$0xff]
    %v3455 = vld [vmem:[#allocation3 + $0x20] sm:$0xff]
    %v3456 = vld [vmem:[#allocation3 + $0x28] sm:$0xff]
    %v3457 = vld [vmem:[#allocation3 + $0x30] sm:$0xff]
    %v3458 = vld [vmem:[#allocation3 + $0x38] sm:$0xff]
    %v3459 = vld [vmem:[#allocation3 + $0x40] sm:$0xff]
    %v3460 = vld [vmem:[#allocation3 + $0x48] sm:$0xff]
    %v3461 = vld [vmem:[#allocation3 + $0x50] sm:$0xff]
    %v3462 = vld [vmem:[#allocation3 + $0x58] sm:$0xff]
    %v3463 = vld [vmem:[#allocation3 + $0x60] sm:$0xff]
    %v3464 = vld [vmem:[#allocation3 + $0x68] sm:$0xff]
    %v3465 = vld [vmem:[#allocation3 + $0x70] sm:$0xff]
    %v3466 = vld [vmem:[#allocation3 + $0x78] sm:$0xff]
    %v3467 = vld [vmem:[#allocation3 + $0x80] sm:$0xff]
    %v3468 = vld [vmem:[#allocation3 + $0x88] sm:$0xff]
    %v3469 = vld [vmem:[#allocation3 + $0x90] sm:$0xff]
    %v3470 = vld [vmem:[#allocation3 + $0x98] sm:$0xff]
    %v3471 = vld [vmem:[#allocation3 + $0xa0] sm:$0xff]
    %v3472 = vld [vmem:[#allocation3 + $0xa8] sm:$0xff]
    %v3473 = vld [vmem:[#allocation3 + $0xb0] sm:$0xff]
    %v3474 = vld [vmem:[#allocation3 + $0xb8] sm:$0xff]
    %v3475 = vld [vmem:[#allocation3 + $0xc0] sm:$0xff]
    %v3476 = vld [vmem:[#allocation3 + $0xc8] sm:$0xff]
    %v3477 = vld [vmem:[#allocation3 + $0xd0] sm:$0xff]
    %v3478 = vld [vmem:[#allocation3 + $0xd8] sm:$0xff]
    %v3479 = vld [vmem:[#allocation3 + $0xe0] sm:$0xff]
    %v3480 = vld [vmem:[#allocation3 + $0xe8] sm:$0xff]
    %v3481 = vld [vmem:[#allocation3 + $0xf0] sm:$0xff]
    %v3482 = vld [vmem:[#allocation3 + $0xf8] sm:$0xff]
    %v3483 = vld [vmem:[#allocation3 + $0x100] sm:$0xff]
    %v3484 = vld [vmem:[#allocation3 + $0x108] sm:$0xff]
    %v3485 = vld [vmem:[#allocation3 + $0x110] sm:$0xff]
    %v3486 = vld [vmem:[#allocation3 + $0x118] sm:$0xff]
    %v3487 = vld [vmem:[#allocation3 + $0x120] sm:$0xff]
    %v3488 = vld [vmem:[#allocation3 + $0x128] sm:$0xff]
    %v3489 = vld [vmem:[#allocation3 + $0x130] sm:$0xff]
    %v3490 = vld [vmem:[#allocation3 + $0x138] sm:$0xff]
    %v3491 = vld [vmem:[#allocation3 + $0x140] sm:$0xff]
    %v3492 = vld [vmem:[#allocation3 + $0x148] sm:$0xff]
    %v3493 = vld [vmem:[#allocation3 + $0x150] sm:$0xff]
    %v3494 = vld [vmem:[#allocation3 + $0x158] sm:$0xff]
    %v3495 = vld [vmem:[#allocation3 + $0x160] sm:$0xff]
    %v3496 = vld [vmem:[#allocation3 + $0x168] sm:$0xff]
    %v3497 = vld [vmem:[#allocation3 + $0x170] sm:$0xff]
    %v3498 = vld [vmem:[#allocation3 + $0x178] sm:$0xff]
    %v3499 = vld [vmem:[#allocation3 + $0x180] sm:$0xff]
    %v3500 = vld [vmem:[#allocation3 + $0x188] sm:$0xff]
    %v3501 = vld [vmem:[#allocation3 + $0x190] sm:$0xff]
    %v3502 = vld [vmem:[#allocation3 + $0x198] sm:$0xff]
    %v3503 = vld [vmem:[#allocation3 + $0x1a0] sm:$0xff]
    %v3504 = vld [vmem:[#allocation3 + $0x1a8] sm:$0xff]
    %v3505 = vld [vmem:[#allocation3 + $0x1b0] sm:$0xff]
    %v3506 = vld [vmem:[#allocation3 + $0x1b8] sm:$0xff]
    %v3507 = vld [vmem:[#allocation3 + $0x1c0] sm:$0xff]
    %v3508 = vld [vmem:[#allocation3 + $0x1c8] sm:$0xff]
    %v3509 = vld [vmem:[#allocation3 + $0x1d0] sm:$0xff]
    %v3510 = vld [vmem:[#allocation3 + $0x1d8] sm:$0xff]
    %v3511 = vld [vmem:[#allocation3 + $0x1e0] sm:$0xff]
    %v3512 = vld [vmem:[#allocation3 + $0x1e8] sm:$0xff]
    %v3513 = vld [vmem:[#allocation3 + $0x1f0] sm:$0xff]
    %v3514 = vld [vmem:[#allocation3 + $0x1f8] sm:$0xff]
    %v3515 = vld [vmem:[#allocation7] sm:$0xff]
    %v3516 = vld [vmem:[#allocation7 + $0x8] sm:$0xff]
    %v3517 = vld [vmem:[#allocation7 + $0x10] sm:$0xff]
    %v3518 = vld [vmem:[#allocation7 + $0x18] sm:$0xff]
    %v3519 = vld [vmem:[#allocation7 + $0x20] sm:$0xff]
    %v3520 = vld [vmem:[#allocation7 + $0x28] sm:$0xff]
    %v3521 = vld [vmem:[#allocation7 + $0x30] sm:$0xff]
    %v3522 = vld [vmem:[#allocation7 + $0x38] sm:$0xff]
    %v3523 = vld [vmem:[#allocation7 + $0x40] sm:$0xff]
    %v3524 = vld [vmem:[#allocation7 + $0x48] sm:$0xff]
    %v3525 = vld [vmem:[#allocation7 + $0x50] sm:$0xff]
    %v3526 = vld [vmem:[#allocation7 + $0x58] sm:$0xff]
    %v3527 = vld [vmem:[#allocation7 + $0x60] sm:$0xff]
    %v3528 = vld [vmem:[#allocation7 + $0x68] sm:$0xff]
    %v3529 = vld [vmem:[#allocation7 + $0x70] sm:$0xff]
    %v3530 = vld [vmem:[#allocation7 + $0x78] sm:$0xff]
    %v3531 = vld [vmem:[#allocation7 + $0x80] sm:$0xff]
    %v3532 = vld [vmem:[#allocation7 + $0x88] sm:$0xff]
    %v3533 = vld [vmem:[#allocation7 + $0x90] sm:$0xff]
    %v3534 = vld [vmem:[#allocation7 + $0x98] sm:$0xff]
    %v3535 = vld [vmem:[#allocation7 + $0xa0] sm:$0xff]
    %v3536 = vld [vmem:[#allocation7 + $0xa8] sm:$0xff]
    %v3537 = vld [vmem:[#allocation7 + $0xb0] sm:$0xff]
    %v3538 = vld [vmem:[#allocation7 + $0xb8] sm:$0xff]
    %v3539 = vld [vmem:[#allocation7 + $0xc0] sm:$0xff]
    %v3540 = vld [vmem:[#allocation7 + $0xc8] sm:$0xff]
    %v3541 = vld [vmem:[#allocation7 + $0xd0] sm:$0xff]
    %v3542 = vld [vmem:[#allocation7 + $0xd8] sm:$0xff]
    %v3543 = vld [vmem:[#allocation7 + $0xe0] sm:$0xff]
    %v3544 = vld [vmem:[#allocation7 + $0xe8] sm:$0xff]
    %v3545 = vld [vmem:[#allocation7 + $0xf0] sm:$0xff]
    %v3546 = vld [vmem:[#allocation7 + $0xf8] sm:$0xff]
    %v3547 = vld [vmem:[#allocation7 + $0x100] sm:$0xff]
    %v3548 = vld [vmem:[#allocation7 + $0x108] sm:$0xff]
    %v3549 = vld [vmem:[#allocation7 + $0x110] sm:$0xff]
    %v3550 = vld [vmem:[#allocation7 + $0x118] sm:$0xff]
    %v3551 = vld [vmem:[#allocation7 + $0x120] sm:$0xff]
    %v3552 = vld [vmem:[#allocation7 + $0x128] sm:$0xff]
    %v3553 = vld [vmem:[#allocation7 + $0x130] sm:$0xff]
    %v3554 = vld [vmem:[#allocation7 + $0x138] sm:$0xff]
    %v3555 = vld [vmem:[#allocation7 + $0x140] sm:$0xff]
    %v3556 = vld [vmem:[#allocation7 + $0x148] sm:$0xff]
    %v3557 = vld [vmem:[#allocation7 + $0x150] sm:$0xff]
    %v3558 = vld [vmem:[#allocation7 + $0x158] sm:$0xff]
    %v3559 = vld [vmem:[#allocation7 + $0x160] sm:$0xff]
    %v3560 = vld [vmem:[#allocation7 + $0x168] sm:$0xff]
    %v3561 = vld [vmem:[#allocation7 + $0x170] sm:$0xff]
    %v3562 = vld [vmem:[#allocation7 + $0x178] sm:$0xff]
    %v3563 = vld [vmem:[#allocation7 + $0x180] sm:$0xff]
    %v3564 = vld [vmem:[#allocation7 + $0x188] sm:$0xff]
    %v3565 = vld [vmem:[#allocation7 + $0x190] sm:$0xff]
    %v3566 = vld [vmem:[#allocation7 + $0x198] sm:$0xff]
    %v3567 = vld [vmem:[#allocation7 + $0x1a0] sm:$0xff]
    %v3568 = vld [vmem:[#allocation7 + $0x1a8] sm:$0xff]
    %v3569 = vld [vmem:[#allocation7 + $0x1b0] sm:$0xff]
    %v3570 = vld [vmem:[#allocation7 + $0x1b8] sm:$0xff]
    %v3571 = vld [vmem:[#allocation7 + $0x1c0] sm:$0xff]
    %v3572 = vld [vmem:[#allocation7 + $0x1c8] sm:$0xff]
    %v3573 = vld [vmem:[#allocation7 + $0x1d0] sm:$0xff]
    %v3574 = vld [vmem:[#allocation7 + $0x1d8] sm:$0xff]
    %v3575 = vld [vmem:[#allocation7 + $0x1e0] sm:$0xff]
    %v3576 = vld [vmem:[#allocation7 + $0x1e8] sm:$0xff]
    %v3577 = vld [vmem:[#allocation7 + $0x1f0] sm:$0xff]
    %v3578 = vld [vmem:[#allocation7 + $0x1f8] sm:$0xff]
    %v3579 = vld [vmem:[#allocation7 + $0x200] sm:$0xff]
    %v3580 = vld [vmem:[#allocation7 + $0x208] sm:$0xff]
    %v3581 = vld [vmem:[#allocation7 + $0x210] sm:$0xff]
    %v3582 = vld [vmem:[#allocation7 + $0x218] sm:$0xff]
    %v3583 = vld [vmem:[#allocation7 + $0x220] sm:$0xff]
    %v3584 = vld [vmem:[#allocation7 + $0x228] sm:$0xff]
    %v3585 = vld [vmem:[#allocation7 + $0x230] sm:$0xff]
    %v3586 = vld [vmem:[#allocation7 + $0x238] sm:$0xff]
    %v3587 = vld [vmem:[#allocation7 + $0x240] sm:$0xff]
    %v3588 = vld [vmem:[#allocation7 + $0x248] sm:$0xff]
    %v3589 = vld [vmem:[#allocation7 + $0x250] sm:$0xff]
    %v3590 = vld [vmem:[#allocation7 + $0x258] sm:$0xff]
    %v3591 = vld [vmem:[#allocation7 + $0x260] sm:$0xff]
    %v3592 = vld [vmem:[#allocation7 + $0x268] sm:$0xff]
    %v3593 = vld [vmem:[#allocation7 + $0x270] sm:$0xff]
    %v3594 = vld [vmem:[#allocation7 + $0x278] sm:$0xff]
    %v3595 = vld [vmem:[#allocation7 + $0x280] sm:$0xff]
    %v3596 = vld [vmem:[#allocation7 + $0x288] sm:$0xff]
    %v3597 = vld [vmem:[#allocation7 + $0x290] sm:$0xff]
    %v3598 = vld [vmem:[#allocation7 + $0x298] sm:$0xff]
    %v3599 = vld [vmem:[#allocation7 + $0x2a0] sm:$0xff]
    %v3600 = vld [vmem:[#allocation7 + $0x2a8] sm:$0xff]
    %v3601 = vld [vmem:[#allocation7 + $0x2b0] sm:$0xff]
    %v3602 = vld [vmem:[#allocation7 + $0x2b8] sm:$0xff]
    %v3603 = vld [vmem:[#allocation7 + $0x2c0] sm:$0xff]
    %v3604 = vld [vmem:[#allocation7 + $0x2c8] sm:$0xff]
    %v3605 = vld [vmem:[#allocation7 + $0x2d0] sm:$0xff]
    %v3606 = vld [vmem:[#allocation7 + $0x2d8] sm:$0xff]
    %v3607 = vld [vmem:[#allocation7 + $0x2e0] sm:$0xff]
    %v3608 = vld [vmem:[#allocation7 + $0x2e8] sm:$0xff]
    %v3609 = vld [vmem:[#allocation7 + $0x2f0] sm:$0xff]
    %v3610 = vld [vmem:[#allocation7 + $0x2f8] sm:$0xff]
    %v3611 = vld [vmem:[#allocation7 + $0x300] sm:$0xff]
    %v3612 = vld [vmem:[#allocation7 + $0x308] sm:$0xff]
    %v3613 = vld [vmem:[#allocation7 + $0x310] sm:$0xff]
    %v3614 = vld [vmem:[#allocation7 + $0x318] sm:$0xff]
    %v3615 = vld [vmem:[#allocation7 + $0x320] sm:$0xff]
    %v3616 = vld [vmem:[#allocation7 + $0x328] sm:$0xff]
    %v3617 = vld [vmem:[#allocation7 + $0x330] sm:$0xff]
    %v3618 = vld [vmem:[#allocation7 + $0x338] sm:$0xff]
    %v3619 = vld [vmem:[#allocation7 + $0x340] sm:$0xff]
    %v3620 = vld [vmem:[#allocation7 + $0x348] sm:$0xff]
    %v3621 = vld [vmem:[#allocation7 + $0x350] sm:$0xff]
    %v3622 = vld [vmem:[#allocation7 + $0x358] sm:$0xff]
    %v3623 = vld [vmem:[#allocation7 + $0x360] sm:$0xff]
    %v3624 = vld [vmem:[#allocation7 + $0x368] sm:$0xff]
    %v3625 = vld [vmem:[#allocation7 + $0x370] sm:$0xff]
    %v3626 = vld [vmem:[#allocation7 + $0x378] sm:$0xff]
    %v3627 = vld [vmem:[#allocation7 + $0x380] sm:$0xff]
    %v3628 = vld [vmem:[#allocation7 + $0x388] sm:$0xff]
    %v3629 = vld [vmem:[#allocation7 + $0x390] sm:$0xff]
    %v3630 = vld [vmem:[#allocation7 + $0x398] sm:$0xff]
    %v3631 = vld [vmem:[#allocation7 + $0x3a0] sm:$0xff]
    %v3632 = vld [vmem:[#allocation7 + $0x3a8] sm:$0xff]
    %v3633 = vld [vmem:[#allocation7 + $0x3b0] sm:$0xff]
    %v3634 = vld [vmem:[#allocation7 + $0x3b8] sm:$0xff]
    %v3635 = vld [vmem:[#allocation7 + $0x3c0] sm:$0xff]
    %v3636 = vld [vmem:[#allocation7 + $0x3c8] sm:$0xff]
    %v3637 = vld [vmem:[#allocation7 + $0x3d0] sm:$0xff]
    %v3638 = vld [vmem:[#allocation7 + $0x3d8] sm:$0xff]
    %v3639 = vld [vmem:[#allocation7 + $0x3e0] sm:$0xff]
    %v3640 = vld [vmem:[#allocation7 + $0x3e8] sm:$0xff]
    %v3641 = vld [vmem:[#allocation7 + $0x3f0] sm:$0xff]
    %v3642 = vld [vmem:[#allocation7 + $0x3f8] sm:$0xff]
    %v3643 = vld [vmem:[#allocation7 + $0x400] sm:$0xff]
    %v3644 = vld [vmem:[#allocation7 + $0x408] sm:$0xff]
    %v3645 = vld [vmem:[#allocation7 + $0x410] sm:$0xff]
    %v3646 = vld [vmem:[#allocation7 + $0x418] sm:$0xff]
    %v3647 = vld [vmem:[#allocation7 + $0x420] sm:$0xff]
    %v3648 = vld [vmem:[#allocation7 + $0x428] sm:$0xff]
    %v3649 = vld [vmem:[#allocation7 + $0x430] sm:$0xff]
    %v3650 = vld [vmem:[#allocation7 + $0x438] sm:$0xff]
    %v3651 = vld [vmem:[#allocation7 + $0x440] sm:$0xff]
    %v3652 = vld [vmem:[#allocation7 + $0x448] sm:$0xff]
    %v3653 = vld [vmem:[#allocation7 + $0x450] sm:$0xff]
    %v3654 = vld [vmem:[#allocation7 + $0x458] sm:$0xff]
    %v3655 = vld [vmem:[#allocation7 + $0x460] sm:$0xff]
    %v3656 = vld [vmem:[#allocation7 + $0x468] sm:$0xff]
    %v3657 = vld [vmem:[#allocation7 + $0x470] sm:$0xff]
    %v3658 = vld [vmem:[#allocation7 + $0x478] sm:$0xff]
    %v3659 = vld [vmem:[#allocation7 + $0x480] sm:$0xff]
    %v3660 = vld [vmem:[#allocation7 + $0x488] sm:$0xff]
    %v3661 = vld [vmem:[#allocation7 + $0x490] sm:$0xff]
    %v3662 = vld [vmem:[#allocation7 + $0x498] sm:$0xff]
    %v3663 = vld [vmem:[#allocation7 + $0x4a0] sm:$0xff]
    %v3664 = vld [vmem:[#allocation7 + $0x4a8] sm:$0xff]
    %v3665 = vld [vmem:[#allocation7 + $0x4b0] sm:$0xff]
    %v3666 = vld [vmem:[#allocation7 + $0x4b8] sm:$0xff]
    %v3667 = vld [vmem:[#allocation7 + $0x4c0] sm:$0xff]
    %v3668 = vld [vmem:[#allocation7 + $0x4c8] sm:$0xff]
    %v3669 = vld [vmem:[#allocation7 + $0x4d0] sm:$0xff]
    %v3670 = vld [vmem:[#allocation7 + $0x4d8] sm:$0xff]
    %v3671 = vld [vmem:[#allocation7 + $0x4e0] sm:$0xff]
    %v3672 = vld [vmem:[#allocation7 + $0x4e8] sm:$0xff]
    %v3673 = vld [vmem:[#allocation7 + $0x4f0] sm:$0xff]
    %v3674 = vld [vmem:[#allocation7 + $0x4f8] sm:$0xff]
    %v3675 = vld [vmem:[#allocation7 + $0x500] sm:$0xff]
    %v3676 = vld [vmem:[#allocation7 + $0x508] sm:$0xff]
    %v3677 = vld [vmem:[#allocation7 + $0x510] sm:$0xff]
    %v3678 = vld [vmem:[#allocation7 + $0x518] sm:$0xff]
    %v3679 = vld [vmem:[#allocation7 + $0x520] sm:$0xff]
    %v3680 = vld [vmem:[#allocation7 + $0x528] sm:$0xff]
    %v3681 = vld [vmem:[#allocation7 + $0x530] sm:$0xff]
    %v3682 = vld [vmem:[#allocation7 + $0x538] sm:$0xff]
    %v3683 = vld [vmem:[#allocation7 + $0x540] sm:$0xff]
    %v3684 = vld [vmem:[#allocation7 + $0x548] sm:$0xff]
    %v3685 = vld [vmem:[#allocation7 + $0x550] sm:$0xff]
    %v3686 = vld [vmem:[#allocation7 + $0x558] sm:$0xff]
    %v3687 = vld [vmem:[#allocation7 + $0x560] sm:$0xff]
    %v3688 = vld [vmem:[#allocation7 + $0x568] sm:$0xff]
    %v3689 = vld [vmem:[#allocation7 + $0x570] sm:$0xff]
    %v3690 = vld [vmem:[#allocation7 + $0x578] sm:$0xff]
    %v3691 = vld [vmem:[#allocation7 + $0x580] sm:$0xff]
    %v3692 = vld [vmem:[#allocation7 + $0x588] sm:$0xff]
    %v3693 = vld [vmem:[#allocation7 + $0x590] sm:$0xff]
    %v3694 = vld [vmem:[#allocation7 + $0x598] sm:$0xff]
    %v3695 = vld [vmem:[#allocation7 + $0x5a0] sm:$0xff]
    %v3696 = vld [vmem:[#allocation7 + $0x5a8] sm:$0xff]
    %v3697 = vld [vmem:[#allocation7 + $0x5b0] sm:$0xff]
    %v3698 = vld [vmem:[#allocation7 + $0x5b8] sm:$0xff]
    %v3699 = vld [vmem:[#allocation7 + $0x5c0] sm:$0xff]
    %v3700 = vld [vmem:[#allocation7 + $0x5c8] sm:$0xff]
    %v3701 = vld [vmem:[#allocation7 + $0x5d0] sm:$0xff]
    %v3702 = vld [vmem:[#allocation7 + $0x5d8] sm:$0xff]
    %v3703 = vld [vmem:[#allocation7 + $0x5e0] sm:$0xff]
    %v3704 = vld [vmem:[#allocation7 + $0x5e8] sm:$0xff]
    %v3705 = vld [vmem:[#allocation7 + $0x5f0] sm:$0xff]
    %v3706 = vld [vmem:[#allocation7 + $0x5f8] sm:$0xff]
    %v3707 = vld [vmem:[#allocation7 + $0x600] sm:$0xff]
    %v3708 = vld [vmem:[#allocation7 + $0x608] sm:$0xff]
    %v3709 = vld [vmem:[#allocation7 + $0x610] sm:$0xff]
    %v3710 = vld [vmem:[#allocation7 + $0x618] sm:$0xff]
    %v3711 = vld [vmem:[#allocation7 + $0x620] sm:$0xff]
    %v3712 = vld [vmem:[#allocation7 + $0x628] sm:$0xff]
    %v3713 = vld [vmem:[#allocation7 + $0x630] sm:$0xff]
    %v3714 = vld [vmem:[#allocation7 + $0x638] sm:$0xff]
    %v3715 = vld [vmem:[#allocation7 + $0x640] sm:$0xff]
    %v3716 = vld [vmem:[#allocation7 + $0x648] sm:$0xff]
    %v3717 = vld [vmem:[#allocation7 + $0x650] sm:$0xff]
    %v3718 = vld [vmem:[#allocation7 + $0x658] sm:$0xff]
    %v3719 = vld [vmem:[#allocation7 + $0x660] sm:$0xff]
    %v3720 = vld [vmem:[#allocation7 + $0x668] sm:$0xff]
    %v3721 = vld [vmem:[#allocation7 + $0x670] sm:$0xff]
    %v3722 = vld [vmem:[#allocation7 + $0x678] sm:$0xff]
    %v3723 = vld [vmem:[#allocation7 + $0x680] sm:$0xff]
    %v3724 = vld [vmem:[#allocation7 + $0x688] sm:$0xff]
    %v3725 = vld [vmem:[#allocation7 + $0x690] sm:$0xff]
    %v3726 = vld [vmem:[#allocation7 + $0x698] sm:$0xff]
    %v3727 = vld [vmem:[#allocation7 + $0x6a0] sm:$0xff]
    %v3728 = vld [vmem:[#allocation7 + $0x6a8] sm:$0xff]
    %v3729 = vld [vmem:[#allocation7 + $0x6b0] sm:$0xff]
    %v3730 = vld [vmem:[#allocation7 + $0x6b8] sm:$0xff]
    %v3731 = vld [vmem:[#allocation7 + $0x6c0] sm:$0xff]
    %v3732 = vld [vmem:[#allocation7 + $0x6c8] sm:$0xff]
    %v3733 = vld [vmem:[#allocation7 + $0x6d0] sm:$0xff]
    %v3734 = vld [vmem:[#allocation7 + $0x6d8] sm:$0xff]
    %v3735 = vld [vmem:[#allocation7 + $0x6e0] sm:$0xff]
    %v3736 = vld [vmem:[#allocation7 + $0x6e8] sm:$0xff]
    %v3737 = vld [vmem:[#allocation7 + $0x6f0] sm:$0xff]
    %v3738 = vld [vmem:[#allocation7 + $0x6f8] sm:$0xff]
    %v3739 = vld [vmem:[#allocation7 + $0x700] sm:$0xff]
    %v3740 = vld [vmem:[#allocation7 + $0x708] sm:$0xff]
    %v3741 = vld [vmem:[#allocation7 + $0x710] sm:$0xff]
    %v3742 = vld [vmem:[#allocation7 + $0x718] sm:$0xff]
    %v3743 = vld [vmem:[#allocation7 + $0x720] sm:$0xff]
    %v3744 = vld [vmem:[#allocation7 + $0x728] sm:$0xff]
    %v3745 = vld [vmem:[#allocation7 + $0x730] sm:$0xff]
    %v3746 = vld [vmem:[#allocation7 + $0x738] sm:$0xff]
    %v3747 = vld [vmem:[#allocation7 + $0x740] sm:$0xff]
    %v3748 = vld [vmem:[#allocation7 + $0x748] sm:$0xff]
    %v3749 = vld [vmem:[#allocation7 + $0x750] sm:$0xff]
    %v3750 = vld [vmem:[#allocation7 + $0x758] sm:$0xff]
    %v3751 = vld [vmem:[#allocation7 + $0x760] sm:$0xff]
    %v3752 = vld [vmem:[#allocation7 + $0x768] sm:$0xff]
    %v3753 = vld [vmem:[#allocation7 + $0x770] sm:$0xff]
    %v3754 = vld [vmem:[#allocation7 + $0x778] sm:$0xff]
    %v3755 = vld [vmem:[#allocation7 + $0x780] sm:$0xff]
    %v3756 = vld [vmem:[#allocation7 + $0x788] sm:$0xff]
    %v3757 = vld [vmem:[#allocation7 + $0x790] sm:$0xff]
    %v3758 = vld [vmem:[#allocation7 + $0x798] sm:$0xff]
    %v3759 = vld [vmem:[#allocation7 + $0x7a0] sm:$0xff]
    %v3760 = vld [vmem:[#allocation7 + $0x7a8] sm:$0xff]
    %v3761 = vld [vmem:[#allocation7 + $0x7b0] sm:$0xff]
    %v3762 = vld [vmem:[#allocation7 + $0x7b8] sm:$0xff]
    %v3763 = vld [vmem:[#allocation7 + $0x7c0] sm:$0xff]
    %v3764 = vld [vmem:[#allocation7 + $0x7c8] sm:$0xff]
    %v3765 = vld [vmem:[#allocation7 + $0x7d0] sm:$0xff]
    %v3766 = vld [vmem:[#allocation7 + $0x7d8] sm:$0xff]
    %v3767 = vld [vmem:[#allocation7 + $0x7e0] sm:$0xff]
    %v3768 = vld [vmem:[#allocation7 + $0x7e8] sm:$0xff]
    %v3769 = vld [vmem:[#allocation7 + $0x7f0] sm:$0xff]
    %v3770 = vld [vmem:[#allocation7 + $0x7f8] sm:$0xff]
    %3771 = vmatprep.subr.mxu0 %v3516
    %3772 = vmatpush1.msra.mxu0 %v3515
    %3773 = vmatprep.subr.mxu0 %v3520
    %3774 = vmatpush1.msra.mxu0 %v3519
    %3775 = vmatprep.subr.mxu0 %v3524
    %3776 = vmatpush1.msra.mxu0 %v3523
    %3777 = vmatprep.subr.mxu0 %v3528
    %3778 = vmatpush1.msra.mxu0 %v3527
    %3779 = vmatprep.subr.mxu0 %v3532
    %3780 = vmatpush1.msra.mxu0 %v3531
    %3781 = vmatprep.subr.mxu0 %v3536
    %3782 = vmatpush1.msra.mxu0 %v3535
    %3783 = vmatprep.subr.mxu0 %v3540
    %3784 = vmatpush1.msra.mxu0 %v3539
    %3785 = vmatprep.subr.mxu0 %v3544
    %3786 = vmatpush1.msra.mxu0 %v3543
    %3787 = vmatprep.subr.mxu0 %v3548
    %3788 = vmatpush1.msra.mxu0 %v3547
    %3789 = vmatprep.subr.mxu0 %v3552
    %3790 = vmatpush1.msra.mxu0 %v3551
    %3791 = vmatprep.subr.mxu0 %v3556
    %3792 = vmatpush1.msra.mxu0 %v3555
    %3793 = vmatprep.subr.mxu0 %v3560
    %3794 = vmatpush1.msra.mxu0 %v3559
    %3795 = vmatprep.subr.mxu0 %v3564
    %3796 = vmatpush1.msra.mxu0 %v3563
    %3797 = vmatprep.subr.mxu0 %v3568
    %3798 = vmatpush1.msra.mxu0 %v3567
    %3799 = vmatprep.subr.mxu0 %v3572
    %3800 = vmatpush1.msra.mxu0 %v3571
    %3801 = vmatprep.subr.mxu0 %v3576
    %3802 = vmatpush1.msra.mxu0 %v3575
    %3803 = vmatprep.subr.mxu0 %v3580
    %3804 = vmatpush1.msra.mxu0 %v3579
    %3805 = vmatprep.subr.mxu0 %v3584
    %3806 = vmatpush1.msra.mxu0 %v3583
    %3807 = vmatprep.subr.mxu0 %v3588
    %3808 = vmatpush1.msra.mxu0 %v3587
    %3809 = vmatprep.subr.mxu0 %v3592
    %3810 = vmatpush1.msra.mxu0 %v3591
    %3811 = vmatprep.subr.mxu0 %v3596
    %3812 = vmatpush1.msra.mxu0 %v3595
    %3813 = vmatprep.subr.mxu0 %v3600
    %3814 = vmatpush1.msra.mxu0 %v3599
    %3815 = vmatprep.subr.mxu0 %v3604
    %3816 = vmatpush1.msra.mxu0 %v3603
    %3817 = vmatprep.subr.mxu0 %v3608
    %3818 = vmatpush1.msra.mxu0 %v3607
    %3819 = vmatprep.subr.mxu0 %v3612
    %3820 = vmatpush1.msra.mxu0 %v3611
    %3821 = vmatprep.subr.mxu0 %v3616
    %3822 = vmatpush1.msra.mxu0 %v3615
    %3823 = vmatprep.subr.mxu0 %v3620
    %3824 = vmatpush1.msra.mxu0 %v3619
    %3825 = vmatprep.subr.mxu0 %v3624
    %3826 = vmatpush1.msra.mxu0 %v3623
    %3827 = vmatprep.subr.mxu0 %v3628
    %3828 = vmatpush1.msra.mxu0 %v3627
    %3829 = vmatprep.subr.mxu0 %v3632
    %3830 = vmatpush1.msra.mxu0 %v3631
    %3831 = vmatprep.subr.mxu0 %v3636
    %3832 = vmatpush1.msra.mxu0 %v3635
    %3833 = vmatprep.subr.mxu0 %v3640
    %3834 = vmatpush1.msra.mxu0 %v3639
    %3835 = vmatprep.mubr.f32.mxu0 %v3452
    %3836 = vmatmul.mubr.f32.gmra.mrb[0].mxu0 %v3451
    %v3837 = vpop.f32.mrb[0].mxu0
    %v3838 = vadd.f32 0.0, %v3837
    %v3839 = vpop.f32.mrb[0].mxu0
    %v3840 = vadd.f32 0.0, %v3839
    %3841 = vmatprep.mubr.f32.mxu0 %v3456
    %3842 = vmatmul.mubr.f32.gmra.mrb[0].mxu0 %v3455
    %v3843 = vpop.f32.mrb[0].mxu0
    %v3844 = vadd.f32 0.0, %v3843
    %v3845 = vpop.f32.mrb[0].mxu0
    %v3846 = vadd.f32 0.0, %v3845
    %3847 = vmatprep.mubr.f32.mxu0 %v3460
    %3848 = vmatmul.mubr.f32.gmra.mrb[0].mxu0 %v3459
    %v3849 = vpop.f32.mrb[0].mxu0
    %v3850 = vadd.f32 0.0, %v3849
    %v3851 = vpop.f32.mrb[0].mxu0
    %v3852 = vadd.f32 0.0, %v3851
    %3853 = vmatprep.mubr.f32.mxu0 %v3464
    %3854 = vmatmul.mubr.f32.gmra.mrb[0].mxu0 %v3463
    %v3855 = vpop.f32.mrb[0].mxu0
    %v3856 = vadd.f32 0.0, %v3855
    %v3857 = vpop.f32.mrb[0].mxu0
    %v3858 = vadd.f32 0.0, %v3857
    %3859 = vmatprep.mubr.f32.mxu0 %v3468
    %3860 = vmatmul.mubr.f32.gmra.mrb[0].mxu0 %v3467
    %v3861 = vpop.f32.mrb[0].mxu0
    %v3862 = vadd.f32 0.0, %v3861
    %v3863 = vpop.f32.mrb[0].mxu0
    %v3864 = vadd.f32 0.0, %v3863
    %3865 = vmatprep.mubr.f32.mxu0 %v3472
    %3866 = vmatmul.mubr.f32.gmra.mrb[0].mxu0 %v3471
    %v3867 = vpop.f32.mrb[0].mxu0
    %v3868 = vadd.f32 0.0, %v3867
    %v3869 = vpop.f32.mrb[0].mxu0
    %v3870 = vadd.f32 0.0, %v3869
    %3871 = vmatprep.mubr.f32.mxu0 %v3476
    %3872 = vmatmul.mubr.f32.gmra.mrb[0].mxu0 %v3475
    %v3873 = vpop.f32.mrb[0].mxu0
    %v3874 = vadd.f32 0.0, %v3873
    %v3875 = vpop.f32.mrb[0].mxu0
    %v3876 = vadd.f32 0.0, %v3875
    %3877 = vmatprep.mubr.f32.mxu0 %v3480
    %3878 = vmatmul.mubr.f32.gmra.mrb[0].mxu0 %v3479
    %v3879 = vpop.f32.mrb[0].mxu0
    %v3880 = vadd.f32 0.0, %v3879
    %v3881 = vpop.f32.mrb[0].mxu0
    %v3882 = vadd.f32 0.0, %v3881
    %3883 = vmatprep.mubr.f32.mxu0 %v3484
    %3884 = vmatmul.mubr.f32.gmra.mrb[0].mxu0 %v3483
    %v3885 = vpop.f32.mrb[0].mxu0
    %v3886 = vadd.f32 0.0, %v3885
    %v3887 = vpop.f32.mrb[0].mxu0
    %v3888 = vadd.f32 0.0, %v3887
    %3889 = vmatprep.mubr.f32.mxu0 %v3488
    %3890 = vmatmul.mubr.f32.gmra.mrb[0].mxu0 %v3487
    %v3891 = vpop.f32.mrb[0].mxu0
    %v3892 = vadd.f32 0.0, %v3891
    %v3893 = vpop.f32.mrb[0].mxu0
    %v3894 = vadd.f32 0.0, %v3893
    %3895 = vmatprep.mubr.f32.mxu0 %v3492
    %3896 = vmatmul.mubr.f32.gmra.mrb[0].mxu0 %v3491
    %v3897 = vpop.f32.mrb[0].mxu0
    %v3898 = vadd.f32 0.0, %v3897
    %v3899 = vpop.f32.mrb[0].mxu0
    %v3900 = vadd.f32 0.0, %v3899
    %3901 = vmatprep.mubr.f32.mxu0 %v3496
    %3902 = vmatmul.mubr.f32.gmra.mrb[0].mxu0 %v3495
    %v3903 = vpop.f32.mrb[0].mxu0
    %v3904 = vadd.f32 0.0, %v3903
    %v3905 = vpop.f32.mrb[0].mxu0
    %v3906 = vadd.f32 0.0, %v3905
    %3907 = vmatprep.mubr.f32.mxu0 %v3500
    %3908 = vmatmul.mubr.f32.gmra.mrb[0].mxu0 %v3499
    %v3909 = vpop.f32.mrb[0].mxu0
    %v3910 = vadd.f32 0.0, %v3909
    %v3911 = vpop.f32.mrb[0].mxu0
    %v3912 = vadd.f32 0.0, %v3911
    %3913 = vmatprep.mubr.f32.mxu0 %v3504
    %3914 = vmatmul.mubr.f32.gmra.mrb[0].mxu0 %v3503
    %v3915 = vpop.f32.mrb[0].mxu0
    %v3916 = vadd.f32 0.0, %v3915
    %v3917 = vpop.f32.mrb[0].mxu0
    %v3918 = vadd.f32 0.0, %v3917
    %3919 = vmatprep.mubr.f32.mxu0 %v3508
    %3920 = vmatmul.mubr.f32.gmra.mrb[0].mxu0 %v3507
    %v3921 = vpop.f32.mrb[0].mxu0
    %v3922 = vadd.f32 0.0, %v3921
    %v3923 = vpop.f32.mrb[0].mxu0
    %v3924 = vadd.f32 0.0, %v3923
    %3925 = vmatprep.mubr.f32.mxu0 %v3512
    %3926 = vmatmul.mubr.f32.gmra.mrb[0].mxu0 %v3511
    %v3927 = vpop.f32.mrb[0].mxu0
    %v3928 = vadd.f32 0.0, %v3927
    %v3929 = vpop.f32.mrb[0].mxu0
    %v3930 = vadd.f32 0.0, %v3929
    %3931 = vdwg.mxu0
    %3932 = vmatprep.subr.mxu0 %v3644
    %3933 = vmatpush1.msra.mxu0 %v3643
    %3934 = vmatprep.subr.mxu0 %v3648
    %3935 = vmatpush1.msra.mxu0 %v3647
    %3936 = vmatprep.subr.mxu0 %v3652
    %3937 = vmatpush1.msra.mxu0 %v3651
    %3938 = vmatprep.subr.mxu0 %v3656
    %3939 = vmatpush1.msra.mxu0 %v3655
    %3940 = vmatprep.subr.mxu0 %v3660
    %3941 = vmatpush1.msra.mxu0 %v3659
    %3942 = vmatprep.subr.mxu0 %v3664
    %3943 = vmatpush1.msra.mxu0 %v3663
    %3944 = vmatprep.subr.mxu0 %v3668
    %3945 = vmatpush1.msra.mxu0 %v3667
    %3946 = vmatprep.subr.mxu0 %v3672
    %3947 = vmatpush1.msra.mxu0 %v3671
    %3948 = vmatprep.subr.mxu0 %v3676
    %3949 = vmatpush1.msra.mxu0 %v3675
    %3950 = vmatprep.subr.mxu0 %v3680
    %3951 = vmatpush1.msra.mxu0 %v3679
    %3952 = vmatprep.subr.mxu0 %v3684
    %3953 = vmatpush1.msra.mxu0 %v3683
    %3954 = vmatprep.subr.mxu0 %v3688
    %3955 = vmatpush1.msra.mxu0 %v3687
    %3956 = vmatprep.subr.mxu0 %v3692
    %3957 = vmatpush1.msra.mxu0 %v3691
    %3958 = vmatprep.subr.mxu0 %v3696
    %3959 = vmatpush1.msra.mxu0 %v3695
    %3960 = vmatprep.subr.mxu0 %v3700
    %3961 = vmatpush1.msra.mxu0 %v3699
    %3962 = vmatprep.subr.mxu0 %v3704
    %3963 = vmatpush1.msra.mxu0 %v3703
    %3964 = vmatprep.subr.mxu0 %v3708
    %3965 = vmatpush1.msra.mxu0 %v3707
    %3966 = vmatprep.subr.mxu0 %v3712
    %3967 = vmatpush1.msra.mxu0 %v3711
    %3968 = vmatprep.subr.mxu0 %v3716
    %3969 = vmatpush1.msra.mxu0 %v3715
    %3970 = vmatprep.subr.mxu0 %v3720
    %3971 = vmatpush1.msra.mxu0 %v3719
    %3972 = vmatprep.subr.mxu0 %v3724
    %3973 = vmatpush1.msra.mxu0 %v3723
    %3974 = vmatprep.subr.mxu0 %v3728
    %3975 = vmatpush1.msra.mxu0 %v3727
    %3976 = vmatprep.subr.mxu0 %v3732
    %3977 = vmatpush1.msra.mxu0 %v3731
    %3978 = vmatprep.subr.mxu0 %v3736
    %3979 = vmatpush1.msra.mxu0 %v3735
    %3980 = vmatprep.subr.mxu0 %v3740
    %3981 = vmatpush1.msra.mxu0 %v3739
    %3982 = vmatprep.subr.mxu0 %v3744
    %3983 = vmatpush1.msra.mxu0 %v3743
    %3984 = vmatprep.subr.mxu0 %v3748
    %3985 = vmatpush1.msra.mxu0 %v3747
    %3986 = vmatprep.subr.mxu0 %v3752
    %3987 = vmatpush1.msra.mxu0 %v3751
    %3988 = vmatprep.subr.mxu0 %v3756
    %3989 = vmatpush1.msra.mxu0 %v3755
    %3990 = vmatprep.subr.mxu0 %v3760
    %3991 = vmatpush1.msra.mxu0 %v3759
    %3992 = vmatprep.subr.mxu0 %v3764
    %3993 = vmatpush1.msra.mxu0 %v3763
    %3994 = vmatprep.subr.mxu0 %v3768
    %3995 = vmatpush1.msra.mxu0 %v3767
    %3996 = vmatprep.mubr.f32.mxu0 %v3454
    %3997 = vmatmul.mubr.f32.gmra.mrb[0].mxu0 %v3453
    %v3998 = vpop.f32.mrb[0].mxu0
    %v3999 = vadd.f32 %v3838, %v3998
    %v4000 = vpop.f32.mrb[0].mxu0
    %v4001 = vadd.f32 %v3840, %v4000
    %4002 = vmatprep.mubr.f32.mxu0 %v3458
    %4003 = vmatmul.mubr.f32.gmra.mrb[0].mxu0 %v3457
    %v4004 = vpop.f32.mrb[0].mxu0
    %v4005 = vadd.f32 %v3844, %v4004
    %v4006 = vpop.f32.mrb[0].mxu0
    %v4007 = vadd.f32 %v3846, %v4006
    %4008 = vmatprep.mubr.f32.mxu0 %v3462
    %4009 = vmatmul.mubr.f32.gmra.mrb[0].mxu0 %v3461
    %v4010 = vpop.f32.mrb[0].mxu0
    %v4011 = vadd.f32 %v3850, %v4010
    %v4012 = vpop.f32.mrb[0].mxu0
    %v4013 = vadd.f32 %v3852, %v4012
    %4014 = vmatprep.mubr.f32.mxu0 %v3466
    %4015 = vmatmul.mubr.f32.gmra.mrb[0].mxu0 %v3465
    %v4016 = vpop.f32.mrb[0].mxu0
    %v4017 = vadd.f32 %v3856, %v4016
    %v4018 = vpop.f32.mrb[0].mxu0
    %v4019 = vadd.f32 %v3858, %v4018
    %4020 = vmatprep.mubr.f32.mxu0 %v3470
    %4021 = vmatmul.mubr.f32.gmra.mrb[0].mxu0 %v3469
    %v4022 = vpop.f32.mrb[0].mxu0
    %v4023 = vadd.f32 %v3862, %v4022
    %v4024 = vpop.f32.mrb[0].mxu0
    %v4025 = vadd.f32 %v3864, %v4024
    %4026 = vmatprep.mubr.f32.mxu0 %v3474
    %4027 = vmatmul.mubr.f32.gmra.mrb[0].mxu0 %v3473
    %v4028 = vpop.f32.mrb[0].mxu0
    %v4029 = vadd.f32 %v3868, %v4028
    %v4030 = vpop.f32.mrb[0].mxu0
    %v4031 = vadd.f32 %v3870, %v4030
    %4032 = vmatprep.mubr.f32.mxu0 %v3478
    %4033 = vmatmul.mubr.f32.gmra.mrb[0].mxu0 %v3477
    %v4034 = vpop.f32.mrb[0].mxu0
    %v4035 = vadd.f32 %v3874, %v4034
    %v4036 = vpop.f32.mrb[0].mxu0
    %v4037 = vadd.f32 %v3876, %v4036
    %4038 = vmatprep.mubr.f32.mxu0 %v3482
    %4039 = vmatmul.mubr.f32.gmra.mrb[0].mxu0 %v3481
    %v4040 = vpop.f32.mrb[0].mxu0
    %v4041 = vadd.f32 %v3880, %v4040
    %v4042 = vpop.f32.mrb[0].mxu0
    %v4043 = vadd.f32 %v3882, %v4042
    %4044 = vmatprep.mubr.f32.mxu0 %v3486
    %4045 = vmatmul.mubr.f32.gmra.mrb[0].mxu0 %v3485
    %v4046 = vpop.f32.mrb[0].mxu0
    %v4047 = vadd.f32 %v3886, %v4046
    %v4048 = vpop.f32.mrb[0].mxu0
    %v4049 = vadd.f32 %v3888, %v4048
    %4050 = vmatprep.mubr.f32.mxu0 %v3490
    %4051 = vmatmul.mubr.f32.gmra.mrb[0].mxu0 %v3489
    %v4052 = vpop.f32.mrb[0].mxu0
    %v4053 = vadd.f32 %v3892, %v4052
    %v4054 = vpop.f32.mrb[0].mxu0
    %v4055 = vadd.f32 %v3894, %v4054
    %4056 = vmatprep.mubr.f32.mxu0 %v3494
    %4057 = vmatmul.mubr.f32.gmra.mrb[0].mxu0 %v3493
    %v4058 = vpop.f32.mrb[0].mxu0
    %v4059 = vadd.f32 %v3898, %v4058
    %v4060 = vpop.f32.mrb[0].mxu0
    %v4061 = vadd.f32 %v3900, %v4060
    %4062 = vmatprep.mubr.f32.mxu0 %v3498
    %4063 = vmatmul.mubr.f32.gmra.mrb[0].mxu0 %v3497
    %v4064 = vpop.f32.mrb[0].mxu0
    %v4065 = vadd.f32 %v3904, %v4064
    %v4066 = vpop.f32.mrb[0].mxu0
    %v4067 = vadd.f32 %v3906, %v4066
    %4068 = vmatprep.mubr.f32.mxu0 %v3502
    %4069 = vmatmul.mubr.f32.gmra.mrb[0].mxu0 %v3501
    %v4070 = vpop.f32.mrb[0].mxu0
    %v4071 = vadd.f32 %v3910, %v4070
    %v4072 = vpop.f32.mrb[0].mxu0
    %v4073 = vadd.f32 %v3912, %v4072
    %4074 = vmatprep.mubr.f32.mxu0 %v3506
    %4075 = vmatmul.mubr.f32.gmra.mrb[0].mxu0 %v3505
    %v4076 = vpop.f32.mrb[0].mxu0
    %v4077 = vadd.f32 %v3916, %v4076
    %v4078 = vpop.f32.mrb[0].mxu0
    %v4079 = vadd.f32 %v3918, %v4078
    %4080 = vmatprep.mubr.f32.mxu0 %v3510
    %4081 = vmatmul.mubr.f32.gmra.mrb[0].mxu0 %v3509
    %v4082 = vpop.f32.mrb[0].mxu0
    %v4083 = vadd.f32 %v3922, %v4082
    %v4084 = vpop.f32.mrb[0].mxu0
    %v4085 = vadd.f32 %v3924, %v4084
    %4086 = vmatprep.mubr.f32.mxu0 %v3514
    %4087 = vmatmul.mubr.f32.gmra.mrb[0].mxu0 %v3513
    %v4088 = vpop.f32.mrb[0].mxu0
    %v4089 = vadd.f32 %v3928, %v4088
    %v4090 = vpop.f32.mrb[0].mxu0
    %v4091 = vadd.f32 %v3930, %v4090
    %4092 = vdwg.mxu0
    %4093 = vmatprep.subr.mxu0 %v3518
    %4094 = vmatpush1.msra.mxu0 %v3517
    %4095 = vmatprep.subr.mxu0 %v3522
    %4096 = vmatpush1.msra.mxu0 %v3521
    %4097 = vmatprep.subr.mxu0 %v3526
    %4098 = vmatpush1.msra.mxu0 %v3525
    %4099 = vmatprep.subr.mxu0 %v3530
    %4100 = vmatpush1.msra.mxu0 %v3529
    %4101 = vmatprep.subr.mxu0 %v3534
    %4102 = vmatpush1.msra.mxu0 %v3533
    %4103 = vmatprep.subr.mxu0 %v3538
    %4104 = vmatpush1.msra.mxu0 %v3537
    %4105 = vmatprep.subr.mxu0 %v3542
    %4106 = vmatpush1.msra.mxu0 %v3541
    %4107 = vmatprep.subr.mxu0 %v3546
    %4108 = vmatpush1.msra.mxu0 %v3545
    %4109 = vmatprep.subr.mxu0 %v3550
    %4110 = vmatpush1.msra.mxu0 %v3549
    %4111 = vmatprep.subr.mxu0 %v3554
    %4112 = vmatpush1.msra.mxu0 %v3553
    %4113 = vmatprep.subr.mxu0 %v3558
    %4114 = vmatpush1.msra.mxu0 %v3557
    %4115 = vmatprep.subr.mxu0 %v3562
    %4116 = vmatpush1.msra.mxu0 %v3561
    %4117 = vmatprep.subr.mxu0 %v3566
    %4118 = vmatpush1.msra.mxu0 %v3565
    %4119 = vmatprep.subr.mxu0 %v3570
    %4120 = vmatpush1.msra.mxu0 %v3569
    %4121 = vmatprep.subr.mxu0 %v3574
    %4122 = vmatpush1.msra.mxu0 %v3573
    %4123 = vmatprep.subr.mxu0 %v3578
    %4124 = vmatpush1.msra.mxu0 %v3577
    %4125 = vmatprep.subr.mxu0 %v3582
    %4126 = vmatpush1.msra.mxu0 %v3581
    %4127 = vmatprep.subr.mxu0 %v3586
    %4128 = vmatpush1.msra.mxu0 %v3585
    %4129 = vmatprep.subr.mxu0 %v3590
    %4130 = vmatpush1.msra.mxu0 %v3589
    %4131 = vmatprep.subr.mxu0 %v3594
    %4132 = vmatpush1.msra.mxu0 %v3593
    %4133 = vmatprep.subr.mxu0 %v3598
    %4134 = vmatpush1.msra.mxu0 %v3597
    %4135 = vmatprep.subr.mxu0 %v3602
    %4136 = vmatpush1.msra.mxu0 %v3601
    %4137 = vmatprep.subr.mxu0 %v3606
    %4138 = vmatpush1.msra.mxu0 %v3605
    %4139 = vmatprep.subr.mxu0 %v3610
    %4140 = vmatpush1.msra.mxu0 %v3609
    %4141 = vmatprep.subr.mxu0 %v3614
    %4142 = vmatpush1.msra.mxu0 %v3613
    %4143 = vmatprep.subr.mxu0 %v3618
    %4144 = vmatpush1.msra.mxu0 %v3617
    %4145 = vmatprep.subr.mxu0 %v3622
    %4146 = vmatpush1.msra.mxu0 %v3621
    %4147 = vmatprep.subr.mxu0 %v3626
    %4148 = vmatpush1.msra.mxu0 %v3625
    %4149 = vmatprep.subr.mxu0 %v3630
    %4150 = vmatpush1.msra.mxu0 %v3629
    %4151 = vmatprep.subr.mxu0 %v3634
    %4152 = vmatpush1.msra.mxu0 %v3633
    %4153 = vmatprep.subr.mxu0 %v3638
    %4154 = vmatpush1.msra.mxu0 %v3637
    %4155 = vmatprep.subr.mxu0 %v3642
    %4156 = vmatpush1.msra.mxu0 %v3641
    %4157 = vmatprep.mubr.f32.mxu0 %v3452
    %4158 = vmatmul.mubr.f32.gmra.mrb[0].mxu0 %v3451
    %v4159 = vpop.f32.mrb[0].mxu0
    %v4160 = vadd.f32 0.0, %v4159
    %v4161 = vpop.f32.mrb[0].mxu0
    %v4162 = vadd.f32 0.0, %v4161
    %4163 = vmatprep.mubr.f32.mxu0 %v3456
    %4164 = vmatmul.mubr.f32.gmra.mrb[0].mxu0 %v3455
    %v4165 = vpop.f32.mrb[0].mxu0
    %v4166 = vadd.f32 0.0, %v4165
    %v4167 = vpop.f32.mrb[0].mxu0
    %v4168 = vadd.f32 0.0, %v4167
    %4169 = vmatprep.mubr.f32.mxu0 %v3460
    %4170 = vmatmul.mubr.f32.gmra.mrb[0].mxu0 %v3459
    %v4171 = vpop.f32.mrb[0].mxu0
    %v4172 = vadd.f32 0.0, %v4171
    %v4173 = vpop.f32.mrb[0].mxu0
    %v4174 = vadd.f32 0.0, %v4173
    %4175 = vmatprep.mubr.f32.mxu0 %v3464
    %4176 = vmatmul.mubr.f32.gmra.mrb[0].mxu0 %v3463
    %v4177 = vpop.f32.mrb[0].mxu0
    %v4178 = vadd.f32 0.0, %v4177
    %v4179 = vpop.f32.mrb[0].mxu0
    %v4180 = vadd.f32 0.0, %v4179
    %4181 = vmatprep.mubr.f32.mxu0 %v3468
    %4182 = vmatmul.mubr.f32.gmra.mrb[0].mxu0 %v3467
    %v4183 = vpop.f32.mrb[0].mxu0
    %v4184 = vadd.f32 0.0, %v4183
    %v4185 = vpop.f32.mrb[0].mxu0
    %v4186 = vadd.f32 0.0, %v4185
    %4187 = vmatprep.mubr.f32.mxu0 %v3472
    %4188 = vmatmul.mubr.f32.gmra.mrb[0].mxu0 %v3471
    %v4189 = vpop.f32.mrb[0].mxu0
    %v4190 = vadd.f32 0.0, %v4189
    %v4191 = vpop.f32.mrb[0].mxu0
    %v4192 = vadd.f32 0.0, %v4191
    %4193 = vmatprep.mubr.f32.mxu0 %v3476
    %4194 = vmatmul.mubr.f32.gmra.mrb[0].mxu0 %v3475
    %v4195 = vpop.f32.mrb[0].mxu0
    %v4196 = vadd.f32 0.0, %v4195
    %v4197 = vpop.f32.mrb[0].mxu0
    %v4198 = vadd.f32 0.0, %v4197
    %4199 = vmatprep.mubr.f32.mxu0 %v3480
    %4200 = vmatmul.mubr.f32.gmra.mrb[0].mxu0 %v3479
    %v4201 = vpop.f32.mrb[0].mxu0
    %v4202 = vadd.f32 0.0, %v4201
    %v4203 = vpop.f32.mrb[0].mxu0
    %v4204 = vadd.f32 0.0, %v4203
    %4205 = vmatprep.mubr.f32.mxu0 %v3484
    %4206 = vmatmul.mubr.f32.gmra.mrb[0].mxu0 %v3483
    %v4207 = vpop.f32.mrb[0].mxu0
    %v4208 = vadd.f32 0.0, %v4207
    %v4209 = vpop.f32.mrb[0].mxu0
    %v4210 = vadd.f32 0.0, %v4209
    %4211 = vmatprep.mubr.f32.mxu0 %v3488
    %4212 = vmatmul.mubr.f32.gmra.mrb[0].mxu0 %v3487
    %v4213 = vpop.f32.mrb[0].mxu0
    %v4214 = vadd.f32 0.0, %v4213
    %v4215 = vpop.f32.mrb[0].mxu0
    %v4216 = vadd.f32 0.0, %v4215
    %4217 = vmatprep.mubr.f32.mxu0 %v3492
    %4218 = vmatmul.mubr.f32.gmra.mrb[0].mxu0 %v3491
    %v4219 = vpop.f32.mrb[0].mxu0
    %v4220 = vadd.f32 0.0, %v4219
    %v4221 = vpop.f32.mrb[0].mxu0
    %v4222 = vadd.f32 0.0, %v4221
    %4223 = vmatprep.mubr.f32.mxu0 %v3496
    %4224 = vmatmul.mubr.f32.gmra.mrb[0].mxu0 %v3495
    %v4225 = vpop.f32.mrb[0].mxu0
    %v4226 = vadd.f32 0.0, %v4225
    %v4227 = vpop.f32.mrb[0].mxu0
    %v4228 = vadd.f32 0.0, %v4227
    %4229 = vmatprep.mubr.f32.mxu0 %v3500
    %4230 = vmatmul.mubr.f32.gmra.mrb[0].mxu0 %v3499
    %v4231 = vpop.f32.mrb[0].mxu0
    %v4232 = vadd.f32 0.0, %v4231
    %v4233 = vpop.f32.mrb[0].mxu0
    %v4234 = vadd.f32 0.0, %v4233
    %4235 = vmatprep.mubr.f32.mxu0 %v3504
    %4236 = vmatmul.mubr.f32.gmra.mrb[0].mxu0 %v3503
    %v4237 = vpop.f32.mrb[0].mxu0
    %v4238 = vadd.f32 0.0, %v4237
    %v4239 = vpop.f32.mrb[0].mxu0
    %v4240 = vadd.f32 0.0, %v4239
    %4241 = vmatprep.mubr.f32.mxu0 %v3508
    %4242 = vmatmul.mubr.f32.gmra.mrb[0].mxu0 %v3507
    %v4243 = vpop.f32.mrb[0].mxu0
    %v4244 = vadd.f32 0.0, %v4243
    %v4245 = vpop.f32.mrb[0].mxu0
    %v4246 = vadd.f32 0.0, %v4245
    %4247 = vmatprep.mubr.f32.mxu0 %v3512
    %4248 = vmatmul.mubr.f32.gmra.mrb[0].mxu0 %v3511
    %v4249 = vpop.f32.mrb[0].mxu0
    %v4250 = vadd.f32 0.0, %v4249
    %v4251 = vpop.f32.mrb[0].mxu0
    %v4252 = vadd.f32 0.0, %v4251
    %4253 = vdwg.mxu0
    %4254 = vmatprep.subr.mxu0 %v3646
    %4255 = vmatpush1.msra.mxu0 %v3645
    %4256 = vmatprep.subr.mxu0 %v3650
    %4257 = vmatpush1.msra.mxu0 %v3649
    %4258 = vmatprep.subr.mxu0 %v3654
    %4259 = vmatpush1.msra.mxu0 %v3653
    %4260 = vmatprep.subr.mxu0 %v3658
    %4261 = vmatpush1.msra.mxu0 %v3657
    %4262 = vmatprep.subr.mxu0 %v3662
    %4263 = vmatpush1.msra.mxu0 %v3661
    %4264 = vmatprep.subr.mxu0 %v3666
    %4265 = vmatpush1.msra.mxu0 %v3665
    %4266 = vmatprep.subr.mxu0 %v3670
    %4267 = vmatpush1.msra.mxu0 %v3669
    %4268 = vmatprep.subr.mxu0 %v3674
    %4269 = vmatpush1.msra.mxu0 %v3673
    %4270 = vmatprep.subr.mxu0 %v3678
    %4271 = vmatpush1.msra.mxu0 %v3677
    %4272 = vmatprep.subr.mxu0 %v3682
    %4273 = vmatpush1.msra.mxu0 %v3681
    %4274 = vmatprep.subr.mxu0 %v3686
    %4275 = vmatpush1.msra.mxu0 %v3685
    %4276 = vmatprep.subr.mxu0 %v3690
    %4277 = vmatpush1.msra.mxu0 %v3689
    %4278 = vmatprep.subr.mxu0 %v3694
    %4279 = vmatpush1.msra.mxu0 %v3693
    %4280 = vmatprep.subr.mxu0 %v3698
    %4281 = vmatpush1.msra.mxu0 %v3697
    %4282 = vmatprep.subr.mxu0 %v3702
    %4283 = vmatpush1.msra.mxu0 %v3701
    %4284 = vmatprep.subr.mxu0 %v3706
    %4285 = vmatpush1.msra.mxu0 %v3705
    %4286 = vmatprep.subr.mxu0 %v3710
    %4287 = vmatpush1.msra.mxu0 %v3709
    %4288 = vmatprep.subr.mxu0 %v3714
    %4289 = vmatpush1.msra.mxu0 %v3713
    %4290 = vmatprep.subr.mxu0 %v3718
    %4291 = vmatpush1.msra.mxu0 %v3717
    %4292 = vmatprep.subr.mxu0 %v3722
    %4293 = vmatpush1.msra.mxu0 %v3721
    %4294 = vmatprep.subr.mxu0 %v3726
    %4295 = vmatpush1.msra.mxu0 %v3725
    %4296 = vmatprep.subr.mxu0 %v3730
    %4297 = vmatpush1.msra.mxu0 %v3729
    %4298 = vmatprep.subr.mxu0 %v3734
    %4299 = vmatpush1.msra.mxu0 %v3733
    %4300 = vmatprep.subr.mxu0 %v3738
    %4301 = vmatpush1.msra.mxu0 %v3737
    %4302 = vmatprep.subr.mxu0 %v3742
    %4303 = vmatpush1.msra.mxu0 %v3741
    %4304 = vmatprep.subr.mxu0 %v3746
    %4305 = vmatpush1.msra.mxu0 %v3745
    %4306 = vmatprep.subr.mxu0 %v3750
    %4307 = vmatpush1.msra.mxu0 %v3749
    %4308 = vmatprep.subr.mxu0 %v3754
    %4309 = vmatpush1.msra.mxu0 %v3753
    %4310 = vmatprep.subr.mxu0 %v3758
    %4311 = vmatpush1.msra.mxu0 %v3757
    %4312 = vmatprep.subr.mxu0 %v3762
    %4313 = vmatpush1.msra.mxu0 %v3761
    %4314 = vmatprep.subr.mxu0 %v3766
    %4315 = vmatpush1.msra.mxu0 %v3765
    %4316 = vmatprep.subr.mxu0 %v3770
    %4317 = vmatpush1.msra.mxu0 %v3769
    %4318 = vmatprep.mubr.f32.mxu0 %v3454
    %4319 = vmatmul.mubr.f32.gmra.mrb[0].mxu0 %v3453
    %v4320 = vpop.f32.mrb[0].mxu0
    %v4321 = vadd.f32 %v4160, %v4320
    %v4322 = vpop.f32.mrb[0].mxu0
    %v4323 = vadd.f32 %v4162, %v4322
    %4324 = vmatprep.mubr.f32.mxu0 %v3458
    %4325 = vmatmul.mubr.f32.gmra.mrb[0].mxu0 %v3457
    %v4326 = vpop.f32.mrb[0].mxu0
    %v4327 = vadd.f32 %v4166, %v4326
    %v4328 = vpop.f32.mrb[0].mxu0
    %v4329 = vadd.f32 %v4168, %v4328
    %4330 = vmatprep.mubr.f32.mxu0 %v3462
    %4331 = vmatmul.mubr.f32.gmra.mrb[0].mxu0 %v3461
    %v4332 = vpop.f32.mrb[0].mxu0
    %v4333 = vadd.f32 %v4172, %v4332
    %v4334 = vpop.f32.mrb[0].mxu0
    %v4335 = vadd.f32 %v4174, %v4334
    %4336 = vmatprep.mubr.f32.mxu0 %v3466
    %4337 = vmatmul.mubr.f32.gmra.mrb[0].mxu0 %v3465
    %v4338 = vpop.f32.mrb[0].mxu0
    %v4339 = vadd.f32 %v4178, %v4338
    %v4340 = vpop.f32.mrb[0].mxu0
    %v4341 = vadd.f32 %v4180, %v4340
    %4342 = vmatprep.mubr.f32.mxu0 %v3470
    %4343 = vmatmul.mubr.f32.gmra.mrb[0].mxu0 %v3469
    %v4344 = vpop.f32.mrb[0].mxu0
    %v4345 = vadd.f32 %v4184, %v4344
    %v4346 = vpop.f32.mrb[0].mxu0
    %v4347 = vadd.f32 %v4186, %v4346
    %4348 = vmatprep.mubr.f32.mxu0 %v3474
    %4349 = vmatmul.mubr.f32.gmra.mrb[0].mxu0 %v3473
    %v4350 = vpop.f32.mrb[0].mxu0
    %v4351 = vadd.f32 %v4190, %v4350
    %v4352 = vpop.f32.mrb[0].mxu0
    %v4353 = vadd.f32 %v4192, %v4352
    %4354 = vmatprep.mubr.f32.mxu0 %v3478
    %4355 = vmatmul.mubr.f32.gmra.mrb[0].mxu0 %v3477
    %v4356 = vpop.f32.mrb[0].mxu0
    %v4357 = vadd.f32 %v4196, %v4356
    %v4358 = vpop.f32.mrb[0].mxu0
    %v4359 = vadd.f32 %v4198, %v4358
    %4360 = vmatprep.mubr.f32.mxu0 %v3482
    %4361 = vmatmul.mubr.f32.gmra.mrb[0].mxu0 %v3481
    %v4362 = vpop.f32.mrb[0].mxu0
    %v4363 = vadd.f32 %v4202, %v4362
    %v4364 = vpop.f32.mrb[0].mxu0
    %v4365 = vadd.f32 %v4204, %v4364
    %4366 = vmatprep.mubr.f32.mxu0 %v3486
    %4367 = vmatmul.mubr.f32.gmra.mrb[0].mxu0 %v3485
    %v4368 = vpop.f32.mrb[0].mxu0
    %v4369 = vadd.f32 %v4208, %v4368
    %v4370 = vpop.f32.mrb[0].mxu0
    %v4371 = vadd.f32 %v4210, %v4370
    %4372 = vmatprep.mubr.f32.mxu0 %v3490
    %4373 = vmatmul.mubr.f32.gmra.mrb[0].mxu0 %v3489
    %v4374 = vpop.f32.mrb[0].mxu0
    %v4375 = vadd.f32 %v4214, %v4374
    %v4376 = vpop.f32.mrb[0].mxu0
    %v4377 = vadd.f32 %v4216, %v4376
    %4378 = vmatprep.mubr.f32.mxu0 %v3494
    %4379 = vmatmul.mubr.f32.gmra.mrb[0].mxu0 %v3493
    %v4380 = vpop.f32.mrb[0].mxu0
    %v4381 = vadd.f32 %v4220, %v4380
    %v4382 = vpop.f32.mrb[0].mxu0
    %v4383 = vadd.f32 %v4222, %v4382
    %4384 = vmatprep.mubr.f32.mxu0 %v3498
    %4385 = vmatmul.mubr.f32.gmra.mrb[0].mxu0 %v3497
    %v4386 = vpop.f32.mrb[0].mxu0
    %v4387 = vadd.f32 %v4226, %v4386
    %v4388 = vpop.f32.mrb[0].mxu0
    %v4389 = vadd.f32 %v4228, %v4388
    %4390 = vmatprep.mubr.f32.mxu0 %v3502
    %4391 = vmatmul.mubr.f32.gmra.mrb[0].mxu0 %v3501
    %v4392 = vpop.f32.mrb[0].mxu0
    %v4393 = vadd.f32 %v4232, %v4392
    %v4394 = vpop.f32.mrb[0].mxu0
    %v4395 = vadd.f32 %v4234, %v4394
    %4396 = vmatprep.mubr.f32.mxu0 %v3506
    %4397 = vmatmul.mubr.f32.gmra.mrb[0].mxu0 %v3505
    %v4398 = vpop.f32.mrb[0].mxu0
    %v4399 = vadd.f32 %v4238, %v4398
    %v4400 = vpop.f32.mrb[0].mxu0
    %v4401 = vadd.f32 %v4240, %v4400
    %4402 = vmatprep.mubr.f32.mxu0 %v3510
    %4403 = vmatmul.mubr.f32.gmra.mrb[0].mxu0 %v3509
    %v4404 = vpop.f32.mrb[0].mxu0
    %v4405 = vadd.f32 %v4244, %v4404
    %v4406 = vpop.f32.mrb[0].mxu0
    %v4407 = vadd.f32 %v4246, %v4406
    %4408 = vmatprep.mubr.f32.mxu0 %v3514
    %4409 = vmatmul.mubr.f32.gmra.mrb[0].mxu0 %v3513
    %v4410 = vpop.f32.mrb[0].mxu0
    %v4411 = vadd.f32 %v4250, %v4410
    %v4412 = vpop.f32.mrb[0].mxu0
    %v4413 = vadd.f32 %v4252, %v4412
    %4414 = vdwg.mxu0
    %4415 = vst [vmem:[#allocation2] sm:$0xff] %v3999
    %4416 = vst [vmem:[#allocation2 + $0x8] sm:$0xff] %v4001
    %4417 = vst [vmem:[#allocation2 + $0x10] sm:$0xff] %v4321
    %4418 = vst [vmem:[#allocation2 + $0x18] sm:$0xff] %v4323
    %4419 = vst [vmem:[#allocation2 + $0x20] sm:$0xff] %v4005
    %4420 = vst [vmem:[#allocation2 + $0x28] sm:$0xff] %v4007
    %4421 = vst [vmem:[#allocation2 + $0x30] sm:$0xff] %v4327
    %4422 = vst [vmem:[#allocation2 + $0x38] sm:$0xff] %v4329
    %4423 = vst [vmem:[#allocation2 + $0x40] sm:$0xff] %v4011
    %4424 = vst [vmem:[#allocation2 + $0x48] sm:$0xff] %v4013
    %4425 = vst [vmem:[#allocation2 + $0x50] sm:$0xff] %v4333
    %4426 = vst [vmem:[#allocation2 + $0x58] sm:$0xff] %v4335
    %4427 = vst [vmem:[#allocation2 + $0x60] sm:$0xff] %v4017
    %4428 = vst [vmem:[#allocation2 + $0x68] sm:$0xff] %v4019
    %4429 = vst [vmem:[#allocation2 + $0x70] sm:$0xff] %v4339
    %4430 = vst [vmem:[#allocation2 + $0x78] sm:$0xff] %v4341
    %4431 = vst [vmem:[#allocation2 + $0x80] sm:$0xff] %v4023
    %4432 = vst [vmem:[#allocation2 + $0x88] sm:$0xff] %v4025
    %4433 = vst [vmem:[#allocation2 + $0x90] sm:$0xff] %v4345
    %4434 = vst [vmem:[#allocation2 + $0x98] sm:$0xff] %v4347
    %4435 = vst [vmem:[#allocation2 + $0xa0] sm:$0xff] %v4029
    %4436 = vst [vmem:[#allocation2 + $0xa8] sm:$0xff] %v4031
    %4437 = vst [vmem:[#allocation2 + $0xb0] sm:$0xff] %v4351
    %4438 = vst [vmem:[#allocation2 + $0xb8] sm:$0xff] %v4353
    %4439 = vst [vmem:[#allocation2 + $0xc0] sm:$0xff] %v4035
    %4440 = vst [vmem:[#allocation2 + $0xc8] sm:$0xff] %v4037
    %4441 = vst [vmem:[#allocation2 + $0xd0] sm:$0xff] %v4357
    %4442 = vst [vmem:[#allocation2 + $0xd8] sm:$0xff] %v4359
    %4443 = vst [vmem:[#allocation2 + $0xe0] sm:$0xff] %v4041
    %4444 = vst [vmem:[#allocation2 + $0xe8] sm:$0xff] %v4043
    %4445 = vst [vmem:[#allocation2 + $0xf0] sm:$0xff] %v4363
    %4446 = vst [vmem:[#allocation2 + $0xf8] sm:$0xff] %v4365
    %4447 = vst [vmem:[#allocation2 + $0x100] sm:$0xff] %v4047
    %4448 = vst [vmem:[#allocation2 + $0x108] sm:$0xff] %v4049
    %4449 = vst [vmem:[#allocation2 + $0x110] sm:$0xff] %v4369
    %4450 = vst [vmem:[#allocation2 + $0x118] sm:$0xff] %v4371
    %4451 = vst [vmem:[#allocation2 + $0x120] sm:$0xff] %v4053
    %4452 = vst [vmem:[#allocation2 + $0x128] sm:$0xff] %v4055
    %4453 = vst [vmem:[#allocation2 + $0x130] sm:$0xff] %v4375
    %4454 = vst [vmem:[#allocation2 + $0x138] sm:$0xff] %v4377
    %4455 = vst [vmem:[#allocation2 + $0x140] sm:$0xff] %v4059
    %4456 = vst [vmem:[#allocation2 + $0x148] sm:$0xff] %v4061
    %4457 = vst [vmem:[#allocation2 + $0x150] sm:$0xff] %v4381
    %4458 = vst [vmem:[#allocation2 + $0x158] sm:$0xff] %v4383
    %4459 = vst [vmem:[#allocation2 + $0x160] sm:$0xff] %v4065
    %4460 = vst [vmem:[#allocation2 + $0x168] sm:$0xff] %v4067
    %4461 = vst [vmem:[#allocation2 + $0x170] sm:$0xff] %v4387
    %4462 = vst [vmem:[#allocation2 + $0x178] sm:$0xff] %v4389
    %4463 = vst [vmem:[#allocation2 + $0x180] sm:$0xff] %v4071
    %4464 = vst [vmem:[#allocation2 + $0x188] sm:$0xff] %v4073
    %4465 = vst [vmem:[#allocation2 + $0x190] sm:$0xff] %v4393
    %4466 = vst [vmem:[#allocation2 + $0x198] sm:$0xff] %v4395
    %4467 = vst [vmem:[#allocation2 + $0x1a0] sm:$0xff] %v4077
    %4468 = vst [vmem:[#allocation2 + $0x1a8] sm:$0xff] %v4079
    %4469 = vst [vmem:[#allocation2 + $0x1b0] sm:$0xff] %v4399
    %4470 = vst [vmem:[#allocation2 + $0x1b8] sm:$0xff] %v4401
    %4471 = vst [vmem:[#allocation2 + $0x1c0] sm:$0xff] %v4083
    %4472 = vst [vmem:[#allocation2 + $0x1c8] sm:$0xff] %v4085
    %4473 = vst [vmem:[#allocation2 + $0x1d0] sm:$0xff] %v4405
    %4474 = vst [vmem:[#allocation2 + $0x1d8] sm:$0xff] %v4407
    %4475 = vst [vmem:[#allocation2 + $0x1e0] sm:$0xff] %v4089
    %4476 = vst [vmem:[#allocation2 + $0x1e8] sm:$0xff] %v4091
    %4477 = vst [vmem:[#allocation2 + $0x1f0] sm:$0xff] %v4411
    %4478 = vst [vmem:[#allocation2 + $0x1f8] sm:$0xff] %v4413
    %v4479 = vld [vmem:[%s5] sm:$0xff]
    %v4480 = vld [vmem:[%s5 + $0x8] sm:$0xff]
    %v4481 = vld [vmem:[%s5 + $0x10] sm:$0xff]
    %v4482 = vld [vmem:[%s5 + $0x18] sm:$0xff]
    %v4483 = vld [vmem:[%s5 + $0x20] sm:$0xff]
    %v4484 = vld [vmem:[%s5 + $0x28] sm:$0xff]
    %v4485 = vld [vmem:[%s5 + $0x30] sm:$0xff]
    %v4486 = vld [vmem:[%s5 + $0x38] sm:$0xff]
    %v4487 = vld [vmem:[#allocation9] sm:$0xff]
    %v4488 = vld [vmem:[#allocation9 + $0x8] sm:$0xff]
    %v4489 = vld [vmem:[#allocation9 + $0x10] sm:$0xff]
    %v4490 = vld [vmem:[#allocation9 + $0x18] sm:$0xff]
    %v4491 = vld [vmem:[#allocation9 + $0x20] sm:$0xff]
    %v4492 = vld [vmem:[#allocation9 + $0x28] sm:$0xff]
    %v4493 = vld [vmem:[#allocation9 + $0x30] sm:$0xff]
    %v4494 = vld [vmem:[#allocation9 + $0x38] sm:$0xff]
    %v4495 = vld [vmem:[#allocation9 + $0x40] sm:$0xff]
    %v4496 = vld [vmem:[#allocation9 + $0x48] sm:$0xff]
    %v4497 = vld [vmem:[#allocation9 + $0x50] sm:$0xff]
    %v4498 = vld [vmem:[#allocation9 + $0x58] sm:$0xff]
    %v4499 = vld [vmem:[#allocation9 + $0x60] sm:$0xff]
    %v4500 = vld [vmem:[#allocation9 + $0x68] sm:$0xff]
    %v4501 = vld [vmem:[#allocation9 + $0x70] sm:$0xff]
    %v4502 = vld [vmem:[#allocation9 + $0x78] sm:$0xff]
    %v4503 = vld [vmem:[#allocation9 + $0x80] sm:$0xff]
    %v4504 = vld [vmem:[#allocation9 + $0x88] sm:$0xff]
    %v4505 = vld [vmem:[#allocation9 + $0x90] sm:$0xff]
    %v4506 = vld [vmem:[#allocation9 + $0x98] sm:$0xff]
    %v4507 = vld [vmem:[#allocation9 + $0xa0] sm:$0xff]
    %v4508 = vld [vmem:[#allocation9 + $0xa8] sm:$0xff]
    %v4509 = vld [vmem:[#allocation9 + $0xb0] sm:$0xff]
    %v4510 = vld [vmem:[#allocation9 + $0xb8] sm:$0xff]
    %v4511 = vld [vmem:[#allocation9 + $0xc0] sm:$0xff]
    %v4512 = vld [vmem:[#allocation9 + $0xc8] sm:$0xff]
    %v4513 = vld [vmem:[#allocation9 + $0xd0] sm:$0xff]
    %v4514 = vld [vmem:[#allocation9 + $0xd8] sm:$0xff]
    %v4515 = vld [vmem:[#allocation9 + $0xe0] sm:$0xff]
    %v4516 = vld [vmem:[#allocation9 + $0xe8] sm:$0xff]
    %v4517 = vld [vmem:[#allocation9 + $0xf0] sm:$0xff]
    %v4518 = vld [vmem:[#allocation9 + $0xf8] sm:$0xff]
    %v4519 = vld [vmem:[#allocation9 + $0x100] sm:$0xff]
    %v4520 = vld [vmem:[#allocation9 + $0x108] sm:$0xff]
    %v4521 = vld [vmem:[#allocation9 + $0x110] sm:$0xff]
    %v4522 = vld [vmem:[#allocation9 + $0x118] sm:$0xff]
    %v4523 = vld [vmem:[#allocation9 + $0x120] sm:$0xff]
    %v4524 = vld [vmem:[#allocation9 + $0x128] sm:$0xff]
    %v4525 = vld [vmem:[#allocation9 + $0x130] sm:$0xff]
    %v4526 = vld [vmem:[#allocation9 + $0x138] sm:$0xff]
    %v4527 = vld [vmem:[#allocation9 + $0x140] sm:$0xff]
    %v4528 = vld [vmem:[#allocation9 + $0x148] sm:$0xff]
    %v4529 = vld [vmem:[#allocation9 + $0x150] sm:$0xff]
    %v4530 = vld [vmem:[#allocation9 + $0x158] sm:$0xff]
    %v4531 = vld [vmem:[#allocation9 + $0x160] sm:$0xff]
    %v4532 = vld [vmem:[#allocation9 + $0x168] sm:$0xff]
    %v4533 = vld [vmem:[#allocation9 + $0x170] sm:$0xff]
    %v4534 = vld [vmem:[#allocation9 + $0x178] sm:$0xff]
    %v4535 = vld [vmem:[#allocation9 + $0x180] sm:$0xff]
    %v4536 = vld [vmem:[#allocation9 + $0x188] sm:$0xff]
    %v4537 = vld [vmem:[#allocation9 + $0x190] sm:$0xff]
    %v4538 = vld [vmem:[#allocation9 + $0x198] sm:$0xff]
    %v4539 = vld [vmem:[#allocation9 + $0x1a0] sm:$0xff]
    %v4540 = vld [vmem:[#allocation9 + $0x1a8] sm:$0xff]
    %v4541 = vld [vmem:[#allocation9 + $0x1b0] sm:$0xff]
    %v4542 = vld [vmem:[#allocation9 + $0x1b8] sm:$0xff]
    %v4543 = vld [vmem:[#allocation9 + $0x1c0] sm:$0xff]
    %v4544 = vld [vmem:[#allocation9 + $0x1c8] sm:$0xff]
    %v4545 = vld [vmem:[#allocation9 + $0x1d0] sm:$0xff]
    %v4546 = vld [vmem:[#allocation9 + $0x1d8] sm:$0xff]
    %v4547 = vld [vmem:[#allocation9 + $0x1e0] sm:$0xff]
    %v4548 = vld [vmem:[#allocation9 + $0x1e8] sm:$0xff]
    %v4549 = vld [vmem:[#allocation9 + $0x1f0] sm:$0xff]
    %v4550 = vld [vmem:[#allocation9 + $0x1f8] sm:$0xff]
    %v4551 = vld [vmem:[#allocation9 + $0x200] sm:$0xff]
    %v4552 = vld [vmem:[#allocation9 + $0x208] sm:$0xff]
    %v4553 = vld [vmem:[#allocation9 + $0x210] sm:$0xff]
    %v4554 = vld [vmem:[#allocation9 + $0x218] sm:$0xff]
    %v4555 = vld [vmem:[#allocation9 + $0x220] sm:$0xff]
    %v4556 = vld [vmem:[#allocation9 + $0x228] sm:$0xff]
    %v4557 = vld [vmem:[#allocation9 + $0x230] sm:$0xff]
    %v4558 = vld [vmem:[#allocation9 + $0x238] sm:$0xff]
    %v4559 = vld [vmem:[#allocation9 + $0x240] sm:$0xff]
    %v4560 = vld [vmem:[#allocation9 + $0x248] sm:$0xff]
    %v4561 = vld [vmem:[#allocation9 + $0x250] sm:$0xff]
    %v4562 = vld [vmem:[#allocation9 + $0x258] sm:$0xff]
    %v4563 = vld [vmem:[#allocation9 + $0x260] sm:$0xff]
    %v4564 = vld [vmem:[#allocation9 + $0x268] sm:$0xff]
    %v4565 = vld [vmem:[#allocation9 + $0x270] sm:$0xff]
    %v4566 = vld [vmem:[#allocation9 + $0x278] sm:$0xff]
    %v4567 = vld [vmem:[#allocation9 + $0x280] sm:$0xff]
    %v4568 = vld [vmem:[#allocation9 + $0x288] sm:$0xff]
    %v4569 = vld [vmem:[#allocation9 + $0x290] sm:$0xff]
    %v4570 = vld [vmem:[#allocation9 + $0x298] sm:$0xff]
    %v4571 = vld [vmem:[#allocation9 + $0x2a0] sm:$0xff]
    %v4572 = vld [vmem:[#allocation9 + $0x2a8] sm:$0xff]
    %v4573 = vld [vmem:[#allocation9 + $0x2b0] sm:$0xff]
    %v4574 = vld [vmem:[#allocation9 + $0x2b8] sm:$0xff]
    %v4575 = vld [vmem:[#allocation9 + $0x2c0] sm:$0xff]
    %v4576 = vld [vmem:[#allocation9 + $0x2c8] sm:$0xff]
    %v4577 = vld [vmem:[#allocation9 + $0x2d0] sm:$0xff]
    %v4578 = vld [vmem:[#allocation9 + $0x2d8] sm:$0xff]
    %v4579 = vld [vmem:[#allocation9 + $0x2e0] sm:$0xff]
    %v4580 = vld [vmem:[#allocation9 + $0x2e8] sm:$0xff]
    %v4581 = vld [vmem:[#allocation9 + $0x2f0] sm:$0xff]
    %v4582 = vld [vmem:[#allocation9 + $0x2f8] sm:$0xff]
    %v4583 = vld [vmem:[#allocation9 + $0x300] sm:$0xff]
    %v4584 = vld [vmem:[#allocation9 + $0x308] sm:$0xff]
    %v4585 = vld [vmem:[#allocation9 + $0x310] sm:$0xff]
    %v4586 = vld [vmem:[#allocation9 + $0x318] sm:$0xff]
    %v4587 = vld [vmem:[#allocation9 + $0x320] sm:$0xff]
    %v4588 = vld [vmem:[#allocation9 + $0x328] sm:$0xff]
    %v4589 = vld [vmem:[#allocation9 + $0x330] sm:$0xff]
    %v4590 = vld [vmem:[#allocation9 + $0x338] sm:$0xff]
    %v4591 = vld [vmem:[#allocation9 + $0x340] sm:$0xff]
    %v4592 = vld [vmem:[#allocation9 + $0x348] sm:$0xff]
    %v4593 = vld [vmem:[#allocation9 + $0x350] sm:$0xff]
    %v4594 = vld [vmem:[#allocation9 + $0x358] sm:$0xff]
    %v4595 = vld [vmem:[#allocation9 + $0x360] sm:$0xff]
    %v4596 = vld [vmem:[#allocation9 + $0x368] sm:$0xff]
    %v4597 = vld [vmem:[#allocation9 + $0x370] sm:$0xff]
    %v4598 = vld [vmem:[#allocation9 + $0x378] sm:$0xff]
    %v4599 = vld [vmem:[#allocation9 + $0x380] sm:$0xff]
    %v4600 = vld [vmem:[#allocation9 + $0x388] sm:$0xff]
    %v4601 = vld [vmem:[#allocation9 + $0x390] sm:$0xff]
    %v4602 = vld [vmem:[#allocation9 + $0x398] sm:$0xff]
    %v4603 = vld [vmem:[#allocation9 + $0x3a0] sm:$0xff]
    %v4604 = vld [vmem:[#allocation9 + $0x3a8] sm:$0xff]
    %v4605 = vld [vmem:[#allocation9 + $0x3b0] sm:$0xff]
    %v4606 = vld [vmem:[#allocation9 + $0x3b8] sm:$0xff]
    %v4607 = vld [vmem:[#allocation9 + $0x3c0] sm:$0xff]
    %v4608 = vld [vmem:[#allocation9 + $0x3c8] sm:$0xff]
    %v4609 = vld [vmem:[#allocation9 + $0x3d0] sm:$0xff]
    %v4610 = vld [vmem:[#allocation9 + $0x3d8] sm:$0xff]
    %v4611 = vld [vmem:[#allocation9 + $0x3e0] sm:$0xff]
    %v4612 = vld [vmem:[#allocation9 + $0x3e8] sm:$0xff]
    %v4613 = vld [vmem:[#allocation9 + $0x3f0] sm:$0xff]
    %v4614 = vld [vmem:[#allocation9 + $0x3f8] sm:$0xff]
    %v4615 = vld [vmem:[#allocation2] sm:$0xff]
    %v4616 = vld [vmem:[#allocation2 + $0x8] sm:$0xff]
    %v4617 = vld [vmem:[#allocation2 + $0x10] sm:$0xff]
    %v4618 = vld [vmem:[#allocation2 + $0x18] sm:$0xff]
    %v4619 = vld [vmem:[#allocation2 + $0x20] sm:$0xff]
    %v4620 = vld [vmem:[#allocation2 + $0x28] sm:$0xff]
    %v4621 = vld [vmem:[#allocation2 + $0x30] sm:$0xff]
    %v4622 = vld [vmem:[#allocation2 + $0x38] sm:$0xff]
    %4623 = vmatprep.subr.mxu0 %v4488
    %4624 = vmatpush1.msra.mxu0 %v4487
    %4625 = vmatprep.subr.mxu0 %v4492
    %4626 = vmatpush1.msra.mxu0 %v4491
    %4627 = vmatprep.subr.mxu0 %v4496
    %4628 = vmatpush1.msra.mxu0 %v4495
    %4629 = vmatprep.subr.mxu0 %v4500
    %4630 = vmatpush1.msra.mxu0 %v4499
    %4631 = vmatprep.subr.mxu0 %v4504
    %4632 = vmatpush1.msra.mxu0 %v4503
    %4633 = vmatprep.subr.mxu0 %v4508
    %4634 = vmatpush1.msra.mxu0 %v4507
    %4635 = vmatprep.subr.mxu0 %v4512
    %4636 = vmatpush1.msra.mxu0 %v4511
    %4637 = vmatprep.subr.mxu0 %v4516
    %4638 = vmatpush1.msra.mxu0 %v4515
    %4639 = vmatprep.subr.mxu0 %v4520
    %4640 = vmatpush1.msra.mxu0 %v4519
    %4641 = vmatprep.subr.mxu0 %v4524
    %4642 = vmatpush1.msra.mxu0 %v4523
    %4643 = vmatprep.subr.mxu0 %v4528
    %4644 = vmatpush1.msra.mxu0 %v4527
    %4645 = vmatprep.subr.mxu0 %v4532
    %4646 = vmatpush1.msra.mxu0 %v4531
    %4647 = vmatprep.subr.mxu0 %v4536
    %4648 = vmatpush1.msra.mxu0 %v4535
    %4649 = vmatprep.subr.mxu0 %v4540
    %4650 = vmatpush1.msra.mxu0 %v4539
    %4651 = vmatprep.subr.mxu0 %v4544
    %4652 = vmatpush1.msra.mxu0 %v4543
    %4653 = vmatprep.subr.mxu0 %v4548
    %4654 = vmatpush1.msra.mxu0 %v4547
    %4655 = vmatprep.subr.mxu0 %v4552
    %4656 = vmatpush1.msra.mxu0 %v4551
    %4657 = vmatprep.subr.mxu0 %v4556
    %4658 = vmatpush1.msra.mxu0 %v4555
    %4659 = vmatprep.subr.mxu0 %v4560
    %4660 = vmatpush1.msra.mxu0 %v4559
    %4661 = vmatprep.subr.mxu0 %v4564
    %4662 = vmatpush1.msra.mxu0 %v4563
    %4663 = vmatprep.subr.mxu0 %v4568
    %4664 = vmatpush1.msra.mxu0 %v4567
    %4665 = vmatprep.subr.mxu0 %v4572
    %4666 = vmatpush1.msra.mxu0 %v4571
    %4667 = vmatprep.subr.mxu0 %v4576
    %4668 = vmatpush1.msra.mxu0 %v4575
    %4669 = vmatprep.subr.mxu0 %v4580
    %4670 = vmatpush1.msra.mxu0 %v4579
    %4671 = vmatprep.subr.mxu0 %v4584
    %4672 = vmatpush1.msra.mxu0 %v4583
    %4673 = vmatprep.subr.mxu0 %v4588
    %4674 = vmatpush1.msra.mxu0 %v4587
    %4675 = vmatprep.subr.mxu0 %v4592
    %4676 = vmatpush1.msra.mxu0 %v4591
    %4677 = vmatprep.subr.mxu0 %v4596
    %4678 = vmatpush1.msra.mxu0 %v4595
    %4679 = vmatprep.subr.mxu0 %v4600
    %4680 = vmatpush1.msra.mxu0 %v4599
    %4681 = vmatprep.subr.mxu0 %v4604
    %4682 = vmatpush1.msra.mxu0 %v4603
    %4683 = vmatprep.subr.mxu0 %v4608
    %4684 = vmatpush1.msra.mxu0 %v4607
    %4685 = vmatprep.subr.mxu0 %v4612
    %4686 = vmatpush1.msra.mxu0 %v4611
    %4687 = vmatprep.mubr.f32.mxu0 0.0
    %4688 = vmatmul.mubr.f32.gmra.mrb[0].mxu0 0.0
    %v4689 = vpop.f32.mrb[0].mxu0
    %v4690 = vadd.f32 %v4615, %v4689
    %v4691 = vpop.f32.mrb[0].mxu0
    %v4692 = vadd.f32 %v4616, %v4691
    %4693 = vmatprep.mubr.f32.mxu0 0.0
    %4694 = vmatmul.mubr.f32.gmra.mrb[0].mxu0 0.0
    %v4695 = vpop.f32.mrb[0].mxu0
    %v4696 = vadd.f32 %v4619, %v4695
    %v4697 = vpop.f32.mrb[0].mxu0
    %v4698 = vadd.f32 %v4620, %v4697
    %4699 = vdwg.mxu0
    %4700 = vmatprep.subr.mxu0 %v4490
    %4701 = vmatpush1.msra.mxu0 %v4489
    %4702 = vmatprep.subr.mxu0 %v4494
    %4703 = vmatpush1.msra.mxu0 %v4493
    %4704 = vmatprep.subr.mxu0 %v4498
    %4705 = vmatpush1.msra.mxu0 %v4497
    %4706 = vmatprep.subr.mxu0 %v4502
    %4707 = vmatpush1.msra.mxu0 %v4501
    %4708 = vmatprep.subr.mxu0 %v4506
    %4709 = vmatpush1.msra.mxu0 %v4505
    %4710 = vmatprep.subr.mxu0 %v4510
    %4711 = vmatpush1.msra.mxu0 %v4509
    %4712 = vmatprep.subr.mxu0 %v4514
    %4713 = vmatpush1.msra.mxu0 %v4513
    %4714 = vmatprep.subr.mxu0 %v4518
    %4715 = vmatpush1.msra.mxu0 %v4517
    %4716 = vmatprep.subr.mxu0 %v4522
    %4717 = vmatpush1.msra.mxu0 %v4521
    %4718 = vmatprep.subr.mxu0 %v4526
    %4719 = vmatpush1.msra.mxu0 %v4525
    %4720 = vmatprep.subr.mxu0 %v4530
    %4721 = vmatpush1.msra.mxu0 %v4529
    %4722 = vmatprep.subr.mxu0 %v4534
    %4723 = vmatpush1.msra.mxu0 %v4533
    %4724 = vmatprep.subr.mxu0 %v4538
    %4725 = vmatpush1.msra.mxu0 %v4537
    %4726 = vmatprep.subr.mxu0 %v4542
    %4727 = vmatpush1.msra.mxu0 %v4541
    %4728 = vmatprep.subr.mxu0 %v4546
    %4729 = vmatpush1.msra.mxu0 %v4545
    %4730 = vmatprep.subr.mxu0 %v4550
    %4731 = vmatpush1.msra.mxu0 %v4549
    %4732 = vmatprep.subr.mxu0 %v4554
    %4733 = vmatpush1.msra.mxu0 %v4553
    %4734 = vmatprep.subr.mxu0 %v4558
    %4735 = vmatpush1.msra.mxu0 %v4557
    %4736 = vmatprep.subr.mxu0 %v4562
    %4737 = vmatpush1.msra.mxu0 %v4561
    %4738 = vmatprep.subr.mxu0 %v4566
    %4739 = vmatpush1.msra.mxu0 %v4565
    %4740 = vmatprep.subr.mxu0 %v4570
    %4741 = vmatpush1.msra.mxu0 %v4569
    %4742 = vmatprep.subr.mxu0 %v4574
    %4743 = vmatpush1.msra.mxu0 %v4573
    %4744 = vmatprep.subr.mxu0 %v4578
    %4745 = vmatpush1.msra.mxu0 %v4577
    %4746 = vmatprep.subr.mxu0 %v4582
    %4747 = vmatpush1.msra.mxu0 %v4581
    %4748 = vmatprep.subr.mxu0 %v4586
    %4749 = vmatpush1.msra.mxu0 %v4585
    %4750 = vmatprep.subr.mxu0 %v4590
    %4751 = vmatpush1.msra.mxu0 %v4589
    %4752 = vmatprep.subr.mxu0 %v4594
    %4753 = vmatpush1.msra.mxu0 %v4593
    %4754 = vmatprep.subr.mxu0 %v4598
    %4755 = vmatpush1.msra.mxu0 %v4597
    %4756 = vmatprep.subr.mxu0 %v4602
    %4757 = vmatpush1.msra.mxu0 %v4601
    %4758 = vmatprep.subr.mxu0 %v4606
    %4759 = vmatpush1.msra.mxu0 %v4605
    %4760 = vmatprep.subr.mxu0 %v4610
    %4761 = vmatpush1.msra.mxu0 %v4609
    %4762 = vmatprep.subr.mxu0 %v4614
    %4763 = vmatpush1.msra.mxu0 %v4613
    %4764 = vmatprep.mubr.f32.mxu0 0.0
    %4765 = vmatmul.mubr.f32.gmra.mrb[0].mxu0 0.0
    %v4766 = vpop.f32.mrb[0].mxu0
    %v4767 = vadd.f32 %v4617, %v4766
    %v4768 = vpop.f32.mrb[0].mxu0
    %v4769 = vadd.f32 %v4618, %v4768
    %4770 = vmatprep.mubr.f32.mxu0 0.0
    %4771 = vmatmul.mubr.f32.gmra.mrb[0].mxu0 0.0
    %v4772 = vpop.f32.mrb[0].mxu0
    %v4773 = vadd.f32 %v4621, %v4772
    %v4774 = vpop.f32.mrb[0].mxu0
    %v4775 = vadd.f32 %v4622, %v4774
    %4776 = vdwg.mxu0
    %v4777 = vadd.f32 %v4690, %v4479
    %v4778 = vadd.f32 %v4692, %v4480
    %v4779 = vadd.f32 %v4767, %v4481
    %v4780 = vadd.f32 %v4769, %v4482
    %v4781 = vadd.f32 %v4696, %v4483
    %v4782 = vadd.f32 %v4698, %v4484
    %v4783 = vadd.f32 %v4773, %v4485
    %v4784 = vadd.f32 %v4775, %v4486
    %v4785 = vxor.u32 %v4777, 2147483648
    %v4786 = vxor.u32 %v4781, 2147483648
    %v4787 = vmul.f32 %v4785, 1.442695
    %v4788 = vpow.pop %v4787
    %v4789 = vmul.f32 %v4786, 1.442695
    %v4790 = vpow.pop %v4789
    %v4791 = vadd.f32 %v4788, 1.0
    %v4792 = vadd.f32 %v4790, 1.0
    %v4793 = vrcp.pop %v4791
    %v4794 = vmul.f32 1.0, %v4793
    %v4795 = vrcp.pop %v4792
    %v4796 = vmul.f32 1.0, %v4795
    %v4797 = vxor.u32 %v4778, 2147483648
    %v4798 = vxor.u32 %v4782, 2147483648
    %v4799 = vmul.f32 %v4797, 1.442695
    %v4800 = vpow.pop %v4799
    %v4801 = vmul.f32 %v4798, 1.442695
    %v4802 = vpow.pop %v4801
    %v4803 = vadd.f32 %v4800, 1.0
    %v4804 = vadd.f32 %v4802, 1.0
    %v4805 = vrcp.pop %v4803
    %v4806 = vmul.f32 1.0, %v4805
    %v4807 = vrcp.pop %v4804
    %v4808 = vmul.f32 1.0, %v4807
    %v4809 = vtanh.pop %v4779
    %v4810 = vtanh.pop %v4783
    %v4811 = vxor.u32 %v4780, 2147483648
    %v4812 = vxor.u32 %v4784, 2147483648
    %v4813 = vmul.f32 %v4811, 1.442695
    %v4814 = vpow.pop %v4813
    %v4815 = vmul.f32 %v4812, 1.442695
    %v4816 = vpow.pop %v4815
    %v4817 = vadd.f32 %v4814, 1.0
    %v4818 = vadd.f32 %v4816, 1.0
    %v4819 = vrcp.pop %v4817
    %v4820 = vmul.f32 1.0, %v4819
    %v4821 = vrcp.pop %v4818
    %v4822 = vmul.f32 1.0, %v4821
    %v4823 = vmul.f32 %v4806, 0.0
    %v4824 = vmul.f32 %v4808, 0.0
    %v4825 = vmul.f32 %v4794, %v4809
    %v4826 = vmul.f32 %v4796, %v4810
    %v4827 = vadd.f32 %v4823, %v4825
    %v4828 = vadd.f32 %v4824, %v4826
    %v4829 = vtanh.pop %v4827
    %v4830 = vtanh.pop %v4828
    %v4831 = vmul.f32 %v4820, %v4829
    %v4832 = vmul.f32 %v4822, %v4830
    %v4833 = vmul.f32 %v4831, %v92
    %v4834 = vmul.f32 %v4832, %v93
    %v4835 = vmul.f32 %v4831, %v94
    %v4836 = vmul.f32 %v4832, %v95
    %4837 = vst [vmem:[#allocation4] sm:$0xff] %v4831
    %4838 = vst [vmem:[#allocation4 + $0x78] sm:$0xff] %v4832
    %v4839 = vld [vmem:[#allocation9] sm:$0xff]
    %v4840 = vld [vmem:[#allocation9 + $0x8] sm:$0xff]
    %v4841 = vld [vmem:[#allocation9 + $0x10] sm:$0xff]
    %v4842 = vld [vmem:[#allocation9 + $0x18] sm:$0xff]
    %v4843 = vld [vmem:[#allocation9 + $0x20] sm:$0xff]
    %v4844 = vld [vmem:[#allocation9 + $0x28] sm:$0xff]
    %v4845 = vld [vmem:[#allocation9 + $0x30] sm:$0xff]
    %v4846 = vld [vmem:[#allocation9 + $0x38] sm:$0xff]
    %v4847 = vld [vmem:[#allocation9 + $0x40] sm:$0xff]
    %v4848 = vld [vmem:[#allocation9 + $0x48] sm:$0xff]
    %v4849 = vld [vmem:[#allocation9 + $0x50] sm:$0xff]
    %v4850 = vld [vmem:[#allocation9 + $0x58] sm:$0xff]
    %v4851 = vld [vmem:[#allocation9 + $0x60] sm:$0xff]
    %v4852 = vld [vmem:[#allocation9 + $0x68] sm:$0xff]
    %v4853 = vld [vmem:[#allocation9 + $0x70] sm:$0xff]
    %v4854 = vld [vmem:[#allocation9 + $0x78] sm:$0xff]
    %v4855 = vld [vmem:[#allocation9 + $0x80] sm:$0xff]
    %v4856 = vld [vmem:[#allocation9 + $0x88] sm:$0xff]
    %v4857 = vld [vmem:[#allocation9 + $0x90] sm:$0xff]
    %v4858 = vld [vmem:[#allocation9 + $0x98] sm:$0xff]
    %v4859 = vld [vmem:[#allocation9 + $0xa0] sm:$0xff]
    %v4860 = vld [vmem:[#allocation9 + $0xa8] sm:$0xff]
    %v4861 = vld [vmem:[#allocation9 + $0xb0] sm:$0xff]
    %v4862 = vld [vmem:[#allocation9 + $0xb8] sm:$0xff]
    %v4863 = vld [vmem:[#allocation9 + $0xc0] sm:$0xff]
    %v4864 = vld [vmem:[#allocation9 + $0xc8] sm:$0xff]
    %v4865 = vld [vmem:[#allocation9 + $0xd0] sm:$0xff]
    %v4866 = vld [vmem:[#allocation9 + $0xd8] sm:$0xff]
    %v4867 = vld [vmem:[#allocation9 + $0xe0] sm:$0xff]
    %v4868 = vld [vmem:[#allocation9 + $0xe8] sm:$0xff]
    %v4869 = vld [vmem:[#allocation9 + $0xf0] sm:$0xff]
    %v4870 = vld [vmem:[#allocation9 + $0xf8] sm:$0xff]
    %v4871 = vld [vmem:[#allocation9 + $0x100] sm:$0xff]
    %v4872 = vld [vmem:[#allocation9 + $0x108] sm:$0xff]
    %v4873 = vld [vmem:[#allocation9 + $0x110] sm:$0xff]
    %v4874 = vld [vmem:[#allocation9 + $0x118] sm:$0xff]
    %v4875 = vld [vmem:[#allocation9 + $0x120] sm:$0xff]
    %v4876 = vld [vmem:[#allocation9 + $0x128] sm:$0xff]
    %v4877 = vld [vmem:[#allocation9 + $0x130] sm:$0xff]
    %v4878 = vld [vmem:[#allocation9 + $0x138] sm:$0xff]
    %v4879 = vld [vmem:[#allocation9 + $0x140] sm:$0xff]
    %v4880 = vld [vmem:[#allocation9 + $0x148] sm:$0xff]
    %v4881 = vld [vmem:[#allocation9 + $0x150] sm:$0xff]
    %v4882 = vld [vmem:[#allocation9 + $0x158] sm:$0xff]
    %v4883 = vld [vmem:[#allocation9 + $0x160] sm:$0xff]
    %v4884 = vld [vmem:[#allocation9 + $0x168] sm:$0xff]
    %v4885 = vld [vmem:[#allocation9 + $0x170] sm:$0xff]
    %v4886 = vld [vmem:[#allocation9 + $0x178] sm:$0xff]
    %v4887 = vld [vmem:[#allocation9 + $0x180] sm:$0xff]
    %v4888 = vld [vmem:[#allocation9 + $0x188] sm:$0xff]
    %v4889 = vld [vmem:[#allocation9 + $0x190] sm:$0xff]
    %v4890 = vld [vmem:[#allocation9 + $0x198] sm:$0xff]
    %v4891 = vld [vmem:[#allocation9 + $0x1a0] sm:$0xff]
    %v4892 = vld [vmem:[#allocation9 + $0x1a8] sm:$0xff]
    %v4893 = vld [vmem:[#allocation9 + $0x1b0] sm:$0xff]
    %v4894 = vld [vmem:[#allocation9 + $0x1b8] sm:$0xff]
    %v4895 = vld [vmem:[#allocation9 + $0x1c0] sm:$0xff]
    %v4896 = vld [vmem:[#allocation9 + $0x1c8] sm:$0xff]
    %v4897 = vld [vmem:[#allocation9 + $0x1d0] sm:$0xff]
    %v4898 = vld [vmem:[#allocation9 + $0x1d8] sm:$0xff]
    %v4899 = vld [vmem:[#allocation9 + $0x1e0] sm:$0xff]
    %v4900 = vld [vmem:[#allocation9 + $0x1e8] sm:$0xff]
    %v4901 = vld [vmem:[#allocation9 + $0x1f0] sm:$0xff]
    %v4902 = vld [vmem:[#allocation9 + $0x1f8] sm:$0xff]
    %v4903 = vld [vmem:[#allocation9 + $0x200] sm:$0xff]
    %v4904 = vld [vmem:[#allocation9 + $0x208] sm:$0xff]
    %v4905 = vld [vmem:[#allocation9 + $0x210] sm:$0xff]
    %v4906 = vld [vmem:[#allocation9 + $0x218] sm:$0xff]
    %v4907 = vld [vmem:[#allocation9 + $0x220] sm:$0xff]
    %v4908 = vld [vmem:[#allocation9 + $0x228] sm:$0xff]
    %v4909 = vld [vmem:[#allocation9 + $0x230] sm:$0xff]
    %v4910 = vld [vmem:[#allocation9 + $0x238] sm:$0xff]
    %v4911 = vld [vmem:[#allocation9 + $0x240] sm:$0xff]
    %v4912 = vld [vmem:[#allocation9 + $0x248] sm:$0xff]
    %v4913 = vld [vmem:[#allocation9 + $0x250] sm:$0xff]
    %v4914 = vld [vmem:[#allocation9 + $0x258] sm:$0xff]
    %v4915 = vld [vmem:[#allocation9 + $0x260] sm:$0xff]
    %v4916 = vld [vmem:[#allocation9 + $0x268] sm:$0xff]
    %v4917 = vld [vmem:[#allocation9 + $0x270] sm:$0xff]
    %v4918 = vld [vmem:[#allocation9 + $0x278] sm:$0xff]
    %v4919 = vld [vmem:[#allocation9 + $0x280] sm:$0xff]
    %v4920 = vld [vmem:[#allocation9 + $0x288] sm:$0xff]
    %v4921 = vld [vmem:[#allocation9 + $0x290] sm:$0xff]
    %v4922 = vld [vmem:[#allocation9 + $0x298] sm:$0xff]
    %v4923 = vld [vmem:[#allocation9 + $0x2a0] sm:$0xff]
    %v4924 = vld [vmem:[#allocation9 + $0x2a8] sm:$0xff]
    %v4925 = vld [vmem:[#allocation9 + $0x2b0] sm:$0xff]
    %v4926 = vld [vmem:[#allocation9 + $0x2b8] sm:$0xff]
    %v4927 = vld [vmem:[#allocation9 + $0x2c0] sm:$0xff]
    %v4928 = vld [vmem:[#allocation9 + $0x2c8] sm:$0xff]
    %v4929 = vld [vmem:[#allocation9 + $0x2d0] sm:$0xff]
    %v4930 = vld [vmem:[#allocation9 + $0x2d8] sm:$0xff]
    %v4931 = vld [vmem:[#allocation9 + $0x2e0] sm:$0xff]
    %v4932 = vld [vmem:[#allocation9 + $0x2e8] sm:$0xff]
    %v4933 = vld [vmem:[#allocation9 + $0x2f0] sm:$0xff]
    %v4934 = vld [vmem:[#allocation9 + $0x2f8] sm:$0xff]
    %v4935 = vld [vmem:[#allocation9 + $0x300] sm:$0xff]
    %v4936 = vld [vmem:[#allocation9 + $0x308] sm:$0xff]
    %v4937 = vld [vmem:[#allocation9 + $0x310] sm:$0xff]
    %v4938 = vld [vmem:[#allocation9 + $0x318] sm:$0xff]
    %v4939 = vld [vmem:[#allocation9 + $0x320] sm:$0xff]
    %v4940 = vld [vmem:[#allocation9 + $0x328] sm:$0xff]
    %v4941 = vld [vmem:[#allocation9 + $0x330] sm:$0xff]
    %v4942 = vld [vmem:[#allocation9 + $0x338] sm:$0xff]
    %v4943 = vld [vmem:[#allocation9 + $0x340] sm:$0xff]
    %v4944 = vld [vmem:[#allocation9 + $0x348] sm:$0xff]
    %v4945 = vld [vmem:[#allocation9 + $0x350] sm:$0xff]
    %v4946 = vld [vmem:[#allocation9 + $0x358] sm:$0xff]
    %v4947 = vld [vmem:[#allocation9 + $0x360] sm:$0xff]
    %v4948 = vld [vmem:[#allocation9 + $0x368] sm:$0xff]
    %v4949 = vld [vmem:[#allocation9 + $0x370] sm:$0xff]
    %v4950 = vld [vmem:[#allocation9 + $0x378] sm:$0xff]
    %v4951 = vld [vmem:[#allocation9 + $0x380] sm:$0xff]
    %v4952 = vld [vmem:[#allocation9 + $0x388] sm:$0xff]
    %v4953 = vld [vmem:[#allocation9 + $0x390] sm:$0xff]
    %v4954 = vld [vmem:[#allocation9 + $0x398] sm:$0xff]
    %v4955 = vld [vmem:[#allocation9 + $0x3a0] sm:$0xff]
    %v4956 = vld [vmem:[#allocation9 + $0x3a8] sm:$0xff]
    %v4957 = vld [vmem:[#allocation9 + $0x3b0] sm:$0xff]
    %v4958 = vld [vmem:[#allocation9 + $0x3b8] sm:$0xff]
    %v4959 = vld [vmem:[#allocation9 + $0x3c0] sm:$0xff]
    %v4960 = vld [vmem:[#allocation9 + $0x3c8] sm:$0xff]
    %v4961 = vld [vmem:[#allocation9 + $0x3d0] sm:$0xff]
    %v4962 = vld [vmem:[#allocation9 + $0x3d8] sm:$0xff]
    %v4963 = vld [vmem:[#allocation9 + $0x3e0] sm:$0xff]
    %v4964 = vld [vmem:[#allocation9 + $0x3e8] sm:$0xff]
    %v4965 = vld [vmem:[#allocation9 + $0x3f0] sm:$0xff]
    %v4966 = vld [vmem:[#allocation9 + $0x3f8] sm:$0xff]
    %v4967 = vld [vmem:[#allocation2 + $0x40] sm:$0xff]
    %v4968 = vld [vmem:[#allocation2 + $0x48] sm:$0xff]
    %v4969 = vld [vmem:[#allocation2 + $0x50] sm:$0xff]
    %v4970 = vld [vmem:[#allocation2 + $0x58] sm:$0xff]
    %v4971 = vld [vmem:[#allocation2 + $0x60] sm:$0xff]
    %v4972 = vld [vmem:[#allocation2 + $0x68] sm:$0xff]
    %v4973 = vld [vmem:[#allocation2 + $0x70] sm:$0xff]
    %v4974 = vld [vmem:[#allocation2 + $0x78] sm:$0xff]
    %4975 = vmatprep.subr.mxu0 %v4840
    %4976 = vmatpush1.msra.mxu0 %v4839
    %4977 = vmatprep.subr.mxu0 %v4844
    %4978 = vmatpush1.msra.mxu0 %v4843
    %4979 = vmatprep.subr.mxu0 %v4848
    %4980 = vmatpush1.msra.mxu0 %v4847
    %4981 = vmatprep.subr.mxu0 %v4852
    %4982 = vmatpush1.msra.mxu0 %v4851
    %4983 = vmatprep.subr.mxu0 %v4856
    %4984 = vmatpush1.msra.mxu0 %v4855
    %4985 = vmatprep.subr.mxu0 %v4860
    %4986 = vmatpush1.msra.mxu0 %v4859
    %4987 = vmatprep.subr.mxu0 %v4864
    %4988 = vmatpush1.msra.mxu0 %v4863
    %4989 = vmatprep.subr.mxu0 %v4868
    %4990 = vmatpush1.msra.mxu0 %v4867
    %4991 = vmatprep.subr.mxu0 %v4872
    %4992 = vmatpush1.msra.mxu0 %v4871
    %4993 = vmatprep.subr.mxu0 %v4876
    %4994 = vmatpush1.msra.mxu0 %v4875
    %4995 = vmatprep.subr.mxu0 %v4880
    %4996 = vmatpush1.msra.mxu0 %v4879
    %4997 = vmatprep.subr.mxu0 %v4884
    %4998 = vmatpush1.msra.mxu0 %v4883
    %4999 = vmatprep.subr.mxu0 %v4888
    %5000 = vmatpush1.msra.mxu0 %v4887
    %5001 = vmatprep.subr.mxu0 %v4892
    %5002 = vmatpush1.msra.mxu0 %v4891
    %5003 = vmatprep.subr.mxu0 %v4896
    %5004 = vmatpush1.msra.mxu0 %v4895
    %5005 = vmatprep.subr.mxu0 %v4900
    %5006 = vmatpush1.msra.mxu0 %v4899
    %5007 = vmatprep.subr.mxu0 %v4904
    %5008 = vmatpush1.msra.mxu0 %v4903
    %5009 = vmatprep.subr.mxu0 %v4908
    %5010 = vmatpush1.msra.mxu0 %v4907
    %5011 = vmatprep.subr.mxu0 %v4912
    %5012 = vmatpush1.msra.mxu0 %v4911
    %5013 = vmatprep.subr.mxu0 %v4916
    %5014 = vmatpush1.msra.mxu0 %v4915
    %5015 = vmatprep.subr.mxu0 %v4920
    %5016 = vmatpush1.msra.mxu0 %v4919
    %5017 = vmatprep.subr.mxu0 %v4924
    %5018 = vmatpush1.msra.mxu0 %v4923
    %5019 = vmatprep.subr.mxu0 %v4928
    %5020 = vmatpush1.msra.mxu0 %v4927
    %5021 = vmatprep.subr.mxu0 %v4932
    %5022 = vmatpush1.msra.mxu0 %v4931
    %5023 = vmatprep.subr.mxu0 %v4936
    %5024 = vmatpush1.msra.mxu0 %v4935
    %5025 = vmatprep.subr.mxu0 %v4940
    %5026 = vmatpush1.msra.mxu0 %v4939
    %5027 = vmatprep.subr.mxu0 %v4944
    %5028 = vmatpush1.msra.mxu0 %v4943
    %5029 = vmatprep.subr.mxu0 %v4948
    %5030 = vmatpush1.msra.mxu0 %v4947
    %5031 = vmatprep.subr.mxu0 %v4952
    %5032 = vmatpush1.msra.mxu0 %v4951
    %5033 = vmatprep.subr.mxu0 %v4956
    %5034 = vmatpush1.msra.mxu0 %v4955
    %5035 = vmatprep.subr.mxu0 %v4960
    %5036 = vmatpush1.msra.mxu0 %v4959
    %5037 = vmatprep.subr.mxu0 %v4964
    %5038 = vmatpush1.msra.mxu0 %v4963
    %5039 = vmatprep.mubr.f32.mxu0 %v4835
    %5040 = vmatmul.mubr.f32.gmra.mrb[0].mxu0 %v4833
    %v5041 = vpop.f32.mrb[0].mxu0
    %v5042 = vadd.f32 %v4967, %v5041
    %v5043 = vpop.f32.mrb[0].mxu0
    %v5044 = vadd.f32 %v4968, %v5043
    %5045 = vmatprep.mubr.f32.mxu0 %v4836
    %5046 = vmatmul.mubr.f32.gmra.mrb[0].mxu0 %v4834
    %v5047 = vpop.f32.mrb[0].mxu0
    %v5048 = vadd.f32 %v4971, %v5047
    %v5049 = vpop.f32.mrb[0].mxu0
    %v5050 = vadd.f32 %v4972, %v5049
    %5051 = vdwg.mxu0
    %5052 = vmatprep.subr.mxu0 %v4842
    %5053 = vmatpush1.msra.mxu0 %v4841
    %5054 = vmatprep.subr.mxu0 %v4846
    %5055 = vmatpush1.msra.mxu0 %v4845
    %5056 = vmatprep.subr.mxu0 %v4850
    %5057 = vmatpush1.msra.mxu0 %v4849
    %5058 = vmatprep.subr.mxu0 %v4854
    %5059 = vmatpush1.msra.mxu0 %v4853
    %5060 = vmatprep.subr.mxu0 %v4858
    %5061 = vmatpush1.msra.mxu0 %v4857
    %5062 = vmatprep.subr.mxu0 %v4862
    %5063 = vmatpush1.msra.mxu0 %v4861
    %5064 = vmatprep.subr.mxu0 %v4866
    %5065 = vmatpush1.msra.mxu0 %v4865
    %5066 = vmatprep.subr.mxu0 %v4870
    %5067 = vmatpush1.msra.mxu0 %v4869
    %5068 = vmatprep.subr.mxu0 %v4874
    %5069 = vmatpush1.msra.mxu0 %v4873
    %5070 = vmatprep.subr.mxu0 %v4878
    %5071 = vmatpush1.msra.mxu0 %v4877
    %5072 = vmatprep.subr.mxu0 %v4882
    %5073 = vmatpush1.msra.mxu0 %v4881
    %5074 = vmatprep.subr.mxu0 %v4886
    %5075 = vmatpush1.msra.mxu0 %v4885
    %5076 = vmatprep.subr.mxu0 %v4890
    %5077 = vmatpush1.msra.mxu0 %v4889
    %5078 = vmatprep.subr.mxu0 %v4894
    %5079 = vmatpush1.msra.mxu0 %v4893
    %5080 = vmatprep.subr.mxu0 %v4898
    %5081 = vmatpush1.msra.mxu0 %v4897
    %5082 = vmatprep.subr.mxu0 %v4902
    %5083 = vmatpush1.msra.mxu0 %v4901
    %5084 = vmatprep.subr.mxu0 %v4906
    %5085 = vmatpush1.msra.mxu0 %v4905
    %5086 = vmatprep.subr.mxu0 %v4910
    %5087 = vmatpush1.msra.mxu0 %v4909
    %5088 = vmatprep.subr.mxu0 %v4914
    %5089 = vmatpush1.msra.mxu0 %v4913
    %5090 = vmatprep.subr.mxu0 %v4918
    %5091 = vmatpush1.msra.mxu0 %v4917
    %5092 = vmatprep.subr.mxu0 %v4922
    %5093 = vmatpush1.msra.mxu0 %v4921
    %5094 = vmatprep.subr.mxu0 %v4926
    %5095 = vmatpush1.msra.mxu0 %v4925
    %5096 = vmatprep.subr.mxu0 %v4930
    %5097 = vmatpush1.msra.mxu0 %v4929
    %5098 = vmatprep.subr.mxu0 %v4934
    %5099 = vmatpush1.msra.mxu0 %v4933
    %5100 = vmatprep.subr.mxu0 %v4938
    %5101 = vmatpush1.msra.mxu0 %v4937
    %5102 = vmatprep.subr.mxu0 %v4942
    %5103 = vmatpush1.msra.mxu0 %v4941
    %5104 = vmatprep.subr.mxu0 %v4946
    %5105 = vmatpush1.msra.mxu0 %v4945
    %5106 = vmatprep.subr.mxu0 %v4950
    %5107 = vmatpush1.msra.mxu0 %v4949
    %5108 = vmatprep.subr.mxu0 %v4954
    %5109 = vmatpush1.msra.mxu0 %v4953
    %5110 = vmatprep.subr.mxu0 %v4958
    %5111 = vmatpush1.msra.mxu0 %v4957
    %5112 = vmatprep.subr.mxu0 %v4962
    %5113 = vmatpush1.msra.mxu0 %v4961
    %5114 = vmatprep.subr.mxu0 %v4966
    %5115 = vmatpush1.msra.mxu0 %v4965
    %5116 = vmatprep.mubr.f32.mxu0 %v4835
    %5117 = vmatmul.mubr.f32.gmra.mrb[0].mxu0 %v4833
    %v5118 = vpop.f32.mrb[0].mxu0
    %v5119 = vadd.f32 %v4969, %v5118
    %v5120 = vpop.f32.mrb[0].mxu0
    %v5121 = vadd.f32 %v4970, %v5120
    %5122 = vmatprep.mubr.f32.mxu0 %v4836
    %5123 = vmatmul.mubr.f32.gmra.mrb[0].mxu0 %v4834
    %v5124 = vpop.f32.mrb[0].mxu0
    %v5125 = vadd.f32 %v4973, %v5124
    %v5126 = vpop.f32.mrb[0].mxu0
    %v5127 = vadd.f32 %v4974, %v5126
    %5128 = vdwg.mxu0
    %v5129 = vadd.f32 %v5042, %v4479
    %v5130 = vadd.f32 %v5044, %v4480
    %v5131 = vadd.f32 %v5119, %v4481
    %v5132 = vadd.f32 %v5121, %v4482
    %v5133 = vadd.f32 %v5048, %v4483
    %v5134 = vadd.f32 %v5050, %v4484
    %v5135 = vadd.f32 %v5125, %v4485
    %v5136 = vadd.f32 %v5127, %v4486
    %v5137 = vxor.u32 %v5129, 2147483648
    %v5138 = vxor.u32 %v5133, 2147483648
    %v5139 = vmul.f32 %v5137, 1.442695
    %v5140 = vpow.pop %v5139
    %v5141 = vmul.f32 %v5138, 1.442695
    %v5142 = vpow.pop %v5141
    %v5143 = vadd.f32 %v5140, 1.0
    %v5144 = vadd.f32 %v5142, 1.0
    %v5145 = vrcp.pop %v5143
    %v5146 = vmul.f32 1.0, %v5145
    %v5147 = vrcp.pop %v5144
    %v5148 = vmul.f32 1.0, %v5147
    %v5149 = vxor.u32 %v5130, 2147483648
    %v5150 = vxor.u32 %v5134, 2147483648
    %v5151 = vmul.f32 %v5149, 1.442695
    %v5152 = vpow.pop %v5151
    %v5153 = vmul.f32 %v5150, 1.442695
    %v5154 = vpow.pop %v5153
    %v5155 = vadd.f32 %v5152, 1.0
    %v5156 = vadd.f32 %v5154, 1.0
    %v5157 = vrcp.pop %v5155
    %v5158 = vmul.f32 1.0, %v5157
    %v5159 = vrcp.pop %v5156
    %v5160 = vmul.f32 1.0, %v5159
    %v5161 = vtanh.pop %v5131
    %v5162 = vtanh.pop %v5135
    %v5163 = vxor.u32 %v5132, 2147483648
    %v5164 = vxor.u32 %v5136, 2147483648
    %v5165 = vmul.f32 %v5163, 1.442695
    %v5166 = vpow.pop %v5165
    %v5167 = vmul.f32 %v5164, 1.442695
    %v5168 = vpow.pop %v5167
    %v5169 = vadd.f32 %v5166, 1.0
    %v5170 = vadd.f32 %v5168, 1.0
    %v5171 = vrcp.pop %v5169
    %v5172 = vmul.f32 1.0, %v5171
    %v5173 = vrcp.pop %v5170
    %v5174 = vmul.f32 1.0, %v5173
    %v5175 = vmul.f32 %v5158, %v4827
    %v5176 = vmul.f32 %v5160, %v4828
    %v5177 = vmul.f32 %v5146, %v5161
    %v5178 = vmul.f32 %v5148, %v5162
    %v5179 = vadd.f32 %v5175, %v5177
    %v5180 = vadd.f32 %v5176, %v5178
    %v5181 = vtanh.pop %v5179
    %v5182 = vtanh.pop %v5180
    %v5183 = vmul.f32 %v5172, %v5181
    %v5184 = vmul.f32 %v5174, %v5182
    %v5185 = vmul.f32 %v5183, %v92
    %v5186 = vmul.f32 %v5184, %v93
    %v5187 = vmul.f32 %v5183, %v94
    %v5188 = vmul.f32 %v5184, %v95
    %5189 = vst [vmem:[#allocation4 + $0x10] sm:$0xff] %v5183
    %5190 = vst [vmem:[#allocation4 + $0x68] sm:$0xff] %v5184
    %v5191 = vld [vmem:[#allocation9] sm:$0xff]
    %v5192 = vld [vmem:[#allocation9 + $0x8] sm:$0xff]
    %v5193 = vld [vmem:[#allocation9 + $0x10] sm:$0xff]
    %v5194 = vld [vmem:[#allocation9 + $0x18] sm:$0xff]
    %v5195 = vld [vmem:[#allocation9 + $0x20] sm:$0xff]
    %v5196 = vld [vmem:[#allocation9 + $0x28] sm:$0xff]
    %v5197 = vld [vmem:[#allocation9 + $0x30] sm:$0xff]
    %v5198 = vld [vmem:[#allocation9 + $0x38] sm:$0xff]
    %v5199 = vld [vmem:[#allocation9 + $0x40] sm:$0xff]
    %v5200 = vld [vmem:[#allocation9 + $0x48] sm:$0xff]
    %v5201 = vld [vmem:[#allocation9 + $0x50] sm:$0xff]
    %v5202 = vld [vmem:[#allocation9 + $0x58] sm:$0xff]
    %v5203 = vld [vmem:[#allocation9 + $0x60] sm:$0xff]
    %v5204 = vld [vmem:[#allocation9 + $0x68] sm:$0xff]
    %v5205 = vld [vmem:[#allocation9 + $0x70] sm:$0xff]
    %v5206 = vld [vmem:[#allocation9 + $0x78] sm:$0xff]
    %v5207 = vld [vmem:[#allocation9 + $0x80] sm:$0xff]
    %v5208 = vld [vmem:[#allocation9 + $0x88] sm:$0xff]
    %v5209 = vld [vmem:[#allocation9 + $0x90] sm:$0xff]
    %v5210 = vld [vmem:[#allocation9 + $0x98] sm:$0xff]
    %v5211 = vld [vmem:[#allocation9 + $0xa0] sm:$0xff]
    %v5212 = vld [vmem:[#allocation9 + $0xa8] sm:$0xff]
    %v5213 = vld [vmem:[#allocation9 + $0xb0] sm:$0xff]
    %v5214 = vld [vmem:[#allocation9 + $0xb8] sm:$0xff]
    %v5215 = vld [vmem:[#allocation9 + $0xc0] sm:$0xff]
    %v5216 = vld [vmem:[#allocation9 + $0xc8] sm:$0xff]
    %v5217 = vld [vmem:[#allocation9 + $0xd0] sm:$0xff]
    %v5218 = vld [vmem:[#allocation9 + $0xd8] sm:$0xff]
    %v5219 = vld [vmem:[#allocation9 + $0xe0] sm:$0xff]
    %v5220 = vld [vmem:[#allocation9 + $0xe8] sm:$0xff]
    %v5221 = vld [vmem:[#allocation9 + $0xf0] sm:$0xff]
    %v5222 = vld [vmem:[#allocation9 + $0xf8] sm:$0xff]
    %v5223 = vld [vmem:[#allocation9 + $0x100] sm:$0xff]
    %v5224 = vld [vmem:[#allocation9 + $0x108] sm:$0xff]
    %v5225 = vld [vmem:[#allocation9 + $0x110] sm:$0xff]
    %v5226 = vld [vmem:[#allocation9 + $0x118] sm:$0xff]
    %v5227 = vld [vmem:[#allocation9 + $0x120] sm:$0xff]
    %v5228 = vld [vmem:[#allocation9 + $0x128] sm:$0xff]
    %v5229 = vld [vmem:[#allocation9 + $0x130] sm:$0xff]
    %v5230 = vld [vmem:[#allocation9 + $0x138] sm:$0xff]
    %v5231 = vld [vmem:[#allocation9 + $0x140] sm:$0xff]
    %v5232 = vld [vmem:[#allocation9 + $0x148] sm:$0xff]
    %v5233 = vld [vmem:[#allocation9 + $0x150] sm:$0xff]
    %v5234 = vld [vmem:[#allocation9 + $0x158] sm:$0xff]
    %v5235 = vld [vmem:[#allocation9 + $0x160] sm:$0xff]
    %v5236 = vld [vmem:[#allocation9 + $0x168] sm:$0xff]
    %v5237 = vld [vmem:[#allocation9 + $0x170] sm:$0xff]
    %v5238 = vld [vmem:[#allocation9 + $0x178] sm:$0xff]
    %v5239 = vld [vmem:[#allocation9 + $0x180] sm:$0xff]
    %v5240 = vld [vmem:[#allocation9 + $0x188] sm:$0xff]
    %v5241 = vld [vmem:[#allocation9 + $0x190] sm:$0xff]
    %v5242 = vld [vmem:[#allocation9 + $0x198] sm:$0xff]
    %v5243 = vld [vmem:[#allocation9 + $0x1a0] sm:$0xff]
    %v5244 = vld [vmem:[#allocation9 + $0x1a8] sm:$0xff]
    %v5245 = vld [vmem:[#allocation9 + $0x1b0] sm:$0xff]
    %v5246 = vld [vmem:[#allocation9 + $0x1b8] sm:$0xff]
    %v5247 = vld [vmem:[#allocation9 + $0x1c0] sm:$0xff]
    %v5248 = vld [vmem:[#allocation9 + $0x1c8] sm:$0xff]
    %v5249 = vld [vmem:[#allocation9 + $0x1d0] sm:$0xff]
    %v5250 = vld [vmem:[#allocation9 + $0x1d8] sm:$0xff]
    %v5251 = vld [vmem:[#allocation9 + $0x1e0] sm:$0xff]
    %v5252 = vld [vmem:[#allocation9 + $0x1e8] sm:$0xff]
    %v5253 = vld [vmem:[#allocation9 + $0x1f0] sm:$0xff]
    %v5254 = vld [vmem:[#allocation9 + $0x1f8] sm:$0xff]
    %v5255 = vld [vmem:[#allocation9 + $0x200] sm:$0xff]
    %v5256 = vld [vmem:[#allocation9 + $0x208] sm:$0xff]
    %v5257 = vld [vmem:[#allocation9 + $0x210] sm:$0xff]
    %v5258 = vld [vmem:[#allocation9 + $0x218] sm:$0xff]
    %v5259 = vld [vmem:[#allocation9 + $0x220] sm:$0xff]
    %v5260 = vld [vmem:[#allocation9 + $0x228] sm:$0xff]
    %v5261 = vld [vmem:[#allocation9 + $0x230] sm:$0xff]
    %v5262 = vld [vmem:[#allocation9 + $0x238] sm:$0xff]
    %v5263 = vld [vmem:[#allocation9 + $0x240] sm:$0xff]
    %v5264 = vld [vmem:[#allocation9 + $0x248] sm:$0xff]
    %v5265 = vld [vmem:[#allocation9 + $0x250] sm:$0xff]
    %v5266 = vld [vmem:[#allocation9 + $0x258] sm:$0xff]
    %v5267 = vld [vmem:[#allocation9 + $0x260] sm:$0xff]
    %v5268 = vld [vmem:[#allocation9 + $0x268] sm:$0xff]
    %v5269 = vld [vmem:[#allocation9 + $0x270] sm:$0xff]
    %v5270 = vld [vmem:[#allocation9 + $0x278] sm:$0xff]
    %v5271 = vld [vmem:[#allocation9 + $0x280] sm:$0xff]
    %v5272 = vld [vmem:[#allocation9 + $0x288] sm:$0xff]
    %v5273 = vld [vmem:[#allocation9 + $0x290] sm:$0xff]
    %v5274 = vld [vmem:[#allocation9 + $0x298] sm:$0xff]
    %v5275 = vld [vmem:[#allocation9 + $0x2a0] sm:$0xff]
    %v5276 = vld [vmem:[#allocation9 + $0x2a8] sm:$0xff]
    %v5277 = vld [vmem:[#allocation9 + $0x2b0] sm:$0xff]
    %v5278 = vld [vmem:[#allocation9 + $0x2b8] sm:$0xff]
    %v5279 = vld [vmem:[#allocation9 + $0x2c0] sm:$0xff]
    %v5280 = vld [vmem:[#allocation9 + $0x2c8] sm:$0xff]
    %v5281 = vld [vmem:[#allocation9 + $0x2d0] sm:$0xff]
    %v5282 = vld [vmem:[#allocation9 + $0x2d8] sm:$0xff]
    %v5283 = vld [vmem:[#allocation9 + $0x2e0] sm:$0xff]
    %v5284 = vld [vmem:[#allocation9 + $0x2e8] sm:$0xff]
    %v5285 = vld [vmem:[#allocation9 + $0x2f0] sm:$0xff]
    %v5286 = vld [vmem:[#allocation9 + $0x2f8] sm:$0xff]
    %v5287 = vld [vmem:[#allocation9 + $0x300] sm:$0xff]
    %v5288 = vld [vmem:[#allocation9 + $0x308] sm:$0xff]
    %v5289 = vld [vmem:[#allocation9 + $0x310] sm:$0xff]
    %v5290 = vld [vmem:[#allocation9 + $0x318] sm:$0xff]
    %v5291 = vld [vmem:[#allocation9 + $0x320] sm:$0xff]
    %v5292 = vld [vmem:[#allocation9 + $0x328] sm:$0xff]
    %v5293 = vld [vmem:[#allocation9 + $0x330] sm:$0xff]
    %v5294 = vld [vmem:[#allocation9 + $0x338] sm:$0xff]
    %v5295 = vld [vmem:[#allocation9 + $0x340] sm:$0xff]
    %v5296 = vld [vmem:[#allocation9 + $0x348] sm:$0xff]
    %v5297 = vld [vmem:[#allocation9 + $0x350] sm:$0xff]
    %v5298 = vld [vmem:[#allocation9 + $0x358] sm:$0xff]
    %v5299 = vld [vmem:[#allocation9 + $0x360] sm:$0xff]
    %v5300 = vld [vmem:[#allocation9 + $0x368] sm:$0xff]
    %v5301 = vld [vmem:[#allocation9 + $0x370] sm:$0xff]
    %v5302 = vld [vmem:[#allocation9 + $0x378] sm:$0xff]
    %v5303 = vld [vmem:[#allocation9 + $0x380] sm:$0xff]
    %v5304 = vld [vmem:[#allocation9 + $0x388] sm:$0xff]
    %v5305 = vld [vmem:[#allocation9 + $0x390] sm:$0xff]
    %v5306 = vld [vmem:[#allocation9 + $0x398] sm:$0xff]
    %v5307 = vld [vmem:[#allocation9 + $0x3a0] sm:$0xff]
    %v5308 = vld [vmem:[#allocation9 + $0x3a8] sm:$0xff]
    %v5309 = vld [vmem:[#allocation9 + $0x3b0] sm:$0xff]
    %v5310 = vld [vmem:[#allocation9 + $0x3b8] sm:$0xff]
    %v5311 = vld [vmem:[#allocation9 + $0x3c0] sm:$0xff]
    %v5312 = vld [vmem:[#allocation9 + $0x3c8] sm:$0xff]
    %v5313 = vld [vmem:[#allocation9 + $0x3d0] sm:$0xff]
    %v5314 = vld [vmem:[#allocation9 + $0x3d8] sm:$0xff]
    %v5315 = vld [vmem:[#allocation9 + $0x3e0] sm:$0xff]
    %v5316 = vld [vmem:[#allocation9 + $0x3e8] sm:$0xff]
    %v5317 = vld [vmem:[#allocation9 + $0x3f0] sm:$0xff]
    %v5318 = vld [vmem:[#allocation9 + $0x3f8] sm:$0xff]
    %v5319 = vld [vmem:[#allocation2 + $0x80] sm:$0xff]
    %v5320 = vld [vmem:[#allocation2 + $0x88] sm:$0xff]
    %v5321 = vld [vmem:[#allocation2 + $0x90] sm:$0xff]
    %v5322 = vld [vmem:[#allocation2 + $0x98] sm:$0xff]
    %v5323 = vld [vmem:[#allocation2 + $0xa0] sm:$0xff]
    %v5324 = vld [vmem:[#allocation2 + $0xa8] sm:$0xff]
    %v5325 = vld [vmem:[#allocation2 + $0xb0] sm:$0xff]
    %v5326 = vld [vmem:[#allocation2 + $0xb8] sm:$0xff]
    %5327 = vmatprep.subr.mxu0 %v5192
    %5328 = vmatpush1.msra.mxu0 %v5191
    %5329 = vmatprep.subr.mxu0 %v5196
    %5330 = vmatpush1.msra.mxu0 %v5195
    %5331 = vmatprep.subr.mxu0 %v5200
    %5332 = vmatpush1.msra.mxu0 %v5199
    %5333 = vmatprep.subr.mxu0 %v5204
    %5334 = vmatpush1.msra.mxu0 %v5203
    %5335 = vmatprep.subr.mxu0 %v5208
    %5336 = vmatpush1.msra.mxu0 %v5207
    %5337 = vmatprep.subr.mxu0 %v5212
    %5338 = vmatpush1.msra.mxu0 %v5211
    %5339 = vmatprep.subr.mxu0 %v5216
    %5340 = vmatpush1.msra.mxu0 %v5215
    %5341 = vmatprep.subr.mxu0 %v5220
    %5342 = vmatpush1.msra.mxu0 %v5219
    %5343 = vmatprep.subr.mxu0 %v5224
    %5344 = vmatpush1.msra.mxu0 %v5223
    %5345 = vmatprep.subr.mxu0 %v5228
    %5346 = vmatpush1.msra.mxu0 %v5227
    %5347 = vmatprep.subr.mxu0 %v5232
    %5348 = vmatpush1.msra.mxu0 %v5231
    %5349 = vmatprep.subr.mxu0 %v5236
    %5350 = vmatpush1.msra.mxu0 %v5235
    %5351 = vmatprep.subr.mxu0 %v5240
    %5352 = vmatpush1.msra.mxu0 %v5239
    %5353 = vmatprep.subr.mxu0 %v5244
    %5354 = vmatpush1.msra.mxu0 %v5243
    %5355 = vmatprep.subr.mxu0 %v5248
    %5356 = vmatpush1.msra.mxu0 %v5247
    %5357 = vmatprep.subr.mxu0 %v5252
    %5358 = vmatpush1.msra.mxu0 %v5251
    %5359 = vmatprep.subr.mxu0 %v5256
    %5360 = vmatpush1.msra.mxu0 %v5255
    %5361 = vmatprep.subr.mxu0 %v5260
    %5362 = vmatpush1.msra.mxu0 %v5259
    %5363 = vmatprep.subr.mxu0 %v5264
    %5364 = vmatpush1.msra.mxu0 %v5263
    %5365 = vmatprep.subr.mxu0 %v5268
    %5366 = vmatpush1.msra.mxu0 %v5267
    %5367 = vmatprep.subr.mxu0 %v5272
    %5368 = vmatpush1.msra.mxu0 %v5271
    %5369 = vmatprep.subr.mxu0 %v5276
    %5370 = vmatpush1.msra.mxu0 %v5275
    %5371 = vmatprep.subr.mxu0 %v5280
    %5372 = vmatpush1.msra.mxu0 %v5279
    %5373 = vmatprep.subr.mxu0 %v5284
    %5374 = vmatpush1.msra.mxu0 %v5283
    %5375 = vmatprep.subr.mxu0 %v5288
    %5376 = vmatpush1.msra.mxu0 %v5287
    %5377 = vmatprep.subr.mxu0 %v5292
    %5378 = vmatpush1.msra.mxu0 %v5291
    %5379 = vmatprep.subr.mxu0 %v5296
    %5380 = vmatpush1.msra.mxu0 %v5295
    %5381 = vmatprep.subr.mxu0 %v5300
    %5382 = vmatpush1.msra.mxu0 %v5299
    %5383 = vmatprep.subr.mxu0 %v5304
    %5384 = vmatpush1.msra.mxu0 %v5303
    %5385 = vmatprep.subr.mxu0 %v5308
    %5386 = vmatpush1.msra.mxu0 %v5307
    %5387 = vmatprep.subr.mxu0 %v5312
    %5388 = vmatpush1.msra.mxu0 %v5311
    %5389 = vmatprep.subr.mxu0 %v5316
    %5390 = vmatpush1.msra.mxu0 %v5315
    %5391 = vmatprep.mubr.f32.mxu0 %v5187
    %5392 = vmatmul.mubr.f32.gmra.mrb[0].mxu0 %v5185
    %v5393 = vpop.f32.mrb[0].mxu0
    %v5394 = vadd.f32 %v5319, %v5393
    %v5395 = vpop.f32.mrb[0].mxu0
    %v5396 = vadd.f32 %v5320, %v5395
    %5397 = vmatprep.mubr.f32.mxu0 %v5188
    %5398 = vmatmul.mubr.f32.gmra.mrb[0].mxu0 %v5186
    %v5399 = vpop.f32.mrb[0].mxu0
    %v5400 = vadd.f32 %v5323, %v5399
    %v5401 = vpop.f32.mrb[0].mxu0
    %v5402 = vadd.f32 %v5324, %v5401
    %5403 = vdwg.mxu0
    %5404 = vmatprep.subr.mxu0 %v5194
    %5405 = vmatpush1.msra.mxu0 %v5193
    %5406 = vmatprep.subr.mxu0 %v5198
    %5407 = vmatpush1.msra.mxu0 %v5197
    %5408 = vmatprep.subr.mxu0 %v5202
    %5409 = vmatpush1.msra.mxu0 %v5201
    %5410 = vmatprep.subr.mxu0 %v5206
    %5411 = vmatpush1.msra.mxu0 %v5205
    %5412 = vmatprep.subr.mxu0 %v5210
    %5413 = vmatpush1.msra.mxu0 %v5209
    %5414 = vmatprep.subr.mxu0 %v5214
    %5415 = vmatpush1.msra.mxu0 %v5213
    %5416 = vmatprep.subr.mxu0 %v5218
    %5417 = vmatpush1.msra.mxu0 %v5217
    %5418 = vmatprep.subr.mxu0 %v5222
    %5419 = vmatpush1.msra.mxu0 %v5221
    %5420 = vmatprep.subr.mxu0 %v5226
    %5421 = vmatpush1.msra.mxu0 %v5225
    %5422 = vmatprep.subr.mxu0 %v5230
    %5423 = vmatpush1.msra.mxu0 %v5229
    %5424 = vmatprep.subr.mxu0 %v5234
    %5425 = vmatpush1.msra.mxu0 %v5233
    %5426 = vmatprep.subr.mxu0 %v5238
    %5427 = vmatpush1.msra.mxu0 %v5237
    %5428 = vmatprep.subr.mxu0 %v5242
    %5429 = vmatpush1.msra.mxu0 %v5241
    %5430 = vmatprep.subr.mxu0 %v5246
    %5431 = vmatpush1.msra.mxu0 %v5245
    %5432 = vmatprep.subr.mxu0 %v5250
    %5433 = vmatpush1.msra.mxu0 %v5249
    %5434 = vmatprep.subr.mxu0 %v5254
    %5435 = vmatpush1.msra.mxu0 %v5253
    %5436 = vmatprep.subr.mxu0 %v5258
    %5437 = vmatpush1.msra.mxu0 %v5257
    %5438 = vmatprep.subr.mxu0 %v5262
    %5439 = vmatpush1.msra.mxu0 %v5261
    %5440 = vmatprep.subr.mxu0 %v5266
    %5441 = vmatpush1.msra.mxu0 %v5265
    %5442 = vmatprep.subr.mxu0 %v5270
    %5443 = vmatpush1.msra.mxu0 %v5269
    %5444 = vmatprep.subr.mxu0 %v5274
    %5445 = vmatpush1.msra.mxu0 %v5273
    %5446 = vmatprep.subr.mxu0 %v5278
    %5447 = vmatpush1.msra.mxu0 %v5277
    %5448 = vmatprep.subr.mxu0 %v5282
    %5449 = vmatpush1.msra.mxu0 %v5281
    %5450 = vmatprep.subr.mxu0 %v5286
    %5451 = vmatpush1.msra.mxu0 %v5285
    %5452 = vmatprep.subr.mxu0 %v5290
    %5453 = vmatpush1.msra.mxu0 %v5289
    %5454 = vmatprep.subr.mxu0 %v5294
    %5455 = vmatpush1.msra.mxu0 %v5293
    %5456 = vmatprep.subr.mxu0 %v5298
    %5457 = vmatpush1.msra.mxu0 %v5297
    %5458 = vmatprep.subr.mxu0 %v5302
    %5459 = vmatpush1.msra.mxu0 %v5301
    %5460 = vmatprep.subr.mxu0 %v5306
    %5461 = vmatpush1.msra.mxu0 %v5305
    %5462 = vmatprep.subr.mxu0 %v5310
    %5463 = vmatpush1.msra.mxu0 %v5309
    %5464 = vmatprep.subr.mxu0 %v5314
    %5465 = vmatpush1.msra.mxu0 %v5313
    %5466 = vmatprep.subr.mxu0 %v5318
    %5467 = vmatpush1.msra.mxu0 %v5317
    %5468 = vmatprep.mubr.f32.mxu0 %v5187
    %5469 = vmatmul.mubr.f32.gmra.mrb[0].mxu0 %v5185
    %v5470 = vpop.f32.mrb[0].mxu0
    %v5471 = vadd.f32 %v5321, %v5470
    %v5472 = vpop.f32.mrb[0].mxu0
    %v5473 = vadd.f32 %v5322, %v5472
    %5474 = vmatprep.mubr.f32.mxu0 %v5188
    %5475 = vmatmul.mubr.f32.gmra.mrb[0].mxu0 %v5186
    %v5476 = vpop.f32.mrb[0].mxu0
    %v5477 = vadd.f32 %v5325, %v5476
    %v5478 = vpop.f32.mrb[0].mxu0
    %v5479 = vadd.f32 %v5326, %v5478
    %5480 = vdwg.mxu0
    %v5481 = vadd.f32 %v5394, %v4479
    %v5482 = vadd.f32 %v5396, %v4480
    %v5483 = vadd.f32 %v5471, %v4481
    %v5484 = vadd.f32 %v5473, %v4482
    %v5485 = vadd.f32 %v5400, %v4483
    %v5486 = vadd.f32 %v5402, %v4484
    %v5487 = vadd.f32 %v5477, %v4485
    %v5488 = vadd.f32 %v5479, %v4486
    %v5489 = vxor.u32 %v5481, 2147483648
    %v5490 = vxor.u32 %v5485, 2147483648
    %v5491 = vmul.f32 %v5489, 1.442695
    %v5492 = vpow.pop %v5491
    %v5493 = vmul.f32 %v5490, 1.442695
    %v5494 = vpow.pop %v5493
    %v5495 = vadd.f32 %v5492, 1.0
    %v5496 = vadd.f32 %v5494, 1.0
    %v5497 = vrcp.pop %v5495
    %v5498 = vmul.f32 1.0, %v5497
    %v5499 = vrcp.pop %v5496
    %v5500 = vmul.f32 1.0, %v5499
    %v5501 = vxor.u32 %v5482, 2147483648
    %v5502 = vxor.u32 %v5486, 2147483648
    %v5503 = vmul.f32 %v5501, 1.442695
    %v5504 = vpow.pop %v5503
    %v5505 = vmul.f32 %v5502, 1.442695
    %v5506 = vpow.pop %v5505
    %v5507 = vadd.f32 %v5504, 1.0
    %v5508 = vadd.f32 %v5506, 1.0
    %v5509 = vrcp.pop %v5507
    %v5510 = vmul.f32 1.0, %v5509
    %v5511 = vrcp.pop %v5508
    %v5512 = vmul.f32 1.0, %v5511
    %v5513 = vtanh.pop %v5483
    %v5514 = vtanh.pop %v5487
    %v5515 = vxor.u32 %v5484, 2147483648
    %v5516 = vxor.u32 %v5488, 2147483648
    %v5517 = vmul.f32 %v5515, 1.442695
    %v5518 = vpow.pop %v5517
    %v5519 = vmul.f32 %v5516, 1.442695
    %v5520 = vpow.pop %v5519
    %v5521 = vadd.f32 %v5518, 1.0
    %v5522 = vadd.f32 %v5520, 1.0
    %v5523 = vrcp.pop %v5521
    %v5524 = vmul.f32 1.0, %v5523
    %v5525 = vrcp.pop %v5522
    %v5526 = vmul.f32 1.0, %v5525
    %v5527 = vmul.f32 %v5510, %v5179
    %v5528 = vmul.f32 %v5512, %v5180
    %v5529 = vmul.f32 %v5498, %v5513
    %v5530 = vmul.f32 %v5500, %v5514
    %v5531 = vadd.f32 %v5527, %v5529
    %v5532 = vadd.f32 %v5528, %v5530
    %v5533 = vtanh.pop %v5531
    %v5534 = vtanh.pop %v5532
    %v5535 = vmul.f32 %v5524, %v5533
    %v5536 = vmul.f32 %v5526, %v5534
    %v5537 = vmul.f32 %v5535, %v92
    %v5538 = vmul.f32 %v5536, %v93
    %v5539 = vmul.f32 %v5535, %v94
    %v5540 = vmul.f32 %v5536, %v95
    %5541 = vst [vmem:[#allocation4 + $0x20] sm:$0xff] %v5535
    %5542 = vst [vmem:[#allocation4 + $0x58] sm:$0xff] %v5536
    %v5543 = vld [vmem:[#allocation9] sm:$0xff]
    %v5544 = vld [vmem:[#allocation9 + $0x8] sm:$0xff]
    %v5545 = vld [vmem:[#allocation9 + $0x10] sm:$0xff]
    %v5546 = vld [vmem:[#allocation9 + $0x18] sm:$0xff]
    %v5547 = vld [vmem:[#allocation9 + $0x20] sm:$0xff]
    %v5548 = vld [vmem:[#allocation9 + $0x28] sm:$0xff]
    %v5549 = vld [vmem:[#allocation9 + $0x30] sm:$0xff]
    %v5550 = vld [vmem:[#allocation9 + $0x38] sm:$0xff]
    %v5551 = vld [vmem:[#allocation9 + $0x40] sm:$0xff]
    %v5552 = vld [vmem:[#allocation9 + $0x48] sm:$0xff]
    %v5553 = vld [vmem:[#allocation9 + $0x50] sm:$0xff]
    %v5554 = vld [vmem:[#allocation9 + $0x58] sm:$0xff]
    %v5555 = vld [vmem:[#allocation9 + $0x60] sm:$0xff]
    %v5556 = vld [vmem:[#allocation9 + $0x68] sm:$0xff]
    %v5557 = vld [vmem:[#allocation9 + $0x70] sm:$0xff]
    %v5558 = vld [vmem:[#allocation9 + $0x78] sm:$0xff]
    %v5559 = vld [vmem:[#allocation9 + $0x80] sm:$0xff]
    %v5560 = vld [vmem:[#allocation9 + $0x88] sm:$0xff]
    %v5561 = vld [vmem:[#allocation9 + $0x90] sm:$0xff]
    %v5562 = vld [vmem:[#allocation9 + $0x98] sm:$0xff]
    %v5563 = vld [vmem:[#allocation9 + $0xa0] sm:$0xff]
    %v5564 = vld [vmem:[#allocation9 + $0xa8] sm:$0xff]
    %v5565 = vld [vmem:[#allocation9 + $0xb0] sm:$0xff]
    %v5566 = vld [vmem:[#allocation9 + $0xb8] sm:$0xff]
    %v5567 = vld [vmem:[#allocation9 + $0xc0] sm:$0xff]
    %v5568 = vld [vmem:[#allocation9 + $0xc8] sm:$0xff]
    %v5569 = vld [vmem:[#allocation9 + $0xd0] sm:$0xff]
    %v5570 = vld [vmem:[#allocation9 + $0xd8] sm:$0xff]
    %v5571 = vld [vmem:[#allocation9 + $0xe0] sm:$0xff]
    %v5572 = vld [vmem:[#allocation9 + $0xe8] sm:$0xff]
    %v5573 = vld [vmem:[#allocation9 + $0xf0] sm:$0xff]
    %v5574 = vld [vmem:[#allocation9 + $0xf8] sm:$0xff]
    %v5575 = vld [vmem:[#allocation9 + $0x100] sm:$0xff]
    %v5576 = vld [vmem:[#allocation9 + $0x108] sm:$0xff]
    %v5577 = vld [vmem:[#allocation9 + $0x110] sm:$0xff]
    %v5578 = vld [vmem:[#allocation9 + $0x118] sm:$0xff]
    %v5579 = vld [vmem:[#allocation9 + $0x120] sm:$0xff]
    %v5580 = vld [vmem:[#allocation9 + $0x128] sm:$0xff]
    %v5581 = vld [vmem:[#allocation9 + $0x130] sm:$0xff]
    %v5582 = vld [vmem:[#allocation9 + $0x138] sm:$0xff]
    %v5583 = vld [vmem:[#allocation9 + $0x140] sm:$0xff]
    %v5584 = vld [vmem:[#allocation9 + $0x148] sm:$0xff]
    %v5585 = vld [vmem:[#allocation9 + $0x150] sm:$0xff]
    %v5586 = vld [vmem:[#allocation9 + $0x158] sm:$0xff]
    %v5587 = vld [vmem:[#allocation9 + $0x160] sm:$0xff]
    %v5588 = vld [vmem:[#allocation9 + $0x168] sm:$0xff]
    %v5589 = vld [vmem:[#allocation9 + $0x170] sm:$0xff]
    %v5590 = vld [vmem:[#allocation9 + $0x178] sm:$0xff]
    %v5591 = vld [vmem:[#allocation9 + $0x180] sm:$0xff]
    %v5592 = vld [vmem:[#allocation9 + $0x188] sm:$0xff]
    %v5593 = vld [vmem:[#allocation9 + $0x190] sm:$0xff]
    %v5594 = vld [vmem:[#allocation9 + $0x198] sm:$0xff]
    %v5595 = vld [vmem:[#allocation9 + $0x1a0] sm:$0xff]
    %v5596 = vld [vmem:[#allocation9 + $0x1a8] sm:$0xff]
    %v5597 = vld [vmem:[#allocation9 + $0x1b0] sm:$0xff]
    %v5598 = vld [vmem:[#allocation9 + $0x1b8] sm:$0xff]
    %v5599 = vld [vmem:[#allocation9 + $0x1c0] sm:$0xff]
    %v5600 = vld [vmem:[#allocation9 + $0x1c8] sm:$0xff]
    %v5601 = vld [vmem:[#allocation9 + $0x1d0] sm:$0xff]
    %v5602 = vld [vmem:[#allocation9 + $0x1d8] sm:$0xff]
    %v5603 = vld [vmem:[#allocation9 + $0x1e0] sm:$0xff]
    %v5604 = vld [vmem:[#allocation9 + $0x1e8] sm:$0xff]
    %v5605 = vld [vmem:[#allocation9 + $0x1f0] sm:$0xff]
    %v5606 = vld [vmem:[#allocation9 + $0x1f8] sm:$0xff]
    %v5607 = vld [vmem:[#allocation9 + $0x200] sm:$0xff]
    %v5608 = vld [vmem:[#allocation9 + $0x208] sm:$0xff]
    %v5609 = vld [vmem:[#allocation9 + $0x210] sm:$0xff]
    %v5610 = vld [vmem:[#allocation9 + $0x218] sm:$0xff]
    %v5611 = vld [vmem:[#allocation9 + $0x220] sm:$0xff]
    %v5612 = vld [vmem:[#allocation9 + $0x228] sm:$0xff]
    %v5613 = vld [vmem:[#allocation9 + $0x230] sm:$0xff]
    %v5614 = vld [vmem:[#allocation9 + $0x238] sm:$0xff]
    %v5615 = vld [vmem:[#allocation9 + $0x240] sm:$0xff]
    %v5616 = vld [vmem:[#allocation9 + $0x248] sm:$0xff]
    %v5617 = vld [vmem:[#allocation9 + $0x250] sm:$0xff]
    %v5618 = vld [vmem:[#allocation9 + $0x258] sm:$0xff]
    %v5619 = vld [vmem:[#allocation9 + $0x260] sm:$0xff]
    %v5620 = vld [vmem:[#allocation9 + $0x268] sm:$0xff]
    %v5621 = vld [vmem:[#allocation9 + $0x270] sm:$0xff]
    %v5622 = vld [vmem:[#allocation9 + $0x278] sm:$0xff]
    %v5623 = vld [vmem:[#allocation9 + $0x280] sm:$0xff]
    %v5624 = vld [vmem:[#allocation9 + $0x288] sm:$0xff]
    %v5625 = vld [vmem:[#allocation9 + $0x290] sm:$0xff]
    %v5626 = vld [vmem:[#allocation9 + $0x298] sm:$0xff]
    %v5627 = vld [vmem:[#allocation9 + $0x2a0] sm:$0xff]
    %v5628 = vld [vmem:[#allocation9 + $0x2a8] sm:$0xff]
    %v5629 = vld [vmem:[#allocation9 + $0x2b0] sm:$0xff]
    %v5630 = vld [vmem:[#allocation9 + $0x2b8] sm:$0xff]
    %v5631 = vld [vmem:[#allocation9 + $0x2c0] sm:$0xff]
    %v5632 = vld [vmem:[#allocation9 + $0x2c8] sm:$0xff]
    %v5633 = vld [vmem:[#allocation9 + $0x2d0] sm:$0xff]
    %v5634 = vld [vmem:[#allocation9 + $0x2d8] sm:$0xff]
    %v5635 = vld [vmem:[#allocation9 + $0x2e0] sm:$0xff]
    %v5636 = vld [vmem:[#allocation9 + $0x2e8] sm:$0xff]
    %v5637 = vld [vmem:[#allocation9 + $0x2f0] sm:$0xff]
    %v5638 = vld [vmem:[#allocation9 + $0x2f8] sm:$0xff]
    %v5639 = vld [vmem:[#allocation9 + $0x300] sm:$0xff]
    %v5640 = vld [vmem:[#allocation9 + $0x308] sm:$0xff]
    %v5641 = vld [vmem:[#allocation9 + $0x310] sm:$0xff]
    %v5642 = vld [vmem:[#allocation9 + $0x318] sm:$0xff]
    %v5643 = vld [vmem:[#allocation9 + $0x320] sm:$0xff]
    %v5644 = vld [vmem:[#allocation9 + $0x328] sm:$0xff]
    %v5645 = vld [vmem:[#allocation9 + $0x330] sm:$0xff]
    %v5646 = vld [vmem:[#allocation9 + $0x338] sm:$0xff]
    %v5647 = vld [vmem:[#allocation9 + $0x340] sm:$0xff]
    %v5648 = vld [vmem:[#allocation9 + $0x348] sm:$0xff]
    %v5649 = vld [vmem:[#allocation9 + $0x350] sm:$0xff]
    %v5650 = vld [vmem:[#allocation9 + $0x358] sm:$0xff]
    %v5651 = vld [vmem:[#allocation9 + $0x360] sm:$0xff]
    %v5652 = vld [vmem:[#allocation9 + $0x368] sm:$0xff]
    %v5653 = vld [vmem:[#allocation9 + $0x370] sm:$0xff]
    %v5654 = vld [vmem:[#allocation9 + $0x378] sm:$0xff]
    %v5655 = vld [vmem:[#allocation9 + $0x380] sm:$0xff]
    %v5656 = vld [vmem:[#allocation9 + $0x388] sm:$0xff]
    %v5657 = vld [vmem:[#allocation9 + $0x390] sm:$0xff]
    %v5658 = vld [vmem:[#allocation9 + $0x398] sm:$0xff]
    %v5659 = vld [vmem:[#allocation9 + $0x3a0] sm:$0xff]
    %v5660 = vld [vmem:[#allocation9 + $0x3a8] sm:$0xff]
    %v5661 = vld [vmem:[#allocation9 + $0x3b0] sm:$0xff]
    %v5662 = vld [vmem:[#allocation9 + $0x3b8] sm:$0xff]
    %v5663 = vld [vmem:[#allocation9 + $0x3c0] sm:$0xff]
    %v5664 = vld [vmem:[#allocation9 + $0x3c8] sm:$0xff]
    %v5665 = vld [vmem:[#allocation9 + $0x3d0] sm:$0xff]
    %v5666 = vld [vmem:[#allocation9 + $0x3d8] sm:$0xff]
    %v5667 = vld [vmem:[#allocation9 + $0x3e0] sm:$0xff]
    %v5668 = vld [vmem:[#allocation9 + $0x3e8] sm:$0xff]
    %v5669 = vld [vmem:[#allocation9 + $0x3f0] sm:$0xff]
    %v5670 = vld [vmem:[#allocation9 + $0x3f8] sm:$0xff]
    %v5671 = vld [vmem:[#allocation2 + $0xc0] sm:$0xff]
    %v5672 = vld [vmem:[#allocation2 + $0xc8] sm:$0xff]
    %v5673 = vld [vmem:[#allocation2 + $0xd0] sm:$0xff]
    %v5674 = vld [vmem:[#allocation2 + $0xd8] sm:$0xff]
    %v5675 = vld [vmem:[#allocation2 + $0xe0] sm:$0xff]
    %v5676 = vld [vmem:[#allocation2 + $0xe8] sm:$0xff]
    %v5677 = vld [vmem:[#allocation2 + $0xf0] sm:$0xff]
    %v5678 = vld [vmem:[#allocation2 + $0xf8] sm:$0xff]
    %5679 = vmatprep.subr.mxu0 %v5544
    %5680 = vmatpush1.msra.mxu0 %v5543
    %5681 = vmatprep.subr.mxu0 %v5548
    %5682 = vmatpush1.msra.mxu0 %v5547
    %5683 = vmatprep.subr.mxu0 %v5552
    %5684 = vmatpush1.msra.mxu0 %v5551
    %5685 = vmatprep.subr.mxu0 %v5556
    %5686 = vmatpush1.msra.mxu0 %v5555
    %5687 = vmatprep.subr.mxu0 %v5560
    %5688 = vmatpush1.msra.mxu0 %v5559
    %5689 = vmatprep.subr.mxu0 %v5564
    %5690 = vmatpush1.msra.mxu0 %v5563
    %5691 = vmatprep.subr.mxu0 %v5568
    %5692 = vmatpush1.msra.mxu0 %v5567
    %5693 = vmatprep.subr.mxu0 %v5572
    %5694 = vmatpush1.msra.mxu0 %v5571
    %5695 = vmatprep.subr.mxu0 %v5576
    %5696 = vmatpush1.msra.mxu0 %v5575
    %5697 = vmatprep.subr.mxu0 %v5580
    %5698 = vmatpush1.msra.mxu0 %v5579
    %5699 = vmatprep.subr.mxu0 %v5584
    %5700 = vmatpush1.msra.mxu0 %v5583
    %5701 = vmatprep.subr.mxu0 %v5588
    %5702 = vmatpush1.msra.mxu0 %v5587
    %5703 = vmatprep.subr.mxu0 %v5592
    %5704 = vmatpush1.msra.mxu0 %v5591
    %5705 = vmatprep.subr.mxu0 %v5596
    %5706 = vmatpush1.msra.mxu0 %v5595
    %5707 = vmatprep.subr.mxu0 %v5600
    %5708 = vmatpush1.msra.mxu0 %v5599
    %5709 = vmatprep.subr.mxu0 %v5604
    %5710 = vmatpush1.msra.mxu0 %v5603
    %5711 = vmatprep.subr.mxu0 %v5608
    %5712 = vmatpush1.msra.mxu0 %v5607
    %5713 = vmatprep.subr.mxu0 %v5612
    %5714 = vmatpush1.msra.mxu0 %v5611
    %5715 = vmatprep.subr.mxu0 %v5616
    %5716 = vmatpush1.msra.mxu0 %v5615
    %5717 = vmatprep.subr.mxu0 %v5620
    %5718 = vmatpush1.msra.mxu0 %v5619
    %5719 = vmatprep.subr.mxu0 %v5624
    %5720 = vmatpush1.msra.mxu0 %v5623
    %5721 = vmatprep.subr.mxu0 %v5628
    %5722 = vmatpush1.msra.mxu0 %v5627
    %5723 = vmatprep.subr.mxu0 %v5632
    %5724 = vmatpush1.msra.mxu0 %v5631
    %5725 = vmatprep.subr.mxu0 %v5636
    %5726 = vmatpush1.msra.mxu0 %v5635
    %5727 = vmatprep.subr.mxu0 %v5640
    %5728 = vmatpush1.msra.mxu0 %v5639
    %5729 = vmatprep.subr.mxu0 %v5644
    %5730 = vmatpush1.msra.mxu0 %v5643
    %5731 = vmatprep.subr.mxu0 %v5648
    %5732 = vmatpush1.msra.mxu0 %v5647
    %5733 = vmatprep.subr.mxu0 %v5652
    %5734 = vmatpush1.msra.mxu0 %v5651
    %5735 = vmatprep.subr.mxu0 %v5656
    %5736 = vmatpush1.msra.mxu0 %v5655
    %5737 = vmatprep.subr.mxu0 %v5660
    %5738 = vmatpush1.msra.mxu0 %v5659
    %5739 = vmatprep.subr.mxu0 %v5664
    %5740 = vmatpush1.msra.mxu0 %v5663
    %5741 = vmatprep.subr.mxu0 %v5668
    %5742 = vmatpush1.msra.mxu0 %v5667
    %5743 = vmatprep.mubr.f32.mxu0 %v5539
    %5744 = vmatmul.mubr.f32.gmra.mrb[0].mxu0 %v5537
    %v5745 = vpop.f32.mrb[0].mxu0
    %v5746 = vadd.f32 %v5671, %v5745
    %v5747 = vpop.f32.mrb[0].mxu0
    %v5748 = vadd.f32 %v5672, %v5747
    %5749 = vmatprep.mubr.f32.mxu0 %v5540
    %5750 = vmatmul.mubr.f32.gmra.mrb[0].mxu0 %v5538
    %v5751 = vpop.f32.mrb[0].mxu0
    %v5752 = vadd.f32 %v5675, %v5751
    %v5753 = vpop.f32.mrb[0].mxu0
    %v5754 = vadd.f32 %v5676, %v5753
    %5755 = vdwg.mxu0
    %5756 = vmatprep.subr.mxu0 %v5546
    %5757 = vmatpush1.msra.mxu0 %v5545
    %5758 = vmatprep.subr.mxu0 %v5550
    %5759 = vmatpush1.msra.mxu0 %v5549
    %5760 = vmatprep.subr.mxu0 %v5554
    %5761 = vmatpush1.msra.mxu0 %v5553
    %5762 = vmatprep.subr.mxu0 %v5558
    %5763 = vmatpush1.msra.mxu0 %v5557
    %5764 = vmatprep.subr.mxu0 %v5562
    %5765 = vmatpush1.msra.mxu0 %v5561
    %5766 = vmatprep.subr.mxu0 %v5566
    %5767 = vmatpush1.msra.mxu0 %v5565
    %5768 = vmatprep.subr.mxu0 %v5570
    %5769 = vmatpush1.msra.mxu0 %v5569
    %5770 = vmatprep.subr.mxu0 %v5574
    %5771 = vmatpush1.msra.mxu0 %v5573
    %5772 = vmatprep.subr.mxu0 %v5578
    %5773 = vmatpush1.msra.mxu0 %v5577
    %5774 = vmatprep.subr.mxu0 %v5582
    %5775 = vmatpush1.msra.mxu0 %v5581
    %5776 = vmatprep.subr.mxu0 %v5586
    %5777 = vmatpush1.msra.mxu0 %v5585
    %5778 = vmatprep.subr.mxu0 %v5590
    %5779 = vmatpush1.msra.mxu0 %v5589
    %5780 = vmatprep.subr.mxu0 %v5594
    %5781 = vmatpush1.msra.mxu0 %v5593
    %5782 = vmatprep.subr.mxu0 %v5598
    %5783 = vmatpush1.msra.mxu0 %v5597
    %5784 = vmatprep.subr.mxu0 %v5602
    %5785 = vmatpush1.msra.mxu0 %v5601
    %5786 = vmatprep.subr.mxu0 %v5606
    %5787 = vmatpush1.msra.mxu0 %v5605
    %5788 = vmatprep.subr.mxu0 %v5610
    %5789 = vmatpush1.msra.mxu0 %v5609
    %5790 = vmatprep.subr.mxu0 %v5614
    %5791 = vmatpush1.msra.mxu0 %v5613
    %5792 = vmatprep.subr.mxu0 %v5618
    %5793 = vmatpush1.msra.mxu0 %v5617
    %5794 = vmatprep.subr.mxu0 %v5622
    %5795 = vmatpush1.msra.mxu0 %v5621
    %5796 = vmatprep.subr.mxu0 %v5626
    %5797 = vmatpush1.msra.mxu0 %v5625
    %5798 = vmatprep.subr.mxu0 %v5630
    %5799 = vmatpush1.msra.mxu0 %v5629
    %5800 = vmatprep.subr.mxu0 %v5634
    %5801 = vmatpush1.msra.mxu0 %v5633
    %5802 = vmatprep.subr.mxu0 %v5638
    %5803 = vmatpush1.msra.mxu0 %v5637
    %5804 = vmatprep.subr.mxu0 %v5642
    %5805 = vmatpush1.msra.mxu0 %v5641
    %5806 = vmatprep.subr.mxu0 %v5646
    %5807 = vmatpush1.msra.mxu0 %v5645
    %5808 = vmatprep.subr.mxu0 %v5650
    %5809 = vmatpush1.msra.mxu0 %v5649
    %5810 = vmatprep.subr.mxu0 %v5654
    %5811 = vmatpush1.msra.mxu0 %v5653
    %5812 = vmatprep.subr.mxu0 %v5658
    %5813 = vmatpush1.msra.mxu0 %v5657
    %5814 = vmatprep.subr.mxu0 %v5662
    %5815 = vmatpush1.msra.mxu0 %v5661
    %5816 = vmatprep.subr.mxu0 %v5666
    %5817 = vmatpush1.msra.mxu0 %v5665
    %5818 = vmatprep.subr.mxu0 %v5670
    %5819 = vmatpush1.msra.mxu0 %v5669
    %5820 = vmatprep.mubr.f32.mxu0 %v5539
    %5821 = vmatmul.mubr.f32.gmra.mrb[0].mxu0 %v5537
    %v5822 = vpop.f32.mrb[0].mxu0
    %v5823 = vadd.f32 %v5673, %v5822
    %v5824 = vpop.f32.mrb[0].mxu0
    %v5825 = vadd.f32 %v5674, %v5824
    %5826 = vmatprep.mubr.f32.mxu0 %v5540
    %5827 = vmatmul.mubr.f32.gmra.mrb[0].mxu0 %v5538
    %v5828 = vpop.f32.mrb[0].mxu0
    %v5829 = vadd.f32 %v5677, %v5828
    %v5830 = vpop.f32.mrb[0].mxu0
    %v5831 = vadd.f32 %v5678, %v5830
    %5832 = vdwg.mxu0
    %v5833 = vadd.f32 %v5746, %v4479
    %v5834 = vadd.f32 %v5748, %v4480
    %v5835 = vadd.f32 %v5823, %v4481
    %v5836 = vadd.f32 %v5825, %v4482
    %v5837 = vadd.f32 %v5752, %v4483
    %v5838 = vadd.f32 %v5754, %v4484
    %v5839 = vadd.f32 %v5829, %v4485
    %v5840 = vadd.f32 %v5831, %v4486
    %v5841 = vxor.u32 %v5833, 2147483648
    %v5842 = vxor.u32 %v5837, 2147483648
    %v5843 = vmul.f32 %v5841, 1.442695
    %v5844 = vpow.pop %v5843
    %v5845 = vmul.f32 %v5842, 1.442695
    %v5846 = vpow.pop %v5845
    %v5847 = vadd.f32 %v5844, 1.0
    %v5848 = vadd.f32 %v5846, 1.0
    %v5849 = vrcp.pop %v5847
    %v5850 = vmul.f32 1.0, %v5849
    %v5851 = vrcp.pop %v5848
    %v5852 = vmul.f32 1.0, %v5851
    %v5853 = vxor.u32 %v5834, 2147483648
    %v5854 = vxor.u32 %v5838, 2147483648
    %v5855 = vmul.f32 %v5853, 1.442695
    %v5856 = vpow.pop %v5855
    %v5857 = vmul.f32 %v5854, 1.442695
    %v5858 = vpow.pop %v5857
    %v5859 = vadd.f32 %v5856, 1.0
    %v5860 = vadd.f32 %v5858, 1.0
    %v5861 = vrcp.pop %v5859
    %v5862 = vmul.f32 1.0, %v5861
    %v5863 = vrcp.pop %v5860
    %v5864 = vmul.f32 1.0, %v5863
    %v5865 = vtanh.pop %v5835
    %v5866 = vtanh.pop %v5839
    %v5867 = vxor.u32 %v5836, 2147483648
    %v5868 = vxor.u32 %v5840, 2147483648
    %v5869 = vmul.f32 %v5867, 1.442695
    %v5870 = vpow.pop %v5869
    %v5871 = vmul.f32 %v5868, 1.442695
    %v5872 = vpow.pop %v5871
    %v5873 = vadd.f32 %v5870, 1.0
    %v5874 = vadd.f32 %v5872, 1.0
    %v5875 = vrcp.pop %v5873
    %v5876 = vmul.f32 1.0, %v5875
    %v5877 = vrcp.pop %v5874
    %v5878 = vmul.f32 1.0, %v5877
    %v5879 = vmul.f32 %v5862, %v5531
    %v5880 = vmul.f32 %v5864, %v5532
    %v5881 = vmul.f32 %v5850, %v5865
    %v5882 = vmul.f32 %v5852, %v5866
    %v5883 = vadd.f32 %v5879, %v5881
    %v5884 = vadd.f32 %v5880, %v5882
    %v5885 = vtanh.pop %v5883
    %v5886 = vtanh.pop %v5884
    %v5887 = vmul.f32 %v5876, %v5885
    %v5888 = vmul.f32 %v5878, %v5886
    %v5889 = vmul.f32 %v5887, %v92
    %v5890 = vmul.f32 %v5888, %v93
    %v5891 = vmul.f32 %v5887, %v94
    %v5892 = vmul.f32 %v5888, %v95
    %5893 = vst [vmem:[#allocation4 + $0x30] sm:$0xff] %v5887
    %5894 = vst [vmem:[#allocation4 + $0x48] sm:$0xff] %v5888
    %v5895 = vld [vmem:[#allocation9] sm:$0xff]
    %v5896 = vld [vmem:[#allocation9 + $0x8] sm:$0xff]
    %v5897 = vld [vmem:[#allocation9 + $0x10] sm:$0xff]
    %v5898 = vld [vmem:[#allocation9 + $0x18] sm:$0xff]
    %v5899 = vld [vmem:[#allocation9 + $0x20] sm:$0xff]
    %v5900 = vld [vmem:[#allocation9 + $0x28] sm:$0xff]
    %v5901 = vld [vmem:[#allocation9 + $0x30] sm:$0xff]
    %v5902 = vld [vmem:[#allocation9 + $0x38] sm:$0xff]
    %v5903 = vld [vmem:[#allocation9 + $0x40] sm:$0xff]
    %v5904 = vld [vmem:[#allocation9 + $0x48] sm:$0xff]
    %v5905 = vld [vmem:[#allocation9 + $0x50] sm:$0xff]
    %v5906 = vld [vmem:[#allocation9 + $0x58] sm:$0xff]
    %v5907 = vld [vmem:[#allocation9 + $0x60] sm:$0xff]
    %v5908 = vld [vmem:[#allocation9 + $0x68] sm:$0xff]
    %v5909 = vld [vmem:[#allocation9 + $0x70] sm:$0xff]
    %v5910 = vld [vmem:[#allocation9 + $0x78] sm:$0xff]
    %v5911 = vld [vmem:[#allocation9 + $0x80] sm:$0xff]
    %v5912 = vld [vmem:[#allocation9 + $0x88] sm:$0xff]
    %v5913 = vld [vmem:[#allocation9 + $0x90] sm:$0xff]
    %v5914 = vld [vmem:[#allocation9 + $0x98] sm:$0xff]
    %v5915 = vld [vmem:[#allocation9 + $0xa0] sm:$0xff]
    %v5916 = vld [vmem:[#allocation9 + $0xa8] sm:$0xff]
    %v5917 = vld [vmem:[#allocation9 + $0xb0] sm:$0xff]
    %v5918 = vld [vmem:[#allocation9 + $0xb8] sm:$0xff]
    %v5919 = vld [vmem:[#allocation9 + $0xc0] sm:$0xff]
    %v5920 = vld [vmem:[#allocation9 + $0xc8] sm:$0xff]
    %v5921 = vld [vmem:[#allocation9 + $0xd0] sm:$0xff]
    %v5922 = vld [vmem:[#allocation9 + $0xd8] sm:$0xff]
    %v5923 = vld [vmem:[#allocation9 + $0xe0] sm:$0xff]
    %v5924 = vld [vmem:[#allocation9 + $0xe8] sm:$0xff]
    %v5925 = vld [vmem:[#allocation9 + $0xf0] sm:$0xff]
    %v5926 = vld [vmem:[#allocation9 + $0xf8] sm:$0xff]
    %v5927 = vld [vmem:[#allocation9 + $0x100] sm:$0xff]
    %v5928 = vld [vmem:[#allocation9 + $0x108] sm:$0xff]
    %v5929 = vld [vmem:[#allocation9 + $0x110] sm:$0xff]
    %v5930 = vld [vmem:[#allocation9 + $0x118] sm:$0xff]
    %v5931 = vld [vmem:[#allocation9 + $0x120] sm:$0xff]
    %v5932 = vld [vmem:[#allocation9 + $0x128] sm:$0xff]
    %v5933 = vld [vmem:[#allocation9 + $0x130] sm:$0xff]
    %v5934 = vld [vmem:[#allocation9 + $0x138] sm:$0xff]
    %v5935 = vld [vmem:[#allocation9 + $0x140] sm:$0xff]
    %v5936 = vld [vmem:[#allocation9 + $0x148] sm:$0xff]
    %v5937 = vld [vmem:[#allocation9 + $0x150] sm:$0xff]
    %v5938 = vld [vmem:[#allocation9 + $0x158] sm:$0xff]
    %v5939 = vld [vmem:[#allocation9 + $0x160] sm:$0xff]
    %v5940 = vld [vmem:[#allocation9 + $0x168] sm:$0xff]
    %v5941 = vld [vmem:[#allocation9 + $0x170] sm:$0xff]
    %v5942 = vld [vmem:[#allocation9 + $0x178] sm:$0xff]
    %v5943 = vld [vmem:[#allocation9 + $0x180] sm:$0xff]
    %v5944 = vld [vmem:[#allocation9 + $0x188] sm:$0xff]
    %v5945 = vld [vmem:[#allocation9 + $0x190] sm:$0xff]
    %v5946 = vld [vmem:[#allocation9 + $0x198] sm:$0xff]
    %v5947 = vld [vmem:[#allocation9 + $0x1a0] sm:$0xff]
    %v5948 = vld [vmem:[#allocation9 + $0x1a8] sm:$0xff]
    %v5949 = vld [vmem:[#allocation9 + $0x1b0] sm:$0xff]
    %v5950 = vld [vmem:[#allocation9 + $0x1b8] sm:$0xff]
    %v5951 = vld [vmem:[#allocation9 + $0x1c0] sm:$0xff]
    %v5952 = vld [vmem:[#allocation9 + $0x1c8] sm:$0xff]
    %v5953 = vld [vmem:[#allocation9 + $0x1d0] sm:$0xff]
    %v5954 = vld [vmem:[#allocation9 + $0x1d8] sm:$0xff]
    %v5955 = vld [vmem:[#allocation9 + $0x1e0] sm:$0xff]
    %v5956 = vld [vmem:[#allocation9 + $0x1e8] sm:$0xff]
    %v5957 = vld [vmem:[#allocation9 + $0x1f0] sm:$0xff]
    %v5958 = vld [vmem:[#allocation9 + $0x1f8] sm:$0xff]
    %v5959 = vld [vmem:[#allocation9 + $0x200] sm:$0xff]
    %v5960 = vld [vmem:[#allocation9 + $0x208] sm:$0xff]
    %v5961 = vld [vmem:[#allocation9 + $0x210] sm:$0xff]
    %v5962 = vld [vmem:[#allocation9 + $0x218] sm:$0xff]
    %v5963 = vld [vmem:[#allocation9 + $0x220] sm:$0xff]
    %v5964 = vld [vmem:[#allocation9 + $0x228] sm:$0xff]
    %v5965 = vld [vmem:[#allocation9 + $0x230] sm:$0xff]
    %v5966 = vld [vmem:[#allocation9 + $0x238] sm:$0xff]
    %v5967 = vld [vmem:[#allocation9 + $0x240] sm:$0xff]
    %v5968 = vld [vmem:[#allocation9 + $0x248] sm:$0xff]
    %v5969 = vld [vmem:[#allocation9 + $0x250] sm:$0xff]
    %v5970 = vld [vmem:[#allocation9 + $0x258] sm:$0xff]
    %v5971 = vld [vmem:[#allocation9 + $0x260] sm:$0xff]
    %v5972 = vld [vmem:[#allocation9 + $0x268] sm:$0xff]
    %v5973 = vld [vmem:[#allocation9 + $0x270] sm:$0xff]
    %v5974 = vld [vmem:[#allocation9 + $0x278] sm:$0xff]
    %v5975 = vld [vmem:[#allocation9 + $0x280] sm:$0xff]
    %v5976 = vld [vmem:[#allocation9 + $0x288] sm:$0xff]
    %v5977 = vld [vmem:[#allocation9 + $0x290] sm:$0xff]
    %v5978 = vld [vmem:[#allocation9 + $0x298] sm:$0xff]
    %v5979 = vld [vmem:[#allocation9 + $0x2a0] sm:$0xff]
    %v5980 = vld [vmem:[#allocation9 + $0x2a8] sm:$0xff]
    %v5981 = vld [vmem:[#allocation9 + $0x2b0] sm:$0xff]
    %v5982 = vld [vmem:[#allocation9 + $0x2b8] sm:$0xff]
    %v5983 = vld [vmem:[#allocation9 + $0x2c0] sm:$0xff]
    %v5984 = vld [vmem:[#allocation9 + $0x2c8] sm:$0xff]
    %v5985 = vld [vmem:[#allocation9 + $0x2d0] sm:$0xff]
    %v5986 = vld [vmem:[#allocation9 + $0x2d8] sm:$0xff]
    %v5987 = vld [vmem:[#allocation9 + $0x2e0] sm:$0xff]
    %v5988 = vld [vmem:[#allocation9 + $0x2e8] sm:$0xff]
    %v5989 = vld [vmem:[#allocation9 + $0x2f0] sm:$0xff]
    %v5990 = vld [vmem:[#allocation9 + $0x2f8] sm:$0xff]
    %v5991 = vld [vmem:[#allocation9 + $0x300] sm:$0xff]
    %v5992 = vld [vmem:[#allocation9 + $0x308] sm:$0xff]
    %v5993 = vld [vmem:[#allocation9 + $0x310] sm:$0xff]
    %v5994 = vld [vmem:[#allocation9 + $0x318] sm:$0xff]
    %v5995 = vld [vmem:[#allocation9 + $0x320] sm:$0xff]
    %v5996 = vld [vmem:[#allocation9 + $0x328] sm:$0xff]
    %v5997 = vld [vmem:[#allocation9 + $0x330] sm:$0xff]
    %v5998 = vld [vmem:[#allocation9 + $0x338] sm:$0xff]
    %v5999 = vld [vmem:[#allocation9 + $0x340] sm:$0xff]
    %v6000 = vld [vmem:[#allocation9 + $0x348] sm:$0xff]
    %v6001 = vld [vmem:[#allocation9 + $0x350] sm:$0xff]
    %v6002 = vld [vmem:[#allocation9 + $0x358] sm:$0xff]
    %v6003 = vld [vmem:[#allocation9 + $0x360] sm:$0xff]
    %v6004 = vld [vmem:[#allocation9 + $0x368] sm:$0xff]
    %v6005 = vld [vmem:[#allocation9 + $0x370] sm:$0xff]
    %v6006 = vld [vmem:[#allocation9 + $0x378] sm:$0xff]
    %v6007 = vld [vmem:[#allocation9 + $0x380] sm:$0xff]
    %v6008 = vld [vmem:[#allocation9 + $0x388] sm:$0xff]
    %v6009 = vld [vmem:[#allocation9 + $0x390] sm:$0xff]
    %v6010 = vld [vmem:[#allocation9 + $0x398] sm:$0xff]
    %v6011 = vld [vmem:[#allocation9 + $0x3a0] sm:$0xff]
    %v6012 = vld [vmem:[#allocation9 + $0x3a8] sm:$0xff]
    %v6013 = vld [vmem:[#allocation9 + $0x3b0] sm:$0xff]
    %v6014 = vld [vmem:[#allocation9 + $0x3b8] sm:$0xff]
    %v6015 = vld [vmem:[#allocation9 + $0x3c0] sm:$0xff]
    %v6016 = vld [vmem:[#allocation9 + $0x3c8] sm:$0xff]
    %v6017 = vld [vmem:[#allocation9 + $0x3d0] sm:$0xff]
    %v6018 = vld [vmem:[#allocation9 + $0x3d8] sm:$0xff]
    %v6019 = vld [vmem:[#allocation9 + $0x3e0] sm:$0xff]
    %v6020 = vld [vmem:[#allocation9 + $0x3e8] sm:$0xff]
    %v6021 = vld [vmem:[#allocation9 + $0x3f0] sm:$0xff]
    %v6022 = vld [vmem:[#allocation9 + $0x3f8] sm:$0xff]
    %v6023 = vld [vmem:[#allocation2 + $0x100] sm:$0xff]
    %v6024 = vld [vmem:[#allocation2 + $0x108] sm:$0xff]
    %v6025 = vld [vmem:[#allocation2 + $0x110] sm:$0xff]
    %v6026 = vld [vmem:[#allocation2 + $0x118] sm:$0xff]
    %v6027 = vld [vmem:[#allocation2 + $0x120] sm:$0xff]
    %v6028 = vld [vmem:[#allocation2 + $0x128] sm:$0xff]
    %v6029 = vld [vmem:[#allocation2 + $0x130] sm:$0xff]
    %v6030 = vld [vmem:[#allocation2 + $0x138] sm:$0xff]
    %6031 = vmatprep.subr.mxu0 %v5896
    %6032 = vmatpush1.msra.mxu0 %v5895
    %6033 = vmatprep.subr.mxu0 %v5900
    %6034 = vmatpush1.msra.mxu0 %v5899
    %6035 = vmatprep.subr.mxu0 %v5904
    %6036 = vmatpush1.msra.mxu0 %v5903
    %6037 = vmatprep.subr.mxu0 %v5908
    %6038 = vmatpush1.msra.mxu0 %v5907
    %6039 = vmatprep.subr.mxu0 %v5912
    %6040 = vmatpush1.msra.mxu0 %v5911
    %6041 = vmatprep.subr.mxu0 %v5916
    %6042 = vmatpush1.msra.mxu0 %v5915
    %6043 = vmatprep.subr.mxu0 %v5920
    %6044 = vmatpush1.msra.mxu0 %v5919
    %6045 = vmatprep.subr.mxu0 %v5924
    %6046 = vmatpush1.msra.mxu0 %v5923
    %6047 = vmatprep.subr.mxu0 %v5928
    %6048 = vmatpush1.msra.mxu0 %v5927
    %6049 = vmatprep.subr.mxu0 %v5932
    %6050 = vmatpush1.msra.mxu0 %v5931
    %6051 = vmatprep.subr.mxu0 %v5936
    %6052 = vmatpush1.msra.mxu0 %v5935
    %6053 = vmatprep.subr.mxu0 %v5940
    %6054 = vmatpush1.msra.mxu0 %v5939
    %6055 = vmatprep.subr.mxu0 %v5944
    %6056 = vmatpush1.msra.mxu0 %v5943
    %6057 = vmatprep.subr.mxu0 %v5948
    %6058 = vmatpush1.msra.mxu0 %v5947
    %6059 = vmatprep.subr.mxu0 %v5952
    %6060 = vmatpush1.msra.mxu0 %v5951
    %6061 = vmatprep.subr.mxu0 %v5956
    %6062 = vmatpush1.msra.mxu0 %v5955
    %6063 = vmatprep.subr.mxu0 %v5960
    %6064 = vmatpush1.msra.mxu0 %v5959
    %6065 = vmatprep.subr.mxu0 %v5964
    %6066 = vmatpush1.msra.mxu0 %v5963
    %6067 = vmatprep.subr.mxu0 %v5968
    %6068 = vmatpush1.msra.mxu0 %v5967
    %6069 = vmatprep.subr.mxu0 %v5972
    %6070 = vmatpush1.msra.mxu0 %v5971
    %6071 = vmatprep.subr.mxu0 %v5976
    %6072 = vmatpush1.msra.mxu0 %v5975
    %6073 = vmatprep.subr.mxu0 %v5980
    %6074 = vmatpush1.msra.mxu0 %v5979
    %6075 = vmatprep.subr.mxu0 %v5984
    %6076 = vmatpush1.msra.mxu0 %v5983
    %6077 = vmatprep.subr.mxu0 %v5988
    %6078 = vmatpush1.msra.mxu0 %v5987
    %6079 = vmatprep.subr.mxu0 %v5992
    %6080 = vmatpush1.msra.mxu0 %v5991
    %6081 = vmatprep.subr.mxu0 %v5996
    %6082 = vmatpush1.msra.mxu0 %v5995
    %6083 = vmatprep.subr.mxu0 %v6000
    %6084 = vmatpush1.msra.mxu0 %v5999
    %6085 = vmatprep.subr.mxu0 %v6004
    %6086 = vmatpush1.msra.mxu0 %v6003
    %6087 = vmatprep.subr.mxu0 %v6008
    %6088 = vmatpush1.msra.mxu0 %v6007
    %6089 = vmatprep.subr.mxu0 %v6012
    %6090 = vmatpush1.msra.mxu0 %v6011
    %6091 = vmatprep.subr.mxu0 %v6016
    %6092 = vmatpush1.msra.mxu0 %v6015
    %6093 = vmatprep.subr.mxu0 %v6020
    %6094 = vmatpush1.msra.mxu0 %v6019
    %6095 = vmatprep.mubr.f32.mxu0 %v5891
    %6096 = vmatmul.mubr.f32.gmra.mrb[0].mxu0 %v5889
    %v6097 = vpop.f32.mrb[0].mxu0
    %v6098 = vadd.f32 %v6023, %v6097
    %v6099 = vpop.f32.mrb[0].mxu0
    %v6100 = vadd.f32 %v6024, %v6099
    %6101 = vmatprep.mubr.f32.mxu0 %v5892
    %6102 = vmatmul.mubr.f32.gmra.mrb[0].mxu0 %v5890
    %v6103 = vpop.f32.mrb[0].mxu0
    %v6104 = vadd.f32 %v6027, %v6103
    %v6105 = vpop.f32.mrb[0].mxu0
    %v6106 = vadd.f32 %v6028, %v6105
    %6107 = vdwg.mxu0
    %6108 = vmatprep.subr.mxu0 %v5898
    %6109 = vmatpush1.msra.mxu0 %v5897
    %6110 = vmatprep.subr.mxu0 %v5902
    %6111 = vmatpush1.msra.mxu0 %v5901
    %6112 = vmatprep.subr.mxu0 %v5906
    %6113 = vmatpush1.msra.mxu0 %v5905
    %6114 = vmatprep.subr.mxu0 %v5910
    %6115 = vmatpush1.msra.mxu0 %v5909
    %6116 = vmatprep.subr.mxu0 %v5914
    %6117 = vmatpush1.msra.mxu0 %v5913
    %6118 = vmatprep.subr.mxu0 %v5918
    %6119 = vmatpush1.msra.mxu0 %v5917
    %6120 = vmatprep.subr.mxu0 %v5922
    %6121 = vmatpush1.msra.mxu0 %v5921
    %6122 = vmatprep.subr.mxu0 %v5926
    %6123 = vmatpush1.msra.mxu0 %v5925
    %6124 = vmatprep.subr.mxu0 %v5930
    %6125 = vmatpush1.msra.mxu0 %v5929
    %6126 = vmatprep.subr.mxu0 %v5934
    %6127 = vmatpush1.msra.mxu0 %v5933
    %6128 = vmatprep.subr.mxu0 %v5938
    %6129 = vmatpush1.msra.mxu0 %v5937
    %6130 = vmatprep.subr.mxu0 %v5942
    %6131 = vmatpush1.msra.mxu0 %v5941
    %6132 = vmatprep.subr.mxu0 %v5946
    %6133 = vmatpush1.msra.mxu0 %v5945
    %6134 = vmatprep.subr.mxu0 %v5950
    %6135 = vmatpush1.msra.mxu0 %v5949
    %6136 = vmatprep.subr.mxu0 %v5954
    %6137 = vmatpush1.msra.mxu0 %v5953
    %6138 = vmatprep.subr.mxu0 %v5958
    %6139 = vmatpush1.msra.mxu0 %v5957
    %6140 = vmatprep.subr.mxu0 %v5962
    %6141 = vmatpush1.msra.mxu0 %v5961
    %6142 = vmatprep.subr.mxu0 %v5966
    %6143 = vmatpush1.msra.mxu0 %v5965
    %6144 = vmatprep.subr.mxu0 %v5970
    %6145 = vmatpush1.msra.mxu0 %v5969
    %6146 = vmatprep.subr.mxu0 %v5974
    %6147 = vmatpush1.msra.mxu0 %v5973
    %6148 = vmatprep.subr.mxu0 %v5978
    %6149 = vmatpush1.msra.mxu0 %v5977
    %6150 = vmatprep.subr.mxu0 %v5982
    %6151 = vmatpush1.msra.mxu0 %v5981
    %6152 = vmatprep.subr.mxu0 %v5986
    %6153 = vmatpush1.msra.mxu0 %v5985
    %6154 = vmatprep.subr.mxu0 %v5990
    %6155 = vmatpush1.msra.mxu0 %v5989
    %6156 = vmatprep.subr.mxu0 %v5994
    %6157 = vmatpush1.msra.mxu0 %v5993
    %6158 = vmatprep.subr.mxu0 %v5998
    %6159 = vmatpush1.msra.mxu0 %v5997
    %6160 = vmatprep.subr.mxu0 %v6002
    %6161 = vmatpush1.msra.mxu0 %v6001
    %6162 = vmatprep.subr.mxu0 %v6006
    %6163 = vmatpush1.msra.mxu0 %v6005
    %6164 = vmatprep.subr.mxu0 %v6010
    %6165 = vmatpush1.msra.mxu0 %v6009
    %6166 = vmatprep.subr.mxu0 %v6014
    %6167 = vmatpush1.msra.mxu0 %v6013
    %6168 = vmatprep.subr.mxu0 %v6018
    %6169 = vmatpush1.msra.mxu0 %v6017
    %6170 = vmatprep.subr.mxu0 %v6022
    %6171 = vmatpush1.msra.mxu0 %v6021
    %6172 = vmatprep.mubr.f32.mxu0 %v5891
    %6173 = vmatmul.mubr.f32.gmra.mrb[0].mxu0 %v5889
    %v6174 = vpop.f32.mrb[0].mxu0
    %v6175 = vadd.f32 %v6025, %v6174
    %v6176 = vpop.f32.mrb[0].mxu0
    %v6177 = vadd.f32 %v6026, %v6176
    %6178 = vmatprep.mubr.f32.mxu0 %v5892
    %6179 = vmatmul.mubr.f32.gmra.mrb[0].mxu0 %v5890
    %v6180 = vpop.f32.mrb[0].mxu0
    %v6181 = vadd.f32 %v6029, %v6180
    %v6182 = vpop.f32.mrb[0].mxu0
    %v6183 = vadd.f32 %v6030, %v6182
    %6184 = vdwg.mxu0
    %v6185 = vadd.f32 %v6098, %v4479
    %v6186 = vadd.f32 %v6100, %v4480
    %v6187 = vadd.f32 %v6175, %v4481
    %v6188 = vadd.f32 %v6177, %v4482
    %v6189 = vadd.f32 %v6104, %v4483
    %v6190 = vadd.f32 %v6106, %v4484
    %v6191 = vadd.f32 %v6181, %v4485
    %v6192 = vadd.f32 %v6183, %v4486
    %v6193 = vxor.u32 %v6185, 2147483648
    %v6194 = vxor.u32 %v6189, 2147483648
    %v6195 = vmul.f32 %v6193, 1.442695
    %v6196 = vpow.pop %v6195
    %v6197 = vmul.f32 %v6194, 1.442695
    %v6198 = vpow.pop %v6197
    %v6199 = vadd.f32 %v6196, 1.0
    %v6200 = vadd.f32 %v6198, 1.0
    %v6201 = vrcp.pop %v6199
    %v6202 = vmul.f32 1.0, %v6201
    %v6203 = vrcp.pop %v6200
    %v6204 = vmul.f32 1.0, %v6203
    %v6205 = vxor.u32 %v6186, 2147483648
    %v6206 = vxor.u32 %v6190, 2147483648
    %v6207 = vmul.f32 %v6205, 1.442695
    %v6208 = vpow.pop %v6207
    %v6209 = vmul.f32 %v6206, 1.442695
    %v6210 = vpow.pop %v6209
    %v6211 = vadd.f32 %v6208, 1.0
    %v6212 = vadd.f32 %v6210, 1.0
    %v6213 = vrcp.pop %v6211
    %v6214 = vmul.f32 1.0, %v6213
    %v6215 = vrcp.pop %v6212
    %v6216 = vmul.f32 1.0, %v6215
    %v6217 = vtanh.pop %v6187
    %v6218 = vtanh.pop %v6191
    %v6219 = vxor.u32 %v6188, 2147483648
    %v6220 = vxor.u32 %v6192, 2147483648
    %v6221 = vmul.f32 %v6219, 1.442695
    %v6222 = vpow.pop %v6221
    %v6223 = vmul.f32 %v6220, 1.442695
    %v6224 = vpow.pop %v6223
    %v6225 = vadd.f32 %v6222, 1.0
    %v6226 = vadd.f32 %v6224, 1.0
    %v6227 = vrcp.pop %v6225
    %v6228 = vmul.f32 1.0, %v6227
    %v6229 = vrcp.pop %v6226
    %v6230 = vmul.f32 1.0, %v6229
    %v6231 = vmul.f32 %v6214, %v5883
    %v6232 = vmul.f32 %v6216, %v5884
    %v6233 = vmul.f32 %v6202, %v6217
    %v6234 = vmul.f32 %v6204, %v6218
    %v6235 = vadd.f32 %v6231, %v6233
    %v6236 = vadd.f32 %v6232, %v6234
    %v6237 = vtanh.pop %v6235
    %v6238 = vtanh.pop %v6236
    %v6239 = vmul.f32 %v6228, %v6237
    %v6240 = vmul.f32 %v6230, %v6238
    %v6241 = vmul.f32 %v6239, %v92
    %v6242 = vmul.f32 %v6240, %v93
    %v6243 = vmul.f32 %v6239, %v94
    %v6244 = vmul.f32 %v6240, %v95
    %6245 = vst [vmem:[#allocation4 + $0x40] sm:$0xff] %v6239
    %6246 = vst [vmem:[#allocation4 + $0x38] sm:$0xff] %v6240
    %v6247 = vld [vmem:[#allocation9] sm:$0xff]
    %v6248 = vld [vmem:[#allocation9 + $0x8] sm:$0xff]
    %v6249 = vld [vmem:[#allocation9 + $0x10] sm:$0xff]
    %v6250 = vld [vmem:[#allocation9 + $0x18] sm:$0xff]
    %v6251 = vld [vmem:[#allocation9 + $0x20] sm:$0xff]
    %v6252 = vld [vmem:[#allocation9 + $0x28] sm:$0xff]
    %v6253 = vld [vmem:[#allocation9 + $0x30] sm:$0xff]
    %v6254 = vld [vmem:[#allocation9 + $0x38] sm:$0xff]
    %v6255 = vld [vmem:[#allocation9 + $0x40] sm:$0xff]
    %v6256 = vld [vmem:[#allocation9 + $0x48] sm:$0xff]
    %v6257 = vld [vmem:[#allocation9 + $0x50] sm:$0xff]
    %v6258 = vld [vmem:[#allocation9 + $0x58] sm:$0xff]
    %v6259 = vld [vmem:[#allocation9 + $0x60] sm:$0xff]
    %v6260 = vld [vmem:[#allocation9 + $0x68] sm:$0xff]
    %v6261 = vld [vmem:[#allocation9 + $0x70] sm:$0xff]
    %v6262 = vld [vmem:[#allocation9 + $0x78] sm:$0xff]
    %v6263 = vld [vmem:[#allocation9 + $0x80] sm:$0xff]
    %v6264 = vld [vmem:[#allocation9 + $0x88] sm:$0xff]
    %v6265 = vld [vmem:[#allocation9 + $0x90] sm:$0xff]
    %v6266 = vld [vmem:[#allocation9 + $0x98] sm:$0xff]
    %v6267 = vld [vmem:[#allocation9 + $0xa0] sm:$0xff]
    %v6268 = vld [vmem:[#allocation9 + $0xa8] sm:$0xff]
    %v6269 = vld [vmem:[#allocation9 + $0xb0] sm:$0xff]
    %v6270 = vld [vmem:[#allocation9 + $0xb8] sm:$0xff]
    %v6271 = vld [vmem:[#allocation9 + $0xc0] sm:$0xff]
    %v6272 = vld [vmem:[#allocation9 + $0xc8] sm:$0xff]
    %v6273 = vld [vmem:[#allocation9 + $0xd0] sm:$0xff]
    %v6274 = vld [vmem:[#allocation9 + $0xd8] sm:$0xff]
    %v6275 = vld [vmem:[#allocation9 + $0xe0] sm:$0xff]
    %v6276 = vld [vmem:[#allocation9 + $0xe8] sm:$0xff]
    %v6277 = vld [vmem:[#allocation9 + $0xf0] sm:$0xff]
    %v6278 = vld [vmem:[#allocation9 + $0xf8] sm:$0xff]
    %v6279 = vld [vmem:[#allocation9 + $0x100] sm:$0xff]
    %v6280 = vld [vmem:[#allocation9 + $0x108] sm:$0xff]
    %v6281 = vld [vmem:[#allocation9 + $0x110] sm:$0xff]
    %v6282 = vld [vmem:[#allocation9 + $0x118] sm:$0xff]
    %v6283 = vld [vmem:[#allocation9 + $0x120] sm:$0xff]
    %v6284 = vld [vmem:[#allocation9 + $0x128] sm:$0xff]
    %v6285 = vld [vmem:[#allocation9 + $0x130] sm:$0xff]
    %v6286 = vld [vmem:[#allocation9 + $0x138] sm:$0xff]
    %v6287 = vld [vmem:[#allocation9 + $0x140] sm:$0xff]
    %v6288 = vld [vmem:[#allocation9 + $0x148] sm:$0xff]
    %v6289 = vld [vmem:[#allocation9 + $0x150] sm:$0xff]
    %v6290 = vld [vmem:[#allocation9 + $0x158] sm:$0xff]
    %v6291 = vld [vmem:[#allocation9 + $0x160] sm:$0xff]
    %v6292 = vld [vmem:[#allocation9 + $0x168] sm:$0xff]
    %v6293 = vld [vmem:[#allocation9 + $0x170] sm:$0xff]
    %v6294 = vld [vmem:[#allocation9 + $0x178] sm:$0xff]
    %v6295 = vld [vmem:[#allocation9 + $0x180] sm:$0xff]
    %v6296 = vld [vmem:[#allocation9 + $0x188] sm:$0xff]
    %v6297 = vld [vmem:[#allocation9 + $0x190] sm:$0xff]
    %v6298 = vld [vmem:[#allocation9 + $0x198] sm:$0xff]
    %v6299 = vld [vmem:[#allocation9 + $0x1a0] sm:$0xff]
    %v6300 = vld [vmem:[#allocation9 + $0x1a8] sm:$0xff]
    %v6301 = vld [vmem:[#allocation9 + $0x1b0] sm:$0xff]
    %v6302 = vld [vmem:[#allocation9 + $0x1b8] sm:$0xff]
    %v6303 = vld [vmem:[#allocation9 + $0x1c0] sm:$0xff]
    %v6304 = vld [vmem:[#allocation9 + $0x1c8] sm:$0xff]
    %v6305 = vld [vmem:[#allocation9 + $0x1d0] sm:$0xff]
    %v6306 = vld [vmem:[#allocation9 + $0x1d8] sm:$0xff]
    %v6307 = vld [vmem:[#allocation9 + $0x1e0] sm:$0xff]
    %v6308 = vld [vmem:[#allocation9 + $0x1e8] sm:$0xff]
    %v6309 = vld [vmem:[#allocation9 + $0x1f0] sm:$0xff]
    %v6310 = vld [vmem:[#allocation9 + $0x1f8] sm:$0xff]
    %v6311 = vld [vmem:[#allocation9 + $0x200] sm:$0xff]
    %v6312 = vld [vmem:[#allocation9 + $0x208] sm:$0xff]
    %v6313 = vld [vmem:[#allocation9 + $0x210] sm:$0xff]
    %v6314 = vld [vmem:[#allocation9 + $0x218] sm:$0xff]
    %v6315 = vld [vmem:[#allocation9 + $0x220] sm:$0xff]
    %v6316 = vld [vmem:[#allocation9 + $0x228] sm:$0xff]
    %v6317 = vld [vmem:[#allocation9 + $0x230] sm:$0xff]
    %v6318 = vld [vmem:[#allocation9 + $0x238] sm:$0xff]
    %v6319 = vld [vmem:[#allocation9 + $0x240] sm:$0xff]
    %v6320 = vld [vmem:[#allocation9 + $0x248] sm:$0xff]
    %v6321 = vld [vmem:[#allocation9 + $0x250] sm:$0xff]
    %v6322 = vld [vmem:[#allocation9 + $0x258] sm:$0xff]
    %v6323 = vld [vmem:[#allocation9 + $0x260] sm:$0xff]
    %v6324 = vld [vmem:[#allocation9 + $0x268] sm:$0xff]
    %v6325 = vld [vmem:[#allocation9 + $0x270] sm:$0xff]
    %v6326 = vld [vmem:[#allocation9 + $0x278] sm:$0xff]
    %v6327 = vld [vmem:[#allocation9 + $0x280] sm:$0xff]
    %v6328 = vld [vmem:[#allocation9 + $0x288] sm:$0xff]
    %v6329 = vld [vmem:[#allocation9 + $0x290] sm:$0xff]
    %v6330 = vld [vmem:[#allocation9 + $0x298] sm:$0xff]
    %v6331 = vld [vmem:[#allocation9 + $0x2a0] sm:$0xff]
    %v6332 = vld [vmem:[#allocation9 + $0x2a8] sm:$0xff]
    %v6333 = vld [vmem:[#allocation9 + $0x2b0] sm:$0xff]
    %v6334 = vld [vmem:[#allocation9 + $0x2b8] sm:$0xff]
    %v6335 = vld [vmem:[#allocation9 + $0x2c0] sm:$0xff]
    %v6336 = vld [vmem:[#allocation9 + $0x2c8] sm:$0xff]
    %v6337 = vld [vmem:[#allocation9 + $0x2d0] sm:$0xff]
    %v6338 = vld [vmem:[#allocation9 + $0x2d8] sm:$0xff]
    %v6339 = vld [vmem:[#allocation9 + $0x2e0] sm:$0xff]
    %v6340 = vld [vmem:[#allocation9 + $0x2e8] sm:$0xff]
    %v6341 = vld [vmem:[#allocation9 + $0x2f0] sm:$0xff]
    %v6342 = vld [vmem:[#allocation9 + $0x2f8] sm:$0xff]
    %v6343 = vld [vmem:[#allocation9 + $0x300] sm:$0xff]
    %v6344 = vld [vmem:[#allocation9 + $0x308] sm:$0xff]
    %v6345 = vld [vmem:[#allocation9 + $0x310] sm:$0xff]
    %v6346 = vld [vmem:[#allocation9 + $0x318] sm:$0xff]
    %v6347 = vld [vmem:[#allocation9 + $0x320] sm:$0xff]
    %v6348 = vld [vmem:[#allocation9 + $0x328] sm:$0xff]
    %v6349 = vld [vmem:[#allocation9 + $0x330] sm:$0xff]
    %v6350 = vld [vmem:[#allocation9 + $0x338] sm:$0xff]
    %v6351 = vld [vmem:[#allocation9 + $0x340] sm:$0xff]
    %v6352 = vld [vmem:[#allocation9 + $0x348] sm:$0xff]
    %v6353 = vld [vmem:[#allocation9 + $0x350] sm:$0xff]
    %v6354 = vld [vmem:[#allocation9 + $0x358] sm:$0xff]
    %v6355 = vld [vmem:[#allocation9 + $0x360] sm:$0xff]
    %v6356 = vld [vmem:[#allocation9 + $0x368] sm:$0xff]
    %v6357 = vld [vmem:[#allocation9 + $0x370] sm:$0xff]
    %v6358 = vld [vmem:[#allocation9 + $0x378] sm:$0xff]
    %v6359 = vld [vmem:[#allocation9 + $0x380] sm:$0xff]
    %v6360 = vld [vmem:[#allocation9 + $0x388] sm:$0xff]
    %v6361 = vld [vmem:[#allocation9 + $0x390] sm:$0xff]
    %v6362 = vld [vmem:[#allocation9 + $0x398] sm:$0xff]
    %v6363 = vld [vmem:[#allocation9 + $0x3a0] sm:$0xff]
    %v6364 = vld [vmem:[#allocation9 + $0x3a8] sm:$0xff]
    %v6365 = vld [vmem:[#allocation9 + $0x3b0] sm:$0xff]
    %v6366 = vld [vmem:[#allocation9 + $0x3b8] sm:$0xff]
    %v6367 = vld [vmem:[#allocation9 + $0x3c0] sm:$0xff]
    %v6368 = vld [vmem:[#allocation9 + $0x3c8] sm:$0xff]
    %v6369 = vld [vmem:[#allocation9 + $0x3d0] sm:$0xff]
    %v6370 = vld [vmem:[#allocation9 + $0x3d8] sm:$0xff]
    %v6371 = vld [vmem:[#allocation9 + $0x3e0] sm:$0xff]
    %v6372 = vld [vmem:[#allocation9 + $0x3e8] sm:$0xff]
    %v6373 = vld [vmem:[#allocation9 + $0x3f0] sm:$0xff]
    %v6374 = vld [vmem:[#allocation9 + $0x3f8] sm:$0xff]
    %v6375 = vld [vmem:[#allocation2 + $0x140] sm:$0xff]
    %v6376 = vld [vmem:[#allocation2 + $0x148] sm:$0xff]
    %v6377 = vld [vmem:[#allocation2 + $0x150] sm:$0xff]
    %v6378 = vld [vmem:[#allocation2 + $0x158] sm:$0xff]
    %v6379 = vld [vmem:[#allocation2 + $0x160] sm:$0xff]
    %v6380 = vld [vmem:[#allocation2 + $0x168] sm:$0xff]
    %v6381 = vld [vmem:[#allocation2 + $0x170] sm:$0xff]
    %v6382 = vld [vmem:[#allocation2 + $0x178] sm:$0xff]
    %6383 = vmatprep.subr.mxu0 %v6248
    %6384 = vmatpush1.msra.mxu0 %v6247
    %6385 = vmatprep.subr.mxu0 %v6252
    %6386 = vmatpush1.msra.mxu0 %v6251
    %6387 = vmatprep.subr.mxu0 %v6256
    %6388 = vmatpush1.msra.mxu0 %v6255
    %6389 = vmatprep.subr.mxu0 %v6260
    %6390 = vmatpush1.msra.mxu0 %v6259
    %6391 = vmatprep.subr.mxu0 %v6264
    %6392 = vmatpush1.msra.mxu0 %v6263
    %6393 = vmatprep.subr.mxu0 %v6268
    %6394 = vmatpush1.msra.mxu0 %v6267
    %6395 = vmatprep.subr.mxu0 %v6272
    %6396 = vmatpush1.msra.mxu0 %v6271
    %6397 = vmatprep.subr.mxu0 %v6276
    %6398 = vmatpush1.msra.mxu0 %v6275
    %6399 = vmatprep.subr.mxu0 %v6280
    %6400 = vmatpush1.msra.mxu0 %v6279
    %6401 = vmatprep.subr.mxu0 %v6284
    %6402 = vmatpush1.msra.mxu0 %v6283
    %6403 = vmatprep.subr.mxu0 %v6288
    %6404 = vmatpush1.msra.mxu0 %v6287
    %6405 = vmatprep.subr.mxu0 %v6292
    %6406 = vmatpush1.msra.mxu0 %v6291
    %6407 = vmatprep.subr.mxu0 %v6296
    %6408 = vmatpush1.msra.mxu0 %v6295
    %6409 = vmatprep.subr.mxu0 %v6300
    %6410 = vmatpush1.msra.mxu0 %v6299
    %6411 = vmatprep.subr.mxu0 %v6304
    %6412 = vmatpush1.msra.mxu0 %v6303
    %6413 = vmatprep.subr.mxu0 %v6308
    %6414 = vmatpush1.msra.mxu0 %v6307
    %6415 = vmatprep.subr.mxu0 %v6312
    %6416 = vmatpush1.msra.mxu0 %v6311
    %6417 = vmatprep.subr.mxu0 %v6316
    %6418 = vmatpush1.msra.mxu0 %v6315
    %6419 = vmatprep.subr.mxu0 %v6320
    %6420 = vmatpush1.msra.mxu0 %v6319
    %6421 = vmatprep.subr.mxu0 %v6324
    %6422 = vmatpush1.msra.mxu0 %v6323
    %6423 = vmatprep.subr.mxu0 %v6328
    %6424 = vmatpush1.msra.mxu0 %v6327
    %6425 = vmatprep.subr.mxu0 %v6332
    %6426 = vmatpush1.msra.mxu0 %v6331
    %6427 = vmatprep.subr.mxu0 %v6336
    %6428 = vmatpush1.msra.mxu0 %v6335
    %6429 = vmatprep.subr.mxu0 %v6340
    %6430 = vmatpush1.msra.mxu0 %v6339
    %6431 = vmatprep.subr.mxu0 %v6344
    %6432 = vmatpush1.msra.mxu0 %v6343
    %6433 = vmatprep.subr.mxu0 %v6348
    %6434 = vmatpush1.msra.mxu0 %v6347
    %6435 = vmatprep.subr.mxu0 %v6352
    %6436 = vmatpush1.msra.mxu0 %v6351
    %6437 = vmatprep.subr.mxu0 %v6356
    %6438 = vmatpush1.msra.mxu0 %v6355
    %6439 = vmatprep.subr.mxu0 %v6360
    %6440 = vmatpush1.msra.mxu0 %v6359
    %6441 = vmatprep.subr.mxu0 %v6364
    %6442 = vmatpush1.msra.mxu0 %v6363
    %6443 = vmatprep.subr.mxu0 %v6368
    %6444 = vmatpush1.msra.mxu0 %v6367
    %6445 = vmatprep.subr.mxu0 %v6372
    %6446 = vmatpush1.msra.mxu0 %v6371
    %6447 = vmatprep.mubr.f32.mxu0 %v6243
    %6448 = vmatmul.mubr.f32.gmra.mrb[0].mxu0 %v6241
    %v6449 = vpop.f32.mrb[0].mxu0
    %v6450 = vadd.f32 %v6375, %v6449
    %v6451 = vpop.f32.mrb[0].mxu0
    %v6452 = vadd.f32 %v6376, %v6451
    %6453 = vmatprep.mubr.f32.mxu0 %v6244
    %6454 = vmatmul.mubr.f32.gmra.mrb[0].mxu0 %v6242
    %v6455 = vpop.f32.mrb[0].mxu0
    %v6456 = vadd.f32 %v6379, %v6455
    %v6457 = vpop.f32.mrb[0].mxu0
    %v6458 = vadd.f32 %v6380, %v6457
    %6459 = vdwg.mxu0
    %6460 = vmatprep.subr.mxu0 %v6250
    %6461 = vmatpush1.msra.mxu0 %v6249
    %6462 = vmatprep.subr.mxu0 %v6254
    %6463 = vmatpush1.msra.mxu0 %v6253
    %6464 = vmatprep.subr.mxu0 %v6258
    %6465 = vmatpush1.msra.mxu0 %v6257
    %6466 = vmatprep.subr.mxu0 %v6262
    %6467 = vmatpush1.msra.mxu0 %v6261
    %6468 = vmatprep.subr.mxu0 %v6266
    %6469 = vmatpush1.msra.mxu0 %v6265
    %6470 = vmatprep.subr.mxu0 %v6270
    %6471 = vmatpush1.msra.mxu0 %v6269
    %6472 = vmatprep.subr.mxu0 %v6274
    %6473 = vmatpush1.msra.mxu0 %v6273
    %6474 = vmatprep.subr.mxu0 %v6278
    %6475 = vmatpush1.msra.mxu0 %v6277
    %6476 = vmatprep.subr.mxu0 %v6282
    %6477 = vmatpush1.msra.mxu0 %v6281
    %6478 = vmatprep.subr.mxu0 %v6286
    %6479 = vmatpush1.msra.mxu0 %v6285
    %6480 = vmatprep.subr.mxu0 %v6290
    %6481 = vmatpush1.msra.mxu0 %v6289
    %6482 = vmatprep.subr.mxu0 %v6294
    %6483 = vmatpush1.msra.mxu0 %v6293
    %6484 = vmatprep.subr.mxu0 %v6298
    %6485 = vmatpush1.msra.mxu0 %v6297
    %6486 = vmatprep.subr.mxu0 %v6302
    %6487 = vmatpush1.msra.mxu0 %v6301
    %6488 = vmatprep.subr.mxu0 %v6306
    %6489 = vmatpush1.msra.mxu0 %v6305
    %6490 = vmatprep.subr.mxu0 %v6310
    %6491 = vmatpush1.msra.mxu0 %v6309
    %6492 = vmatprep.subr.mxu0 %v6314
    %6493 = vmatpush1.msra.mxu0 %v6313
    %6494 = vmatprep.subr.mxu0 %v6318
    %6495 = vmatpush1.msra.mxu0 %v6317
    %6496 = vmatprep.subr.mxu0 %v6322
    %6497 = vmatpush1.msra.mxu0 %v6321
    %6498 = vmatprep.subr.mxu0 %v6326
    %6499 = vmatpush1.msra.mxu0 %v6325
    %6500 = vmatprep.subr.mxu0 %v6330
    %6501 = vmatpush1.msra.mxu0 %v6329
    %6502 = vmatprep.subr.mxu0 %v6334
    %6503 = vmatpush1.msra.mxu0 %v6333
    %6504 = vmatprep.subr.mxu0 %v6338
    %6505 = vmatpush1.msra.mxu0 %v6337
    %6506 = vmatprep.subr.mxu0 %v6342
    %6507 = vmatpush1.msra.mxu0 %v6341
    %6508 = vmatprep.subr.mxu0 %v6346
    %6509 = vmatpush1.msra.mxu0 %v6345
    %6510 = vmatprep.subr.mxu0 %v6350
    %6511 = vmatpush1.msra.mxu0 %v6349
    %6512 = vmatprep.subr.mxu0 %v6354
    %6513 = vmatpush1.msra.mxu0 %v6353
    %6514 = vmatprep.subr.mxu0 %v6358
    %6515 = vmatpush1.msra.mxu0 %v6357
    %6516 = vmatprep.subr.mxu0 %v6362
    %6517 = vmatpush1.msra.mxu0 %v6361
    %6518 = vmatprep.subr.mxu0 %v6366
    %6519 = vmatpush1.msra.mxu0 %v6365
    %6520 = vmatprep.subr.mxu0 %v6370
    %6521 = vmatpush1.msra.mxu0 %v6369
    %6522 = vmatprep.subr.mxu0 %v6374
    %6523 = vmatpush1.msra.mxu0 %v6373
    %6524 = vmatprep.mubr.f32.mxu0 %v6243
    %6525 = vmatmul.mubr.f32.gmra.mrb[0].mxu0 %v6241
    %v6526 = vpop.f32.mrb[0].mxu0
    %v6527 = vadd.f32 %v6377, %v6526
    %v6528 = vpop.f32.mrb[0].mxu0
    %v6529 = vadd.f32 %v6378, %v6528
    %6530 = vmatprep.mubr.f32.mxu0 %v6244
    %6531 = vmatmul.mubr.f32.gmra.mrb[0].mxu0 %v6242
    %v6532 = vpop.f32.mrb[0].mxu0
    %v6533 = vadd.f32 %v6381, %v6532
    %v6534 = vpop.f32.mrb[0].mxu0
    %v6535 = vadd.f32 %v6382, %v6534
    %6536 = vdwg.mxu0
    %v6537 = vadd.f32 %v6450, %v4479
    %v6538 = vadd.f32 %v6452, %v4480
    %v6539 = vadd.f32 %v6527, %v4481
    %v6540 = vadd.f32 %v6529, %v4482
    %v6541 = vadd.f32 %v6456, %v4483
    %v6542 = vadd.f32 %v6458, %v4484
    %v6543 = vadd.f32 %v6533, %v4485
    %v6544 = vadd.f32 %v6535, %v4486
    %v6545 = vxor.u32 %v6537, 2147483648
    %v6546 = vxor.u32 %v6541, 2147483648
    %v6547 = vmul.f32 %v6545, 1.442695
    %v6548 = vpow.pop %v6547
    %v6549 = vmul.f32 %v6546, 1.442695
    %v6550 = vpow.pop %v6549
    %v6551 = vadd.f32 %v6548, 1.0
    %v6552 = vadd.f32 %v6550, 1.0
    %v6553 = vrcp.pop %v6551
    %v6554 = vmul.f32 1.0, %v6553
    %v6555 = vrcp.pop %v6552
    %v6556 = vmul.f32 1.0, %v6555
    %v6557 = vxor.u32 %v6538, 2147483648
    %v6558 = vxor.u32 %v6542, 2147483648
    %v6559 = vmul.f32 %v6557, 1.442695
    %v6560 = vpow.pop %v6559
    %v6561 = vmul.f32 %v6558, 1.442695
    %v6562 = vpow.pop %v6561
    %v6563 = vadd.f32 %v6560, 1.0
    %v6564 = vadd.f32 %v6562, 1.0
    %v6565 = vrcp.pop %v6563
    %v6566 = vmul.f32 1.0, %v6565
    %v6567 = vrcp.pop %v6564
    %v6568 = vmul.f32 1.0, %v6567
    %v6569 = vtanh.pop %v6539
    %v6570 = vtanh.pop %v6543
    %v6571 = vxor.u32 %v6540, 2147483648
    %v6572 = vxor.u32 %v6544, 2147483648
    %v6573 = vmul.f32 %v6571, 1.442695
    %v6574 = vpow.pop %v6573
    %v6575 = vmul.f32 %v6572, 1.442695
    %v6576 = vpow.pop %v6575
    %v6577 = vadd.f32 %v6574, 1.0
    %v6578 = vadd.f32 %v6576, 1.0
    %v6579 = vrcp.pop %v6577
    %v6580 = vmul.f32 1.0, %v6579
    %v6581 = vrcp.pop %v6578
    %v6582 = vmul.f32 1.0, %v6581
    %v6583 = vmul.f32 %v6566, %v6235
    %v6584 = vmul.f32 %v6568, %v6236
    %v6585 = vmul.f32 %v6554, %v6569
    %v6586 = vmul.f32 %v6556, %v6570
    %v6587 = vadd.f32 %v6583, %v6585
    %v6588 = vadd.f32 %v6584, %v6586
    %v6589 = vtanh.pop %v6587
    %v6590 = vtanh.pop %v6588
    %v6591 = vmul.f32 %v6580, %v6589
    %v6592 = vmul.f32 %v6582, %v6590
    %v6593 = vmul.f32 %v6591, %v92
    %v6594 = vmul.f32 %v6592, %v93
    %v6595 = vmul.f32 %v6591, %v94
    %v6596 = vmul.f32 %v6592, %v95
    %6597 = vst [vmem:[#allocation4 + $0x50] sm:$0xff] %v6591
    %6598 = vst [vmem:[#allocation4 + $0x28] sm:$0xff] %v6592
    %v6599 = vld [vmem:[#allocation9] sm:$0xff]
    %v6600 = vld [vmem:[#allocation9 + $0x8] sm:$0xff]
    %v6601 = vld [vmem:[#allocation9 + $0x10] sm:$0xff]
    %v6602 = vld [vmem:[#allocation9 + $0x18] sm:$0xff]
    %v6603 = vld [vmem:[#allocation9 + $0x20] sm:$0xff]
    %v6604 = vld [vmem:[#allocation9 + $0x28] sm:$0xff]
    %v6605 = vld [vmem:[#allocation9 + $0x30] sm:$0xff]
    %v6606 = vld [vmem:[#allocation9 + $0x38] sm:$0xff]
    %v6607 = vld [vmem:[#allocation9 + $0x40] sm:$0xff]
    %v6608 = vld [vmem:[#allocation9 + $0x48] sm:$0xff]
    %v6609 = vld [vmem:[#allocation9 + $0x50] sm:$0xff]
    %v6610 = vld [vmem:[#allocation9 + $0x58] sm:$0xff]
    %v6611 = vld [vmem:[#allocation9 + $0x60] sm:$0xff]
    %v6612 = vld [vmem:[#allocation9 + $0x68] sm:$0xff]
    %v6613 = vld [vmem:[#allocation9 + $0x70] sm:$0xff]
    %v6614 = vld [vmem:[#allocation9 + $0x78] sm:$0xff]
    %v6615 = vld [vmem:[#allocation9 + $0x80] sm:$0xff]
    %v6616 = vld [vmem:[#allocation9 + $0x88] sm:$0xff]
    %v6617 = vld [vmem:[#allocation9 + $0x90] sm:$0xff]
    %v6618 = vld [vmem:[#allocation9 + $0x98] sm:$0xff]
    %v6619 = vld [vmem:[#allocation9 + $0xa0] sm:$0xff]
    %v6620 = vld [vmem:[#allocation9 + $0xa8] sm:$0xff]
    %v6621 = vld [vmem:[#allocation9 + $0xb0] sm:$0xff]
    %v6622 = vld [vmem:[#allocation9 + $0xb8] sm:$0xff]
    %v6623 = vld [vmem:[#allocation9 + $0xc0] sm:$0xff]
    %v6624 = vld [vmem:[#allocation9 + $0xc8] sm:$0xff]
    %v6625 = vld [vmem:[#allocation9 + $0xd0] sm:$0xff]
    %v6626 = vld [vmem:[#allocation9 + $0xd8] sm:$0xff]
    %v6627 = vld [vmem:[#allocation9 + $0xe0] sm:$0xff]
    %v6628 = vld [vmem:[#allocation9 + $0xe8] sm:$0xff]
    %v6629 = vld [vmem:[#allocation9 + $0xf0] sm:$0xff]
    %v6630 = vld [vmem:[#allocation9 + $0xf8] sm:$0xff]
    %v6631 = vld [vmem:[#allocation9 + $0x100] sm:$0xff]
    %v6632 = vld [vmem:[#allocation9 + $0x108] sm:$0xff]
    %v6633 = vld [vmem:[#allocation9 + $0x110] sm:$0xff]
    %v6634 = vld [vmem:[#allocation9 + $0x118] sm:$0xff]
    %v6635 = vld [vmem:[#allocation9 + $0x120] sm:$0xff]
    %v6636 = vld [vmem:[#allocation9 + $0x128] sm:$0xff]
    %v6637 = vld [vmem:[#allocation9 + $0x130] sm:$0xff]
    %v6638 = vld [vmem:[#allocation9 + $0x138] sm:$0xff]
    %v6639 = vld [vmem:[#allocation9 + $0x140] sm:$0xff]
    %v6640 = vld [vmem:[#allocation9 + $0x148] sm:$0xff]
    %v6641 = vld [vmem:[#allocation9 + $0x150] sm:$0xff]
    %v6642 = vld [vmem:[#allocation9 + $0x158] sm:$0xff]
    %v6643 = vld [vmem:[#allocation9 + $0x160] sm:$0xff]
    %v6644 = vld [vmem:[#allocation9 + $0x168] sm:$0xff]
    %v6645 = vld [vmem:[#allocation9 + $0x170] sm:$0xff]
    %v6646 = vld [vmem:[#allocation9 + $0x178] sm:$0xff]
    %v6647 = vld [vmem:[#allocation9 + $0x180] sm:$0xff]
    %v6648 = vld [vmem:[#allocation9 + $0x188] sm:$0xff]
    %v6649 = vld [vmem:[#allocation9 + $0x190] sm:$0xff]
    %v6650 = vld [vmem:[#allocation9 + $0x198] sm:$0xff]
    %v6651 = vld [vmem:[#allocation9 + $0x1a0] sm:$0xff]
    %v6652 = vld [vmem:[#allocation9 + $0x1a8] sm:$0xff]
    %v6653 = vld [vmem:[#allocation9 + $0x1b0] sm:$0xff]
    %v6654 = vld [vmem:[#allocation9 + $0x1b8] sm:$0xff]
    %v6655 = vld [vmem:[#allocation9 + $0x1c0] sm:$0xff]
    %v6656 = vld [vmem:[#allocation9 + $0x1c8] sm:$0xff]
    %v6657 = vld [vmem:[#allocation9 + $0x1d0] sm:$0xff]
    %v6658 = vld [vmem:[#allocation9 + $0x1d8] sm:$0xff]
    %v6659 = vld [vmem:[#allocation9 + $0x1e0] sm:$0xff]
    %v6660 = vld [vmem:[#allocation9 + $0x1e8] sm:$0xff]
    %v6661 = vld [vmem:[#allocation9 + $0x1f0] sm:$0xff]
    %v6662 = vld [vmem:[#allocation9 + $0x1f8] sm:$0xff]
    %v6663 = vld [vmem:[#allocation9 + $0x200] sm:$0xff]
    %v6664 = vld [vmem:[#allocation9 + $0x208] sm:$0xff]
    %v6665 = vld [vmem:[#allocation9 + $0x210] sm:$0xff]
    %v6666 = vld [vmem:[#allocation9 + $0x218] sm:$0xff]
    %v6667 = vld [vmem:[#allocation9 + $0x220] sm:$0xff]
    %v6668 = vld [vmem:[#allocation9 + $0x228] sm:$0xff]
    %v6669 = vld [vmem:[#allocation9 + $0x230] sm:$0xff]
    %v6670 = vld [vmem:[#allocation9 + $0x238] sm:$0xff]
    %v6671 = vld [vmem:[#allocation9 + $0x240] sm:$0xff]
    %v6672 = vld [vmem:[#allocation9 + $0x248] sm:$0xff]
    %v6673 = vld [vmem:[#allocation9 + $0x250] sm:$0xff]
    %v6674 = vld [vmem:[#allocation9 + $0x258] sm:$0xff]
    %v6675 = vld [vmem:[#allocation9 + $0x260] sm:$0xff]
    %v6676 = vld [vmem:[#allocation9 + $0x268] sm:$0xff]
    %v6677 = vld [vmem:[#allocation9 + $0x270] sm:$0xff]
    %v6678 = vld [vmem:[#allocation9 + $0x278] sm:$0xff]
    %v6679 = vld [vmem:[#allocation9 + $0x280] sm:$0xff]
    %v6680 = vld [vmem:[#allocation9 + $0x288] sm:$0xff]
    %v6681 = vld [vmem:[#allocation9 + $0x290] sm:$0xff]
    %v6682 = vld [vmem:[#allocation9 + $0x298] sm:$0xff]
    %v6683 = vld [vmem:[#allocation9 + $0x2a0] sm:$0xff]
    %v6684 = vld [vmem:[#allocation9 + $0x2a8] sm:$0xff]
    %v6685 = vld [vmem:[#allocation9 + $0x2b0] sm:$0xff]
    %v6686 = vld [vmem:[#allocation9 + $0x2b8] sm:$0xff]
    %v6687 = vld [vmem:[#allocation9 + $0x2c0] sm:$0xff]
    %v6688 = vld [vmem:[#allocation9 + $0x2c8] sm:$0xff]
    %v6689 = vld [vmem:[#allocation9 + $0x2d0] sm:$0xff]
    %v6690 = vld [vmem:[#allocation9 + $0x2d8] sm:$0xff]
    %v6691 = vld [vmem:[#allocation9 + $0x2e0] sm:$0xff]
    %v6692 = vld [vmem:[#allocation9 + $0x2e8] sm:$0xff]
    %v6693 = vld [vmem:[#allocation9 + $0x2f0] sm:$0xff]
    %v6694 = vld [vmem:[#allocation9 + $0x2f8] sm:$0xff]
    %v6695 = vld [vmem:[#allocation9 + $0x300] sm:$0xff]
    %v6696 = vld [vmem:[#allocation9 + $0x308] sm:$0xff]
    %v6697 = vld [vmem:[#allocation9 + $0x310] sm:$0xff]
    %v6698 = vld [vmem:[#allocation9 + $0x318] sm:$0xff]
    %v6699 = vld [vmem:[#allocation9 + $0x320] sm:$0xff]
    %v6700 = vld [vmem:[#allocation9 + $0x328] sm:$0xff]
    %v6701 = vld [vmem:[#allocation9 + $0x330] sm:$0xff]
    %v6702 = vld [vmem:[#allocation9 + $0x338] sm:$0xff]
    %v6703 = vld [vmem:[#allocation9 + $0x340] sm:$0xff]
    %v6704 = vld [vmem:[#allocation9 + $0x348] sm:$0xff]
    %v6705 = vld [vmem:[#allocation9 + $0x350] sm:$0xff]
    %v6706 = vld [vmem:[#allocation9 + $0x358] sm:$0xff]
    %v6707 = vld [vmem:[#allocation9 + $0x360] sm:$0xff]
    %v6708 = vld [vmem:[#allocation9 + $0x368] sm:$0xff]
    %v6709 = vld [vmem:[#allocation9 + $0x370] sm:$0xff]
    %v6710 = vld [vmem:[#allocation9 + $0x378] sm:$0xff]
    %v6711 = vld [vmem:[#allocation9 + $0x380] sm:$0xff]
    %v6712 = vld [vmem:[#allocation9 + $0x388] sm:$0xff]
    %v6713 = vld [vmem:[#allocation9 + $0x390] sm:$0xff]
    %v6714 = vld [vmem:[#allocation9 + $0x398] sm:$0xff]
    %v6715 = vld [vmem:[#allocation9 + $0x3a0] sm:$0xff]
    %v6716 = vld [vmem:[#allocation9 + $0x3a8] sm:$0xff]
    %v6717 = vld [vmem:[#allocation9 + $0x3b0] sm:$0xff]
    %v6718 = vld [vmem:[#allocation9 + $0x3b8] sm:$0xff]
    %v6719 = vld [vmem:[#allocation9 + $0x3c0] sm:$0xff]
    %v6720 = vld [vmem:[#allocation9 + $0x3c8] sm:$0xff]
    %v6721 = vld [vmem:[#allocation9 + $0x3d0] sm:$0xff]
    %v6722 = vld [vmem:[#allocation9 + $0x3d8] sm:$0xff]
    %v6723 = vld [vmem:[#allocation9 + $0x3e0] sm:$0xff]
    %v6724 = vld [vmem:[#allocation9 + $0x3e8] sm:$0xff]
    %v6725 = vld [vmem:[#allocation9 + $0x3f0] sm:$0xff]
    %v6726 = vld [vmem:[#allocation9 + $0x3f8] sm:$0xff]
    %v6727 = vld [vmem:[#allocation2 + $0x180] sm:$0xff]
    %v6728 = vld [vmem:[#allocation2 + $0x188] sm:$0xff]
    %v6729 = vld [vmem:[#allocation2 + $0x190] sm:$0xff]
    %v6730 = vld [vmem:[#allocation2 + $0x198] sm:$0xff]
    %v6731 = vld [vmem:[#allocation2 + $0x1a0] sm:$0xff]
    %v6732 = vld [vmem:[#allocation2 + $0x1a8] sm:$0xff]
    %v6733 = vld [vmem:[#allocation2 + $0x1b0] sm:$0xff]
    %v6734 = vld [vmem:[#allocation2 + $0x1b8] sm:$0xff]
    %6735 = vmatprep.subr.mxu0 %v6600
    %6736 = vmatpush1.msra.mxu0 %v6599
    %6737 = vmatprep.subr.mxu0 %v6604
    %6738 = vmatpush1.msra.mxu0 %v6603
    %6739 = vmatprep.subr.mxu0 %v6608
    %6740 = vmatpush1.msra.mxu0 %v6607
    %6741 = vmatprep.subr.mxu0 %v6612
    %6742 = vmatpush1.msra.mxu0 %v6611
    %6743 = vmatprep.subr.mxu0 %v6616
    %6744 = vmatpush1.msra.mxu0 %v6615
    %6745 = vmatprep.subr.mxu0 %v6620
    %6746 = vmatpush1.msra.mxu0 %v6619
    %6747 = vmatprep.subr.mxu0 %v6624
    %6748 = vmatpush1.msra.mxu0 %v6623
    %6749 = vmatprep.subr.mxu0 %v6628
    %6750 = vmatpush1.msra.mxu0 %v6627
    %6751 = vmatprep.subr.mxu0 %v6632
    %6752 = vmatpush1.msra.mxu0 %v6631
    %6753 = vmatprep.subr.mxu0 %v6636
    %6754 = vmatpush1.msra.mxu0 %v6635
    %6755 = vmatprep.subr.mxu0 %v6640
    %6756 = vmatpush1.msra.mxu0 %v6639
    %6757 = vmatprep.subr.mxu0 %v6644
    %6758 = vmatpush1.msra.mxu0 %v6643
    %6759 = vmatprep.subr.mxu0 %v6648
    %6760 = vmatpush1.msra.mxu0 %v6647
    %6761 = vmatprep.subr.mxu0 %v6652
    %6762 = vmatpush1.msra.mxu0 %v6651
    %6763 = vmatprep.subr.mxu0 %v6656
    %6764 = vmatpush1.msra.mxu0 %v6655
    %6765 = vmatprep.subr.mxu0 %v6660
    %6766 = vmatpush1.msra.mxu0 %v6659
    %6767 = vmatprep.subr.mxu0 %v6664
    %6768 = vmatpush1.msra.mxu0 %v6663
    %6769 = vmatprep.subr.mxu0 %v6668
    %6770 = vmatpush1.msra.mxu0 %v6667
    %6771 = vmatprep.subr.mxu0 %v6672
    %6772 = vmatpush1.msra.mxu0 %v6671
    %6773 = vmatprep.subr.mxu0 %v6676
    %6774 = vmatpush1.msra.mxu0 %v6675
    %6775 = vmatprep.subr.mxu0 %v6680
    %6776 = vmatpush1.msra.mxu0 %v6679
    %6777 = vmatprep.subr.mxu0 %v6684
    %6778 = vmatpush1.msra.mxu0 %v6683
    %6779 = vmatprep.subr.mxu0 %v6688
    %6780 = vmatpush1.msra.mxu0 %v6687
    %6781 = vmatprep.subr.mxu0 %v6692
    %6782 = vmatpush1.msra.mxu0 %v6691
    %6783 = vmatprep.subr.mxu0 %v6696
    %6784 = vmatpush1.msra.mxu0 %v6695
    %6785 = vmatprep.subr.mxu0 %v6700
    %6786 = vmatpush1.msra.mxu0 %v6699
    %6787 = vmatprep.subr.mxu0 %v6704
    %6788 = vmatpush1.msra.mxu0 %v6703
    %6789 = vmatprep.subr.mxu0 %v6708
    %6790 = vmatpush1.msra.mxu0 %v6707
    %6791 = vmatprep.subr.mxu0 %v6712
    %6792 = vmatpush1.msra.mxu0 %v6711
    %6793 = vmatprep.subr.mxu0 %v6716
    %6794 = vmatpush1.msra.mxu0 %v6715
    %6795 = vmatprep.subr.mxu0 %v6720
    %6796 = vmatpush1.msra.mxu0 %v6719
    %6797 = vmatprep.subr.mxu0 %v6724
    %6798 = vmatpush1.msra.mxu0 %v6723
    %6799 = vmatprep.mubr.f32.mxu0 %v6595
    %6800 = vmatmul.mubr.f32.gmra.mrb[0].mxu0 %v6593
    %v6801 = vpop.f32.mrb[0].mxu0
    %v6802 = vadd.f32 %v6727, %v6801
    %v6803 = vpop.f32.mrb[0].mxu0
    %v6804 = vadd.f32 %v6728, %v6803
    %6805 = vmatprep.mubr.f32.mxu0 %v6596
    %6806 = vmatmul.mubr.f32.gmra.mrb[0].mxu0 %v6594
    %v6807 = vpop.f32.mrb[0].mxu0
    %v6808 = vadd.f32 %v6731, %v6807
    %v6809 = vpop.f32.mrb[0].mxu0
    %v6810 = vadd.f32 %v6732, %v6809
    %6811 = vdwg.mxu0
    %6812 = vmatprep.subr.mxu0 %v6602
    %6813 = vmatpush1.msra.mxu0 %v6601
    %6814 = vmatprep.subr.mxu0 %v6606
    %6815 = vmatpush1.msra.mxu0 %v6605
    %6816 = vmatprep.subr.mxu0 %v6610
    %6817 = vmatpush1.msra.mxu0 %v6609
    %6818 = vmatprep.subr.mxu0 %v6614
    %6819 = vmatpush1.msra.mxu0 %v6613
    %6820 = vmatprep.subr.mxu0 %v6618
    %6821 = vmatpush1.msra.mxu0 %v6617
    %6822 = vmatprep.subr.mxu0 %v6622
    %6823 = vmatpush1.msra.mxu0 %v6621
    %6824 = vmatprep.subr.mxu0 %v6626
    %6825 = vmatpush1.msra.mxu0 %v6625
    %6826 = vmatprep.subr.mxu0 %v6630
    %6827 = vmatpush1.msra.mxu0 %v6629
    %6828 = vmatprep.subr.mxu0 %v6634
    %6829 = vmatpush1.msra.mxu0 %v6633
    %6830 = vmatprep.subr.mxu0 %v6638
    %6831 = vmatpush1.msra.mxu0 %v6637
    %6832 = vmatprep.subr.mxu0 %v6642
    %6833 = vmatpush1.msra.mxu0 %v6641
    %6834 = vmatprep.subr.mxu0 %v6646
    %6835 = vmatpush1.msra.mxu0 %v6645
    %6836 = vmatprep.subr.mxu0 %v6650
    %6837 = vmatpush1.msra.mxu0 %v6649
    %6838 = vmatprep.subr.mxu0 %v6654
    %6839 = vmatpush1.msra.mxu0 %v6653
    %6840 = vmatprep.subr.mxu0 %v6658
    %6841 = vmatpush1.msra.mxu0 %v6657
    %6842 = vmatprep.subr.mxu0 %v6662
    %6843 = vmatpush1.msra.mxu0 %v6661
    %6844 = vmatprep.subr.mxu0 %v6666
    %6845 = vmatpush1.msra.mxu0 %v6665
    %6846 = vmatprep.subr.mxu0 %v6670
    %6847 = vmatpush1.msra.mxu0 %v6669
    %6848 = vmatprep.subr.mxu0 %v6674
    %6849 = vmatpush1.msra.mxu0 %v6673
    %6850 = vmatprep.subr.mxu0 %v6678
    %6851 = vmatpush1.msra.mxu0 %v6677
    %6852 = vmatprep.subr.mxu0 %v6682
    %6853 = vmatpush1.msra.mxu0 %v6681
    %6854 = vmatprep.subr.mxu0 %v6686
    %6855 = vmatpush1.msra.mxu0 %v6685
    %6856 = vmatprep.subr.mxu0 %v6690
    %6857 = vmatpush1.msra.mxu0 %v6689
    %6858 = vmatprep.subr.mxu0 %v6694
    %6859 = vmatpush1.msra.mxu0 %v6693
    %6860 = vmatprep.subr.mxu0 %v6698
    %6861 = vmatpush1.msra.mxu0 %v6697
    %6862 = vmatprep.subr.mxu0 %v6702
    %6863 = vmatpush1.msra.mxu0 %v6701
    %6864 = vmatprep.subr.mxu0 %v6706
    %6865 = vmatpush1.msra.mxu0 %v6705
    %6866 = vmatprep.subr.mxu0 %v6710
    %6867 = vmatpush1.msra.mxu0 %v6709
    %6868 = vmatprep.subr.mxu0 %v6714
    %6869 = vmatpush1.msra.mxu0 %v6713
    %6870 = vmatprep.subr.mxu0 %v6718
    %6871 = vmatpush1.msra.mxu0 %v6717
    %6872 = vmatprep.subr.mxu0 %v6722
    %6873 = vmatpush1.msra.mxu0 %v6721
    %6874 = vmatprep.subr.mxu0 %v6726
    %6875 = vmatpush1.msra.mxu0 %v6725
    %6876 = vmatprep.mubr.f32.mxu0 %v6595
    %6877 = vmatmul.mubr.f32.gmra.mrb[0].mxu0 %v6593
    %v6878 = vpop.f32.mrb[0].mxu0
    %v6879 = vadd.f32 %v6729, %v6878
    %v6880 = vpop.f32.mrb[0].mxu0
    %v6881 = vadd.f32 %v6730, %v6880
    %6882 = vmatprep.mubr.f32.mxu0 %v6596
    %6883 = vmatmul.mubr.f32.gmra.mrb[0].mxu0 %v6594
    %v6884 = vpop.f32.mrb[0].mxu0
    %v6885 = vadd.f32 %v6733, %v6884
    %v6886 = vpop.f32.mrb[0].mxu0
    %v6887 = vadd.f32 %v6734, %v6886
    %6888 = vdwg.mxu0
    %v6889 = vadd.f32 %v6802, %v4479
    %v6890 = vadd.f32 %v6804, %v4480
    %v6891 = vadd.f32 %v6879, %v4481
    %v6892 = vadd.f32 %v6881, %v4482
    %v6893 = vadd.f32 %v6808, %v4483
    %v6894 = vadd.f32 %v6810, %v4484
    %v6895 = vadd.f32 %v6885, %v4485
    %v6896 = vadd.f32 %v6887, %v4486
    %v6897 = vxor.u32 %v6889, 2147483648
    %v6898 = vxor.u32 %v6893, 2147483648
    %v6899 = vmul.f32 %v6897, 1.442695
    %v6900 = vpow.pop %v6899
    %v6901 = vmul.f32 %v6898, 1.442695
    %v6902 = vpow.pop %v6901
    %v6903 = vadd.f32 %v6900, 1.0
    %v6904 = vadd.f32 %v6902, 1.0
    %v6905 = vrcp.pop %v6903
    %v6906 = vmul.f32 1.0, %v6905
    %v6907 = vrcp.pop %v6904
    %v6908 = vmul.f32 1.0, %v6907
    %v6909 = vxor.u32 %v6890, 2147483648
    %v6910 = vxor.u32 %v6894, 2147483648
    %v6911 = vmul.f32 %v6909, 1.442695
    %v6912 = vpow.pop %v6911
    %v6913 = vmul.f32 %v6910, 1.442695
    %v6914 = vpow.pop %v6913
    %v6915 = vadd.f32 %v6912, 1.0
    %v6916 = vadd.f32 %v6914, 1.0
    %v6917 = vrcp.pop %v6915
    %v6918 = vmul.f32 1.0, %v6917
    %v6919 = vrcp.pop %v6916
    %v6920 = vmul.f32 1.0, %v6919
    %v6921 = vtanh.pop %v6891
    %v6922 = vtanh.pop %v6895
    %v6923 = vxor.u32 %v6892, 2147483648
    %v6924 = vxor.u32 %v6896, 2147483648
    %v6925 = vmul.f32 %v6923, 1.442695
    %v6926 = vpow.pop %v6925
    %v6927 = vmul.f32 %v6924, 1.442695
    %v6928 = vpow.pop %v6927
    %v6929 = vadd.f32 %v6926, 1.0
    %v6930 = vadd.f32 %v6928, 1.0
    %v6931 = vrcp.pop %v6929
    %v6932 = vmul.f32 1.0, %v6931
    %v6933 = vrcp.pop %v6930
    %v6934 = vmul.f32 1.0, %v6933
    %v6935 = vmul.f32 %v6918, %v6587
    %v6936 = vmul.f32 %v6920, %v6588
    %v6937 = vmul.f32 %v6906, %v6921
    %v6938 = vmul.f32 %v6908, %v6922
    %v6939 = vadd.f32 %v6935, %v6937
    %v6940 = vadd.f32 %v6936, %v6938
    %v6941 = vtanh.pop %v6939
    %v6942 = vtanh.pop %v6940
    %v6943 = vmul.f32 %v6932, %v6941
    %v6944 = vmul.f32 %v6934, %v6942
    %v6945 = vmul.f32 %v6943, %v92
    %v6946 = vmul.f32 %v6944, %v93
    %v6947 = vmul.f32 %v6943, %v94
    %v6948 = vmul.f32 %v6944, %v95
    %6949 = vst [vmem:[#allocation4 + $0x60] sm:$0xff] %v6943
    %6950 = vst [vmem:[#allocation4 + $0x18] sm:$0xff] %v6944
    %v6951 = vld [vmem:[#allocation9] sm:$0xff]
    %v6952 = vld [vmem:[#allocation9 + $0x8] sm:$0xff]
    %v6953 = vld [vmem:[#allocation9 + $0x10] sm:$0xff]
    %v6954 = vld [vmem:[#allocation9 + $0x18] sm:$0xff]
    %v6955 = vld [vmem:[#allocation9 + $0x20] sm:$0xff]
    %v6956 = vld [vmem:[#allocation9 + $0x28] sm:$0xff]
    %v6957 = vld [vmem:[#allocation9 + $0x30] sm:$0xff]
    %v6958 = vld [vmem:[#allocation9 + $0x38] sm:$0xff]
    %v6959 = vld [vmem:[#allocation9 + $0x40] sm:$0xff]
    %v6960 = vld [vmem:[#allocation9 + $0x48] sm:$0xff]
    %v6961 = vld [vmem:[#allocation9 + $0x50] sm:$0xff]
    %v6962 = vld [vmem:[#allocation9 + $0x58] sm:$0xff]
    %v6963 = vld [vmem:[#allocation9 + $0x60] sm:$0xff]
    %v6964 = vld [vmem:[#allocation9 + $0x68] sm:$0xff]
    %v6965 = vld [vmem:[#allocation9 + $0x70] sm:$0xff]
    %v6966 = vld [vmem:[#allocation9 + $0x78] sm:$0xff]
    %v6967 = vld [vmem:[#allocation9 + $0x80] sm:$0xff]
    %v6968 = vld [vmem:[#allocation9 + $0x88] sm:$0xff]
    %v6969 = vld [vmem:[#allocation9 + $0x90] sm:$0xff]
    %v6970 = vld [vmem:[#allocation9 + $0x98] sm:$0xff]
    %v6971 = vld [vmem:[#allocation9 + $0xa0] sm:$0xff]
    %v6972 = vld [vmem:[#allocation9 + $0xa8] sm:$0xff]
    %v6973 = vld [vmem:[#allocation9 + $0xb0] sm:$0xff]
    %v6974 = vld [vmem:[#allocation9 + $0xb8] sm:$0xff]
    %v6975 = vld [vmem:[#allocation9 + $0xc0] sm:$0xff]
    %v6976 = vld [vmem:[#allocation9 + $0xc8] sm:$0xff]
    %v6977 = vld [vmem:[#allocation9 + $0xd0] sm:$0xff]
    %v6978 = vld [vmem:[#allocation9 + $0xd8] sm:$0xff]
    %v6979 = vld [vmem:[#allocation9 + $0xe0] sm:$0xff]
    %v6980 = vld [vmem:[#allocation9 + $0xe8] sm:$0xff]
    %v6981 = vld [vmem:[#allocation9 + $0xf0] sm:$0xff]
    %v6982 = vld [vmem:[#allocation9 + $0xf8] sm:$0xff]
    %v6983 = vld [vmem:[#allocation9 + $0x100] sm:$0xff]
    %v6984 = vld [vmem:[#allocation9 + $0x108] sm:$0xff]
    %v6985 = vld [vmem:[#allocation9 + $0x110] sm:$0xff]
    %v6986 = vld [vmem:[#allocation9 + $0x118] sm:$0xff]
    %v6987 = vld [vmem:[#allocation9 + $0x120] sm:$0xff]
    %v6988 = vld [vmem:[#allocation9 + $0x128] sm:$0xff]
    %v6989 = vld [vmem:[#allocation9 + $0x130] sm:$0xff]
    %v6990 = vld [vmem:[#allocation9 + $0x138] sm:$0xff]
    %v6991 = vld [vmem:[#allocation9 + $0x140] sm:$0xff]
    %v6992 = vld [vmem:[#allocation9 + $0x148] sm:$0xff]
    %v6993 = vld [vmem:[#allocation9 + $0x150] sm:$0xff]
    %v6994 = vld [vmem:[#allocation9 + $0x158] sm:$0xff]
    %v6995 = vld [vmem:[#allocation9 + $0x160] sm:$0xff]
    %v6996 = vld [vmem:[#allocation9 + $0x168] sm:$0xff]
    %v6997 = vld [vmem:[#allocation9 + $0x170] sm:$0xff]
    %v6998 = vld [vmem:[#allocation9 + $0x178] sm:$0xff]
    %v6999 = vld [vmem:[#allocation9 + $0x180] sm:$0xff]
    %v7000 = vld [vmem:[#allocation9 + $0x188] sm:$0xff]
    %v7001 = vld [vmem:[#allocation9 + $0x190] sm:$0xff]
    %v7002 = vld [vmem:[#allocation9 + $0x198] sm:$0xff]
    %v7003 = vld [vmem:[#allocation9 + $0x1a0] sm:$0xff]
    %v7004 = vld [vmem:[#allocation9 + $0x1a8] sm:$0xff]
    %v7005 = vld [vmem:[#allocation9 + $0x1b0] sm:$0xff]
    %v7006 = vld [vmem:[#allocation9 + $0x1b8] sm:$0xff]
    %v7007 = vld [vmem:[#allocation9 + $0x1c0] sm:$0xff]
    %v7008 = vld [vmem:[#allocation9 + $0x1c8] sm:$0xff]
    %v7009 = vld [vmem:[#allocation9 + $0x1d0] sm:$0xff]
    %v7010 = vld [vmem:[#allocation9 + $0x1d8] sm:$0xff]
    %v7011 = vld [vmem:[#allocation9 + $0x1e0] sm:$0xff]
    %v7012 = vld [vmem:[#allocation9 + $0x1e8] sm:$0xff]
    %v7013 = vld [vmem:[#allocation9 + $0x1f0] sm:$0xff]
    %v7014 = vld [vmem:[#allocation9 + $0x1f8] sm:$0xff]
    %v7015 = vld [vmem:[#allocation9 + $0x200] sm:$0xff]
    %v7016 = vld [vmem:[#allocation9 + $0x208] sm:$0xff]
    %v7017 = vld [vmem:[#allocation9 + $0x210] sm:$0xff]
    %v7018 = vld [vmem:[#allocation9 + $0x218] sm:$0xff]
    %v7019 = vld [vmem:[#allocation9 + $0x220] sm:$0xff]
    %v7020 = vld [vmem:[#allocation9 + $0x228] sm:$0xff]
    %v7021 = vld [vmem:[#allocation9 + $0x230] sm:$0xff]
    %v7022 = vld [vmem:[#allocation9 + $0x238] sm:$0xff]
    %v7023 = vld [vmem:[#allocation9 + $0x240] sm:$0xff]
    %v7024 = vld [vmem:[#allocation9 + $0x248] sm:$0xff]
    %v7025 = vld [vmem:[#allocation9 + $0x250] sm:$0xff]
    %v7026 = vld [vmem:[#allocation9 + $0x258] sm:$0xff]
    %v7027 = vld [vmem:[#allocation9 + $0x260] sm:$0xff]
    %v7028 = vld [vmem:[#allocation9 + $0x268] sm:$0xff]
    %v7029 = vld [vmem:[#allocation9 + $0x270] sm:$0xff]
    %v7030 = vld [vmem:[#allocation9 + $0x278] sm:$0xff]
    %v7031 = vld [vmem:[#allocation9 + $0x280] sm:$0xff]
    %v7032 = vld [vmem:[#allocation9 + $0x288] sm:$0xff]
    %v7033 = vld [vmem:[#allocation9 + $0x290] sm:$0xff]
    %v7034 = vld [vmem:[#allocation9 + $0x298] sm:$0xff]
    %v7035 = vld [vmem:[#allocation9 + $0x2a0] sm:$0xff]
    %v7036 = vld [vmem:[#allocation9 + $0x2a8] sm:$0xff]
    %v7037 = vld [vmem:[#allocation9 + $0x2b0] sm:$0xff]
    %v7038 = vld [vmem:[#allocation9 + $0x2b8] sm:$0xff]
    %v7039 = vld [vmem:[#allocation9 + $0x2c0] sm:$0xff]
    %v7040 = vld [vmem:[#allocation9 + $0x2c8] sm:$0xff]
    %v7041 = vld [vmem:[#allocation9 + $0x2d0] sm:$0xff]
    %v7042 = vld [vmem:[#allocation9 + $0x2d8] sm:$0xff]
    %v7043 = vld [vmem:[#allocation9 + $0x2e0] sm:$0xff]
    %v7044 = vld [vmem:[#allocation9 + $0x2e8] sm:$0xff]
    %v7045 = vld [vmem:[#allocation9 + $0x2f0] sm:$0xff]
    %v7046 = vld [vmem:[#allocation9 + $0x2f8] sm:$0xff]
    %v7047 = vld [vmem:[#allocation9 + $0x300] sm:$0xff]
    %v7048 = vld [vmem:[#allocation9 + $0x308] sm:$0xff]
    %v7049 = vld [vmem:[#allocation9 + $0x310] sm:$0xff]
    %v7050 = vld [vmem:[#allocation9 + $0x318] sm:$0xff]
    %v7051 = vld [vmem:[#allocation9 + $0x320] sm:$0xff]
    %v7052 = vld [vmem:[#allocation9 + $0x328] sm:$0xff]
    %v7053 = vld [vmem:[#allocation9 + $0x330] sm:$0xff]
    %v7054 = vld [vmem:[#allocation9 + $0x338] sm:$0xff]
    %v7055 = vld [vmem:[#allocation9 + $0x340] sm:$0xff]
    %v7056 = vld [vmem:[#allocation9 + $0x348] sm:$0xff]
    %v7057 = vld [vmem:[#allocation9 + $0x350] sm:$0xff]
    %v7058 = vld [vmem:[#allocation9 + $0x358] sm:$0xff]
    %v7059 = vld [vmem:[#allocation9 + $0x360] sm:$0xff]
    %v7060 = vld [vmem:[#allocation9 + $0x368] sm:$0xff]
    %v7061 = vld [vmem:[#allocation9 + $0x370] sm:$0xff]
    %v7062 = vld [vmem:[#allocation9 + $0x378] sm:$0xff]
    %v7063 = vld [vmem:[#allocation9 + $0x380] sm:$0xff]
    %v7064 = vld [vmem:[#allocation9 + $0x388] sm:$0xff]
    %v7065 = vld [vmem:[#allocation9 + $0x390] sm:$0xff]
    %v7066 = vld [vmem:[#allocation9 + $0x398] sm:$0xff]
    %v7067 = vld [vmem:[#allocation9 + $0x3a0] sm:$0xff]
    %v7068 = vld [vmem:[#allocation9 + $0x3a8] sm:$0xff]
    %v7069 = vld [vmem:[#allocation9 + $0x3b0] sm:$0xff]
    %v7070 = vld [vmem:[#allocation9 + $0x3b8] sm:$0xff]
    %v7071 = vld [vmem:[#allocation9 + $0x3c0] sm:$0xff]
    %v7072 = vld [vmem:[#allocation9 + $0x3c8] sm:$0xff]
    %v7073 = vld [vmem:[#allocation9 + $0x3d0] sm:$0xff]
    %v7074 = vld [vmem:[#allocation9 + $0x3d8] sm:$0xff]
    %v7075 = vld [vmem:[#allocation9 + $0x3e0] sm:$0xff]
    %v7076 = vld [vmem:[#allocation9 + $0x3e8] sm:$0xff]
    %v7077 = vld [vmem:[#allocation9 + $0x3f0] sm:$0xff]
    %v7078 = vld [vmem:[#allocation9 + $0x3f8] sm:$0xff]
    %v7079 = vld [vmem:[#allocation2 + $0x1c0] sm:$0xff]
    %v7080 = vld [vmem:[#allocation2 + $0x1c8] sm:$0xff]
    %v7081 = vld [vmem:[#allocation2 + $0x1d0] sm:$0xff]
    %v7082 = vld [vmem:[#allocation2 + $0x1d8] sm:$0xff]
    %v7083 = vld [vmem:[#allocation2 + $0x1e0] sm:$0xff]
    %v7084 = vld [vmem:[#allocation2 + $0x1e8] sm:$0xff]
    %v7085 = vld [vmem:[#allocation2 + $0x1f0] sm:$0xff]
    %v7086 = vld [vmem:[#allocation2 + $0x1f8] sm:$0xff]
    %7087 = vmatprep.subr.mxu0 %v6952
    %7088 = vmatpush1.msra.mxu0 %v6951
    %7089 = vmatprep.subr.mxu0 %v6956
    %7090 = vmatpush1.msra.mxu0 %v6955
    %7091 = vmatprep.subr.mxu0 %v6960
    %7092 = vmatpush1.msra.mxu0 %v6959
    %7093 = vmatprep.subr.mxu0 %v6964
    %7094 = vmatpush1.msra.mxu0 %v6963
    %7095 = vmatprep.subr.mxu0 %v6968
    %7096 = vmatpush1.msra.mxu0 %v6967
    %7097 = vmatprep.subr.mxu0 %v6972
    %7098 = vmatpush1.msra.mxu0 %v6971
    %7099 = vmatprep.subr.mxu0 %v6976
    %7100 = vmatpush1.msra.mxu0 %v6975
    %7101 = vmatprep.subr.mxu0 %v6980
    %7102 = vmatpush1.msra.mxu0 %v6979
    %7103 = vmatprep.subr.mxu0 %v6984
    %7104 = vmatpush1.msra.mxu0 %v6983
    %7105 = vmatprep.subr.mxu0 %v6988
    %7106 = vmatpush1.msra.mxu0 %v6987
    %7107 = vmatprep.subr.mxu0 %v6992
    %7108 = vmatpush1.msra.mxu0 %v6991
    %7109 = vmatprep.subr.mxu0 %v6996
    %7110 = vmatpush1.msra.mxu0 %v6995
    %7111 = vmatprep.subr.mxu0 %v7000
    %7112 = vmatpush1.msra.mxu0 %v6999
    %7113 = vmatprep.subr.mxu0 %v7004
    %7114 = vmatpush1.msra.mxu0 %v7003
    %7115 = vmatprep.subr.mxu0 %v7008
    %7116 = vmatpush1.msra.mxu0 %v7007
    %7117 = vmatprep.subr.mxu0 %v7012
    %7118 = vmatpush1.msra.mxu0 %v7011
    %7119 = vmatprep.subr.mxu0 %v7016
    %7120 = vmatpush1.msra.mxu0 %v7015
    %7121 = vmatprep.subr.mxu0 %v7020
    %7122 = vmatpush1.msra.mxu0 %v7019
    %7123 = vmatprep.subr.mxu0 %v7024
    %7124 = vmatpush1.msra.mxu0 %v7023
    %7125 = vmatprep.subr.mxu0 %v7028
    %7126 = vmatpush1.msra.mxu0 %v7027
    %7127 = vmatprep.subr.mxu0 %v7032
    %7128 = vmatpush1.msra.mxu0 %v7031
    %7129 = vmatprep.subr.mxu0 %v7036
    %7130 = vmatpush1.msra.mxu0 %v7035
    %7131 = vmatprep.subr.mxu0 %v7040
    %7132 = vmatpush1.msra.mxu0 %v7039
    %7133 = vmatprep.subr.mxu0 %v7044
    %7134 = vmatpush1.msra.mxu0 %v7043
    %7135 = vmatprep.subr.mxu0 %v7048
    %7136 = vmatpush1.msra.mxu0 %v7047
    %7137 = vmatprep.subr.mxu0 %v7052
    %7138 = vmatpush1.msra.mxu0 %v7051
    %7139 = vmatprep.subr.mxu0 %v7056
    %7140 = vmatpush1.msra.mxu0 %v7055
    %7141 = vmatprep.subr.mxu0 %v7060
    %7142 = vmatpush1.msra.mxu0 %v7059
    %7143 = vmatprep.subr.mxu0 %v7064
    %7144 = vmatpush1.msra.mxu0 %v7063
    %7145 = vmatprep.subr.mxu0 %v7068
    %7146 = vmatpush1.msra.mxu0 %v7067
    %7147 = vmatprep.subr.mxu0 %v7072
    %7148 = vmatpush1.msra.mxu0 %v7071
    %7149 = vmatprep.subr.mxu0 %v7076
    %7150 = vmatpush1.msra.mxu0 %v7075
    %7151 = vmatprep.mubr.f32.mxu0 %v6947
    %7152 = vmatmul.mubr.f32.gmra.mrb[0].mxu0 %v6945
    %v7153 = vpop.f32.mrb[0].mxu0
    %v7154 = vadd.f32 %v7079, %v7153
    %v7155 = vpop.f32.mrb[0].mxu0
    %v7156 = vadd.f32 %v7080, %v7155
    %7157 = vmatprep.mubr.f32.mxu0 %v6948
    %7158 = vmatmul.mubr.f32.gmra.mrb[0].mxu0 %v6946
    %v7159 = vpop.f32.mrb[0].mxu0
    %v7160 = vadd.f32 %v7083, %v7159
    %v7161 = vpop.f32.mrb[0].mxu0
    %v7162 = vadd.f32 %v7084, %v7161
    %7163 = vdwg.mxu0
    %7164 = vmatprep.subr.mxu0 %v6954
    %7165 = vmatpush1.msra.mxu0 %v6953
    %7166 = vmatprep.subr.mxu0 %v6958
    %7167 = vmatpush1.msra.mxu0 %v6957
    %7168 = vmatprep.subr.mxu0 %v6962
    %7169 = vmatpush1.msra.mxu0 %v6961
    %7170 = vmatprep.subr.mxu0 %v6966
    %7171 = vmatpush1.msra.mxu0 %v6965
    %7172 = vmatprep.subr.mxu0 %v6970
    %7173 = vmatpush1.msra.mxu0 %v6969
    %7174 = vmatprep.subr.mxu0 %v6974
    %7175 = vmatpush1.msra.mxu0 %v6973
    %7176 = vmatprep.subr.mxu0 %v6978
    %7177 = vmatpush1.msra.mxu0 %v6977
    %7178 = vmatprep.subr.mxu0 %v6982
    %7179 = vmatpush1.msra.mxu0 %v6981
    %7180 = vmatprep.subr.mxu0 %v6986
    %7181 = vmatpush1.msra.mxu0 %v6985
    %7182 = vmatprep.subr.mxu0 %v6990
    %7183 = vmatpush1.msra.mxu0 %v6989
    %7184 = vmatprep.subr.mxu0 %v6994
    %7185 = vmatpush1.msra.mxu0 %v6993
    %7186 = vmatprep.subr.mxu0 %v6998
    %7187 = vmatpush1.msra.mxu0 %v6997
    %7188 = vmatprep.subr.mxu0 %v7002
    %7189 = vmatpush1.msra.mxu0 %v7001
    %7190 = vmatprep.subr.mxu0 %v7006
    %7191 = vmatpush1.msra.mxu0 %v7005
    %7192 = vmatprep.subr.mxu0 %v7010
    %7193 = vmatpush1.msra.mxu0 %v7009
    %7194 = vmatprep.subr.mxu0 %v7014
    %7195 = vmatpush1.msra.mxu0 %v7013
    %7196 = vmatprep.subr.mxu0 %v7018
    %7197 = vmatpush1.msra.mxu0 %v7017
    %7198 = vmatprep.subr.mxu0 %v7022
    %7199 = vmatpush1.msra.mxu0 %v7021
    %7200 = vmatprep.subr.mxu0 %v7026
    %7201 = vmatpush1.msra.mxu0 %v7025
    %7202 = vmatprep.subr.mxu0 %v7030
    %7203 = vmatpush1.msra.mxu0 %v7029
    %7204 = vmatprep.subr.mxu0 %v7034
    %7205 = vmatpush1.msra.mxu0 %v7033
    %7206 = vmatprep.subr.mxu0 %v7038
    %7207 = vmatpush1.msra.mxu0 %v7037
    %7208 = vmatprep.subr.mxu0 %v7042
    %7209 = vmatpush1.msra.mxu0 %v7041
    %7210 = vmatprep.subr.mxu0 %v7046
    %7211 = vmatpush1.msra.mxu0 %v7045
    %7212 = vmatprep.subr.mxu0 %v7050
    %7213 = vmatpush1.msra.mxu0 %v7049
    %7214 = vmatprep.subr.mxu0 %v7054
    %7215 = vmatpush1.msra.mxu0 %v7053
    %7216 = vmatprep.subr.mxu0 %v7058
    %7217 = vmatpush1.msra.mxu0 %v7057
    %7218 = vmatprep.subr.mxu0 %v7062
    %7219 = vmatpush1.msra.mxu0 %v7061
    %7220 = vmatprep.subr.mxu0 %v7066
    %7221 = vmatpush1.msra.mxu0 %v7065
    %7222 = vmatprep.subr.mxu0 %v7070
    %7223 = vmatpush1.msra.mxu0 %v7069
    %7224 = vmatprep.subr.mxu0 %v7074
    %7225 = vmatpush1.msra.mxu0 %v7073
    %7226 = vmatprep.subr.mxu0 %v7078
    %7227 = vmatpush1.msra.mxu0 %v7077
    %7228 = vmatprep.mubr.f32.mxu0 %v6947
    %7229 = vmatmul.mubr.f32.gmra.mrb[0].mxu0 %v6945
    %v7230 = vpop.f32.mrb[0].mxu0
    %v7231 = vadd.f32 %v7081, %v7230
    %v7232 = vpop.f32.mrb[0].mxu0
    %v7233 = vadd.f32 %v7082, %v7232
    %7234 = vmatprep.mubr.f32.mxu0 %v6948
    %7235 = vmatmul.mubr.f32.gmra.mrb[0].mxu0 %v6946
    %v7236 = vpop.f32.mrb[0].mxu0
    %v7237 = vadd.f32 %v7085, %v7236
    %v7238 = vpop.f32.mrb[0].mxu0
    %v7239 = vadd.f32 %v7086, %v7238
    %7240 = vdwg.mxu0
    %v7241 = vadd.f32 %v7154, %v4479
    %v7242 = vadd.f32 %v7156, %v4480
    %v7243 = vadd.f32 %v7231, %v4481
    %v7244 = vadd.f32 %v7233, %v4482
    %v7245 = vadd.f32 %v7160, %v4483
    %v7246 = vadd.f32 %v7162, %v4484
    %v7247 = vadd.f32 %v7237, %v4485
    %v7248 = vadd.f32 %v7239, %v4486
    %v7249 = vxor.u32 %v7241, 2147483648
    %v7250 = vxor.u32 %v7245, 2147483648
    %v7251 = vmul.f32 %v7249, 1.442695
    %v7252 = vpow.pop %v7251
    %v7253 = vmul.f32 %v7250, 1.442695
    %v7254 = vpow.pop %v7253
    %v7255 = vadd.f32 %v7252, 1.0
    %v7256 = vadd.f32 %v7254, 1.0
    %v7257 = vrcp.pop %v7255
    %v7258 = vmul.f32 1.0, %v7257
    %v7259 = vrcp.pop %v7256
    %v7260 = vmul.f32 1.0, %v7259
    %v7261 = vxor.u32 %v7242, 2147483648
    %v7262 = vxor.u32 %v7246, 2147483648
    %v7263 = vmul.f32 %v7261, 1.442695
    %v7264 = vpow.pop %v7263
    %v7265 = vmul.f32 %v7262, 1.442695
    %v7266 = vpow.pop %v7265
    %v7267 = vadd.f32 %v7264, 1.0
    %v7268 = vadd.f32 %v7266, 1.0
    %v7269 = vrcp.pop %v7267
    %v7270 = vmul.f32 1.0, %v7269
    %v7271 = vrcp.pop %v7268
    %v7272 = vmul.f32 1.0, %v7271
    %v7273 = vtanh.pop %v7243
    %v7274 = vtanh.pop %v7247
    %v7275 = vxor.u32 %v7244, 2147483648
    %v7276 = vxor.u32 %v7248, 2147483648
    %v7277 = vmul.f32 %v7275, 1.442695
    %v7278 = vpow.pop %v7277
    %v7279 = vmul.f32 %v7276, 1.442695
    %v7280 = vpow.pop %v7279
    %v7281 = vadd.f32 %v7278, 1.0
    %v7282 = vadd.f32 %v7280, 1.0
    %v7283 = vrcp.pop %v7281
    %v7284 = vmul.f32 1.0, %v7283
    %v7285 = vrcp.pop %v7282
    %v7286 = vmul.f32 1.0, %v7285
    %v7287 = vmul.f32 %v7270, %v6939
    %v7288 = vmul.f32 %v7272, %v6940
    %v7289 = vmul.f32 %v7258, %v7273
    %v7290 = vmul.f32 %v7260, %v7274
    %v7291 = vadd.f32 %v7287, %v7289
    %v7292 = vadd.f32 %v7288, %v7290
    %v7293 = vtanh.pop %v7291
    %v7294 = vtanh.pop %v7292
    %v7295 = vmul.f32 %v7284, %v7293
    %v7296 = vmul.f32 %v7286, %v7294
    %7297 = vst [vmem:[#allocation4 + $0x70] sm:$0xff] %v7295
    %7298 = vst [vmem:[#allocation4 + $0x8] sm:$0xff] %v7296
    %v7299 = vld [vmem:[#allocation4] sm:$0xff]
    %v7300 = vld [vmem:[#allocation4 + $0x8] sm:$0xff]
    %v7301 = vld [vmem:[#allocation4 + $0x10] sm:$0xff]
    %v7302 = vld [vmem:[#allocation4 + $0x18] sm:$0xff]
    %v7303 = vld [vmem:[#allocation4 + $0x20] sm:$0xff]
    %v7304 = vld [vmem:[#allocation4 + $0x28] sm:$0xff]
    %v7305 = vld [vmem:[#allocation4 + $0x30] sm:$0xff]
    %v7306 = vld [vmem:[#allocation4 + $0x38] sm:$0xff]
    %v7307 = vld [vmem:[#allocation4 + $0x40] sm:$0xff]
    %v7308 = vld [vmem:[#allocation4 + $0x48] sm:$0xff]
    %v7309 = vld [vmem:[#allocation4 + $0x50] sm:$0xff]
    %v7310 = vld [vmem:[#allocation4 + $0x58] sm:$0xff]
    %v7311 = vld [vmem:[#allocation4 + $0x60] sm:$0xff]
    %v7312 = vld [vmem:[#allocation4 + $0x68] sm:$0xff]
    %v7313 = vld [vmem:[#allocation4 + $0x70] sm:$0xff]
    %v7314 = vld [vmem:[#allocation4 + $0x78] sm:$0xff]
    %v7315 = vld [vmem:[%s7] sm:$0xff]
    %v7316 = vld [vmem:[%s7 + $0x8] sm:$0xff]
    %v7317 = vld [vmem:[%s7 + $0x10] sm:$0xff]
    %v7318 = vld [vmem:[%s7 + $0x18] sm:$0xff]
    %v7319 = vld [vmem:[%s7 + $0x20] sm:$0xff]
    %v7320 = vld [vmem:[%s7 + $0x28] sm:$0xff]
    %v7321 = vld [vmem:[%s7 + $0x30] sm:$0xff]
    %v7322 = vld [vmem:[%s7 + $0x38] sm:$0xff]
    %v7323 = vld [vmem:[%s7 + $0x40] sm:$0xff]
    %v7324 = vld [vmem:[%s7 + $0x48] sm:$0xff]
    %v7325 = vld [vmem:[%s7 + $0x50] sm:$0xff]
    %v7326 = vld [vmem:[%s7 + $0x58] sm:$0xff]
    %v7327 = vld [vmem:[%s7 + $0x60] sm:$0xff]
    %v7328 = vld [vmem:[%s7 + $0x68] sm:$0xff]
    %v7329 = vld [vmem:[%s7 + $0x70] sm:$0xff]
    %v7330 = vld [vmem:[%s7 + $0x78] sm:$0xff]
    %v7331 = vld [vmem:[%s7 + $0x80] sm:$0xff]
    %v7332 = vld [vmem:[%s7 + $0x88] sm:$0xff]
    %v7333 = vld [vmem:[%s7 + $0x90] sm:$0xff]
    %v7334 = vld [vmem:[%s7 + $0x98] sm:$0xff]
    %v7335 = vld [vmem:[%s7 + $0xa0] sm:$0xff]
    %v7336 = vld [vmem:[%s7 + $0xa8] sm:$0xff]
    %v7337 = vld [vmem:[%s7 + $0xb0] sm:$0xff]
    %v7338 = vld [vmem:[%s7 + $0xb8] sm:$0xff]
    %v7339 = vld [vmem:[%s7 + $0xc0] sm:$0xff]
    %v7340 = vld [vmem:[%s7 + $0xc8] sm:$0xff]
    %v7341 = vld [vmem:[%s7 + $0xd0] sm:$0xff]
    %v7342 = vld [vmem:[%s7 + $0xd8] sm:$0xff]
    %v7343 = vld [vmem:[%s7 + $0xe0] sm:$0xff]
    %v7344 = vld [vmem:[%s7 + $0xe8] sm:$0xff]
    %v7345 = vld [vmem:[%s7 + $0xf0] sm:$0xff]
    %v7346 = vld [vmem:[%s7 + $0xf8] sm:$0xff]
    %v7347 = vld [vmem:[%s8] sm:$0x1]
    %v7349 = vlaneseq
    %v7350 = vshrl.u32 %v7349, 7
    %v7351 = vsub.s32 0, %v7350
    %v7352 = vrot.slane %v7347, %v7351
    %7354 = vmatprep.subr.mxu0 0.0
    %7355 = vmatpush1.msra.mxu0 %v7315
    %7356 = vmatprep.subr.mxu0 0.0
    %7357 = vmatpush1.msra.mxu0 %v7316
    %7358 = vmatprep.subr.mxu0 0.0
    %7359 = vmatpush1.msra.mxu0 %v7317
    %7360 = vmatprep.subr.mxu0 0.0
    %7361 = vmatpush1.msra.mxu0 %v7318
    %7362 = vmatprep.subr.mxu0 0.0
    %7363 = vmatpush1.msra.mxu0 %v7319
    %7364 = vmatprep.subr.mxu0 0.0
    %7365 = vmatpush1.msra.mxu0 %v7320
    %7366 = vmatprep.subr.mxu0 0.0
    %7367 = vmatpush1.msra.mxu0 %v7321
    %7368 = vmatprep.subr.mxu0 0.0
    %7369 = vmatpush1.msra.mxu0 %v7322
    %7370 = vmatprep.subr.mxu0 0.0
    %7371 = vmatpush1.msra.mxu0 %v7323
    %7372 = vmatprep.subr.mxu0 0.0
    %7373 = vmatpush1.msra.mxu0 %v7324
    %7374 = vmatprep.subr.mxu0 0.0
    %7375 = vmatpush1.msra.mxu0 %v7325
    %7376 = vmatprep.subr.mxu0 0.0
    %7377 = vmatpush1.msra.mxu0 %v7326
    %7378 = vmatprep.subr.mxu0 0.0
    %7379 = vmatpush1.msra.mxu0 %v7327
    %7380 = vmatprep.subr.mxu0 0.0
    %7381 = vmatpush1.msra.mxu0 %v7328
    %7382 = vmatprep.subr.mxu0 0.0
    %7383 = vmatpush1.msra.mxu0 %v7329
    %7384 = vmatprep.subr.mxu0 0.0
    %7385 = vmatpush1.msra.mxu0 %v7330
    %7386 = vmatprep.subr.mxu0 0.0
    %7387 = vmatpush1.msra.mxu0 %v7331
    %7388 = vmatprep.subr.mxu0 0.0
    %7389 = vmatpush1.msra.mxu0 %v7332
    %7390 = vmatprep.subr.mxu0 0.0
    %7391 = vmatpush1.msra.mxu0 %v7333
    %7392 = vmatprep.subr.mxu0 0.0
    %7393 = vmatpush1.msra.mxu0 %v7334
    %7394 = vmatprep.subr.mxu0 0.0
    %7395 = vmatpush1.msra.mxu0 %v7335
    %7396 = vmatprep.subr.mxu0 0.0
    %7397 = vmatpush1.msra.mxu0 %v7336
    %7398 = vmatprep.subr.mxu0 0.0
    %7399 = vmatpush1.msra.mxu0 %v7337
    %7400 = vmatprep.subr.mxu0 0.0
    %7401 = vmatpush1.msra.mxu0 %v7338
    %7402 = vmatprep.subr.mxu0 0.0
    %7403 = vmatpush1.msra.mxu0 %v7339
    %7404 = vmatprep.subr.mxu0 0.0
    %7405 = vmatpush1.msra.mxu0 %v7340
    %7406 = vmatprep.subr.mxu0 0.0
    %7407 = vmatpush1.msra.mxu0 %v7341
    %7408 = vmatprep.subr.mxu0 0.0
    %7409 = vmatpush1.msra.mxu0 %v7342
    %7410 = vmatprep.subr.mxu0 0.0
    %7411 = vmatpush1.msra.mxu0 %v7343
    %7412 = vmatprep.subr.mxu0 0.0
    %7413 = vmatpush1.msra.mxu0 %v7344
    %7414 = vmatprep.subr.mxu0 0.0
    %7415 = vmatpush1.msra.mxu0 %v7345
    %7416 = vmatprep.subr.mxu0 0.0
    %7417 = vmatpush1.msra.mxu0 %v7346
    %7418 = vmatprep.mubr.f32.mxu0 %v7300
    %7419 = vmatmul.mubr.f32.gmra.mrb[0].mxu0 %v7299
    %v7420 = vpop.f32.mrb[0].mxu0
    %v7421 = vadd.f32 %v7352, %v7420
    %v7422 = vpop.f32.mrb[0].mxu0
    %7423 = vmatprep.mubr.f32.mxu0 %v7302
    %7424 = vmatmul.mubr.f32.gmra.mrb[0].mxu0 %v7301
    %v7425 = vpop.f32.mrb[0].mxu0
    %v7426 = vadd.f32 %v7352, %v7425
    %v7427 = vpop.f32.mrb[0].mxu0
    %7428 = vmatprep.mubr.f32.mxu0 %v7304
    %7429 = vmatmul.mubr.f32.gmra.mrb[0].mxu0 %v7303
    %v7430 = vpop.f32.mrb[0].mxu0
    %v7431 = vadd.f32 %v7352, %v7430
    %v7432 = vpop.f32.mrb[0].mxu0
    %7433 = vmatprep.mubr.f32.mxu0 %v7306
    %7434 = vmatmul.mubr.f32.gmra.mrb[0].mxu0 %v7305
    %v7435 = vpop.f32.mrb[0].mxu0
    %v7436 = vadd.f32 %v7352, %v7435
    %v7437 = vpop.f32.mrb[0].mxu0
    %7438 = vmatprep.mubr.f32.mxu0 %v7308
    %7439 = vmatmul.mubr.f32.gmra.mrb[0].mxu0 %v7307
    %v7440 = vpop.f32.mrb[0].mxu0
    %v7441 = vadd.f32 %v7352, %v7440
    %v7442 = vpop.f32.mrb[0].mxu0
    %7443 = vmatprep.mubr.f32.mxu0 %v7310
    %7444 = vmatmul.mubr.f32.gmra.mrb[0].mxu0 %v7309
    %v7445 = vpop.f32.mrb[0].mxu0
    %v7446 = vadd.f32 %v7352, %v7445
    %v7447 = vpop.f32.mrb[0].mxu0
    %7448 = vmatprep.mubr.f32.mxu0 %v7312
    %7449 = vmatmul.mubr.f32.gmra.mrb[0].mxu0 %v7311
    %v7450 = vpop.f32.mrb[0].mxu0
    %v7451 = vadd.f32 %v7352, %v7450
    %v7452 = vpop.f32.mrb[0].mxu0
    %7453 = vmatprep.mubr.f32.mxu0 %v7314
    %7454 = vmatmul.mubr.f32.gmra.mrb[0].mxu0 %v7313
    %v7455 = vpop.f32.mrb[0].mxu0
    %v7456 = vadd.f32 %v7352, %v7455
    %v7457 = vpop.f32.mrb[0].mxu0
    %7458 = vdwg.mxu0
    %v7459 = vmax.f32 %v7421, 0.0
    %v7460 = vmax.f32 %v7426, 0.0
    %v7461 = vmax.f32 %v7431, 0.0
    %v7462 = vmax.f32 %v7436, 0.0
    %v7463 = vmax.f32 %v7441, 0.0
    %v7464 = vmax.f32 %v7446, 0.0
    %v7465 = vmax.f32 %v7451, 0.0
    %v7466 = vmax.f32 %v7456, 0.0
    %v7467 = vld [vmem:[%s9] sm:$0xff]
    %v7468 = vld [vmem:[%s9 + $0x8] sm:$0xff]
    %v7469 = vld [vmem:[%s9 + $0x10] sm:$0xff]
    %v7470 = vld [vmem:[%s9 + $0x18] sm:$0xff]
    %v7471 = vld [vmem:[%s9 + $0x20] sm:$0xff]
    %v7472 = vld [vmem:[%s9 + $0x28] sm:$0xff]
    %v7473 = vld [vmem:[%s9 + $0x30] sm:$0xff]
    %v7474 = vld [vmem:[%s9 + $0x38] sm:$0xff]
    %v7475 = vld [vmem:[%s9 + $0x40] sm:$0xff]
    %v7476 = vld [vmem:[%s9 + $0x48] sm:$0xff]
    %v7477 = vld [vmem:[%s9 + $0x50] sm:$0xff]
    %v7478 = vld [vmem:[%s9 + $0x58] sm:$0xff]
    %v7479 = vld [vmem:[%s9 + $0x60] sm:$0xff]
    %v7480 = vld [vmem:[%s9 + $0x68] sm:$0xff]
    %v7481 = vld [vmem:[%s9 + $0x70] sm:$0xff]
    %v7482 = vld [vmem:[%s9 + $0x78] sm:$0xff]
    %v7483 = vld [vmem:[%s10] sm:$0x1]
    %v7485 = vlaneseq
    %v7486 = vshrl.u32 %v7485, 7
    %v7487 = vsub.s32 0, %v7486
    %v7488 = vrot.slane %v7483, %v7487
    %7490 = vmatprep.subr.mxu0 0.0
    %7491 = vmatpush1.msra.mxu0 %v7467
    %7492 = vmatprep.subr.mxu0 0.0
    %7493 = vmatpush1.msra.mxu0 %v7468
    %7494 = vmatprep.subr.mxu0 0.0
    %7495 = vmatpush1.msra.mxu0 %v7469
    %7496 = vmatprep.subr.mxu0 0.0
    %7497 = vmatpush1.msra.mxu0 %v7470
    %7498 = vmatprep.subr.mxu0 0.0
    %7499 = vmatpush1.msra.mxu0 %v7471
    %7500 = vmatprep.subr.mxu0 0.0
    %7501 = vmatpush1.msra.mxu0 %v7472
    %7502 = vmatprep.subr.mxu0 0.0
    %7503 = vmatpush1.msra.mxu0 %v7473
    %7504 = vmatprep.subr.mxu0 0.0
    %7505 = vmatpush1.msra.mxu0 %v7474
    %7506 = vmatprep.subr.mxu0 0.0
    %7507 = vmatpush1.msra.mxu0 %v7475
    %7508 = vmatprep.subr.mxu0 0.0
    %7509 = vmatpush1.msra.mxu0 %v7476
    %7510 = vmatprep.subr.mxu0 0.0
    %7511 = vmatpush1.msra.mxu0 %v7477
    %7512 = vmatprep.subr.mxu0 0.0
    %7513 = vmatpush1.msra.mxu0 %v7478
    %7514 = vmatprep.subr.mxu0 0.0
    %7515 = vmatpush1.msra.mxu0 %v7479
    %7516 = vmatprep.subr.mxu0 0.0
    %7517 = vmatpush1.msra.mxu0 %v7480
    %7518 = vmatprep.subr.mxu0 0.0
    %7519 = vmatpush1.msra.mxu0 %v7481
    %7520 = vmatprep.subr.mxu0 0.0
    %7521 = vmatpush1.msra.mxu0 %v7482
    %7522 = vmatprep.subr.mxu0 0.0
    %7523 = vmatpush1.msra.mxu0 0.0
    %7524 = vmatprep.subr.mxu0 0.0
    %7525 = vmatpush1.msra.mxu0 0.0
    %7526 = vmatprep.subr.mxu0 0.0
    %7527 = vmatpush1.msra.mxu0 0.0
    %7528 = vmatprep.subr.mxu0 0.0
    %7529 = vmatpush1.msra.mxu0 0.0
    %7530 = vmatprep.subr.mxu0 0.0
    %7531 = vmatpush1.msra.mxu0 0.0
    %7532 = vmatprep.subr.mxu0 0.0
    %7533 = vmatpush1.msra.mxu0 0.0
    %7534 = vmatprep.subr.mxu0 0.0
    %7535 = vmatpush1.msra.mxu0 0.0
    %7536 = vmatprep.subr.mxu0 0.0
    %7537 = vmatpush1.msra.mxu0 0.0
    %7538 = vmatprep.subr.mxu0 0.0
    %7539 = vmatpush1.msra.mxu0 0.0
    %7540 = vmatprep.subr.mxu0 0.0
    %7541 = vmatpush1.msra.mxu0 0.0
    %7542 = vmatprep.subr.mxu0 0.0
    %7543 = vmatpush1.msra.mxu0 0.0
    %7544 = vmatprep.subr.mxu0 0.0
    %7545 = vmatpush1.msra.mxu0 0.0
    %7546 = vmatprep.subr.mxu0 0.0
    %7547 = vmatpush1.msra.mxu0 0.0
    %7548 = vmatprep.subr.mxu0 0.0
    %7549 = vmatpush1.msra.mxu0 0.0
    %7550 = vmatprep.subr.mxu0 0.0
    %7551 = vmatpush1.msra.mxu0 0.0
    %7552 = vmatprep.subr.mxu0 0.0
    %7553 = vmatpush1.msra.mxu0 0.0
    %7554 = vmatprep.mubr.f32.mxu0 0.0
    %7555 = vmatmul.mubr.f32.gmra.mrb[0].mxu0 %v7459
    %v7556 = vpop.f32.mrb[0].mxu0
    %v7557 = vadd.f32 %v7488, %v7556
    %v7558 = vpop.f32.mrb[0].mxu0
    %7559 = vmatprep.mubr.f32.mxu0 0.0
    %7560 = vmatmul.mubr.f32.gmra.mrb[0].mxu0 %v7460
    %v7561 = vpop.f32.mrb[0].mxu0
    %v7562 = vadd.f32 %v7488, %v7561
    %v7563 = vpop.f32.mrb[0].mxu0
    %7564 = vmatprep.mubr.f32.mxu0 0.0
    %7565 = vmatmul.mubr.f32.gmra.mrb[0].mxu0 %v7461
    %v7566 = vpop.f32.mrb[0].mxu0
    %v7567 = vadd.f32 %v7488, %v7566
    %v7568 = vpop.f32.mrb[0].mxu0
    %7569 = vmatprep.mubr.f32.mxu0 0.0
    %7570 = vmatmul.mubr.f32.gmra.mrb[0].mxu0 %v7462
    %v7571 = vpop.f32.mrb[0].mxu0
    %v7572 = vadd.f32 %v7488, %v7571
    %v7573 = vpop.f32.mrb[0].mxu0
    %7574 = vmatprep.mubr.f32.mxu0 0.0
    %7575 = vmatmul.mubr.f32.gmra.mrb[0].mxu0 %v7463
    %v7576 = vpop.f32.mrb[0].mxu0
    %v7577 = vadd.f32 %v7488, %v7576
    %v7578 = vpop.f32.mrb[0].mxu0
    %7579 = vmatprep.mubr.f32.mxu0 0.0
    %7580 = vmatmul.mubr.f32.gmra.mrb[0].mxu0 %v7464
    %v7581 = vpop.f32.mrb[0].mxu0
    %v7582 = vadd.f32 %v7488, %v7581
    %v7583 = vpop.f32.mrb[0].mxu0
    %7584 = vmatprep.mubr.f32.mxu0 0.0
    %7585 = vmatmul.mubr.f32.gmra.mrb[0].mxu0 %v7465
    %v7586 = vpop.f32.mrb[0].mxu0
    %v7587 = vadd.f32 %v7488, %v7586
    %v7588 = vpop.f32.mrb[0].mxu0
    %7589 = vmatprep.mubr.f32.mxu0 0.0
    %7590 = vmatmul.mubr.f32.gmra.mrb[0].mxu0 %v7466
    %v7591 = vpop.f32.mrb[0].mxu0
    %v7592 = vadd.f32 %v7488, %v7591
    %v7593 = vpop.f32.mrb[0].mxu0
    %7594 = vdwg.mxu0
    %v7595 = vmax.f32 %v7557, 0.0
    %v7596 = vmax.f32 %v7562, 0.0
    %v7597 = vmax.f32 %v7567, 0.0
    %v7598 = vmax.f32 %v7572, 0.0
    %v7599 = vmax.f32 %v7577, 0.0
    %v7600 = vmax.f32 %v7582, 0.0
    %v7601 = vmax.f32 %v7587, 0.0
    %v7602 = vmax.f32 %v7592, 0.0
    %v7603 = vld [vmem:[%s11] sm:$0xff]
    %v7604 = vld [vmem:[%s11 + $0x8] sm:$0xff]
    %v7605 = vld [vmem:[%s11 + $0x10] sm:$0xff]
    %v7606 = vld [vmem:[%s11 + $0x18] sm:$0xff]
    %v7607 = vld [vmem:[%s11 + $0x20] sm:$0xff]
    %v7608 = vld [vmem:[%s11 + $0x28] sm:$0xff]
    %v7609 = vld [vmem:[%s11 + $0x30] sm:$0xff]
    %v7610 = vld [vmem:[%s11 + $0x38] sm:$0xff]
    %v7611 = vld [vmem:[%s11 + $0x40] sm:$0xff]
    %v7612 = vld [vmem:[%s11 + $0x48] sm:$0xff]
    %v7613 = vld [vmem:[%s11 + $0x50] sm:$0xff]
    %v7614 = vld [vmem:[%s11 + $0x58] sm:$0xff]
    %v7615 = vld [vmem:[%s11 + $0x60] sm:$0xff]
    %v7616 = vld [vmem:[%s11 + $0x68] sm:$0xff]
    %v7617 = vld [vmem:[%s11 + $0x70] sm:$0xff]
    %v7618 = vld [vmem:[%s11 + $0x78] sm:$0xff]
    %v7619 = vld [vmem:[%s12] sm:$0x1]
    %v7621 = vlaneseq
    %v7622 = vshrl.u32 %v7621, 7
    %v7623 = vsub.s32 0, %v7622
    %v7624 = vrot.slane %v7619, %v7623
    %7626 = vmatprep.subr.mxu0 0.0
    %7627 = vmatpush1.msra.mxu0 %v7603
    %7628 = vmatprep.subr.mxu0 0.0
    %7629 = vmatpush1.msra.mxu0 %v7604
    %7630 = vmatprep.subr.mxu0 0.0
    %7631 = vmatpush1.msra.mxu0 %v7605
    %7632 = vmatprep.subr.mxu0 0.0
    %7633 = vmatpush1.msra.mxu0 %v7606
    %7634 = vmatprep.subr.mxu0 0.0
    %7635 = vmatpush1.msra.mxu0 %v7607
    %7636 = vmatprep.subr.mxu0 0.0
    %7637 = vmatpush1.msra.mxu0 %v7608
    %7638 = vmatprep.subr.mxu0 0.0
    %7639 = vmatpush1.msra.mxu0 %v7609
    %7640 = vmatprep.subr.mxu0 0.0
    %7641 = vmatpush1.msra.mxu0 %v7610
    %7642 = vmatprep.subr.mxu0 0.0
    %7643 = vmatpush1.msra.mxu0 %v7611
    %7644 = vmatprep.subr.mxu0 0.0
    %7645 = vmatpush1.msra.mxu0 %v7612
    %7646 = vmatprep.subr.mxu0 0.0
    %7647 = vmatpush1.msra.mxu0 %v7613
    %7648 = vmatprep.subr.mxu0 0.0
    %7649 = vmatpush1.msra.mxu0 %v7614
    %7650 = vmatprep.subr.mxu0 0.0
    %7651 = vmatpush1.msra.mxu0 %v7615
    %7652 = vmatprep.subr.mxu0 0.0
    %7653 = vmatpush1.msra.mxu0 %v7616
    %7654 = vmatprep.subr.mxu0 0.0
    %7655 = vmatpush1.msra.mxu0 %v7617
    %7656 = vmatprep.subr.mxu0 0.0
    %7657 = vmatpush1.msra.mxu0 %v7618
    %7658 = vmatprep.subr.mxu0 0.0
    %7659 = vmatpush1.msra.mxu0 0.0
    %7660 = vmatprep.subr.mxu0 0.0
    %7661 = vmatpush1.msra.mxu0 0.0
    %7662 = vmatprep.subr.mxu0 0.0
    %7663 = vmatpush1.msra.mxu0 0.0
    %7664 = vmatprep.subr.mxu0 0.0
    %7665 = vmatpush1.msra.mxu0 0.0
    %7666 = vmatprep.subr.mxu0 0.0
    %7667 = vmatpush1.msra.mxu0 0.0
    %7668 = vmatprep.subr.mxu0 0.0
    %7669 = vmatpush1.msra.mxu0 0.0
    %7670 = vmatprep.subr.mxu0 0.0
    %7671 = vmatpush1.msra.mxu0 0.0
    %7672 = vmatprep.subr.mxu0 0.0
    %7673 = vmatpush1.msra.mxu0 0.0
    %7674 = vmatprep.subr.mxu0 0.0
    %7675 = vmatpush1.msra.mxu0 0.0
    %7676 = vmatprep.subr.mxu0 0.0
    %7677 = vmatpush1.msra.mxu0 0.0
    %7678 = vmatprep.subr.mxu0 0.0
    %7679 = vmatpush1.msra.mxu0 0.0
    %7680 = vmatprep.subr.mxu0 0.0
    %7681 = vmatpush1.msra.mxu0 0.0
    %7682 = vmatprep.subr.mxu0 0.0
    %7683 = vmatpush1.msra.mxu0 0.0
    %7684 = vmatprep.subr.mxu0 0.0
    %7685 = vmatpush1.msra.mxu0 0.0
    %7686 = vmatprep.subr.mxu0 0.0
    %7687 = vmatpush1.msra.mxu0 0.0
    %7688 = vmatprep.subr.mxu0 0.0
    %7689 = vmatpush1.msra.mxu0 0.0
    %7690 = vmatprep.mubr.f32.mxu0 0.0
    %7691 = vmatmul.mubr.f32.gmra.mrb[0].mxu0 %v7595
    %v7692 = vpop.f32.mrb[0].mxu0
    %v7693 = vadd.f32 %v7624, %v7692
    %v7694 = vpop.f32.mrb[0].mxu0
    %7695 = vmatprep.mubr.f32.mxu0 0.0
    %7696 = vmatmul.mubr.f32.gmra.mrb[0].mxu0 %v7596
    %v7697 = vpop.f32.mrb[0].mxu0
    %v7698 = vadd.f32 %v7624, %v7697
    %v7699 = vpop.f32.mrb[0].mxu0
    %7700 = vmatprep.mubr.f32.mxu0 0.0
    %7701 = vmatmul.mubr.f32.gmra.mrb[0].mxu0 %v7597
    %v7702 = vpop.f32.mrb[0].mxu0
    %v7703 = vadd.f32 %v7624, %v7702
    %v7704 = vpop.f32.mrb[0].mxu0
    %7705 = vmatprep.mubr.f32.mxu0 0.0
    %7706 = vmatmul.mubr.f32.gmra.mrb[0].mxu0 %v7598
    %v7707 = vpop.f32.mrb[0].mxu0
    %v7708 = vadd.f32 %v7624, %v7707
    %v7709 = vpop.f32.mrb[0].mxu0
    %7710 = vmatprep.mubr.f32.mxu0 0.0
    %7711 = vmatmul.mubr.f32.gmra.mrb[0].mxu0 %v7599
    %v7712 = vpop.f32.mrb[0].mxu0
    %v7713 = vadd.f32 %v7624, %v7712
    %v7714 = vpop.f32.mrb[0].mxu0
    %7715 = vmatprep.mubr.f32.mxu0 0.0
    %7716 = vmatmul.mubr.f32.gmra.mrb[0].mxu0 %v7600
    %v7717 = vpop.f32.mrb[0].mxu0
    %v7718 = vadd.f32 %v7624, %v7717
    %v7719 = vpop.f32.mrb[0].mxu0
    %7720 = vmatprep.mubr.f32.mxu0 0.0
    %7721 = vmatmul.mubr.f32.gmra.mrb[0].mxu0 %v7601
    %v7722 = vpop.f32.mrb[0].mxu0
    %v7723 = vadd.f32 %v7624, %v7722
    %v7724 = vpop.f32.mrb[0].mxu0
    %7725 = vmatprep.mubr.f32.mxu0 0.0
    %7726 = vmatmul.mubr.f32.gmra.mrb[0].mxu0 %v7602
    %v7727 = vpop.f32.mrb[0].mxu0
    %v7728 = vadd.f32 %v7624, %v7727
    %v7729 = vpop.f32.mrb[0].mxu0
    %7730 = vdwg.mxu0
    %7731 = vst [vmem:[%s13] sm:$0xff] %v7693
    %7732 = vst [vmem:[%s13 + $0x8] sm:$0xff] %v7698
    %7733 = vst [vmem:[%s13 + $0x10] sm:$0xff] %v7703
    %7734 = vst [vmem:[%s13 + $0x18] sm:$0xff] %v7708
    %7735 = vst [vmem:[%s13 + $0x20] sm:$0xff] %v7713
    %7736 = vst [vmem:[%s13 + $0x28] sm:$0xff] %v7718
    %7737 = vst [vmem:[%s13 + $0x30] sm:$0xff] %v7723
    %7738 = vst [vmem:[%s13 + $0x38] sm:$0xff] %v7728
    // Predicated region
    $region66: #{lstm_forward.1} parent=1 // pred_check
      _
    $region67: #{lstm_forward.1} parent=1 // pred_check_branch
      %7740 = sbr.rel (0) target = $region69
    $region68: #{lstm_forward.1} parent=1 // pred_region
      _
    $region69: #{lstm_forward.1} parent=1 // pred_fallthru
      _
    // Predicated region
    $region70: #{lstm_forward.1} parent=1 // pred_check
      _
    $region71: #{lstm_forward.1} parent=1 // pred_check_branch
      %7742 = sbr.rel (0) target = $region73
    $region72: #{lstm_forward.1} parent=1 // pred_region
      _
    $region73: #{lstm_forward.1} parent=1 // pred_fallthru
      _
    %7743 = vsyncpa [#allocation6], 1
    %7744 = vsyncpa [#allocation8], 1

</llo_original>
